<compile_context>
chip_gen: v6e
topology: v6e:2x2x1
jax: 0.10.0
libtpu: 0.0.40
codegen_flags: <defaults>
</compile_context>

<pallas_src>
import jax
import jax.numpy as jnp
from jax.experimental import pallas as pl
from jax.experimental.pallas import tpu as pltpu


_SELU_ALPHA = 1.6732632423543772
_SELU_SCALE = 1.0507009873554805
_IN_EPS = 1e-5


# ----------------------------------------------------------------------------
# small helpers
# ----------------------------------------------------------------------------
def _leaky(x):
    return jnp.where(x >= 0, x, 0.2 * x)


def _selu(x):
    return _SELU_SCALE * jnp.where(x > 0, x, _SELU_ALPHA * (jnp.exp(x) - 1.0))


def _col_spec(shape3):
    """Per-sample block of a (B, d0, d1) array (leading batch dim squeezed)."""
    _, d0, d1 = (int(s) for s in shape3)
    return pl.BlockSpec((None, d0, d1), lambda b: (b, 0, 0))


def _full2(shape2):
    """Whole-array block of a small 2-D operand."""
    d0, d1 = (int(s) for s in shape2)
    return pl.BlockSpec((d0, d1), lambda b: (0, 0))


def _patches_3x3(x, H, W):
    """In-kernel zero-padded 3x3 im2col.

    x: (C, H*W) value, channels on sublanes, flattened (row-major) spatial on
    lanes.  Returns (9*C, H*W) with tap-major row order (kh, kw, c), matching
    weights reshaped via w.transpose(0, 2, 3, 1).reshape(Cout, 9*C).
    Only lane-axis concat / static slices / iota / select are used.
    """
    C, HW = x.shape
    pad = W + 1
    zeros = jnp.zeros((C, pad), x.dtype)
    xp = jnp.concatenate([zeros, x, zeros], axis=1)        # (C, HW + 2*(W+1))
    ow = jax.lax.broadcasted_iota(jnp.int32, (1, HW), 1) % W
    not_left = ow >= 1                                     # reading column ow-1 is valid
    not_right = ow <= W - 2                                # reading column ow+1 is valid
    parts = []
    for dh in (-1, 0, 1):
        for dw in (-1, 0, 1):
            off = dh * W + dw
            sh = xp[:, pad + off:pad + off + HW]           # shifted-with-zero-fill view
            if dw == -1:
                sh = jnp.where(not_left, sh, jnp.zeros_like(sh))
            elif dw == 1:
                sh = jnp.where(not_right, sh, jnp.zeros_like(sh))
            parts.append(sh)
    return jnp.concatenate(parts, axis=0)                  # (9*C, HW)


# ----------------------------------------------------------------------------
# Pallas kernels
# ----------------------------------------------------------------------------
def _make_enc_kernel(first, use_norm, eps):
    """Encoder layer: (leaky) conv4x4/s2 matmul + mean + IN + g2e add + SELU fc."""

    def kernel(*refs):
        it = iter(refs)
        col_ref = next(it)                      # (K, OHW) bf16
        w_ref = next(it)                        # (Cout, K) bf16
        b_ref = next(it)                        # (Cout, 1) f32
        if first:
            xflat_ref = next(it)                # (Cin, H*W) f32
            g2e_ref = None
        else:
            xflat_ref = None
            g2e_ref = next(it)                  # (Cout, 1) f32
        gamma_ref = next(it) if use_norm else None
        beta_ref = next(it) if use_norm else None
        fcw_ref = next(it)                      # (Fout, Cmean) f32
        fcg_ref = None if first else next(it)   # (Fout, 1) f32
        fcb_ref = next(it)                      # (Fout, 1) f32
        out_ref = next(it)                      # (Cout, OHW) f32
        gout_ref = next(it)                     # (Fout, 1) f32

        col = col_ref[...]
        if not first:
            col = _leaky(col)
        y = jnp.dot(w_ref[...], col, preferred_element_type=jnp.float32)
        y = y + b_ref[...]

        if first:
            m = jnp.mean(xflat_ref[...], axis=1, keepdims=True)   # raw-input mean
        else:
            m = jnp.mean(y, axis=1, keepdims=True)                # pre-norm mean
        if use_norm:
            msq = jnp.mean(y * y, axis=1, keepdims=True)
            var = jnp.maximum(msq - m * m, 0.0)                   # clamp (review note)
            y = (y - m) * jax.lax.rsqrt(var + eps)
            y = y * gamma_ref[...] + beta_ref[...]
        if not first:
            y = y + g2e_ref[...]
        out_ref[...] = y

        g = jnp.dot(fcw_ref[...], m, preferred_element_type=jnp.float32)
        if not first:
            g = g + fcg_ref[...]
        gout_ref[...] = _selu(g + fcb_ref[...])

    return kernel


def _make_dec_kernel(H, W, last, eps):
    """Fused decoder layer: leaky + conv1 + conv2 (both in-kernel im2col) +
    mean + IN + g2e add + (tanh | SELU fc)."""

    def kernel(*refs):
        it = iter(refs)
        xup_ref = next(it)                      # (Cin1, H*W) bf16
        w1_ref = next(it)                       # (C1, 9*Cin1) bf16
        b1_ref = next(it)                       # (C1, 1) f32
        w2_ref = next(it)                       # (C2, 9*C1) bf16
        b2_ref = next(it)                       # (C2, 1) f32
        g2e_ref = next(it)                      # (C2, 1) f32
        if not last:
            gamma_ref = next(it)
            beta_ref = next(it)
            fcw_ref = next(it)                  # (Fout, C2) f32
            fcg_ref = next(it)                  # (Fout, 1) f32
            fcb_ref = next(it)                  # (Fout, 1) f32
        out_ref = next(it)                      # (C2, H*W) f32
        gout_ref = None if last else next(it)   # (Fout, 1) f32

        x = _leaky(xup_ref[...])                                    # (Cin1, HW) bf16
        col1 = _patches_3x3(x, H, W)                                # (9*Cin1, HW) bf16
        h = jnp.dot(w1_ref[...], col1, preferred_element_type=jnp.float32)
        h = h + b1_ref[...]                                         # (C1, HW) f32

        col2 = _patches_3x3(h.astype(jnp.bfloat16), H, W)           # (9*C1, HW) bf16
        y = jnp.dot(w2_ref[...], col2, preferred_element_type=jnp.float32)
        y = y + b2_ref[...]                                         # (C2, HW) f32

        if not last:
            m = jnp.mean(y, axis=1, keepdims=True)                  # pre-norm mean
            msq = jnp.mean(y * y, axis=1, keepdims=True)
            var = jnp.maximum(msq - m * m, 0.0)
            y = (y - m) * jax.lax.rsqrt(var + eps)
            y = y * gamma_ref[...] + beta_ref[...]
        y = y + g2e_ref[...]
        if last:
            y = jnp.tanh(y)
        out_ref[...] = y

        if not last:
            g = jnp.dot(fcw_ref[...], m, preferred_element_type=jnp.float32)
            gout_ref[...] = _selu(g + fcg_ref[...] + fcb_ref[...])

    return kernel


def _make_basis_kernel(n_layers):
    def kernel(*refs):
        feat_ref = refs[0]
        out_ref = refs[-1]
        h = feat_ref[...]                                           # (B, D0) f32
        for j in range(n_layers):
            w = refs[1 + 2 * j][...]                                # bf16
            b = refs[2 + 2 * j][...]                                # (1, N) f32
            h = jnp.dot(h.astype(jnp.bfloat16), w,
                        preferred_element_type=jnp.float32) + b
            h = jnp.tanh(h) if j == n_layers - 1 else _leaky(h)
        out_ref[...] = h
    return kernel


# ----------------------------------------------------------------------------
# Pallas wrappers (grid=(B,), "parallel")
# ----------------------------------------------------------------------------
def _encoder_layer(col, w_mat, bias, *, xflat=None, g2e_add=None, gamma=None,
                   beta=None, fcw_mT, fc_g=None, fc_b, eps=_IN_EPS):
    B, K, OHW = col.shape
    Cout = w_mat.shape[0]
    Fout = fcw_mT.shape[0]
    first = xflat is not None
    use_norm = gamma is not None
    f32 = jnp.float32

    operands = [col, w_mat, bias]
    specs = [_col_spec(col.shape), _full2(w_mat.shape), _full2(bias.shape)]
    if first:
        operands.append(xflat)
        specs.append(_col_spec(xflat.shape))
    else:
        operands.append(g2e_add)
        specs.append(_col_spec(g2e_add.shape))
    if use_norm:
        operands += [gamma, beta]
        specs += [_full2(gamma.shape), _full2(beta.shape)]
    operands.append(fcw_mT)
    specs.append(_full2(fcw_mT.shape))
    if not first:
        operands.append(fc_g)
        specs.append(_col_spec(fc_g.shape))
    operands.append(fc_b)
    specs.append(_full2(fc_b.shape))

    out_shape = (jax.ShapeDtypeStruct((B, Cout, OHW), f32),
                 jax.ShapeDtypeStruct((B, Fout, 1), f32))
    out_specs = (pl.BlockSpec((None, Cout, OHW), lambda b: (b, 0, 0)),
                 pl.BlockSpec((None, Fout, 1), lambda b: (b, 0, 0)))

    return pl.pallas_call(
        _make_enc_kernel(first=first, use_norm=use_norm, eps=eps),
        grid=(B,),
        in_specs=specs,
        out_specs=out_specs,
        out_shape=out_shape,
        compiler_params=pltpu.CompilerParams(dimension_semantics=("parallel",)),
    )(*operands)


def _decoder_layer(xup, w1_mat, b1, w2_mat, b2, g2e_add, H, W, *, gamma=None,
                   beta=None, fcw_mT=None, fc_g=None, fc_b=None, eps=_IN_EPS):
    B, _, HW = xup.shape
    C2 = w2_mat.shape[0]
    last = fcw_mT is None
    f32 = jnp.float32

    operands = [xup, w1_mat, b1, w2_mat, b2, g2e_add]
    specs = [_col_spec(xup.shape), _full2(w1_mat.shape), _full2(b1.shape),
             _full2(w2_mat.shape), _full2(b2.shape), _col_spec(g2e_add.shape)]
    if not last:
        Fout = fcw_mT.shape[0]
        operands += [gamma, beta, fcw_mT, fc_g, fc_b]
        specs += [_full2(gamma.shape), _full2(beta.shape), _full2(fcw_mT.shape),
                  _col_spec(fc_g.shape), _full2(fc_b.shape)]
        out_shape = (jax.ShapeDtypeStruct((B, C2, HW), f32),
                     jax.ShapeDtypeStruct((B, Fout, 1), f32))
        out_specs = (pl.BlockSpec((None, C2, HW), lambda b: (b, 0, 0)),
                     pl.BlockSpec((None, Fout, 1), lambda b: (b, 0, 0)))
    else:
        out_shape = jax.ShapeDtypeStruct((B, C2, HW), f32)
        out_specs = pl.BlockSpec((None, C2, HW), lambda b: (b, 0, 0))

    return pl.pallas_call(
        _make_dec_kernel(H=H, W=W, last=last, eps=eps),
        grid=(B,),
        in_specs=specs,
        out_specs=out_specs,
        out_shape=out_shape,
        compiler_params=pltpu.CompilerParams(dimension_semantics=("parallel",)),
    )(*operands)


def _basis_net(feat, layer_params):
    """Whole basis MLP (leaky ... leaky, tanh) fused into one pallas_call."""
    n = len(layer_params)
    operands = [feat.astype(jnp.float32)]
    specs = [_full2(feat.shape)]
    for w, b in layer_params:
        wb = w.astype(jnp.bfloat16)
        bb = b.reshape(1, -1).astype(jnp.float32)
        operands += [wb, bb]
        specs += [_full2(wb.shape), _full2(bb.shape)]
    B = feat.shape[0]
    Nout = layer_params[-1][0].shape[1]
    return pl.pallas_call(
        _make_basis_kernel(n),
        grid=(1,),
        in_specs=specs,
        out_specs=_full2((B, Nout)),
        out_shape=jax.ShapeDtypeStruct((B, Nout), jnp.float32),
        compiler_params=pltpu.CompilerParams(dimension_semantics=("arbitrary",)),
    )(*operands)


# ----------------------------------------------------------------------------
# XLA glue: NCHW im2col for the stride-2 encoder convs; weight reordering
# ----------------------------------------------------------------------------
def _im2col_nchw(x, k, stride, pad):
    """x: (B, C, H, W) -> col: (B, k*k*C, OH*OW) with row order (kh, kw, c)."""
    B, C, H, W = x.shape
    xp = jnp.pad(x, ((0, 0), (0, 0), (pad, pad), (pad, pad)))
    OH = (H + 2 * pad - k) // stride + 1
    OW = (W + 2 * pad - k) // stride + 1
    cols = []
    for kh in range(k):
        for kw in range(k):
            patch = jax.lax.slice(
                xp, (0, 0, kh, kw),
                (B, C, kh + stride * (OH - 1) + 1, kw + stride * (OW - 1) + 1),
                (1, 1, stride, stride))
            cols.append(patch)                      # (B, C, OH, OW)
    col = jnp.concatenate(cols, axis=1)             # (B, k*k*C, OH, OW)
    return col.reshape(B, k * k * C, OH * OW), OH, OW


def _conv_wmat(w):
    """(Cout, Cin, kh, kw) -> (Cout, kh*kw*Cin) bf16, tap-major (kh, kw, c)."""
    Cout = w.shape[0]
    return w.transpose(0, 2, 3, 1).reshape(Cout, -1).astype(jnp.bfloat16)


# ----------------------------------------------------------------------------
# Parameter construction (deterministic, mirrors RDANBasis_2018.__init__)
# ----------------------------------------------------------------------------
def make_params(key, en_channels, de_channels, basis_channels, basis_num):
    de_channels = list(de_channels)
    basis_channels = list(basis_channels)
    de_channels[-1] = basis_num
    basis_channels[-1] = int(basis_num * 10)

    cnt = [0]

    def nxt():
        cnt[0] += 1
        return jax.random.fold_in(key, cnt[0])

    def normal(shape, std, mean=0.0):
        return (mean + std * jax.random.normal(nxt(), shape)).astype(jnp.float32)

    def linear(inC, outC):                      # stored as (in, out)
        return (normal((inC, outC), (1.0 / inC) ** 0.5), normal((outC,), 0.002))

    def linear_nb(inC, outC):
        return normal((inC, outC), (1.0 / inC) ** 0.5)

    def conv(inC, outC, k):
        return (normal((outC, inC, k, k), 0.02), normal((outC,), 0.002))

    def inorm(C):
        return (normal((C,), 0.02, mean=1.0), jnp.zeros((C,), jnp.float32))

    # encoder
    in_cs, out_cs = en_channels[:-1], en_channels[1:]
    fc_out = en_channels[2:] + [out_cs[-1]]
    en_convs, en_fcs, en_g2e, en_ins = [], [], [], []
    last_outC = None
    for i, (inC, outC, fcC) in enumerate(zip(in_cs, out_cs, fc_out)):
        en_convs.append(conv(inC, outC, 4))
        if i == 0:
            en_fcs.append(linear(inC, fcC))
        else:
            en_fcs.append(linear(outC + last_outC, fcC))
            en_g2e.append(linear_nb(outC, outC))
            if i != len(in_cs) - 1:
                en_ins.append(inorm(outC))
        last_outC = fcC

    # decoder ("weight_net")
    in_cs, out_cs, fc_out = de_channels[:-1], de_channels[1:], de_channels[1:]
    de_convs, de_fcs, de_g2e, de_ins = [], [], [], []
    for i, (inC, outC, fcC) in enumerate(zip(in_cs, out_cs, fc_out)):
        if i != 0:
            inC = inC * 2
        if i != len(in_cs) - 1:
            de_ins.append(inorm(outC))
            de_fcs.append(linear(outC + last_outC, fcC))
        de_convs.append((conv(inC, outC, 3), conv(outC, outC, 3)))
        de_g2e.append(linear_nb(last_outC, outC))
        last_outC = fcC

    # basis net
    basis = [linear(basis_channels[i], basis_channels[i + 1])
             for i in range(len(basis_channels) - 1)]

    return {
        "en": {"convs": en_convs, "fcs": en_fcs, "g2e": en_g2e, "ins": en_ins},
        "de": {"convs": de_convs, "fcs": de_fcs, "g2e": de_g2e, "ins": de_ins},
        "basis": basis,
    }


# ----------------------------------------------------------------------------
# Forward pass (mirrors RDANBasis_2018.forward)
# ----------------------------------------------------------------------------
def rdan_forward(params, x_nchw, *, basis_num, out_channel):
    f32, bf16 = jnp.float32, jnp.bfloat16
    x = x_nchw.astype(f32)                          # stay NCHW end-to-end
    B = x.shape[0]

    # -------------------- encoder --------------------
    en = params["en"]
    layers = []
    g = None                                        # globalOutput (B, G)
    n_en = len(en["convs"])
    for i in range(n_en):
        cw, cb = en["convs"][i]
        col, OH, OW = _im2col_nchw(x, 4, 2, 1)
        col = col.astype(bf16)
        w_mat = _conv_wmat(cw)
        bias = cb.reshape(-1, 1).astype(f32)
        fw, fb = en["fcs"][i]
        fcb = fb.reshape(-1, 1).astype(f32)
        if i == 0:
            xflat = x.reshape(B, x.shape[1], -1)    # raw-input mean source
            y, gout = _encoder_layer(col, w_mat, bias, xflat=xflat,
                                     fcw_mT=fw.T.astype(f32), fc_b=fcb)
        else:
            G = g.shape[1]
            g2e_add = jnp.dot(g, en["g2e"][i - 1])[:, :, None]      # (B, Cout, 1)
            fc_g = jnp.dot(g, fw[:G, :])[:, :, None]                # (B, Fout, 1)
            kwargs = dict(g2e_add=g2e_add, fcw_mT=fw[G:, :].T.astype(f32),
                          fc_g=fc_g, fc_b=fcb)
            if i != n_en - 1:
                gamma, beta = en["ins"][i - 1]
                kwargs.update(gamma=gamma.reshape(-1, 1).astype(f32),
                              beta=beta.reshape(-1, 1).astype(f32))
            y, gout = _encoder_layer(col, w_mat, bias, **kwargs)
        g = gout[:, :, 0]
        x = y.reshape(B, y.shape[1], OH, OW)
        layers.append(x)

    # -------------------- decoder ("weight_net") --------------------
    de = params["de"]
    n_de = len(de["convs"])
    for i in range(n_de):
        if i != 0:
            x = jnp.concatenate([x, layers[-(i + 1)]], axis=1)
        x = jnp.repeat(jnp.repeat(x, 2, axis=2), 2, axis=3)         # nearest 2x up
        _, Cin1, H2, W2 = x.shape
        xup = x.reshape(B, Cin1, H2 * W2).astype(bf16)
        (w1, b1), (w2, b2) = de["convs"][i]
        w1m, w2m = _conv_wmat(w1), _conv_wmat(w2)
        b1c = b1.reshape(-1, 1).astype(f32)
        b2c = b2.reshape(-1, 1).astype(f32)
        g2e_add = jnp.dot(g, de["g2e"][i])[:, :, None]              # (B, Cout, 1)
        last = i == n_de - 1
        if not last:
            gamma, beta = de["ins"][i]
            fw, fb = de["fcs"][i]
            G = g.shape[1]
            fc_g = jnp.dot(g, fw[:G, :])[:, :, None]
            y, gout = _decoder_layer(
                xup, w1m, b1c, w2m, b2c, g2e_add, H2, W2,
                gamma=gamma.reshape(-1, 1).astype(f32),
                beta=beta.reshape(-1, 1).astype(f32),
                fcw_mT=fw[G:, :].T.astype(f32), fc_g=fc_g,
                fc_b=fb.reshape(-1, 1).astype(f32))
            g = gout[:, :, 0]
        else:
            y = _decoder_layer(xup, w1m, b1c, w2m, b2c, g2e_add, H2, W2)
        x = y.reshape(B, y.shape[1], H2, W2)

    weight = x                                      # tanh applied in the last kernel

    # -------------------- basis net --------------------
    feat = layers[-1].reshape(B, -1)                # NCHW flatten order
    basis = _basis_net(feat, params["basis"])
    return weight, basis.reshape(B, basis_num, out_channel)


# ----------------------------------------------------------------------------
if __name__ == "__main__":
    key = jax.random.PRNGKey(0)

    # Small configuration consistent with the module's shape constraints.
    B, C, H, W = 2, 4, 16, 16
    en_channels = [4, 8, 16, 32]             # 3 encoder layers: 16 -> 8 -> 4 -> 2
    de_channels = [32, 16, 8, 8]             # last entry overridden to basis_num
    basis_num = 8
    out_channel = 10                         # basis_channels[-1] = basis_num*10
    basis_channels = [32 * 2 * 2, 64, 80]    # feat dim of layers[-1] = 32*2*2

    params = make_params(jax.random.fold_in(key, 1),
                         en_channels, de_channels, basis_channels, basis_num)
    x = jax.random.normal(jax.random.fold_in(key, 2), (B, C, H, W), jnp.float32)

    fwd = jax.jit(lambda p, xx: rdan_forward(
        p, xx, basis_num=basis_num, out_channel=out_channel))
    weight, basis = fwd(params, x)
    jax.block_until_ready((weight, basis))

    assert weight.shape == (B, basis_num, H, W), weight.shape
    assert basis.shape == (B, basis_num, out_channel), basis.shape
    assert bool(jnp.all(jnp.isfinite(weight))) and bool(jnp.all(jnp.isfinite(basis)))
    print("KERNEL_OK")
</pallas_src>

<mosaic_0001>
module attributes {stable_mosaic.version = 11 : i64} {
  func.func @kernel(%arg0: i32, %arg1: memref<1x64x64xbf16, #tpu.memory_space<vmem>>, %arg2: memref<8x64xbf16, #tpu.memory_space<vmem>>, %arg3: memref<8x1xf32, #tpu.memory_space<vmem>>, %arg4: memref<1x4x256xf32, #tpu.memory_space<vmem>>, %arg5: memref<16x4xf32, #tpu.memory_space<vmem>>, %arg6: memref<16x1xf32, #tpu.memory_space<vmem>>, %arg7: memref<1x8x64xf32, #tpu.memory_space<vmem>>, %arg8: memref<1x16x1xf32, #tpu.memory_space<vmem>>) attributes {dimension_semantics = [#tpu.dimension_semantics<parallel>], iteration_bounds = array<i64: 2>, scalar_prefetch = 0 : i64, scratch_operands = 0 : i64, tpu.core_type = #tpu.core_type<tc>, window_params = [{transform_indices = @transform_0, window_bounds = array<i64: 1, 64, 64>}, {pipeline_mode = #tpu.pipeline_mode<synchronous>, transform_indices = @transform_1, window_bounds = array<i64: 8, 64>}, {pipeline_mode = #tpu.pipeline_mode<synchronous>, transform_indices = @transform_2, window_bounds = array<i64: 8, 1>}, {transform_indices = @transform_3, window_bounds = array<i64: 1, 4, 256>}, {pipeline_mode = #tpu.pipeline_mode<synchronous>, transform_indices = @transform_4, window_bounds = array<i64: 16, 4>}, {pipeline_mode = #tpu.pipeline_mode<synchronous>, transform_indices = @transform_5, window_bounds = array<i64: 16, 1>}, {transform_indices = @transform_6, window_bounds = array<i64: 1, 8, 64>}, {transform_indices = @transform_7, window_bounds = array<i64: 1, 16, 1>}]} {
    %c0 = arith.constant 0 : index
    %c0_0 = arith.constant 0 : index
    %c0_1 = arith.constant 0 : index
    %0 = vector.load %arg1[%c0, %c0_0, %c0_1] : memref<1x64x64xbf16, #tpu.memory_space<vmem>>, vector<1x64x64xbf16>
    %1 = vector.shape_cast %0 : vector<1x64x64xbf16> to vector<64x64xbf16>
    %c0_2 = arith.constant 0 : index
    %c0_3 = arith.constant 0 : index
    %2 = vector.load %arg2[%c0_2, %c0_3] : memref<8x64xbf16, #tpu.memory_space<vmem>>, vector<8x64xbf16>
    %cst = arith.constant dense<0.000000e+00> : vector<8x64xf32>
    %3 = tpu.matmul %2, %1, %cst {dimension_numbers = #tpu.dot_dimension_numbers<[1], [0], [0], [1], [0, 0, 1, 1], [], []>} : vector<8x64xbf16>, vector<64x64xbf16>, vector<8x64xf32> -> vector<8x64xf32>
    %c0_4 = arith.constant 0 : index
    %c0_5 = arith.constant 0 : index
    %4 = vector.load %arg3[%c0_4, %c0_5] : memref<8x1xf32, #tpu.memory_space<vmem>>, vector<8x1xf32>
    %5 = vector.broadcast %4 : vector<8x1xf32> to vector<8x64xf32>
    %6 = arith.addf %3, %5 : vector<8x64xf32>
    %c0_6 = arith.constant 0 : index
    %c0_7 = arith.constant 0 : index
    %c0_8 = arith.constant 0 : index
    %7 = vector.load %arg4[%c0_6, %c0_7, %c0_8] : memref<1x4x256xf32, #tpu.memory_space<vmem>>, vector<1x4x256xf32>
    %8 = vector.shape_cast %7 : vector<1x4x256xf32> to vector<4x256xf32>
    %cst_9 = arith.constant dense<0.000000e+00> : vector<4xf32>
    %9 = vector.multi_reduction <add>, %8, %cst_9 [1] : vector<4x256xf32> to vector<4xf32>
    %10 = vector.shape_cast %9 : vector<4xf32> to vector<4x1xf32>
    %cst_10 = arith.constant 2.560000e+02 : f32
    %11 = vector.broadcast %cst_10 : f32 to vector<4x1xf32>
    %12 = arith.divf %10, %11 : vector<4x1xf32>
    %c0_11 = arith.constant 0 : index
    %c0_12 = arith.constant 0 : index
    %c0_13 = arith.constant 0 : index
    %13 = vector.load %arg7[%c0_11, %c0_12, %c0_13] : memref<1x8x64xf32, #tpu.memory_space<vmem>>, vector<1x8x64xf32>
    %14 = vector.shape_cast %13 : vector<1x8x64xf32> to vector<8x64xf32>
    %15 = vector.shape_cast %6 : vector<8x64xf32> to vector<1x8x64xf32>
    tpu.vector_store %arg7[%c0_11, %c0_12, %c0_13], %15 {strides = array<i32>} : memref<1x8x64xf32, #tpu.memory_space<vmem>>, vector<1x8x64xf32>,
    %c0_14 = arith.constant 0 : index
    %c0_15 = arith.constant 0 : index
    %16 = vector.load %arg5[%c0_14, %c0_15] : memref<16x4xf32, #tpu.memory_space<vmem>>, vector<16x4xf32>
    %cst_16 = arith.constant dense<0.000000e+00> : vector<16x1xf32>
    %17 = tpu.matmul %16, %12, %cst_16 {dimension_numbers = #tpu.dot_dimension_numbers<[1], [0], [0], [1], [0, 0, 1, 1], [], []>} : vector<16x4xf32>, vector<4x1xf32>, vector<16x1xf32> -> vector<16x1xf32>
    %c0_17 = arith.constant 0 : index
    %c0_18 = arith.constant 0 : index
    %18 = vector.load %arg6[%c0_17, %c0_18] : memref<16x1xf32, #tpu.memory_space<vmem>>, vector<16x1xf32>
    %19 = arith.addf %17, %18 : vector<16x1xf32>
    %cst_19 = arith.constant 0.000000e+00 : f32
    %20 = vector.broadcast %cst_19 : f32 to vector<16x1xf32>
    %21 = arith.cmpf ogt, %19, %20 : vector<16x1xf32>
    %22 = math.exp %19 : vector<16x1xf32>
    %cst_20 = arith.constant 1.000000e+00 : f32
    %23 = vector.broadcast %cst_20 : f32 to vector<16x1xf32>
    %24 = arith.subf %22, %23 : vector<16x1xf32>
    %cst_21 = arith.constant 1.67326319 : f32
    %25 = vector.broadcast %cst_21 : f32 to vector<16x1xf32>
    %26 = arith.mulf %25, %24 : vector<16x1xf32>
    %27 = arith.select %21, %19, %26 : vector<16x1xi1>, vector<16x1xf32>
    %cst_22 = arith.constant 1.05070102 : f32
    %28 = vector.broadcast %cst_22 : f32 to vector<16x1xf32>
    %29 = arith.mulf %28, %27 : vector<16x1xf32>
    %c0_23 = arith.constant 0 : index
    %c0_24 = arith.constant 0 : index
    %c0_25 = arith.constant 0 : index
    %30 = vector.load %arg8[%c0_23, %c0_24, %c0_25] : memref<1x16x1xf32, #tpu.memory_space<vmem>>, vector<1x16x1xf32>
    %31 = vector.shape_cast %30 : vector<1x16x1xf32> to vector<16x1xf32>
    %32 = vector.shape_cast %29 : vector<16x1xf32> to vector<1x16x1xf32>
    tpu.vector_store %arg8[%c0_23, %c0_24, %c0_25], %32 {strides = array<i32>} : memref<1x16x1xf32, #tpu.memory_space<vmem>>, vector<1x16x1xf32>,
    return
  }
  func.func @transform_0(%arg0: i32) -> (i32, i32, i32) {
    %c0_i32 = arith.constant 0 : i32
    %c0_i32_0 = arith.constant 0 : i32
    %c0_i32_1 = arith.constant 0 : i32
    return %arg0, %c0_i32, %c0_i32_0 : i32, i32, i32
  }
  func.func @transform_1(%arg0: i32) -> (i32, i32) {
    %c0_i32 = arith.constant 0 : i32
    %c0_i32_0 = arith.constant 0 : i32
    %c0_i32_1 = arith.constant 0 : i32
    return %c0_i32, %c0_i32_0 : i32, i32
  }
  func.func @transform_2(%arg0: i32) -> (i32, i32) {
    %c0_i32 = arith.constant 0 : i32
    %c0_i32_0 = arith.constant 0 : i32
    %c0_i32_1 = arith.constant 0 : i32
    return %c0_i32, %c0_i32_0 : i32, i32
  }
  func.func @transform_3(%arg0: i32) -> (i32, i32, i32) {
    %c0_i32 = arith.constant 0 : i32
    %c0_i32_0 = arith.constant 0 : i32
    %c0_i32_1 = arith.constant 0 : i32
    return %arg0, %c0_i32, %c0_i32_0 : i32, i32, i32
  }
  func.func @transform_4(%arg0: i32) -> (i32, i32) {
    %c0_i32 = arith.constant 0 : i32
    %c0_i32_0 = arith.constant 0 : i32
    %c0_i32_1 = arith.constant 0 : i32
    return %c0_i32, %c0_i32_0 : i32, i32
  }
  func.func @transform_5(%arg0: i32) -> (i32, i32) {
    %c0_i32 = arith.constant 0 : i32
    %c0_i32_0 = arith.constant 0 : i32
    %c0_i32_1 = arith.constant 0 : i32
    return %c0_i32, %c0_i32_0 : i32, i32
  }
  func.func @transform_6(%arg0: i32) -> (i32, i32, i32) {
    %c0_i32 = arith.constant 0 : i32
    %c0_i32_0 = arith.constant 0 : i32
    %c0_i32_1 = arith.constant 0 : i32
    return %arg0, %c0_i32, %c0_i32_0 : i32, i32, i32
  }
  func.func @transform_7(%arg0: i32) -> (i32, i32, i32) {
    %c0_i32 = arith.constant 0 : i32
    %c0_i32_0 = arith.constant 0 : i32
    %c0_i32_1 = arith.constant 0 : i32
    return %arg0, %c0_i32, %c0_i32_0 : i32, i32, i32
  }
}

module attributes {stable_mosaic.version = 11 : i64} {
  func.func @kernel(%arg0: i32, %arg1: memref<1x128x16xbf16, #tpu.memory_space<vmem>>, %arg2: memref<16x128xbf16, #tpu.memory_space<vmem>>, %arg3: memref<16x1xf32, #tpu.memory_space<vmem>>, %arg4: memref<1x16x1xf32, #tpu.memory_space<vmem>>, %arg5: memref<16x1xf32, #tpu.memory_space<vmem>>, %arg6: memref<16x1xf32, #tpu.memory_space<vmem>>, %arg7: memref<32x16xf32, #tpu.memory_space<vmem>>, %arg8: memref<1x32x1xf32, #tpu.memory_space<vmem>>, %arg9: memref<32x1xf32, #tpu.memory_space<vmem>>, %arg10: memref<1x16x16xf32, #tpu.memory_space<vmem>>, %arg11: memref<1x32x1xf32, #tpu.memory_space<vmem>>) attributes {dimension_semantics = [#tpu.dimension_semantics<parallel>], iteration_bounds = array<i64: 2>, scalar_prefetch = 0 : i64, scratch_operands = 0 : i64, tpu.core_type = #tpu.core_type<tc>, window_params = [{transform_indices = @transform_0, window_bounds = array<i64: 1, 128, 16>}, {pipeline_mode = #tpu.pipeline_mode<synchronous>, transform_indices = @transform_1, window_bounds = array<i64: 16, 128>}, {pipeline_mode = #tpu.pipeline_mode<synchronous>, transform_indices = @transform_2, window_bounds = array<i64: 16, 1>}, {transform_indices = @transform_3, window_bounds = array<i64: 1, 16, 1>}, {pipeline_mode = #tpu.pipeline_mode<synchronous>, transform_indices = @transform_4, window_bounds = array<i64: 16, 1>}, {pipeline_mode = #tpu.pipeline_mode<synchronous>, transform_indices = @transform_5, window_bounds = array<i64: 16, 1>}, {pipeline_mode = #tpu.pipeline_mode<synchronous>, transform_indices = @transform_6, window_bounds = array<i64: 32, 16>}, {transform_indices = @transform_7, window_bounds = array<i64: 1, 32, 1>}, {pipeline_mode = #tpu.pipeline_mode<synchronous>, transform_indices = @transform_8, window_bounds = array<i64: 32, 1>}, {transform_indices = @transform_9, window_bounds = array<i64: 1, 16, 16>}, {transform_indices = @transform_10, window_bounds = array<i64: 1, 32, 1>}]} {
    %c0 = arith.constant 0 : index
    %c0_0 = arith.constant 0 : index
    %c0_1 = arith.constant 0 : index
    %0 = vector.load %arg1[%c0, %c0_0, %c0_1] : memref<1x128x16xbf16, #tpu.memory_space<vmem>>, vector<1x128x16xbf16>
    %1 = vector.shape_cast %0 : vector<1x128x16xbf16> to vector<128x16xbf16>
    %cst = arith.constant 0.000000e+00 : bf16
    %2 = vector.broadcast %cst : bf16 to vector<128x16xbf16>
    %3 = arith.cmpf oge, %1, %2 : vector<128x16xbf16>
    %cst_2 = arith.constant 2.001950e-01 : bf16
    %4 = vector.broadcast %cst_2 : bf16 to vector<128x16xbf16>
    %5 = arith.mulf %4, %1 : vector<128x16xbf16>
    %6 = arith.select %3, %1, %5 : vector<128x16xi1>, vector<128x16xbf16>
    %c0_3 = arith.constant 0 : index
    %c0_4 = arith.constant 0 : index
    %7 = vector.load %arg2[%c0_3, %c0_4] : memref<16x128xbf16, #tpu.memory_space<vmem>>, vector<16x128xbf16>
    %cst_5 = arith.constant dense<0.000000e+00> : vector<16x16xf32>
    %8 = tpu.matmul %7, %6, %cst_5 {dimension_numbers = #tpu.dot_dimension_numbers<[1], [0], [0], [1], [0, 0, 1, 1], [], []>} : vector<16x128xbf16>, vector<128x16xbf16>, vector<16x16xf32> -> vector<16x16xf32>
    %c0_6 = arith.constant 0 : index
    %c0_7 = arith.constant 0 : index
    %9 = vector.load %arg3[%c0_6, %c0_7] : memref<16x1xf32, #tpu.memory_space<vmem>>, vector<16x1xf32>
    %10 = vector.broadcast %9 : vector<16x1xf32> to vector<16x16xf32>
    %11 = arith.addf %8, %10 : vector<16x16xf32>
    %cst_8 = arith.constant dense<0.000000e+00> : vector<16xf32>
    %12 = vector.multi_reduction <add>, %11, %cst_8 [1] : vector<16x16xf32> to vector<16xf32>
    %13 = vector.shape_cast %12 : vector<16xf32> to vector<16x1xf32>
    %cst_9 = arith.constant 1.600000e+01 : f32
    %14 = vector.broadcast %cst_9 : f32 to vector<16x1xf32>
    %15 = arith.divf %13, %14 : vector<16x1xf32>
    %16 = arith.mulf %11, %11 : vector<16x16xf32>
    %cst_10 = arith.constant dense<0.000000e+00> : vector<16xf32>
    %17 = vector.multi_reduction <add>, %16, %cst_10 [1] : vector<16x16xf32> to vector<16xf32>
    %18 = vector.shape_cast %17 : vector<16xf32> to vector<16x1xf32>
    %cst_11 = arith.constant 1.600000e+01 : f32
    %19 = vector.broadcast %cst_11 : f32 to vector<16x1xf32>
    %20 = arith.divf %18, %19 : vector<16x1xf32>
    %21 = arith.mulf %15, %15 : vector<16x1xf32>
    %22 = arith.subf %20, %21 : vector<16x1xf32>
    %cst_12 = arith.constant 0.000000e+00 : f32
    %23 = vector.broadcast %cst_12 : f32 to vector<16x1xf32>
    %24 = arith.maximumf %22, %23 : vector<16x1xf32>
    %25 = vector.broadcast %15 : vector<16x1xf32> to vector<16x16xf32>
    %26 = arith.subf %11, %25 : vector<16x16xf32>
    %cst_13 = arith.constant 9.99999974E-6 : f32
    %27 = vector.broadcast %cst_13 : f32 to vector<16x1xf32>
    %28 = arith.addf %24, %27 : vector<16x1xf32>
    %29 = math.rsqrt %28 : vector<16x1xf32>
    %30 = vector.broadcast %29 : vector<16x1xf32> to vector<16x16xf32>
    %31 = arith.mulf %26, %30 : vector<16x16xf32>
    %c0_14 = arith.constant 0 : index
    %c0_15 = arith.constant 0 : index
    %32 = vector.load %arg5[%c0_14, %c0_15] : memref<16x1xf32, #tpu.memory_space<vmem>>, vector<16x1xf32>
    %33 = vector.broadcast %32 : vector<16x1xf32> to vector<16x16xf32>
    %34 = arith.mulf %31, %33 : vector<16x16xf32>
    %c0_16 = arith.constant 0 : index
    %c0_17 = arith.constant 0 : index
    %35 = vector.load %arg6[%c0_16, %c0_17] : memref<16x1xf32, #tpu.memory_space<vmem>>, vector<16x1xf32>
    %36 = vector.broadcast %35 : vector<16x1xf32> to vector<16x16xf32>
    %37 = arith.addf %34, %36 : vector<16x16xf32>
    %c0_18 = arith.constant 0 : index
    %c0_19 = arith.constant 0 : index
    %c0_20 = arith.constant 0 : index
    %38 = vector.load %arg4[%c0_18, %c0_19, %c0_20] : memref<1x16x1xf32, #tpu.memory_space<vmem>>, vector<1x16x1xf32>
    %39 = vector.shape_cast %38 : vector<1x16x1xf32> to vector<16x1xf32>
    %40 = vector.broadcast %39 : vector<16x1xf32> to vector<16x16xf32>
    %41 = arith.addf %37, %40 : vector<16x16xf32>
    %c0_21 = arith.constant 0 : index
    %c0_22 = arith.constant 0 : index
    %c0_23 = arith.constant 0 : index
    %42 = vector.load %arg10[%c0_21, %c0_22, %c0_23] : memref<1x16x16xf32, #tpu.memory_space<vmem>>, vector<1x16x16xf32>
    %43 = vector.shape_cast %42 : vector<1x16x16xf32> to vector<16x16xf32>
    %44 = vector.shape_cast %41 : vector<16x16xf32> to vector<1x16x16xf32>
    tpu.vector_store %arg10[%c0_21, %c0_22, %c0_23], %44 {strides = array<i32>} : memref<1x16x16xf32, #tpu.memory_space<vmem>>, vector<1x16x16xf32>,
    %c0_24 = arith.constant 0 : index
    %c0_25 = arith.constant 0 : index
    %45 = vector.load %arg7[%c0_24, %c0_25] : memref<32x16xf32, #tpu.memory_space<vmem>>, vector<32x16xf32>
    %cst_26 = arith.constant dense<0.000000e+00> : vector<32x1xf32>
    %46 = tpu.matmul %45, %15, %cst_26 {dimension_numbers = #tpu.dot_dimension_numbers<[1], [0], [0], [1], [0, 0, 1, 1], [], []>} : vector<32x16xf32>, vector<16x1xf32>, vector<32x1xf32> -> vector<32x1xf32>
    %c0_27 = arith.constant 0 : index
    %c0_28 = arith.constant 0 : index
    %c0_29 = arith.constant 0 : index
    %47 = vector.load %arg8[%c0_27, %c0_28, %c0_29] : memref<1x32x1xf32, #tpu.memory_space<vmem>>, vector<1x32x1xf32>
    %48 = vector.shape_cast %47 : vector<1x32x1xf32> to vector<32x1xf32>
    %49 = arith.addf %46, %48 : vector<32x1xf32>
    %c0_30 = arith.constant 0 : index
    %c0_31 = arith.constant 0 : index
    %50 = vector.load %arg9[%c0_30, %c0_31] : memref<32x1xf32, #tpu.memory_space<vmem>>, vector<32x1xf32>
    %51 = arith.addf %49, %50 : vector<32x1xf32>
    %cst_32 = arith.constant 0.000000e+00 : f32
    %52 = vector.broadcast %cst_32 : f32 to vector<32x1xf32>
    %53 = arith.cmpf ogt, %51, %52 : vector<32x1xf32>
    %54 = math.exp %51 : vector<32x1xf32>
    %cst_33 = arith.constant 1.000000e+00 : f32
    %55 = vector.broadcast %cst_33 : f32 to vector<32x1xf32>
    %56 = arith.subf %54, %55 : vector<32x1xf32>
    %cst_34 = arith.constant 1.67326319 : f32
    %57 = vector.broadcast %cst_34 : f32 to vector<32x1xf32>
    %58 = arith.mulf %57, %56 : vector<32x1xf32>
    %59 = arith.select %53, %51, %58 : vector<32x1xi1>, vector<32x1xf32>
    %cst_35 = arith.constant 1.05070102 : f32
    %60 = vector.broadcast %cst_35 : f32 to vector<32x1xf32>
    %61 = arith.mulf %60, %59 : vector<32x1xf32>
    %c0_36 = arith.constant 0 : index
    %c0_37 = arith.constant 0 : index
    %c0_38 = arith.constant 0 : index
    %62 = vector.load %arg11[%c0_36, %c0_37, %c0_38] : memref<1x32x1xf32, #tpu.memory_space<vmem>>, vector<1x32x1xf32>
    %63 = vector.shape_cast %62 : vector<1x32x1xf32> to vector<32x1xf32>
    %64 = vector.shape_cast %61 : vector<32x1xf32> to vector<1x32x1xf32>
    tpu.vector_store %arg11[%c0_36, %c0_37, %c0_38], %64 {strides = array<i32>} : memref<1x32x1xf32, #tpu.memory_space<vmem>>, vector<1x32x1xf32>,
    return
  }
  func.func @transform_0(%arg0: i32) -> (i32, i32, i32) {
    %c0_i32 = arith.constant 0 : i32
    %c0_i32_0 = arith.constant 0 : i32
    %c0_i32_1 = arith.constant 0 : i32
    return %arg0, %c0_i32, %c0_i32_0 : i32, i32, i32
  }
  func.func @transform_1(%arg0: i32) -> (i32, i32) {
    %c0_i32 = arith.constant 0 : i32
    %c0_i32_0 = arith.constant 0 : i32
    %c0_i32_1 = arith.constant 0 : i32
    return %c0_i32, %c0_i32_0 : i32, i32
  }
  func.func @transform_2(%arg0: i32) -> (i32, i32) {
    %c0_i32 = arith.constant 0 : i32
    %c0_i32_0 = arith.constant 0 : i32
    %c0_i32_1 = arith.constant 0 : i32
    return %c0_i32, %c0_i32_0 : i32, i32
  }
  func.func @transform_3(%arg0: i32) -> (i32, i32, i32) {
    %c0_i32 = arith.constant 0 : i32
    %c0_i32_0 = arith.constant 0 : i32
    %c0_i32_1 = arith.constant 0 : i32
    return %arg0, %c0_i32, %c0_i32_0 : i32, i32, i32
  }
  func.func @transform_4(%arg0: i32) -> (i32, i32) {
    %c0_i32 = arith.constant 0 : i32
    %c0_i32_0 = arith.constant 0 : i32
    %c0_i32_1 = arith.constant 0 : i32
    return %c0_i32, %c0_i32_0 : i32, i32
  }
  func.func @transform_5(%arg0: i32) -> (i32, i32) {
    %c0_i32 = arith.constant 0 : i32
    %c0_i32_0 = arith.constant 0 : i32
    %c0_i32_1 = arith.constant 0 : i32
    return %c0_i32, %c0_i32_0 : i32, i32
  }
  func.func @transform_6(%arg0: i32) -> (i32, i32) {
    %c0_i32 = arith.constant 0 : i32
    %c0_i32_0 = arith.constant 0 : i32
    %c0_i32_1 = arith.constant 0 : i32
    return %c0_i32, %c0_i32_0 : i32, i32
  }
  func.func @transform_7(%arg0: i32) -> (i32, i32, i32) {
    %c0_i32 = arith.constant 0 : i32
    %c0_i32_0 = arith.constant 0 : i32
    %c0_i32_1 = arith.constant 0 : i32
    return %arg0, %c0_i32, %c0_i32_0 : i32, i32, i32
  }
  func.func @transform_8(%arg0: i32) -> (i32, i32) {
    %c0_i32 = arith.constant 0 : i32
    %c0_i32_0 = arith.constant 0 : i32
    %c0_i32_1 = arith.constant 0 : i32
    return %c0_i32, %c0_i32_0 : i32, i32
  }
  func.func @transform_9(%arg0: i32) -> (i32, i32, i32) {
    %c0_i32 = arith.constant 0 : i32
    %c0_i32_0 = arith.constant 0 : i32
    %c0_i32_1 = arith.constant 0 : i32
    return %arg0, %c0_i32, %c0_i32_0 : i32, i32, i32
  }
  func.func @transform_10(%arg0: i32) -> (i32, i32, i32) {
    %c0_i32 = arith.constant 0 : i32
    %c0_i32_0 = arith.constant 0 : i32
    %c0_i32_1 = arith.constant 0 : i32
    return %arg0, %c0_i32, %c0_i32_0 : i32, i32, i32
  }
}

module attributes {stable_mosaic.version = 11 : i64} {
  func.func @kernel(%arg0: i32, %arg1: memref<1x256x4xbf16, #tpu.memory_space<vmem>>, %arg2: memref<32x256xbf16, #tpu.memory_space<vmem>>, %arg3: memref<32x1xf32, #tpu.memory_space<vmem>>, %arg4: memref<1x32x1xf32, #tpu.memory_space<vmem>>, %arg5: memref<32x32xf32, #tpu.memory_space<vmem>>, %arg6: memref<1x32x1xf32, #tpu.memory_space<vmem>>, %arg7: memref<32x1xf32, #tpu.memory_space<vmem>>, %arg8: memref<1x32x4xf32, #tpu.memory_space<vmem>>, %arg9: memref<1x32x1xf32, #tpu.memory_space<vmem>>) attributes {dimension_semantics = [#tpu.dimension_semantics<parallel>], iteration_bounds = array<i64: 2>, scalar_prefetch = 0 : i64, scratch_operands = 0 : i64, tpu.core_type = #tpu.core_type<tc>, window_params = [{transform_indices = @transform_0, window_bounds = array<i64: 1, 256, 4>}, {pipeline_mode = #tpu.pipeline_mode<synchronous>, transform_indices = @transform_1, window_bounds = array<i64: 32, 256>}, {pipeline_mode = #tpu.pipeline_mode<synchronous>, transform_indices = @transform_2, window_bounds = array<i64: 32, 1>}, {transform_indices = @transform_3, window_bounds = array<i64: 1, 32, 1>}, {pipeline_mode = #tpu.pipeline_mode<synchronous>, transform_indices = @transform_4, window_bounds = array<i64: 32, 32>}, {transform_indices = @transform_5, window_bounds = array<i64: 1, 32, 1>}, {pipeline_mode = #tpu.pipeline_mode<synchronous>, transform_indices = @transform_6, window_bounds = array<i64: 32, 1>}, {transform_indices = @transform_7, window_bounds = array<i64: 1, 32, 4>}, {transform_indices = @transform_8, window_bounds = array<i64: 1, 32, 1>}]} {
    %c0 = arith.constant 0 : index
    %c0_0 = arith.constant 0 : index
    %c0_1 = arith.constant 0 : index
    %0 = vector.load %arg1[%c0, %c0_0, %c0_1] : memref<1x256x4xbf16, #tpu.memory_space<vmem>>, vector<1x256x4xbf16>
    %1 = vector.shape_cast %0 : vector<1x256x4xbf16> to vector<256x4xbf16>
    %cst = arith.constant 0.000000e+00 : bf16
    %2 = vector.broadcast %cst : bf16 to vector<256x4xbf16>
    %3 = arith.cmpf oge, %1, %2 : vector<256x4xbf16>
    %cst_2 = arith.constant 2.001950e-01 : bf16
    %4 = vector.broadcast %cst_2 : bf16 to vector<256x4xbf16>
    %5 = arith.mulf %4, %1 : vector<256x4xbf16>
    %6 = arith.select %3, %1, %5 : vector<256x4xi1>, vector<256x4xbf16>
    %c0_3 = arith.constant 0 : index
    %c0_4 = arith.constant 0 : index
    %7 = vector.load %arg2[%c0_3, %c0_4] : memref<32x256xbf16, #tpu.memory_space<vmem>>, vector<32x256xbf16>
    %cst_5 = arith.constant dense<0.000000e+00> : vector<32x4xf32>
    %8 = tpu.matmul %7, %6, %cst_5 {dimension_numbers = #tpu.dot_dimension_numbers<[1], [0], [0], [1], [0, 0, 1, 1], [], []>} : vector<32x256xbf16>, vector<256x4xbf16>, vector<32x4xf32> -> vector<32x4xf32>
    %c0_6 = arith.constant 0 : index
    %c0_7 = arith.constant 0 : index
    %9 = vector.load %arg3[%c0_6, %c0_7] : memref<32x1xf32, #tpu.memory_space<vmem>>, vector<32x1xf32>
    %10 = vector.broadcast %9 : vector<32x1xf32> to vector<32x4xf32>
    %11 = arith.addf %8, %10 : vector<32x4xf32>
    %cst_8 = arith.constant dense<0.000000e+00> : vector<32xf32>
    %12 = vector.multi_reduction <add>, %11, %cst_8 [1] : vector<32x4xf32> to vector<32xf32>
    %13 = vector.shape_cast %12 : vector<32xf32> to vector<32x1xf32>
    %cst_9 = arith.constant 4.000000e+00 : f32
    %14 = vector.broadcast %cst_9 : f32 to vector<32x1xf32>
    %15 = arith.divf %13, %14 : vector<32x1xf32>
    %c0_10 = arith.constant 0 : index
    %c0_11 = arith.constant 0 : index
    %c0_12 = arith.constant 0 : index
    %16 = vector.load %arg4[%c0_10, %c0_11, %c0_12] : memref<1x32x1xf32, #tpu.memory_space<vmem>>, vector<1x32x1xf32>
    %17 = vector.shape_cast %16 : vector<1x32x1xf32> to vector<32x1xf32>
    %18 = vector.broadcast %17 : vector<32x1xf32> to vector<32x4xf32>
    %19 = arith.addf %11, %18 : vector<32x4xf32>
    %c0_13 = arith.constant 0 : index
    %c0_14 = arith.constant 0 : index
    %c0_15 = arith.constant 0 : index
    %20 = vector.load %arg8[%c0_13, %c0_14, %c0_15] : memref<1x32x4xf32, #tpu.memory_space<vmem>>, vector<1x32x4xf32>
    %21 = vector.shape_cast %20 : vector<1x32x4xf32> to vector<32x4xf32>
    %22 = vector.shape_cast %19 : vector<32x4xf32> to vector<1x32x4xf32>
    tpu.vector_store %arg8[%c0_13, %c0_14, %c0_15], %22 {strides = array<i32>} : memref<1x32x4xf32, #tpu.memory_space<vmem>>, vector<1x32x4xf32>,
    %c0_16 = arith.constant 0 : index
    %c0_17 = arith.constant 0 : index
    %23 = vector.load %arg5[%c0_16, %c0_17] : memref<32x32xf32, #tpu.memory_space<vmem>>, vector<32x32xf32>
    %cst_18 = arith.constant dense<0.000000e+00> : vector<32x1xf32>
    %24 = tpu.matmul %23, %15, %cst_18 {dimension_numbers = #tpu.dot_dimension_numbers<[1], [0], [0], [1], [0, 0, 1, 1], [], []>} : vector<32x32xf32>, vector<32x1xf32>, vector<32x1xf32> -> vector<32x1xf32>
    %c0_19 = arith.constant 0 : index
    %c0_20 = arith.constant 0 : index
    %c0_21 = arith.constant 0 : index
    %25 = vector.load %arg6[%c0_19, %c0_20, %c0_21] : memref<1x32x1xf32, #tpu.memory_space<vmem>>, vector<1x32x1xf32>
    %26 = vector.shape_cast %25 : vector<1x32x1xf32> to vector<32x1xf32>
    %27 = arith.addf %24, %26 : vector<32x1xf32>
    %c0_22 = arith.constant 0 : index
    %c0_23 = arith.constant 0 : index
    %28 = vector.load %arg7[%c0_22, %c0_23] : memref<32x1xf32, #tpu.memory_space<vmem>>, vector<32x1xf32>
    %29 = arith.addf %27, %28 : vector<32x1xf32>
    %cst_24 = arith.constant 0.000000e+00 : f32
    %30 = vector.broadcast %cst_24 : f32 to vector<32x1xf32>
    %31 = arith.cmpf ogt, %29, %30 : vector<32x1xf32>
    %32 = math.exp %29 : vector<32x1xf32>
    %cst_25 = arith.constant 1.000000e+00 : f32
    %33 = vector.broadcast %cst_25 : f32 to vector<32x1xf32>
    %34 = arith.subf %32, %33 : vector<32x1xf32>
    %cst_26 = arith.constant 1.67326319 : f32
    %35 = vector.broadcast %cst_26 : f32 to vector<32x1xf32>
    %36 = arith.mulf %35, %34 : vector<32x1xf32>
    %37 = arith.select %31, %29, %36 : vector<32x1xi1>, vector<32x1xf32>
    %cst_27 = arith.constant 1.05070102 : f32
    %38 = vector.broadcast %cst_27 : f32 to vector<32x1xf32>
    %39 = arith.mulf %38, %37 : vector<32x1xf32>
    %c0_28 = arith.constant 0 : index
    %c0_29 = arith.constant 0 : index
    %c0_30 = arith.constant 0 : index
    %40 = vector.load %arg9[%c0_28, %c0_29, %c0_30] : memref<1x32x1xf32, #tpu.memory_space<vmem>>, vector<1x32x1xf32>
    %41 = vector.shape_cast %40 : vector<1x32x1xf32> to vector<32x1xf32>
    %42 = vector.shape_cast %39 : vector<32x1xf32> to vector<1x32x1xf32>
    tpu.vector_store %arg9[%c0_28, %c0_29, %c0_30], %42 {strides = array<i32>} : memref<1x32x1xf32, #tpu.memory_space<vmem>>, vector<1x32x1xf32>,
    return
  }
  func.func @transform_0(%arg0: i32) -> (i32, i32, i32) {
    %c0_i32 = arith.constant 0 : i32
    %c0_i32_0 = arith.constant 0 : i32
    %c0_i32_1 = arith.constant 0 : i32
    return %arg0, %c0_i32, %c0_i32_0 : i32, i32, i32
  }
  func.func @transform_1(%arg0: i32) -> (i32, i32) {
    %c0_i32 = arith.constant 0 : i32
    %c0_i32_0 = arith.constant 0 : i32
    %c0_i32_1 = arith.constant 0 : i32
    return %c0_i32, %c0_i32_0 : i32, i32
  }
  func.func @transform_2(%arg0: i32) -> (i32, i32) {
    %c0_i32 = arith.constant 0 : i32
    %c0_i32_0 = arith.constant 0 : i32
    %c0_i32_1 = arith.constant 0 : i32
    return %c0_i32, %c0_i32_0 : i32, i32
  }
  func.func @transform_3(%arg0: i32) -> (i32, i32, i32) {
    %c0_i32 = arith.constant 0 : i32
    %c0_i32_0 = arith.constant 0 : i32
    %c0_i32_1 = arith.constant 0 : i32
    return %arg0, %c0_i32, %c0_i32_0 : i32, i32, i32
  }
  func.func @transform_4(%arg0: i32) -> (i32, i32) {
    %c0_i32 = arith.constant 0 : i32
    %c0_i32_0 = arith.constant 0 : i32
    %c0_i32_1 = arith.constant 0 : i32
    return %c0_i32, %c0_i32_0 : i32, i32
  }
  func.func @transform_5(%arg0: i32) -> (i32, i32, i32) {
    %c0_i32 = arith.constant 0 : i32
    %c0_i32_0 = arith.constant 0 : i32
    %c0_i32_1 = arith.constant 0 : i32
    return %arg0, %c0_i32, %c0_i32_0 : i32, i32, i32
  }
  func.func @transform_6(%arg0: i32) -> (i32, i32) {
    %c0_i32 = arith.constant 0 : i32
    %c0_i32_0 = arith.constant 0 : i32
    %c0_i32_1 = arith.constant 0 : i32
    return %c0_i32, %c0_i32_0 : i32, i32
  }
  func.func @transform_7(%arg0: i32) -> (i32, i32, i32) {
    %c0_i32 = arith.constant 0 : i32
    %c0_i32_0 = arith.constant 0 : i32
    %c0_i32_1 = arith.constant 0 : i32
    return %arg0, %c0_i32, %c0_i32_0 : i32, i32, i32
  }
  func.func @transform_8(%arg0: i32) -> (i32, i32, i32) {
    %c0_i32 = arith.constant 0 : i32
    %c0_i32_0 = arith.constant 0 : i32
    %c0_i32_1 = arith.constant 0 : i32
    return %arg0, %c0_i32, %c0_i32_0 : i32, i32, i32
  }
}

module attributes {stable_mosaic.version = 11 : i64} {
  func.func @kernel(%arg0: i32, %arg1: memref<1x32x16xbf16, #tpu.memory_space<vmem>>, %arg2: memref<16x288xbf16, #tpu.memory_space<vmem>>, %arg3: memref<16x1xf32, #tpu.memory_space<vmem>>, %arg4: memref<16x144xbf16, #tpu.memory_space<vmem>>, %arg5: memref<16x1xf32, #tpu.memory_space<vmem>>, %arg6: memref<1x16x1xf32, #tpu.memory_space<vmem>>, %arg7: memref<16x1xf32, #tpu.memory_space<vmem>>, %arg8: memref<16x1xf32, #tpu.memory_space<vmem>>, %arg9: memref<16x16xf32, #tpu.memory_space<vmem>>, %arg10: memref<1x16x1xf32, #tpu.memory_space<vmem>>, %arg11: memref<16x1xf32, #tpu.memory_space<vmem>>, %arg12: memref<1x16x16xf32, #tpu.memory_space<vmem>>, %arg13: memref<1x16x1xf32, #tpu.memory_space<vmem>>) attributes {dimension_semantics = [#tpu.dimension_semantics<parallel>], iteration_bounds = array<i64: 2>, scalar_prefetch = 0 : i64, scratch_operands = 0 : i64, tpu.core_type = #tpu.core_type<tc>, window_params = [{transform_indices = @transform_0, window_bounds = array<i64: 1, 32, 16>}, {pipeline_mode = #tpu.pipeline_mode<synchronous>, transform_indices = @transform_1, window_bounds = array<i64: 16, 288>}, {pipeline_mode = #tpu.pipeline_mode<synchronous>, transform_indices = @transform_2, window_bounds = array<i64: 16, 1>}, {pipeline_mode = #tpu.pipeline_mode<synchronous>, transform_indices = @transform_3, window_bounds = array<i64: 16, 144>}, {pipeline_mode = #tpu.pipeline_mode<synchronous>, transform_indices = @transform_4, window_bounds = array<i64: 16, 1>}, {transform_indices = @transform_5, window_bounds = array<i64: 1, 16, 1>}, {pipeline_mode = #tpu.pipeline_mode<synchronous>, transform_indices = @transform_6, window_bounds = array<i64: 16, 1>}, {pipeline_mode = #tpu.pipeline_mode<synchronous>, transform_indices = @transform_7, window_bounds = array<i64: 16, 1>}, {pipeline_mode = #tpu.pipeline_mode<synchronous>, transform_indices = @transform_8, window_bounds = array<i64: 16, 16>}, {transform_indices = @transform_9, window_bounds = array<i64: 1, 16, 1>}, {pipeline_mode = #tpu.pipeline_mode<synchronous>, transform_indices = @transform_10, window_bounds = array<i64: 16, 1>}, {transform_indices = @transform_11, window_bounds = array<i64: 1, 16, 16>}, {transform_indices = @transform_12, window_bounds = array<i64: 1, 16, 1>}]} {
    %c0 = arith.constant 0 : index
    %c0_0 = arith.constant 0 : index
    %c0_1 = arith.constant 0 : index
    %0 = vector.load %arg1[%c0, %c0_0, %c0_1] : memref<1x32x16xbf16, #tpu.memory_space<vmem>>, vector<1x32x16xbf16>
    %1 = vector.shape_cast %0 : vector<1x32x16xbf16> to vector<32x16xbf16>
    %cst = arith.constant 0.000000e+00 : bf16
    %2 = vector.broadcast %cst : bf16 to vector<32x16xbf16>
    %3 = arith.cmpf oge, %1, %2 : vector<32x16xbf16>
    %cst_2 = arith.constant 2.001950e-01 : bf16
    %4 = vector.broadcast %cst_2 : bf16 to vector<32x16xbf16>
    %5 = arith.mulf %4, %1 : vector<32x16xbf16>
    %6 = arith.select %3, %1, %5 : vector<32x16xi1>, vector<32x16xbf16>
    %cst_3 = arith.constant 0.000000e+00 : bf16
    %7 = vector.broadcast %cst_3 : bf16 to vector<32x5xbf16>
    %8 = tpu.concatenate %7, %6, %7 in 1 : vector<32x5xbf16>, vector<32x16xbf16>, vector<32x5xbf16> -> vector<32x26xbf16>
    %9 = tpu.iota {dimensions = array<i32: 1>} : vector<1x16xi32>
    %c4_i32 = arith.constant 4 : i32
    %c0_i32 = arith.constant 0 : i32
    %10 = arith.cmpi eq, %c4_i32, %c0_i32 : i32
    %c1_i32 = arith.constant 1 : i32
    %11 = arith.select %10, %c1_i32, %c4_i32 : i32
    %12 = vector.broadcast %11 : i32 to vector<1x16xi32>
    %13 = arith.remsi %9, %12 : vector<1x16xi32>
    %c0_i32_4 = arith.constant 0 : i32
    %14 = vector.broadcast %c0_i32_4 : i32 to vector<1x16xi32>
    %15 = arith.cmpi ne, %13, %14 : vector<1x16xi32>
    %c0_i32_5 = arith.constant 0 : i32
    %16 = vector.broadcast %c0_i32_5 : i32 to vector<1x16xi32>
    %17 = arith.cmpi slt, %13, %16 : vector<1x16xi32>
    %c0_i32_6 = arith.constant 0 : i32
    %18 = arith.cmpi slt, %11, %c0_i32_6 : i32
    %19 = vector.broadcast %18 : i1 to vector<1x16xi1>
    %20 = vector.broadcast %19 : vector<1x16xi1> to vector<1x16xi1>
    %21 = arith.xori %17, %20 : vector<1x16xi1>
    %22 = arith.andi %21, %15 : vector<1x16xi1>
    %23 = vector.broadcast %11 : i32 to vector<1x16xi32>
    %24 = arith.addi %13, %23 : vector<1x16xi32>
    %25 = arith.select %22, %24, %13 : vector<1x16xi1>, vector<1x16xi32>
    %c1_i32_7 = arith.constant 1 : i32
    %26 = vector.broadcast %c1_i32_7 : i32 to vector<1x16xi32>
    %27 = arith.cmpi sge, %25, %26 : vector<1x16xi32>
    %c2_i32 = arith.constant 2 : i32
    %28 = vector.broadcast %c2_i32 : i32 to vector<1x16xi32>
    %29 = arith.cmpi sle, %25, %28 : vector<1x16xi32>
    %30 = vector.extract_strided_slice %8 {offsets = [0, 0], sizes = [32, 16], strides = [1, 1]} : vector<32x26xbf16> to vector<32x16xbf16>
    %cst_8 = arith.constant 0.000000e+00 : bf16
    %31 = vector.broadcast %cst_8 : bf16 to vector<32x16xbf16>
    %32 = vector.shape_cast %27 : vector<1x16xi1> to vector<1x16xi1>
    %33 = vector.broadcast %32 : vector<1x16xi1> to vector<32x16xi1>
    %34 = arith.select %33, %30, %31 : vector<32x16xi1>, vector<32x16xbf16>
    %35 = vector.extract_strided_slice %8 {offsets = [0, 1], sizes = [32, 16], strides = [1, 1]} : vector<32x26xbf16> to vector<32x16xbf16>
    %36 = vector.extract_strided_slice %8 {offsets = [0, 2], sizes = [32, 16], strides = [1, 1]} : vector<32x26xbf16> to vector<32x16xbf16>
    %cst_9 = arith.constant 0.000000e+00 : bf16
    %37 = vector.broadcast %cst_9 : bf16 to vector<32x16xbf16>
    %38 = vector.shape_cast %29 : vector<1x16xi1> to vector<1x16xi1>
    %39 = vector.broadcast %38 : vector<1x16xi1> to vector<32x16xi1>
    %40 = arith.select %39, %36, %37 : vector<32x16xi1>, vector<32x16xbf16>
    %41 = vector.extract_strided_slice %8 {offsets = [0, 4], sizes = [32, 16], strides = [1, 1]} : vector<32x26xbf16> to vector<32x16xbf16>
    %cst_10 = arith.constant 0.000000e+00 : bf16
    %42 = vector.broadcast %cst_10 : bf16 to vector<32x16xbf16>
    %43 = vector.shape_cast %27 : vector<1x16xi1> to vector<1x16xi1>
    %44 = vector.broadcast %43 : vector<1x16xi1> to vector<32x16xi1>
    %45 = arith.select %44, %41, %42 : vector<32x16xi1>, vector<32x16xbf16>
    %46 = vector.extract_strided_slice %8 {offsets = [0, 5], sizes = [32, 16], strides = [1, 1]} : vector<32x26xbf16> to vector<32x16xbf16>
    %47 = vector.extract_strided_slice %8 {offsets = [0, 6], sizes = [32, 16], strides = [1, 1]} : vector<32x26xbf16> to vector<32x16xbf16>
    %cst_11 = arith.constant 0.000000e+00 : bf16
    %48 = vector.broadcast %cst_11 : bf16 to vector<32x16xbf16>
    %49 = vector.shape_cast %29 : vector<1x16xi1> to vector<1x16xi1>
    %50 = vector.broadcast %49 : vector<1x16xi1> to vector<32x16xi1>
    %51 = arith.select %50, %47, %48 : vector<32x16xi1>, vector<32x16xbf16>
    %52 = vector.extract_strided_slice %8 {offsets = [0, 8], sizes = [32, 16], strides = [1, 1]} : vector<32x26xbf16> to vector<32x16xbf16>
    %cst_12 = arith.constant 0.000000e+00 : bf16
    %53 = vector.broadcast %cst_12 : bf16 to vector<32x16xbf16>
    %54 = vector.shape_cast %27 : vector<1x16xi1> to vector<1x16xi1>
    %55 = vector.broadcast %54 : vector<1x16xi1> to vector<32x16xi1>
    %56 = arith.select %55, %52, %53 : vector<32x16xi1>, vector<32x16xbf16>
    %57 = vector.extract_strided_slice %8 {offsets = [0, 9], sizes = [32, 16], strides = [1, 1]} : vector<32x26xbf16> to vector<32x16xbf16>
    %58 = vector.extract_strided_slice %8 {offsets = [0, 10], sizes = [32, 16], strides = [1, 1]} : vector<32x26xbf16> to vector<32x16xbf16>
    %cst_13 = arith.constant 0.000000e+00 : bf16
    %59 = vector.broadcast %cst_13 : bf16 to vector<32x16xbf16>
    %60 = vector.shape_cast %29 : vector<1x16xi1> to vector<1x16xi1>
    %61 = vector.broadcast %60 : vector<1x16xi1> to vector<32x16xi1>
    %62 = arith.select %61, %58, %59 : vector<32x16xi1>, vector<32x16xbf16>
    %63 = tpu.concatenate %34, %35, %40, %45, %46, %51, %56, %57, %62 in 0 : vector<32x16xbf16>, vector<32x16xbf16>, vector<32x16xbf16>, vector<32x16xbf16>, vector<32x16xbf16>, vector<32x16xbf16>, vector<32x16xbf16>, vector<32x16xbf16>, vector<32x16xbf16> -> vector<288x16xbf16>
    %c0_14 = arith.constant 0 : index
    %c0_15 = arith.constant 0 : index
    %64 = vector.load %arg2[%c0_14, %c0_15] : memref<16x288xbf16, #tpu.memory_space<vmem>>, vector<16x288xbf16>
    %cst_16 = arith.constant dense<0.000000e+00> : vector<16x16xf32>
    %65 = tpu.matmul %64, %63, %cst_16 {dimension_numbers = #tpu.dot_dimension_numbers<[1], [0], [0], [1], [0, 0, 1, 1], [], []>} : vector<16x288xbf16>, vector<288x16xbf16>, vector<16x16xf32> -> vector<16x16xf32>
    %c0_17 = arith.constant 0 : index
    %c0_18 = arith.constant 0 : index
    %66 = vector.load %arg3[%c0_17, %c0_18] : memref<16x1xf32, #tpu.memory_space<vmem>>, vector<16x1xf32>
    %67 = vector.broadcast %66 : vector<16x1xf32> to vector<16x16xf32>
    %68 = arith.addf %65, %67 : vector<16x16xf32>
    %69 = arith.truncf %68 : vector<16x16xf32> to vector<16x16xbf16>
    %cst_19 = arith.constant 0.000000e+00 : bf16
    %70 = vector.broadcast %cst_19 : bf16 to vector<16x5xbf16>
    %71 = tpu.concatenate %70, %69, %70 in 1 : vector<16x5xbf16>, vector<16x16xbf16>, vector<16x5xbf16> -> vector<16x26xbf16>
    %72 = tpu.iota {dimensions = array<i32: 1>} : vector<1x16xi32>
    %c4_i32_20 = arith.constant 4 : i32
    %c0_i32_21 = arith.constant 0 : i32
    %73 = arith.cmpi eq, %c4_i32_20, %c0_i32_21 : i32
    %c1_i32_22 = arith.constant 1 : i32
    %74 = arith.select %73, %c1_i32_22, %c4_i32_20 : i32
    %75 = vector.broadcast %74 : i32 to vector<1x16xi32>
    %76 = arith.remsi %72, %75 : vector<1x16xi32>
    %c0_i32_23 = arith.constant 0 : i32
    %77 = vector.broadcast %c0_i32_23 : i32 to vector<1x16xi32>
    %78 = arith.cmpi ne, %76, %77 : vector<1x16xi32>
    %c0_i32_24 = arith.constant 0 : i32
    %79 = vector.broadcast %c0_i32_24 : i32 to vector<1x16xi32>
    %80 = arith.cmpi slt, %76, %79 : vector<1x16xi32>
    %c0_i32_25 = arith.constant 0 : i32
    %81 = arith.cmpi slt, %74, %c0_i32_25 : i32
    %82 = vector.broadcast %81 : i1 to vector<1x16xi1>
    %83 = vector.broadcast %82 : vector<1x16xi1> to vector<1x16xi1>
    %84 = arith.xori %80, %83 : vector<1x16xi1>
    %85 = arith.andi %84, %78 : vector<1x16xi1>
    %86 = vector.broadcast %74 : i32 to vector<1x16xi32>
    %87 = arith.addi %76, %86 : vector<1x16xi32>
    %88 = arith.select %85, %87, %76 : vector<1x16xi1>, vector<1x16xi32>
    %c1_i32_26 = arith.constant 1 : i32
    %89 = vector.broadcast %c1_i32_26 : i32 to vector<1x16xi32>
    %90 = arith.cmpi sge, %88, %89 : vector<1x16xi32>
    %c2_i32_27 = arith.constant 2 : i32
    %91 = vector.broadcast %c2_i32_27 : i32 to vector<1x16xi32>
    %92 = arith.cmpi sle, %88, %91 : vector<1x16xi32>
    %93 = vector.extract_strided_slice %71 {offsets = [0, 0], sizes = [16, 16], strides = [1, 1]} : vector<16x26xbf16> to vector<16x16xbf16>
    %cst_28 = arith.constant 0.000000e+00 : bf16
    %94 = vector.broadcast %cst_28 : bf16 to vector<16x16xbf16>
    %95 = vector.shape_cast %90 : vector<1x16xi1> to vector<1x16xi1>
    %96 = vector.broadcast %95 : vector<1x16xi1> to vector<16x16xi1>
    %97 = arith.select %96, %93, %94 : vector<16x16xi1>, vector<16x16xbf16>
    %98 = vector.extract_strided_slice %71 {offsets = [0, 1], sizes = [16, 16], strides = [1, 1]} : vector<16x26xbf16> to vector<16x16xbf16>
    %99 = vector.extract_strided_slice %71 {offsets = [0, 2], sizes = [16, 16], strides = [1, 1]} : vector<16x26xbf16> to vector<16x16xbf16>
    %cst_29 = arith.constant 0.000000e+00 : bf16
    %100 = vector.broadcast %cst_29 : bf16 to vector<16x16xbf16>
    %101 = vector.shape_cast %92 : vector<1x16xi1> to vector<1x16xi1>
    %102 = vector.broadcast %101 : vector<1x16xi1> to vector<16x16xi1>
    %103 = arith.select %102, %99, %100 : vector<16x16xi1>, vector<16x16xbf16>
    %104 = vector.extract_strided_slice %71 {offsets = [0, 4], sizes = [16, 16], strides = [1, 1]} : vector<16x26xbf16> to vector<16x16xbf16>
    %cst_30 = arith.constant 0.000000e+00 : bf16
    %105 = vector.broadcast %cst_30 : bf16 to vector<16x16xbf16>
    %106 = vector.shape_cast %90 : vector<1x16xi1> to vector<1x16xi1>
    %107 = vector.broadcast %106 : vector<1x16xi1> to vector<16x16xi1>
    %108 = arith.select %107, %104, %105 : vector<16x16xi1>, vector<16x16xbf16>
    %109 = vector.extract_strided_slice %71 {offsets = [0, 5], sizes = [16, 16], strides = [1, 1]} : vector<16x26xbf16> to vector<16x16xbf16>
    %110 = vector.extract_strided_slice %71 {offsets = [0, 6], sizes = [16, 16], strides = [1, 1]} : vector<16x26xbf16> to vector<16x16xbf16>
    %cst_31 = arith.constant 0.000000e+00 : bf16
    %111 = vector.broadcast %cst_31 : bf16 to vector<16x16xbf16>
    %112 = vector.shape_cast %92 : vector<1x16xi1> to vector<1x16xi1>
    %113 = vector.broadcast %112 : vector<1x16xi1> to vector<16x16xi1>
    %114 = arith.select %113, %110, %111 : vector<16x16xi1>, vector<16x16xbf16>
    %115 = vector.extract_strided_slice %71 {offsets = [0, 8], sizes = [16, 16], strides = [1, 1]} : vector<16x26xbf16> to vector<16x16xbf16>
    %cst_32 = arith.constant 0.000000e+00 : bf16
    %116 = vector.broadcast %cst_32 : bf16 to vector<16x16xbf16>
    %117 = vector.shape_cast %90 : vector<1x16xi1> to vector<1x16xi1>
    %118 = vector.broadcast %117 : vector<1x16xi1> to vector<16x16xi1>
    %119 = arith.select %118, %115, %116 : vector<16x16xi1>, vector<16x16xbf16>
    %120 = vector.extract_strided_slice %71 {offsets = [0, 9], sizes = [16, 16], strides = [1, 1]} : vector<16x26xbf16> to vector<16x16xbf16>
    %121 = vector.extract_strided_slice %71 {offsets = [0, 10], sizes = [16, 16], strides = [1, 1]} : vector<16x26xbf16> to vector<16x16xbf16>
    %cst_33 = arith.constant 0.000000e+00 : bf16
    %122 = vector.broadcast %cst_33 : bf16 to vector<16x16xbf16>
    %123 = vector.shape_cast %92 : vector<1x16xi1> to vector<1x16xi1>
    %124 = vector.broadcast %123 : vector<1x16xi1> to vector<16x16xi1>
    %125 = arith.select %124, %121, %122 : vector<16x16xi1>, vector<16x16xbf16>
    %126 = tpu.concatenate %97, %98, %103, %108, %109, %114, %119, %120, %125 in 0 : vector<16x16xbf16>, vector<16x16xbf16>, vector<16x16xbf16>, vector<16x16xbf16>, vector<16x16xbf16>, vector<16x16xbf16>, vector<16x16xbf16>, vector<16x16xbf16>, vector<16x16xbf16> -> vector<144x16xbf16>
    %c0_34 = arith.constant 0 : index
    %c0_35 = arith.constant 0 : index
    %127 = vector.load %arg4[%c0_34, %c0_35] : memref<16x144xbf16, #tpu.memory_space<vmem>>, vector<16x144xbf16>
    %cst_36 = arith.constant dense<0.000000e+00> : vector<16x16xf32>
    %128 = tpu.matmul %127, %126, %cst_36 {dimension_numbers = #tpu.dot_dimension_numbers<[1], [0], [0], [1], [0, 0, 1, 1], [], []>} : vector<16x144xbf16>, vector<144x16xbf16>, vector<16x16xf32> -> vector<16x16xf32>
    %c0_37 = arith.constant 0 : index
    %c0_38 = arith.constant 0 : index
    %129 = vector.load %arg5[%c0_37, %c0_38] : memref<16x1xf32, #tpu.memory_space<vmem>>, vector<16x1xf32>
    %130 = vector.broadcast %129 : vector<16x1xf32> to vector<16x16xf32>
    %131 = arith.addf %128, %130 : vector<16x16xf32>
    %cst_39 = arith.constant dense<0.000000e+00> : vector<16xf32>
    %132 = vector.multi_reduction <add>, %131, %cst_39 [1] : vector<16x16xf32> to vector<16xf32>
    %133 = vector.shape_cast %132 : vector<16xf32> to vector<16x1xf32>
    %cst_40 = arith.constant 1.600000e+01 : f32
    %134 = vector.broadcast %cst_40 : f32 to vector<16x1xf32>
    %135 = arith.divf %133, %134 : vector<16x1xf32>
    %136 = arith.mulf %131, %131 : vector<16x16xf32>
    %cst_41 = arith.constant dense<0.000000e+00> : vector<16xf32>
    %137 = vector.multi_reduction <add>, %136, %cst_41 [1] : vector<16x16xf32> to vector<16xf32>
    %138 = vector.shape_cast %137 : vector<16xf32> to vector<16x1xf32>
    %cst_42 = arith.constant 1.600000e+01 : f32
    %139 = vector.broadcast %cst_42 : f32 to vector<16x1xf32>
    %140 = arith.divf %138, %139 : vector<16x1xf32>
    %141 = arith.mulf %135, %135 : vector<16x1xf32>
    %142 = arith.subf %140, %141 : vector<16x1xf32>
    %cst_43 = arith.constant 0.000000e+00 : f32
    %143 = vector.broadcast %cst_43 : f32 to vector<16x1xf32>
    %144 = arith.maximumf %142, %143 : vector<16x1xf32>
    %145 = vector.broadcast %135 : vector<16x1xf32> to vector<16x16xf32>
    %146 = arith.subf %131, %145 : vector<16x16xf32>
    %cst_44 = arith.constant 9.99999974E-6 : f32
    %147 = vector.broadcast %cst_44 : f32 to vector<16x1xf32>
    %148 = arith.addf %144, %147 : vector<16x1xf32>
    %149 = math.rsqrt %148 : vector<16x1xf32>
    %150 = vector.broadcast %149 : vector<16x1xf32> to vector<16x16xf32>
    %151 = arith.mulf %146, %150 : vector<16x16xf32>
    %c0_45 = arith.constant 0 : index
    %c0_46 = arith.constant 0 : index
    %152 = vector.load %arg7[%c0_45, %c0_46] : memref<16x1xf32, #tpu.memory_space<vmem>>, vector<16x1xf32>
    %153 = vector.broadcast %152 : vector<16x1xf32> to vector<16x16xf32>
    %154 = arith.mulf %151, %153 : vector<16x16xf32>
    %c0_47 = arith.constant 0 : index
    %c0_48 = arith.constant 0 : index
    %155 = vector.load %arg8[%c0_47, %c0_48] : memref<16x1xf32, #tpu.memory_space<vmem>>, vector<16x1xf32>
    %156 = vector.broadcast %155 : vector<16x1xf32> to vector<16x16xf32>
    %157 = arith.addf %154, %156 : vector<16x16xf32>
    %c0_49 = arith.constant 0 : index
    %c0_50 = arith.constant 0 : index
    %c0_51 = arith.constant 0 : index
    %158 = vector.load %arg6[%c0_49, %c0_50, %c0_51] : memref<1x16x1xf32, #tpu.memory_space<vmem>>, vector<1x16x1xf32>
    %159 = vector.shape_cast %158 : vector<1x16x1xf32> to vector<16x1xf32>
    %160 = vector.broadcast %159 : vector<16x1xf32> to vector<16x16xf32>
    %161 = arith.addf %157, %160 : vector<16x16xf32>
    %c0_52 = arith.constant 0 : index
    %c0_53 = arith.constant 0 : index
    %c0_54 = arith.constant 0 : index
    %162 = vector.load %arg12[%c0_52, %c0_53, %c0_54] : memref<1x16x16xf32, #tpu.memory_space<vmem>>, vector<1x16x16xf32>
    %163 = vector.shape_cast %162 : vector<1x16x16xf32> to vector<16x16xf32>
    %164 = vector.shape_cast %161 : vector<16x16xf32> to vector<1x16x16xf32>
    tpu.vector_store %arg12[%c0_52, %c0_53, %c0_54], %164 {strides = array<i32>} : memref<1x16x16xf32, #tpu.memory_space<vmem>>, vector<1x16x16xf32>,
    %c0_55 = arith.constant 0 : index
    %c0_56 = arith.constant 0 : index
    %165 = vector.load %arg9[%c0_55, %c0_56] : memref<16x16xf32, #tpu.memory_space<vmem>>, vector<16x16xf32>
    %cst_57 = arith.constant dense<0.000000e+00> : vector<16x1xf32>
    %166 = tpu.matmul %165, %135, %cst_57 {dimension_numbers = #tpu.dot_dimension_numbers<[1], [0], [0], [1], [0, 0, 1, 1], [], []>} : vector<16x16xf32>, vector<16x1xf32>, vector<16x1xf32> -> vector<16x1xf32>
    %c0_58 = arith.constant 0 : index
    %c0_59 = arith.constant 0 : index
    %c0_60 = arith.constant 0 : index
    %167 = vector.load %arg10[%c0_58, %c0_59, %c0_60] : memref<1x16x1xf32, #tpu.memory_space<vmem>>, vector<1x16x1xf32>
    %168 = vector.shape_cast %167 : vector<1x16x1xf32> to vector<16x1xf32>
    %169 = arith.addf %166, %168 : vector<16x1xf32>
    %c0_61 = arith.constant 0 : index
    %c0_62 = arith.constant 0 : index
    %170 = vector.load %arg11[%c0_61, %c0_62] : memref<16x1xf32, #tpu.memory_space<vmem>>, vector<16x1xf32>
    %171 = arith.addf %169, %170 : vector<16x1xf32>
    %cst_63 = arith.constant 0.000000e+00 : f32
    %172 = vector.broadcast %cst_63 : f32 to vector<16x1xf32>
    %173 = arith.cmpf ogt, %171, %172 : vector<16x1xf32>
    %174 = math.exp %171 : vector<16x1xf32>
    %cst_64 = arith.constant 1.000000e+00 : f32
    %175 = vector.broadcast %cst_64 : f32 to vector<16x1xf32>
    %176 = arith.subf %174, %175 : vector<16x1xf32>
    %cst_65 = arith.constant 1.67326319 : f32
    %177 = vector.broadcast %cst_65 : f32 to vector<16x1xf32>
    %178 = arith.mulf %177, %176 : vector<16x1xf32>
    %179 = arith.select %173, %171, %178 : vector<16x1xi1>, vector<16x1xf32>
    %cst_66 = arith.constant 1.05070102 : f32
    %180 = vector.broadcast %cst_66 : f32 to vector<16x1xf32>
    %181 = arith.mulf %180, %179 : vector<16x1xf32>
    %c0_67 = arith.constant 0 : index
    %c0_68 = arith.constant 0 : index
    %c0_69 = arith.constant 0 : index
    %182 = vector.load %arg13[%c0_67, %c0_68, %c0_69] : memref<1x16x1xf32, #tpu.memory_space<vmem>>, vector<1x16x1xf32>
    %183 = vector.shape_cast %182 : vector<1x16x1xf32> to vector<16x1xf32>
    %184 = vector.shape_cast %181 : vector<16x1xf32> to vector<1x16x1xf32>
    tpu.vector_store %arg13[%c0_67, %c0_68, %c0_69], %184 {strides = array<i32>} : memref<1x16x1xf32, #tpu.memory_space<vmem>>, vector<1x16x1xf32>,
    return
  }
  func.func @transform_0(%arg0: i32) -> (i32, i32, i32) {
    %c0_i32 = arith.constant 0 : i32
    %c0_i32_0 = arith.constant 0 : i32
    %c0_i32_1 = arith.constant 0 : i32
    return %arg0, %c0_i32, %c0_i32_0 : i32, i32, i32
  }
  func.func @transform_1(%arg0: i32) -> (i32, i32) {
    %c0_i32 = arith.constant 0 : i32
    %c0_i32_0 = arith.constant 0 : i32
    %c0_i32_1 = arith.constant 0 : i32
    return %c0_i32, %c0_i32_0 : i32, i32
  }
  func.func @transform_2(%arg0: i32) -> (i32, i32) {
    %c0_i32 = arith.constant 0 : i32
    %c0_i32_0 = arith.constant 0 : i32
    %c0_i32_1 = arith.constant 0 : i32
    return %c0_i32, %c0_i32_0 : i32, i32
  }
  func.func @transform_3(%arg0: i32) -> (i32, i32) {
    %c0_i32 = arith.constant 0 : i32
    %c0_i32_0 = arith.constant 0 : i32
    %c0_i32_1 = arith.constant 0 : i32
    return %c0_i32, %c0_i32_0 : i32, i32
  }
  func.func @transform_4(%arg0: i32) -> (i32, i32) {
    %c0_i32 = arith.constant 0 : i32
    %c0_i32_0 = arith.constant 0 : i32
    %c0_i32_1 = arith.constant 0 : i32
    return %c0_i32, %c0_i32_0 : i32, i32
  }
  func.func @transform_5(%arg0: i32) -> (i32, i32, i32) {
    %c0_i32 = arith.constant 0 : i32
    %c0_i32_0 = arith.constant 0 : i32
    %c0_i32_1 = arith.constant 0 : i32
    return %arg0, %c0_i32, %c0_i32_0 : i32, i32, i32
  }
  func.func @transform_6(%arg0: i32) -> (i32, i32) {
    %c0_i32 = arith.constant 0 : i32
    %c0_i32_0 = arith.constant 0 : i32
    %c0_i32_1 = arith.constant 0 : i32
    return %c0_i32, %c0_i32_0 : i32, i32
  }
  func.func @transform_7(%arg0: i32) -> (i32, i32) {
    %c0_i32 = arith.constant 0 : i32
    %c0_i32_0 = arith.constant 0 : i32
    %c0_i32_1 = arith.constant 0 : i32
    return %c0_i32, %c0_i32_0 : i32, i32
  }
  func.func @transform_8(%arg0: i32) -> (i32, i32) {
    %c0_i32 = arith.constant 0 : i32
    %c0_i32_0 = arith.constant 0 : i32
    %c0_i32_1 = arith.constant 0 : i32
    return %c0_i32, %c0_i32_0 : i32, i32
  }
  func.func @transform_9(%arg0: i32) -> (i32, i32, i32) {
    %c0_i32 = arith.constant 0 : i32
    %c0_i32_0 = arith.constant 0 : i32
    %c0_i32_1 = arith.constant 0 : i32
    return %arg0, %c0_i32, %c0_i32_0 : i32, i32, i32
  }
  func.func @transform_10(%arg0: i32) -> (i32, i32) {
    %c0_i32 = arith.constant 0 : i32
    %c0_i32_0 = arith.constant 0 : i32
    %c0_i32_1 = arith.constant 0 : i32
    return %c0_i32, %c0_i32_0 : i32, i32
  }
  func.func @transform_11(%arg0: i32) -> (i32, i32, i32) {
    %c0_i32 = arith.constant 0 : i32
    %c0_i32_0 = arith.constant 0 : i32
    %c0_i32_1 = arith.constant 0 : i32
    return %arg0, %c0_i32, %c0_i32_0 : i32, i32, i32
  }
  func.func @transform_12(%arg0: i32) -> (i32, i32, i32) {
    %c0_i32 = arith.constant 0 : i32
    %c0_i32_0 = arith.constant 0 : i32
    %c0_i32_1 = arith.constant 0 : i32
    return %arg0, %c0_i32, %c0_i32_0 : i32, i32, i32
  }
}

module attributes {stable_mosaic.version = 11 : i64} {
  func.func @kernel(%arg0: i32, %arg1: memref<1x32x64xbf16, #tpu.memory_space<vmem>>, %arg2: memref<8x288xbf16, #tpu.memory_space<vmem>>, %arg3: memref<8x1xf32, #tpu.memory_space<vmem>>, %arg4: memref<8x72xbf16, #tpu.memory_space<vmem>>, %arg5: memref<8x1xf32, #tpu.memory_space<vmem>>, %arg6: memref<1x8x1xf32, #tpu.memory_space<vmem>>, %arg7: memref<8x1xf32, #tpu.memory_space<vmem>>, %arg8: memref<8x1xf32, #tpu.memory_space<vmem>>, %arg9: memref<8x8xf32, #tpu.memory_space<vmem>>, %arg10: memref<1x8x1xf32, #tpu.memory_space<vmem>>, %arg11: memref<8x1xf32, #tpu.memory_space<vmem>>, %arg12: memref<1x8x64xf32, #tpu.memory_space<vmem>>, %arg13: memref<1x8x1xf32, #tpu.memory_space<vmem>>) attributes {dimension_semantics = [#tpu.dimension_semantics<parallel>], iteration_bounds = array<i64: 2>, scalar_prefetch = 0 : i64, scratch_operands = 0 : i64, tpu.core_type = #tpu.core_type<tc>, window_params = [{transform_indices = @transform_0, window_bounds = array<i64: 1, 32, 64>}, {pipeline_mode = #tpu.pipeline_mode<synchronous>, transform_indices = @transform_1, window_bounds = array<i64: 8, 288>}, {pipeline_mode = #tpu.pipeline_mode<synchronous>, transform_indices = @transform_2, window_bounds = array<i64: 8, 1>}, {pipeline_mode = #tpu.pipeline_mode<synchronous>, transform_indices = @transform_3, window_bounds = array<i64: 8, 72>}, {pipeline_mode = #tpu.pipeline_mode<synchronous>, transform_indices = @transform_4, window_bounds = array<i64: 8, 1>}, {transform_indices = @transform_5, window_bounds = array<i64: 1, 8, 1>}, {pipeline_mode = #tpu.pipeline_mode<synchronous>, transform_indices = @transform_6, window_bounds = array<i64: 8, 1>}, {pipeline_mode = #tpu.pipeline_mode<synchronous>, transform_indices = @transform_7, window_bounds = array<i64: 8, 1>}, {pipeline_mode = #tpu.pipeline_mode<synchronous>, transform_indices = @transform_8, window_bounds = array<i64: 8, 8>}, {transform_indices = @transform_9, window_bounds = array<i64: 1, 8, 1>}, {pipeline_mode = #tpu.pipeline_mode<synchronous>, transform_indices = @transform_10, window_bounds = array<i64: 8, 1>}, {transform_indices = @transform_11, window_bounds = array<i64: 1, 8, 64>}, {transform_indices = @transform_12, window_bounds = array<i64: 1, 8, 1>}]} {
    %c0 = arith.constant 0 : index
    %c0_0 = arith.constant 0 : index
    %c0_1 = arith.constant 0 : index
    %0 = vector.load %arg1[%c0, %c0_0, %c0_1] : memref<1x32x64xbf16, #tpu.memory_space<vmem>>, vector<1x32x64xbf16>
    %1 = vector.shape_cast %0 : vector<1x32x64xbf16> to vector<32x64xbf16>
    %cst = arith.constant 0.000000e+00 : bf16
    %2 = vector.broadcast %cst : bf16 to vector<32x64xbf16>
    %3 = arith.cmpf oge, %1, %2 : vector<32x64xbf16>
    %cst_2 = arith.constant 2.001950e-01 : bf16
    %4 = vector.broadcast %cst_2 : bf16 to vector<32x64xbf16>
    %5 = arith.mulf %4, %1 : vector<32x64xbf16>
    %6 = arith.select %3, %1, %5 : vector<32x64xi1>, vector<32x64xbf16>
    %cst_3 = arith.constant 0.000000e+00 : bf16
    %7 = vector.broadcast %cst_3 : bf16 to vector<32x9xbf16>
    %8 = tpu.concatenate %7, %6, %7 in 1 : vector<32x9xbf16>, vector<32x64xbf16>, vector<32x9xbf16> -> vector<32x82xbf16>
    %9 = tpu.iota {dimensions = array<i32: 1>} : vector<1x64xi32>
    %c8_i32 = arith.constant 8 : i32
    %c0_i32 = arith.constant 0 : i32
    %10 = arith.cmpi eq, %c8_i32, %c0_i32 : i32
    %c1_i32 = arith.constant 1 : i32
    %11 = arith.select %10, %c1_i32, %c8_i32 : i32
    %12 = vector.broadcast %11 : i32 to vector<1x64xi32>
    %13 = arith.remsi %9, %12 : vector<1x64xi32>
    %c0_i32_4 = arith.constant 0 : i32
    %14 = vector.broadcast %c0_i32_4 : i32 to vector<1x64xi32>
    %15 = arith.cmpi ne, %13, %14 : vector<1x64xi32>
    %c0_i32_5 = arith.constant 0 : i32
    %16 = vector.broadcast %c0_i32_5 : i32 to vector<1x64xi32>
    %17 = arith.cmpi slt, %13, %16 : vector<1x64xi32>
    %c0_i32_6 = arith.constant 0 : i32
    %18 = arith.cmpi slt, %11, %c0_i32_6 : i32
    %19 = vector.broadcast %18 : i1 to vector<1x64xi1>
    %20 = vector.broadcast %19 : vector<1x64xi1> to vector<1x64xi1>
    %21 = arith.xori %17, %20 : vector<1x64xi1>
    %22 = arith.andi %21, %15 : vector<1x64xi1>
    %23 = vector.broadcast %11 : i32 to vector<1x64xi32>
    %24 = arith.addi %13, %23 : vector<1x64xi32>
    %25 = arith.select %22, %24, %13 : vector<1x64xi1>, vector<1x64xi32>
    %c1_i32_7 = arith.constant 1 : i32
    %26 = vector.broadcast %c1_i32_7 : i32 to vector<1x64xi32>
    %27 = arith.cmpi sge, %25, %26 : vector<1x64xi32>
    %c6_i32 = arith.constant 6 : i32
    %28 = vector.broadcast %c6_i32 : i32 to vector<1x64xi32>
    %29 = arith.cmpi sle, %25, %28 : vector<1x64xi32>
    %30 = vector.extract_strided_slice %8 {offsets = [0, 0], sizes = [32, 64], strides = [1, 1]} : vector<32x82xbf16> to vector<32x64xbf16>
    %cst_8 = arith.constant 0.000000e+00 : bf16
    %31 = vector.broadcast %cst_8 : bf16 to vector<32x64xbf16>
    %32 = vector.shape_cast %27 : vector<1x64xi1> to vector<1x64xi1>
    %33 = vector.broadcast %32 : vector<1x64xi1> to vector<32x64xi1>
    %34 = arith.select %33, %30, %31 : vector<32x64xi1>, vector<32x64xbf16>
    %35 = vector.extract_strided_slice %8 {offsets = [0, 1], sizes = [32, 64], strides = [1, 1]} : vector<32x82xbf16> to vector<32x64xbf16>
    %36 = vector.extract_strided_slice %8 {offsets = [0, 2], sizes = [32, 64], strides = [1, 1]} : vector<32x82xbf16> to vector<32x64xbf16>
    %cst_9 = arith.constant 0.000000e+00 : bf16
    %37 = vector.broadcast %cst_9 : bf16 to vector<32x64xbf16>
    %38 = vector.shape_cast %29 : vector<1x64xi1> to vector<1x64xi1>
    %39 = vector.broadcast %38 : vector<1x64xi1> to vector<32x64xi1>
    %40 = arith.select %39, %36, %37 : vector<32x64xi1>, vector<32x64xbf16>
    %41 = vector.extract_strided_slice %8 {offsets = [0, 8], sizes = [32, 64], strides = [1, 1]} : vector<32x82xbf16> to vector<32x64xbf16>
    %cst_10 = arith.constant 0.000000e+00 : bf16
    %42 = vector.broadcast %cst_10 : bf16 to vector<32x64xbf16>
    %43 = vector.shape_cast %27 : vector<1x64xi1> to vector<1x64xi1>
    %44 = vector.broadcast %43 : vector<1x64xi1> to vector<32x64xi1>
    %45 = arith.select %44, %41, %42 : vector<32x64xi1>, vector<32x64xbf16>
    %46 = vector.extract_strided_slice %8 {offsets = [0, 9], sizes = [32, 64], strides = [1, 1]} : vector<32x82xbf16> to vector<32x64xbf16>
    %47 = vector.extract_strided_slice %8 {offsets = [0, 10], sizes = [32, 64], strides = [1, 1]} : vector<32x82xbf16> to vector<32x64xbf16>
    %cst_11 = arith.constant 0.000000e+00 : bf16
    %48 = vector.broadcast %cst_11 : bf16 to vector<32x64xbf16>
    %49 = vector.shape_cast %29 : vector<1x64xi1> to vector<1x64xi1>
    %50 = vector.broadcast %49 : vector<1x64xi1> to vector<32x64xi1>
    %51 = arith.select %50, %47, %48 : vector<32x64xi1>, vector<32x64xbf16>
    %52 = vector.extract_strided_slice %8 {offsets = [0, 16], sizes = [32, 64], strides = [1, 1]} : vector<32x82xbf16> to vector<32x64xbf16>
    %cst_12 = arith.constant 0.000000e+00 : bf16
    %53 = vector.broadcast %cst_12 : bf16 to vector<32x64xbf16>
    %54 = vector.shape_cast %27 : vector<1x64xi1> to vector<1x64xi1>
    %55 = vector.broadcast %54 : vector<1x64xi1> to vector<32x64xi1>
    %56 = arith.select %55, %52, %53 : vector<32x64xi1>, vector<32x64xbf16>
    %57 = vector.extract_strided_slice %8 {offsets = [0, 17], sizes = [32, 64], strides = [1, 1]} : vector<32x82xbf16> to vector<32x64xbf16>
    %58 = vector.extract_strided_slice %8 {offsets = [0, 18], sizes = [32, 64], strides = [1, 1]} : vector<32x82xbf16> to vector<32x64xbf16>
    %cst_13 = arith.constant 0.000000e+00 : bf16
    %59 = vector.broadcast %cst_13 : bf16 to vector<32x64xbf16>
    %60 = vector.shape_cast %29 : vector<1x64xi1> to vector<1x64xi1>
    %61 = vector.broadcast %60 : vector<1x64xi1> to vector<32x64xi1>
    %62 = arith.select %61, %58, %59 : vector<32x64xi1>, vector<32x64xbf16>
    %63 = tpu.concatenate %34, %35, %40, %45, %46, %51, %56, %57, %62 in 0 : vector<32x64xbf16>, vector<32x64xbf16>, vector<32x64xbf16>, vector<32x64xbf16>, vector<32x64xbf16>, vector<32x64xbf16>, vector<32x64xbf16>, vector<32x64xbf16>, vector<32x64xbf16> -> vector<288x64xbf16>
    %c0_14 = arith.constant 0 : index
    %c0_15 = arith.constant 0 : index
    %64 = vector.load %arg2[%c0_14, %c0_15] : memref<8x288xbf16, #tpu.memory_space<vmem>>, vector<8x288xbf16>
    %cst_16 = arith.constant dense<0.000000e+00> : vector<8x64xf32>
    %65 = tpu.matmul %64, %63, %cst_16 {dimension_numbers = #tpu.dot_dimension_numbers<[1], [0], [0], [1], [0, 0, 1, 1], [], []>} : vector<8x288xbf16>, vector<288x64xbf16>, vector<8x64xf32> -> vector<8x64xf32>
    %c0_17 = arith.constant 0 : index
    %c0_18 = arith.constant 0 : index
    %66 = vector.load %arg3[%c0_17, %c0_18] : memref<8x1xf32, #tpu.memory_space<vmem>>, vector<8x1xf32>
    %67 = vector.broadcast %66 : vector<8x1xf32> to vector<8x64xf32>
    %68 = arith.addf %65, %67 : vector<8x64xf32>
    %69 = arith.truncf %68 : vector<8x64xf32> to vector<8x64xbf16>
    %cst_19 = arith.constant 0.000000e+00 : bf16
    %70 = vector.broadcast %cst_19 : bf16 to vector<8x9xbf16>
    %71 = tpu.concatenate %70, %69, %70 in 1 : vector<8x9xbf16>, vector<8x64xbf16>, vector<8x9xbf16> -> vector<8x82xbf16>
    %72 = tpu.iota {dimensions = array<i32: 1>} : vector<1x64xi32>
    %c8_i32_20 = arith.constant 8 : i32
    %c0_i32_21 = arith.constant 0 : i32
    %73 = arith.cmpi eq, %c8_i32_20, %c0_i32_21 : i32
    %c1_i32_22 = arith.constant 1 : i32
    %74 = arith.select %73, %c1_i32_22, %c8_i32_20 : i32
    %75 = vector.broadcast %74 : i32 to vector<1x64xi32>
    %76 = arith.remsi %72, %75 : vector<1x64xi32>
    %c0_i32_23 = arith.constant 0 : i32
    %77 = vector.broadcast %c0_i32_23 : i32 to vector<1x64xi32>
    %78 = arith.cmpi ne, %76, %77 : vector<1x64xi32>
    %c0_i32_24 = arith.constant 0 : i32
    %79 = vector.broadcast %c0_i32_24 : i32 to vector<1x64xi32>
    %80 = arith.cmpi slt, %76, %79 : vector<1x64xi32>
    %c0_i32_25 = arith.constant 0 : i32
    %81 = arith.cmpi slt, %74, %c0_i32_25 : i32
    %82 = vector.broadcast %81 : i1 to vector<1x64xi1>
    %83 = vector.broadcast %82 : vector<1x64xi1> to vector<1x64xi1>
    %84 = arith.xori %80, %83 : vector<1x64xi1>
    %85 = arith.andi %84, %78 : vector<1x64xi1>
    %86 = vector.broadcast %74 : i32 to vector<1x64xi32>
    %87 = arith.addi %76, %86 : vector<1x64xi32>
    %88 = arith.select %85, %87, %76 : vector<1x64xi1>, vector<1x64xi32>
    %c1_i32_26 = arith.constant 1 : i32
    %89 = vector.broadcast %c1_i32_26 : i32 to vector<1x64xi32>
    %90 = arith.cmpi sge, %88, %89 : vector<1x64xi32>
    %c6_i32_27 = arith.constant 6 : i32
    %91 = vector.broadcast %c6_i32_27 : i32 to vector<1x64xi32>
    %92 = arith.cmpi sle, %88, %91 : vector<1x64xi32>
    %93 = vector.extract_strided_slice %71 {offsets = [0, 0], sizes = [8, 64], strides = [1, 1]} : vector<8x82xbf16> to vector<8x64xbf16>
    %cst_28 = arith.constant 0.000000e+00 : bf16
    %94 = vector.broadcast %cst_28 : bf16 to vector<8x64xbf16>
    %95 = vector.shape_cast %90 : vector<1x64xi1> to vector<1x64xi1>
    %96 = vector.broadcast %95 : vector<1x64xi1> to vector<8x64xi1>
    %97 = arith.select %96, %93, %94 : vector<8x64xi1>, vector<8x64xbf16>
    %98 = vector.extract_strided_slice %71 {offsets = [0, 1], sizes = [8, 64], strides = [1, 1]} : vector<8x82xbf16> to vector<8x64xbf16>
    %99 = vector.extract_strided_slice %71 {offsets = [0, 2], sizes = [8, 64], strides = [1, 1]} : vector<8x82xbf16> to vector<8x64xbf16>
    %cst_29 = arith.constant 0.000000e+00 : bf16
    %100 = vector.broadcast %cst_29 : bf16 to vector<8x64xbf16>
    %101 = vector.shape_cast %92 : vector<1x64xi1> to vector<1x64xi1>
    %102 = vector.broadcast %101 : vector<1x64xi1> to vector<8x64xi1>
    %103 = arith.select %102, %99, %100 : vector<8x64xi1>, vector<8x64xbf16>
    %104 = vector.extract_strided_slice %71 {offsets = [0, 8], sizes = [8, 64], strides = [1, 1]} : vector<8x82xbf16> to vector<8x64xbf16>
    %cst_30 = arith.constant 0.000000e+00 : bf16
    %105 = vector.broadcast %cst_30 : bf16 to vector<8x64xbf16>
    %106 = vector.shape_cast %90 : vector<1x64xi1> to vector<1x64xi1>
    %107 = vector.broadcast %106 : vector<1x64xi1> to vector<8x64xi1>
    %108 = arith.select %107, %104, %105 : vector<8x64xi1>, vector<8x64xbf16>
    %109 = vector.extract_strided_slice %71 {offsets = [0, 9], sizes = [8, 64], strides = [1, 1]} : vector<8x82xbf16> to vector<8x64xbf16>
    %110 = vector.extract_strided_slice %71 {offsets = [0, 10], sizes = [8, 64], strides = [1, 1]} : vector<8x82xbf16> to vector<8x64xbf16>
    %cst_31 = arith.constant 0.000000e+00 : bf16
    %111 = vector.broadcast %cst_31 : bf16 to vector<8x64xbf16>
    %112 = vector.shape_cast %92 : vector<1x64xi1> to vector<1x64xi1>
    %113 = vector.broadcast %112 : vector<1x64xi1> to vector<8x64xi1>
    %114 = arith.select %113, %110, %111 : vector<8x64xi1>, vector<8x64xbf16>
    %115 = vector.extract_strided_slice %71 {offsets = [0, 16], sizes = [8, 64], strides = [1, 1]} : vector<8x82xbf16> to vector<8x64xbf16>
    %cst_32 = arith.constant 0.000000e+00 : bf16
    %116 = vector.broadcast %cst_32 : bf16 to vector<8x64xbf16>
    %117 = vector.shape_cast %90 : vector<1x64xi1> to vector<1x64xi1>
    %118 = vector.broadcast %117 : vector<1x64xi1> to vector<8x64xi1>
    %119 = arith.select %118, %115, %116 : vector<8x64xi1>, vector<8x64xbf16>
    %120 = vector.extract_strided_slice %71 {offsets = [0, 17], sizes = [8, 64], strides = [1, 1]} : vector<8x82xbf16> to vector<8x64xbf16>
    %121 = vector.extract_strided_slice %71 {offsets = [0, 18], sizes = [8, 64], strides = [1, 1]} : vector<8x82xbf16> to vector<8x64xbf16>
    %cst_33 = arith.constant 0.000000e+00 : bf16
    %122 = vector.broadcast %cst_33 : bf16 to vector<8x64xbf16>
    %123 = vector.shape_cast %92 : vector<1x64xi1> to vector<1x64xi1>
    %124 = vector.broadcast %123 : vector<1x64xi1> to vector<8x64xi1>
    %125 = arith.select %124, %121, %122 : vector<8x64xi1>, vector<8x64xbf16>
    %126 = tpu.concatenate %97, %98, %103, %108, %109, %114, %119, %120, %125 in 0 : vector<8x64xbf16>, vector<8x64xbf16>, vector<8x64xbf16>, vector<8x64xbf16>, vector<8x64xbf16>, vector<8x64xbf16>, vector<8x64xbf16>, vector<8x64xbf16>, vector<8x64xbf16> -> vector<72x64xbf16>
    %c0_34 = arith.constant 0 : index
    %c0_35 = arith.constant 0 : index
    %127 = vector.load %arg4[%c0_34, %c0_35] : memref<8x72xbf16, #tpu.memory_space<vmem>>, vector<8x72xbf16>
    %cst_36 = arith.constant dense<0.000000e+00> : vector<8x64xf32>
    %128 = tpu.matmul %127, %126, %cst_36 {dimension_numbers = #tpu.dot_dimension_numbers<[1], [0], [0], [1], [0, 0, 1, 1], [], []>} : vector<8x72xbf16>, vector<72x64xbf16>, vector<8x64xf32> -> vector<8x64xf32>
    %c0_37 = arith.constant 0 : index
    %c0_38 = arith.constant 0 : index
    %129 = vector.load %arg5[%c0_37, %c0_38] : memref<8x1xf32, #tpu.memory_space<vmem>>, vector<8x1xf32>
    %130 = vector.broadcast %129 : vector<8x1xf32> to vector<8x64xf32>
    %131 = arith.addf %128, %130 : vector<8x64xf32>
    %cst_39 = arith.constant dense<0.000000e+00> : vector<8xf32>
    %132 = vector.multi_reduction <add>, %131, %cst_39 [1] : vector<8x64xf32> to vector<8xf32>
    %133 = vector.shape_cast %132 : vector<8xf32> to vector<8x1xf32>
    %cst_40 = arith.constant 6.400000e+01 : f32
    %134 = vector.broadcast %cst_40 : f32 to vector<8x1xf32>
    %135 = arith.divf %133, %134 : vector<8x1xf32>
    %136 = arith.mulf %131, %131 : vector<8x64xf32>
    %cst_41 = arith.constant dense<0.000000e+00> : vector<8xf32>
    %137 = vector.multi_reduction <add>, %136, %cst_41 [1] : vector<8x64xf32> to vector<8xf32>
    %138 = vector.shape_cast %137 : vector<8xf32> to vector<8x1xf32>
    %cst_42 = arith.constant 6.400000e+01 : f32
    %139 = vector.broadcast %cst_42 : f32 to vector<8x1xf32>
    %140 = arith.divf %138, %139 : vector<8x1xf32>
    %141 = arith.mulf %135, %135 : vector<8x1xf32>
    %142 = arith.subf %140, %141 : vector<8x1xf32>
    %cst_43 = arith.constant 0.000000e+00 : f32
    %143 = vector.broadcast %cst_43 : f32 to vector<8x1xf32>
    %144 = arith.maximumf %142, %143 : vector<8x1xf32>
    %145 = vector.broadcast %135 : vector<8x1xf32> to vector<8x64xf32>
    %146 = arith.subf %131, %145 : vector<8x64xf32>
    %cst_44 = arith.constant 9.99999974E-6 : f32
    %147 = vector.broadcast %cst_44 : f32 to vector<8x1xf32>
    %148 = arith.addf %144, %147 : vector<8x1xf32>
    %149 = math.rsqrt %148 : vector<8x1xf32>
    %150 = vector.broadcast %149 : vector<8x1xf32> to vector<8x64xf32>
    %151 = arith.mulf %146, %150 : vector<8x64xf32>
    %c0_45 = arith.constant 0 : index
    %c0_46 = arith.constant 0 : index
    %152 = vector.load %arg7[%c0_45, %c0_46] : memref<8x1xf32, #tpu.memory_space<vmem>>, vector<8x1xf32>
    %153 = vector.broadcast %152 : vector<8x1xf32> to vector<8x64xf32>
    %154 = arith.mulf %151, %153 : vector<8x64xf32>
    %c0_47 = arith.constant 0 : index
    %c0_48 = arith.constant 0 : index
    %155 = vector.load %arg8[%c0_47, %c0_48] : memref<8x1xf32, #tpu.memory_space<vmem>>, vector<8x1xf32>
    %156 = vector.broadcast %155 : vector<8x1xf32> to vector<8x64xf32>
    %157 = arith.addf %154, %156 : vector<8x64xf32>
    %c0_49 = arith.constant 0 : index
    %c0_50 = arith.constant 0 : index
    %c0_51 = arith.constant 0 : index
    %158 = vector.load %arg6[%c0_49, %c0_50, %c0_51] : memref<1x8x1xf32, #tpu.memory_space<vmem>>, vector<1x8x1xf32>
    %159 = vector.shape_cast %158 : vector<1x8x1xf32> to vector<8x1xf32>
    %160 = vector.broadcast %159 : vector<8x1xf32> to vector<8x64xf32>
    %161 = arith.addf %157, %160 : vector<8x64xf32>
    %c0_52 = arith.constant 0 : index
    %c0_53 = arith.constant 0 : index
    %c0_54 = arith.constant 0 : index
    %162 = vector.load %arg12[%c0_52, %c0_53, %c0_54] : memref<1x8x64xf32, #tpu.memory_space<vmem>>, vector<1x8x64xf32>
    %163 = vector.shape_cast %162 : vector<1x8x64xf32> to vector<8x64xf32>
    %164 = vector.shape_cast %161 : vector<8x64xf32> to vector<1x8x64xf32>
    tpu.vector_store %arg12[%c0_52, %c0_53, %c0_54], %164 {strides = array<i32>} : memref<1x8x64xf32, #tpu.memory_space<vmem>>, vector<1x8x64xf32>,
    %c0_55 = arith.constant 0 : index
    %c0_56 = arith.constant 0 : index
    %165 = vector.load %arg9[%c0_55, %c0_56] : memref<8x8xf32, #tpu.memory_space<vmem>>, vector<8x8xf32>
    %cst_57 = arith.constant dense<0.000000e+00> : vector<8x1xf32>
    %166 = tpu.matmul %165, %135, %cst_57 {dimension_numbers = #tpu.dot_dimension_numbers<[1], [0], [0], [1], [0, 0, 1, 1], [], []>} : vector<8x8xf32>, vector<8x1xf32>, vector<8x1xf32> -> vector<8x1xf32>
    %c0_58 = arith.constant 0 : index
    %c0_59 = arith.constant 0 : index
    %c0_60 = arith.constant 0 : index
    %167 = vector.load %arg10[%c0_58, %c0_59, %c0_60] : memref<1x8x1xf32, #tpu.memory_space<vmem>>, vector<1x8x1xf32>
    %168 = vector.shape_cast %167 : vector<1x8x1xf32> to vector<8x1xf32>
    %169 = arith.addf %166, %168 : vector<8x1xf32>
    %c0_61 = arith.constant 0 : index
    %c0_62 = arith.constant 0 : index
    %170 = vector.load %arg11[%c0_61, %c0_62] : memref<8x1xf32, #tpu.memory_space<vmem>>, vector<8x1xf32>
    %171 = arith.addf %169, %170 : vector<8x1xf32>
    %cst_63 = arith.constant 0.000000e+00 : f32
    %172 = vector.broadcast %cst_63 : f32 to vector<8x1xf32>
    %173 = arith.cmpf ogt, %171, %172 : vector<8x1xf32>
    %174 = math.exp %171 : vector<8x1xf32>
    %cst_64 = arith.constant 1.000000e+00 : f32
    %175 = vector.broadcast %cst_64 : f32 to vector<8x1xf32>
    %176 = arith.subf %174, %175 : vector<8x1xf32>
    %cst_65 = arith.constant 1.67326319 : f32
    %177 = vector.broadcast %cst_65 : f32 to vector<8x1xf32>
    %178 = arith.mulf %177, %176 : vector<8x1xf32>
    %179 = arith.select %173, %171, %178 : vector<8x1xi1>, vector<8x1xf32>
    %cst_66 = arith.constant 1.05070102 : f32
    %180 = vector.broadcast %cst_66 : f32 to vector<8x1xf32>
    %181 = arith.mulf %180, %179 : vector<8x1xf32>
    %c0_67 = arith.constant 0 : index
    %c0_68 = arith.constant 0 : index
    %c0_69 = arith.constant 0 : index
    %182 = vector.load %arg13[%c0_67, %c0_68, %c0_69] : memref<1x8x1xf32, #tpu.memory_space<vmem>>, vector<1x8x1xf32>
    %183 = vector.shape_cast %182 : vector<1x8x1xf32> to vector<8x1xf32>
    %184 = vector.shape_cast %181 : vector<8x1xf32> to vector<1x8x1xf32>
    tpu.vector_store %arg13[%c0_67, %c0_68, %c0_69], %184 {strides = array<i32>} : memref<1x8x1xf32, #tpu.memory_space<vmem>>, vector<1x8x1xf32>,
    return
  }
  func.func @transform_0(%arg0: i32) -> (i32, i32, i32) {
    %c0_i32 = arith.constant 0 : i32
    %c0_i32_0 = arith.constant 0 : i32
    %c0_i32_1 = arith.constant 0 : i32
    return %arg0, %c0_i32, %c0_i32_0 : i32, i32, i32
  }
  func.func @transform_1(%arg0: i32) -> (i32, i32) {
    %c0_i32 = arith.constant 0 : i32
    %c0_i32_0 = arith.constant 0 : i32
    %c0_i32_1 = arith.constant 0 : i32
    return %c0_i32, %c0_i32_0 : i32, i32
  }
  func.func @transform_2(%arg0: i32) -> (i32, i32) {
    %c0_i32 = arith.constant 0 : i32
    %c0_i32_0 = arith.constant 0 : i32
    %c0_i32_1 = arith.constant 0 : i32
    return %c0_i32, %c0_i32_0 : i32, i32
  }
  func.func @transform_3(%arg0: i32) -> (i32, i32) {
    %c0_i32 = arith.constant 0 : i32
    %c0_i32_0 = arith.constant 0 : i32
    %c0_i32_1 = arith.constant 0 : i32
    return %c0_i32, %c0_i32_0 : i32, i32
  }
  func.func @transform_4(%arg0: i32) -> (i32, i32) {
    %c0_i32 = arith.constant 0 : i32
    %c0_i32_0 = arith.constant 0 : i32
    %c0_i32_1 = arith.constant 0 : i32
    return %c0_i32, %c0_i32_0 : i32, i32
  }
  func.func @transform_5(%arg0: i32) -> (i32, i32, i32) {
    %c0_i32 = arith.constant 0 : i32
    %c0_i32_0 = arith.constant 0 : i32
    %c0_i32_1 = arith.constant 0 : i32
    return %arg0, %c0_i32, %c0_i32_0 : i32, i32, i32
  }
  func.func @transform_6(%arg0: i32) -> (i32, i32) {
    %c0_i32 = arith.constant 0 : i32
    %c0_i32_0 = arith.constant 0 : i32
    %c0_i32_1 = arith.constant 0 : i32
    return %c0_i32, %c0_i32_0 : i32, i32
  }
  func.func @transform_7(%arg0: i32) -> (i32, i32) {
    %c0_i32 = arith.constant 0 : i32
    %c0_i32_0 = arith.constant 0 : i32
    %c0_i32_1 = arith.constant 0 : i32
    return %c0_i32, %c0_i32_0 : i32, i32
  }
  func.func @transform_8(%arg0: i32) -> (i32, i32) {
    %c0_i32 = arith.constant 0 : i32
    %c0_i32_0 = arith.constant 0 : i32
    %c0_i32_1 = arith.constant 0 : i32
    return %c0_i32, %c0_i32_0 : i32, i32
  }
  func.func @transform_9(%arg0: i32) -> (i32, i32, i32) {
    %c0_i32 = arith.constant 0 : i32
    %c0_i32_0 = arith.constant 0 : i32
    %c0_i32_1 = arith.constant 0 : i32
    return %arg0, %c0_i32, %c0_i32_0 : i32, i32, i32
  }
  func.func @transform_10(%arg0: i32) -> (i32, i32) {
    %c0_i32 = arith.constant 0 : i32
    %c0_i32_0 = arith.constant 0 : i32
    %c0_i32_1 = arith.constant 0 : i32
    return %c0_i32, %c0_i32_0 : i32, i32
  }
  func.func @transform_11(%arg0: i32) -> (i32, i32, i32) {
    %c0_i32 = arith.constant 0 : i32
    %c0_i32_0 = arith.constant 0 : i32
    %c0_i32_1 = arith.constant 0 : i32
    return %arg0, %c0_i32, %c0_i32_0 : i32, i32, i32
  }
  func.func @transform_12(%arg0: i32) -> (i32, i32, i32) {
    %c0_i32 = arith.constant 0 : i32
    %c0_i32_0 = arith.constant 0 : i32
    %c0_i32_1 = arith.constant 0 : i32
    return %arg0, %c0_i32, %c0_i32_0 : i32, i32, i32
  }
}

module attributes {stable_mosaic.version = 11 : i64} {
  func.func @kernel(%arg0: i32, %arg1: memref<1x16x256xbf16, #tpu.memory_space<vmem>>, %arg2: memref<8x144xbf16, #tpu.memory_space<vmem>>, %arg3: memref<8x1xf32, #tpu.memory_space<vmem>>, %arg4: memref<8x72xbf16, #tpu.memory_space<vmem>>, %arg5: memref<8x1xf32, #tpu.memory_space<vmem>>, %arg6: memref<1x8x1xf32, #tpu.memory_space<vmem>>, %arg7: memref<1x8x256xf32, #tpu.memory_space<vmem>>) attributes {dimension_semantics = [#tpu.dimension_semantics<parallel>], iteration_bounds = array<i64: 2>, scalar_prefetch = 0 : i64, scratch_operands = 0 : i64, tpu.core_type = #tpu.core_type<tc>, window_params = [{transform_indices = @transform_0, window_bounds = array<i64: 1, 16, 256>}, {pipeline_mode = #tpu.pipeline_mode<synchronous>, transform_indices = @transform_1, window_bounds = array<i64: 8, 144>}, {pipeline_mode = #tpu.pipeline_mode<synchronous>, transform_indices = @transform_2, window_bounds = array<i64: 8, 1>}, {pipeline_mode = #tpu.pipeline_mode<synchronous>, transform_indices = @transform_3, window_bounds = array<i64: 8, 72>}, {pipeline_mode = #tpu.pipeline_mode<synchronous>, transform_indices = @transform_4, window_bounds = array<i64: 8, 1>}, {transform_indices = @transform_5, window_bounds = array<i64: 1, 8, 1>}, {transform_indices = @transform_6, window_bounds = array<i64: 1, 8, 256>}]} {
    %c0 = arith.constant 0 : index
    %c0_0 = arith.constant 0 : index
    %c0_1 = arith.constant 0 : index
    %0 = vector.load %arg1[%c0, %c0_0, %c0_1] : memref<1x16x256xbf16, #tpu.memory_space<vmem>>, vector<1x16x256xbf16>
    %1 = vector.shape_cast %0 : vector<1x16x256xbf16> to vector<16x256xbf16>
    %cst = arith.constant 0.000000e+00 : bf16
    %2 = vector.broadcast %cst : bf16 to vector<16x256xbf16>
    %3 = arith.cmpf oge, %1, %2 : vector<16x256xbf16>
    %cst_2 = arith.constant 2.001950e-01 : bf16
    %4 = vector.broadcast %cst_2 : bf16 to vector<16x256xbf16>
    %5 = arith.mulf %4, %1 : vector<16x256xbf16>
    %6 = arith.select %3, %1, %5 : vector<16x256xi1>, vector<16x256xbf16>
    %cst_3 = arith.constant 0.000000e+00 : bf16
    %7 = vector.broadcast %cst_3 : bf16 to vector<16x17xbf16>
    %8 = tpu.concatenate %7, %6, %7 in 1 : vector<16x17xbf16>, vector<16x256xbf16>, vector<16x17xbf16> -> vector<16x290xbf16>
    %9 = tpu.iota {dimensions = array<i32: 1>} : vector<1x256xi32>
    %c16_i32 = arith.constant 16 : i32
    %c0_i32 = arith.constant 0 : i32
    %10 = arith.cmpi eq, %c16_i32, %c0_i32 : i32
    %c1_i32 = arith.constant 1 : i32
    %11 = arith.select %10, %c1_i32, %c16_i32 : i32
    %12 = vector.broadcast %11 : i32 to vector<1x256xi32>
    %13 = arith.remsi %9, %12 : vector<1x256xi32>
    %c0_i32_4 = arith.constant 0 : i32
    %14 = vector.broadcast %c0_i32_4 : i32 to vector<1x256xi32>
    %15 = arith.cmpi ne, %13, %14 : vector<1x256xi32>
    %c0_i32_5 = arith.constant 0 : i32
    %16 = vector.broadcast %c0_i32_5 : i32 to vector<1x256xi32>
    %17 = arith.cmpi slt, %13, %16 : vector<1x256xi32>
    %c0_i32_6 = arith.constant 0 : i32
    %18 = arith.cmpi slt, %11, %c0_i32_6 : i32
    %19 = vector.broadcast %18 : i1 to vector<1x256xi1>
    %20 = vector.broadcast %19 : vector<1x256xi1> to vector<1x256xi1>
    %21 = arith.xori %17, %20 : vector<1x256xi1>
    %22 = arith.andi %21, %15 : vector<1x256xi1>
    %23 = vector.broadcast %11 : i32 to vector<1x256xi32>
    %24 = arith.addi %13, %23 : vector<1x256xi32>
    %25 = arith.select %22, %24, %13 : vector<1x256xi1>, vector<1x256xi32>
    %c1_i32_7 = arith.constant 1 : i32
    %26 = vector.broadcast %c1_i32_7 : i32 to vector<1x256xi32>
    %27 = arith.cmpi sge, %25, %26 : vector<1x256xi32>
    %c14_i32 = arith.constant 14 : i32
    %28 = vector.broadcast %c14_i32 : i32 to vector<1x256xi32>
    %29 = arith.cmpi sle, %25, %28 : vector<1x256xi32>
    %30 = vector.extract_strided_slice %8 {offsets = [0, 0], sizes = [16, 256], strides = [1, 1]} : vector<16x290xbf16> to vector<16x256xbf16>
    %cst_8 = arith.constant 0.000000e+00 : bf16
    %31 = vector.broadcast %cst_8 : bf16 to vector<16x256xbf16>
    %32 = vector.shape_cast %27 : vector<1x256xi1> to vector<1x256xi1>
    %33 = vector.broadcast %32 : vector<1x256xi1> to vector<16x256xi1>
    %34 = arith.select %33, %30, %31 : vector<16x256xi1>, vector<16x256xbf16>
    %35 = vector.extract_strided_slice %8 {offsets = [0, 1], sizes = [16, 256], strides = [1, 1]} : vector<16x290xbf16> to vector<16x256xbf16>
    %36 = vector.extract_strided_slice %8 {offsets = [0, 2], sizes = [16, 256], strides = [1, 1]} : vector<16x290xbf16> to vector<16x256xbf16>
    %cst_9 = arith.constant 0.000000e+00 : bf16
    %37 = vector.broadcast %cst_9 : bf16 to vector<16x256xbf16>
    %38 = vector.shape_cast %29 : vector<1x256xi1> to vector<1x256xi1>
    %39 = vector.broadcast %38 : vector<1x256xi1> to vector<16x256xi1>
    %40 = arith.select %39, %36, %37 : vector<16x256xi1>, vector<16x256xbf16>
    %41 = vector.extract_strided_slice %8 {offsets = [0, 16], sizes = [16, 256], strides = [1, 1]} : vector<16x290xbf16> to vector<16x256xbf16>
    %cst_10 = arith.constant 0.000000e+00 : bf16
    %42 = vector.broadcast %cst_10 : bf16 to vector<16x256xbf16>
    %43 = vector.shape_cast %27 : vector<1x256xi1> to vector<1x256xi1>
    %44 = vector.broadcast %43 : vector<1x256xi1> to vector<16x256xi1>
    %45 = arith.select %44, %41, %42 : vector<16x256xi1>, vector<16x256xbf16>
    %46 = vector.extract_strided_slice %8 {offsets = [0, 17], sizes = [16, 256], strides = [1, 1]} : vector<16x290xbf16> to vector<16x256xbf16>
    %47 = vector.extract_strided_slice %8 {offsets = [0, 18], sizes = [16, 256], strides = [1, 1]} : vector<16x290xbf16> to vector<16x256xbf16>
    %cst_11 = arith.constant 0.000000e+00 : bf16
    %48 = vector.broadcast %cst_11 : bf16 to vector<16x256xbf16>
    %49 = vector.shape_cast %29 : vector<1x256xi1> to vector<1x256xi1>
    %50 = vector.broadcast %49 : vector<1x256xi1> to vector<16x256xi1>
    %51 = arith.select %50, %47, %48 : vector<16x256xi1>, vector<16x256xbf16>
    %52 = vector.extract_strided_slice %8 {offsets = [0, 32], sizes = [16, 256], strides = [1, 1]} : vector<16x290xbf16> to vector<16x256xbf16>
    %cst_12 = arith.constant 0.000000e+00 : bf16
    %53 = vector.broadcast %cst_12 : bf16 to vector<16x256xbf16>
    %54 = vector.shape_cast %27 : vector<1x256xi1> to vector<1x256xi1>
    %55 = vector.broadcast %54 : vector<1x256xi1> to vector<16x256xi1>
    %56 = arith.select %55, %52, %53 : vector<16x256xi1>, vector<16x256xbf16>
    %57 = vector.extract_strided_slice %8 {offsets = [0, 33], sizes = [16, 256], strides = [1, 1]} : vector<16x290xbf16> to vector<16x256xbf16>
    %58 = vector.extract_strided_slice %8 {offsets = [0, 34], sizes = [16, 256], strides = [1, 1]} : vector<16x290xbf16> to vector<16x256xbf16>
    %cst_13 = arith.constant 0.000000e+00 : bf16
    %59 = vector.broadcast %cst_13 : bf16 to vector<16x256xbf16>
    %60 = vector.shape_cast %29 : vector<1x256xi1> to vector<1x256xi1>
    %61 = vector.broadcast %60 : vector<1x256xi1> to vector<16x256xi1>
    %62 = arith.select %61, %58, %59 : vector<16x256xi1>, vector<16x256xbf16>
    %63 = tpu.concatenate %34, %35, %40, %45, %46, %51, %56, %57, %62 in 0 : vector<16x256xbf16>, vector<16x256xbf16>, vector<16x256xbf16>, vector<16x256xbf16>, vector<16x256xbf16>, vector<16x256xbf16>, vector<16x256xbf16>, vector<16x256xbf16>, vector<16x256xbf16> -> vector<144x256xbf16>
    %c0_14 = arith.constant 0 : index
    %c0_15 = arith.constant 0 : index
    %64 = vector.load %arg2[%c0_14, %c0_15] : memref<8x144xbf16, #tpu.memory_space<vmem>>, vector<8x144xbf16>
    %cst_16 = arith.constant dense<0.000000e+00> : vector<8x256xf32>
    %65 = tpu.matmul %64, %63, %cst_16 {dimension_numbers = #tpu.dot_dimension_numbers<[1], [0], [0], [1], [0, 0, 1, 1], [], []>} : vector<8x144xbf16>, vector<144x256xbf16>, vector<8x256xf32> -> vector<8x256xf32>
    %c0_17 = arith.constant 0 : index
    %c0_18 = arith.constant 0 : index
    %66 = vector.load %arg3[%c0_17, %c0_18] : memref<8x1xf32, #tpu.memory_space<vmem>>, vector<8x1xf32>
    %67 = vector.broadcast %66 : vector<8x1xf32> to vector<8x256xf32>
    %68 = arith.addf %65, %67 : vector<8x256xf32>
    %69 = arith.truncf %68 : vector<8x256xf32> to vector<8x256xbf16>
    %cst_19 = arith.constant 0.000000e+00 : bf16
    %70 = vector.broadcast %cst_19 : bf16 to vector<8x17xbf16>
    %71 = tpu.concatenate %70, %69, %70 in 1 : vector<8x17xbf16>, vector<8x256xbf16>, vector<8x17xbf16> -> vector<8x290xbf16>
    %72 = tpu.iota {dimensions = array<i32: 1>} : vector<1x256xi32>
    %c16_i32_20 = arith.constant 16 : i32
    %c0_i32_21 = arith.constant 0 : i32
    %73 = arith.cmpi eq, %c16_i32_20, %c0_i32_21 : i32
    %c1_i32_22 = arith.constant 1 : i32
    %74 = arith.select %73, %c1_i32_22, %c16_i32_20 : i32
    %75 = vector.broadcast %74 : i32 to vector<1x256xi32>
    %76 = arith.remsi %72, %75 : vector<1x256xi32>
    %c0_i32_23 = arith.constant 0 : i32
    %77 = vector.broadcast %c0_i32_23 : i32 to vector<1x256xi32>
    %78 = arith.cmpi ne, %76, %77 : vector<1x256xi32>
    %c0_i32_24 = arith.constant 0 : i32
    %79 = vector.broadcast %c0_i32_24 : i32 to vector<1x256xi32>
    %80 = arith.cmpi slt, %76, %79 : vector<1x256xi32>
    %c0_i32_25 = arith.constant 0 : i32
    %81 = arith.cmpi slt, %74, %c0_i32_25 : i32
    %82 = vector.broadcast %81 : i1 to vector<1x256xi1>
    %83 = vector.broadcast %82 : vector<1x256xi1> to vector<1x256xi1>
    %84 = arith.xori %80, %83 : vector<1x256xi1>
    %85 = arith.andi %84, %78 : vector<1x256xi1>
    %86 = vector.broadcast %74 : i32 to vector<1x256xi32>
    %87 = arith.addi %76, %86 : vector<1x256xi32>
    %88 = arith.select %85, %87, %76 : vector<1x256xi1>, vector<1x256xi32>
    %c1_i32_26 = arith.constant 1 : i32
    %89 = vector.broadcast %c1_i32_26 : i32 to vector<1x256xi32>
    %90 = arith.cmpi sge, %88, %89 : vector<1x256xi32>
    %c14_i32_27 = arith.constant 14 : i32
    %91 = vector.broadcast %c14_i32_27 : i32 to vector<1x256xi32>
    %92 = arith.cmpi sle, %88, %91 : vector<1x256xi32>
    %93 = vector.extract_strided_slice %71 {offsets = [0, 0], sizes = [8, 256], strides = [1, 1]} : vector<8x290xbf16> to vector<8x256xbf16>
    %cst_28 = arith.constant 0.000000e+00 : bf16
    %94 = vector.broadcast %cst_28 : bf16 to vector<8x256xbf16>
    %95 = vector.shape_cast %90 : vector<1x256xi1> to vector<1x256xi1>
    %96 = vector.broadcast %95 : vector<1x256xi1> to vector<8x256xi1>
    %97 = arith.select %96, %93, %94 : vector<8x256xi1>, vector<8x256xbf16>
    %98 = vector.extract_strided_slice %71 {offsets = [0, 1], sizes = [8, 256], strides = [1, 1]} : vector<8x290xbf16> to vector<8x256xbf16>
    %99 = vector.extract_strided_slice %71 {offsets = [0, 2], sizes = [8, 256], strides = [1, 1]} : vector<8x290xbf16> to vector<8x256xbf16>
    %cst_29 = arith.constant 0.000000e+00 : bf16
    %100 = vector.broadcast %cst_29 : bf16 to vector<8x256xbf16>
    %101 = vector.shape_cast %92 : vector<1x256xi1> to vector<1x256xi1>
    %102 = vector.broadcast %101 : vector<1x256xi1> to vector<8x256xi1>
    %103 = arith.select %102, %99, %100 : vector<8x256xi1>, vector<8x256xbf16>
    %104 = vector.extract_strided_slice %71 {offsets = [0, 16], sizes = [8, 256], strides = [1, 1]} : vector<8x290xbf16> to vector<8x256xbf16>
    %cst_30 = arith.constant 0.000000e+00 : bf16
    %105 = vector.broadcast %cst_30 : bf16 to vector<8x256xbf16>
    %106 = vector.shape_cast %90 : vector<1x256xi1> to vector<1x256xi1>
    %107 = vector.broadcast %106 : vector<1x256xi1> to vector<8x256xi1>
    %108 = arith.select %107, %104, %105 : vector<8x256xi1>, vector<8x256xbf16>
    %109 = vector.extract_strided_slice %71 {offsets = [0, 17], sizes = [8, 256], strides = [1, 1]} : vector<8x290xbf16> to vector<8x256xbf16>
    %110 = vector.extract_strided_slice %71 {offsets = [0, 18], sizes = [8, 256], strides = [1, 1]} : vector<8x290xbf16> to vector<8x256xbf16>
    %cst_31 = arith.constant 0.000000e+00 : bf16
    %111 = vector.broadcast %cst_31 : bf16 to vector<8x256xbf16>
    %112 = vector.shape_cast %92 : vector<1x256xi1> to vector<1x256xi1>
    %113 = vector.broadcast %112 : vector<1x256xi1> to vector<8x256xi1>
    %114 = arith.select %113, %110, %111 : vector<8x256xi1>, vector<8x256xbf16>
    %115 = vector.extract_strided_slice %71 {offsets = [0, 32], sizes = [8, 256], strides = [1, 1]} : vector<8x290xbf16> to vector<8x256xbf16>
    %cst_32 = arith.constant 0.000000e+00 : bf16
    %116 = vector.broadcast %cst_32 : bf16 to vector<8x256xbf16>
    %117 = vector.shape_cast %90 : vector<1x256xi1> to vector<1x256xi1>
    %118 = vector.broadcast %117 : vector<1x256xi1> to vector<8x256xi1>
    %119 = arith.select %118, %115, %116 : vector<8x256xi1>, vector<8x256xbf16>
    %120 = vector.extract_strided_slice %71 {offsets = [0, 33], sizes = [8, 256], strides = [1, 1]} : vector<8x290xbf16> to vector<8x256xbf16>
    %121 = vector.extract_strided_slice %71 {offsets = [0, 34], sizes = [8, 256], strides = [1, 1]} : vector<8x290xbf16> to vector<8x256xbf16>
    %cst_33 = arith.constant 0.000000e+00 : bf16
    %122 = vector.broadcast %cst_33 : bf16 to vector<8x256xbf16>
    %123 = vector.shape_cast %92 : vector<1x256xi1> to vector<1x256xi1>
    %124 = vector.broadcast %123 : vector<1x256xi1> to vector<8x256xi1>
    %125 = arith.select %124, %121, %122 : vector<8x256xi1>, vector<8x256xbf16>
    %126 = tpu.concatenate %97, %98, %103, %108, %109, %114, %119, %120, %125 in 0 : vector<8x256xbf16>, vector<8x256xbf16>, vector<8x256xbf16>, vector<8x256xbf16>, vector<8x256xbf16>, vector<8x256xbf16>, vector<8x256xbf16>, vector<8x256xbf16>, vector<8x256xbf16> -> vector<72x256xbf16>
    %c0_34 = arith.constant 0 : index
    %c0_35 = arith.constant 0 : index
    %127 = vector.load %arg4[%c0_34, %c0_35] : memref<8x72xbf16, #tpu.memory_space<vmem>>, vector<8x72xbf16>
    %cst_36 = arith.constant dense<0.000000e+00> : vector<8x256xf32>
    %128 = tpu.matmul %127, %126, %cst_36 {dimension_numbers = #tpu.dot_dimension_numbers<[1], [0], [0], [1], [0, 0, 1, 1], [], []>} : vector<8x72xbf16>, vector<72x256xbf16>, vector<8x256xf32> -> vector<8x256xf32>
    %c0_37 = arith.constant 0 : index
    %c0_38 = arith.constant 0 : index
    %129 = vector.load %arg5[%c0_37, %c0_38] : memref<8x1xf32, #tpu.memory_space<vmem>>, vector<8x1xf32>
    %130 = vector.broadcast %129 : vector<8x1xf32> to vector<8x256xf32>
    %131 = arith.addf %128, %130 : vector<8x256xf32>
    %c0_39 = arith.constant 0 : index
    %c0_40 = arith.constant 0 : index
    %c0_41 = arith.constant 0 : index
    %132 = vector.load %arg6[%c0_39, %c0_40, %c0_41] : memref<1x8x1xf32, #tpu.memory_space<vmem>>, vector<1x8x1xf32>
    %133 = vector.shape_cast %132 : vector<1x8x1xf32> to vector<8x1xf32>
    %134 = vector.broadcast %133 : vector<8x1xf32> to vector<8x256xf32>
    %135 = arith.addf %131, %134 : vector<8x256xf32>
    %136 = math.tanh %135 : vector<8x256xf32>
    %c0_42 = arith.constant 0 : index
    %c0_43 = arith.constant 0 : index
    %c0_44 = arith.constant 0 : index
    %137 = vector.load %arg7[%c0_42, %c0_43, %c0_44] : memref<1x8x256xf32, #tpu.memory_space<vmem>>, vector<1x8x256xf32>
    %138 = vector.shape_cast %137 : vector<1x8x256xf32> to vector<8x256xf32>
    %139 = vector.shape_cast %136 : vector<8x256xf32> to vector<1x8x256xf32>
    tpu.vector_store %arg7[%c0_42, %c0_43, %c0_44], %139 {strides = array<i32>} : memref<1x8x256xf32, #tpu.memory_space<vmem>>, vector<1x8x256xf32>,
    return
  }
  func.func @transform_0(%arg0: i32) -> (i32, i32, i32) {
    %c0_i32 = arith.constant 0 : i32
    %c0_i32_0 = arith.constant 0 : i32
    %c0_i32_1 = arith.constant 0 : i32
    return %arg0, %c0_i32, %c0_i32_0 : i32, i32, i32
  }
  func.func @transform_1(%arg0: i32) -> (i32, i32) {
    %c0_i32 = arith.constant 0 : i32
    %c0_i32_0 = arith.constant 0 : i32
    %c0_i32_1 = arith.constant 0 : i32
    return %c0_i32, %c0_i32_0 : i32, i32
  }
  func.func @transform_2(%arg0: i32) -> (i32, i32) {
    %c0_i32 = arith.constant 0 : i32
    %c0_i32_0 = arith.constant 0 : i32
    %c0_i32_1 = arith.constant 0 : i32
    return %c0_i32, %c0_i32_0 : i32, i32
  }
  func.func @transform_3(%arg0: i32) -> (i32, i32) {
    %c0_i32 = arith.constant 0 : i32
    %c0_i32_0 = arith.constant 0 : i32
    %c0_i32_1 = arith.constant 0 : i32
    return %c0_i32, %c0_i32_0 : i32, i32
  }
  func.func @transform_4(%arg0: i32) -> (i32, i32) {
    %c0_i32 = arith.constant 0 : i32
    %c0_i32_0 = arith.constant 0 : i32
    %c0_i32_1 = arith.constant 0 : i32
    return %c0_i32, %c0_i32_0 : i32, i32
  }
  func.func @transform_5(%arg0: i32) -> (i32, i32, i32) {
    %c0_i32 = arith.constant 0 : i32
    %c0_i32_0 = arith.constant 0 : i32
    %c0_i32_1 = arith.constant 0 : i32
    return %arg0, %c0_i32, %c0_i32_0 : i32, i32, i32
  }
  func.func @transform_6(%arg0: i32) -> (i32, i32, i32) {
    %c0_i32 = arith.constant 0 : i32
    %c0_i32_0 = arith.constant 0 : i32
    %c0_i32_1 = arith.constant 0 : i32
    return %arg0, %c0_i32, %c0_i32_0 : i32, i32, i32
  }
}

module attributes {stable_mosaic.version = 11 : i64} {
  func.func @kernel(%arg0: i32, %arg1: memref<2x128xf32, #tpu.memory_space<vmem>>, %arg2: memref<128x64xbf16, #tpu.memory_space<vmem>>, %arg3: memref<1x64xf32, #tpu.memory_space<vmem>>, %arg4: memref<64x80xbf16, #tpu.memory_space<vmem>>, %arg5: memref<1x80xf32, #tpu.memory_space<vmem>>, %arg6: memref<2x80xf32, #tpu.memory_space<vmem>>) attributes {dimension_semantics = [#tpu.dimension_semantics<arbitrary>], iteration_bounds = array<i64: 1>, scalar_prefetch = 0 : i64, scratch_operands = 0 : i64, tpu.core_type = #tpu.core_type<tc>, window_params = [{pipeline_mode = #tpu.pipeline_mode<synchronous>, transform_indices = @transform_0, window_bounds = array<i64: 2, 128>}, {pipeline_mode = #tpu.pipeline_mode<synchronous>, transform_indices = @transform_1, window_bounds = array<i64: 128, 64>}, {pipeline_mode = #tpu.pipeline_mode<synchronous>, transform_indices = @transform_2, window_bounds = array<i64: 1, 64>}, {pipeline_mode = #tpu.pipeline_mode<synchronous>, transform_indices = @transform_3, window_bounds = array<i64: 64, 80>}, {pipeline_mode = #tpu.pipeline_mode<synchronous>, transform_indices = @transform_4, window_bounds = array<i64: 1, 80>}, {pipeline_mode = #tpu.pipeline_mode<synchronous>, transform_indices = @transform_5, window_bounds = array<i64: 2, 80>}]} {
    %c0 = arith.constant 0 : index
    %c0_0 = arith.constant 0 : index
    %0 = vector.load %arg1[%c0, %c0_0] : memref<2x128xf32, #tpu.memory_space<vmem>>, vector<2x128xf32>
    %c0_1 = arith.constant 0 : index
    %c0_2 = arith.constant 0 : index
    %1 = vector.load %arg2[%c0_1, %c0_2] : memref<128x64xbf16, #tpu.memory_space<vmem>>, vector<128x64xbf16>
    %c0_3 = arith.constant 0 : index
    %c0_4 = arith.constant 0 : index
    %2 = vector.load %arg3[%c0_3, %c0_4] : memref<1x64xf32, #tpu.memory_space<vmem>>, vector<1x64xf32>
    %3 = arith.truncf %0 : vector<2x128xf32> to vector<2x128xbf16>
    %cst = arith.constant dense<0.000000e+00> : vector<2x64xf32>
    %4 = tpu.matmul %3, %1, %cst {dimension_numbers = #tpu.dot_dimension_numbers<[1], [0], [0], [1], [0, 0, 1, 1], [], []>} : vector<2x128xbf16>, vector<128x64xbf16>, vector<2x64xf32> -> vector<2x64xf32>
    %5 = vector.broadcast %2 : vector<1x64xf32> to vector<2x64xf32>
    %6 = arith.addf %4, %5 : vector<2x64xf32>
    %cst_5 = arith.constant 0.000000e+00 : f32
    %7 = vector.broadcast %cst_5 : f32 to vector<2x64xf32>
    %8 = arith.cmpf oge, %6, %7 : vector<2x64xf32>
    %cst_6 = arith.constant 2.000000e-01 : f32
    %9 = vector.broadcast %cst_6 : f32 to vector<2x64xf32>
    %10 = arith.mulf %9, %6 : vector<2x64xf32>
    %11 = arith.select %8, %6, %10 : vector<2x64xi1>, vector<2x64xf32>
    %c0_7 = arith.constant 0 : index
    %c0_8 = arith.constant 0 : index
    %12 = vector.load %arg4[%c0_7, %c0_8] : memref<64x80xbf16, #tpu.memory_space<vmem>>, vector<64x80xbf16>
    %c0_9 = arith.constant 0 : index
    %c0_10 = arith.constant 0 : index
    %13 = vector.load %arg5[%c0_9, %c0_10] : memref<1x80xf32, #tpu.memory_space<vmem>>, vector<1x80xf32>
    %14 = arith.truncf %11 : vector<2x64xf32> to vector<2x64xbf16>
    %cst_11 = arith.constant dense<0.000000e+00> : vector<2x80xf32>
    %15 = tpu.matmul %14, %12, %cst_11 {dimension_numbers = #tpu.dot_dimension_numbers<[1], [0], [0], [1], [0, 0, 1, 1], [], []>} : vector<2x64xbf16>, vector<64x80xbf16>, vector<2x80xf32> -> vector<2x80xf32>
    %16 = vector.broadcast %13 : vector<1x80xf32> to vector<2x80xf32>
    %17 = arith.addf %15, %16 : vector<2x80xf32>
    %18 = math.tanh %17 : vector<2x80xf32>
    %c0_12 = arith.constant 0 : index
    %c0_13 = arith.constant 0 : index
    %19 = vector.load %arg6[%c0_12, %c0_13] : memref<2x80xf32, #tpu.memory_space<vmem>>, vector<2x80xf32>
    tpu.vector_store %arg6[%c0_12, %c0_13], %18 {strides = array<i32>} : memref<2x80xf32, #tpu.memory_space<vmem>>, vector<2x80xf32>,
    return
  }
  func.func @transform_0(%arg0: i32) -> (i32, i32) {
    %c0_i32 = arith.constant 0 : i32
    %c0_i32_0 = arith.constant 0 : i32
    %c0_i32_1 = arith.constant 0 : i32
    return %c0_i32, %c0_i32_0 : i32, i32
  }
  func.func @transform_1(%arg0: i32) -> (i32, i32) {
    %c0_i32 = arith.constant 0 : i32
    %c0_i32_0 = arith.constant 0 : i32
    %c0_i32_1 = arith.constant 0 : i32
    return %c0_i32, %c0_i32_0 : i32, i32
  }
  func.func @transform_2(%arg0: i32) -> (i32, i32) {
    %c0_i32 = arith.constant 0 : i32
    %c0_i32_0 = arith.constant 0 : i32
    %c0_i32_1 = arith.constant 0 : i32
    return %c0_i32, %c0_i32_0 : i32, i32
  }
  func.func @transform_3(%arg0: i32) -> (i32, i32) {
    %c0_i32 = arith.constant 0 : i32
    %c0_i32_0 = arith.constant 0 : i32
    %c0_i32_1 = arith.constant 0 : i32
    return %c0_i32, %c0_i32_0 : i32, i32
  }
  func.func @transform_4(%arg0: i32) -> (i32, i32) {
    %c0_i32 = arith.constant 0 : i32
    %c0_i32_0 = arith.constant 0 : i32
    %c0_i32_1 = arith.constant 0 : i32
    return %c0_i32, %c0_i32_0 : i32, i32
  }
  func.func @transform_5(%arg0: i32) -> (i32, i32) {
    %c0_i32 = arith.constant 0 : i32
    %c0_i32_0 = arith.constant 0 : i32
    %c0_i32_1 = arith.constant 0 : i32
    return %c0_i32, %c0_i32_0 : i32, i32
  }
}

</mosaic_0001>

<llo_original>
// kernel: _lambda_.7
$region0: #{_lambda_.7}
  #allocation0 [shape = 'u32[]', space=smem, size = 0x4, offset = 0x4, fixed_abs, tag = 'smem constant byte address 0x4 - core index']
  #allocation1 [shape = 'u32[144,128]{1,0:T(1,128)}', space=vmem, size = 0x12000, scoped, tag = 'internal scratch']
  %s0 = inlined_call_operand.vmem [shape: bf16[2,64,64], index: 0, kind: input, shape index: {}]
  %s1 = inlined_call_operand.vmem [shape: bf16[8,64], index: 1, kind: input, shape index: {}]
  %s2 = inlined_call_operand.vmem [shape: f32[8,1], index: 2, kind: input, shape index: {}]
  %s3 = inlined_call_operand.vmem [shape: f32[2,4,256], index: 3, kind: input, shape index: {}]
  %s4 = inlined_call_operand.vmem [shape: f32[16,4], index: 4, kind: input, shape index: {}]
  %s5 = inlined_call_operand.vmem [shape: f32[16,1], index: 5, kind: input, shape index: {}]
  %s6 = inlined_call_operand.vmem [shape: f32[2,8,64], index: 6, kind: output, shape index: {0}]
  %s7 = inlined_call_operand.vmem [shape: f32[2,16,1], index: 7, kind: output, shape index: {1}]
  %8 = xla_tuple %s6, %s7
  %s9 = sld [smem:[#allocation0]]
  $region65: #{_lambda_.7} parent=0
    _
  %s11 = ssub.s32 1, %s9
  %s12 = scalar_select 0, %s11, %s9
  loop: start=0, step=1, limit=4
  $region2: #{_lambda_.7} parent=0 // loop_pre_header
    _
  $region3: #{_lambda_.7} parent=0 // loop_header
    %s14 = sphi 0, %s18
    %p15 = scmp.ge.s32.totalorder %s14, 4
    %s24 = sphi 0, %s26
    %s27 = sphi 0, %s24
    %s28 = sphi 0, %s27
    %s44 = sphi 0, %s28
    %s48 = sphi 0, %s48
    %s50 = sphi 0, %s48
    %s51 = sphi 0, %s50
    %s65 = sphi 0, %s51
    %s69 = sphi 0, %s69
    %s71 = sphi 0, %s69
    %s72 = sphi 0, %s71
    %s86 = sphi 0, %s72
    %s92 = sphi 0, %s94
    %s95 = sphi 0, %s92
    %s96 = sphi 0, %s95
    %s112 = sphi 0, %s96
    %s116 = sphi 0, %s116
    %s118 = sphi 0, %s116
    %s119 = sphi 0, %s118
    %s133 = sphi 0, %s119
    %s137 = sphi 0, %s137
    %s139 = sphi 0, %s137
    %s140 = sphi 0, %s139
    %s154 = sphi 0, %s140
    %s160 = sphi 0, %s162
    %s163 = sphi 0, %s160
    %s164 = sphi 0, %s163
    %s180 = sphi 0, %s164
    %s186 = sphi 0, %s188
    %s189 = sphi 0, %s186
    %s190 = sphi 0, %s189
    %s206 = sphi 0, %s190
  $region4: #{_lambda_.7} parent=0 // loop_header_branch
    %17 = sbr.rel (%p15) target = $region8
  $region5: #{_lambda_.7} parent=0 // loop_body
    %s19 = ssub.s32 %s14, 1
    %s20 = ssub.s32 %s14, 2
    %s21 = sadd.s32 %s14, 1
    %s22 = ssub.s32 %s14, %s21
    %p23 = scmp.eq.s32.totalorder %s22, 0
    %s25 = sadd.s32 %s24, 1
    %s26 = scalar_select %p23, %s24, %s25
    %p29 = pneg %p23
    %p30 = scmp.eq.s32.totalorder %s14, 1
    %p31 = por %p29, %p30
    %p32 = scmp.ne.s32.totalorder %s24, %s27
    %p33 = scmp.eq.s32.totalorder %s14, 0
    %p34 = por %p32, %p33
    %p35 = scmp.ne.s32.totalorder %s24, %s27
    %p36 = scmp.eq.s32.totalorder %s19, 1
    %p37 = por %p35, %p36
    %p38 = scmp.ne.s32.totalorder %s27, %s28
    %p39 = scmp.eq.s32.totalorder %s19, 0
    %p40 = por %p38, %p39
    %p41 = scmp.ne.s32.totalorder %s27, %s28
    %p42 = scmp.eq.s32.totalorder %s20, 1
    %p43 = por %p41, %p42
    %p45 = scmp.ne.s32.totalorder %s28, %s44
    %p46 = scmp.eq.s32.totalorder %s20, 0
    %p47 = por %p45, %p46
    %s49 = sadd.s32 %s48, 1
    %p52 = scmp.eq.s32.totalorder %s14, 1
    %p53 = scmp.ne.s32.totalorder %s48, %s50
    %p54 = scmp.eq.s32.totalorder %s14, 0
    %p55 = por %p53, %p54
    %p56 = scmp.ne.s32.totalorder %s48, %s50
    %p57 = scmp.eq.s32.totalorder %s19, 1
    %p58 = por %p56, %p57
    %p59 = scmp.ne.s32.totalorder %s50, %s51
    %p60 = scmp.eq.s32.totalorder %s19, 0
    %p61 = por %p59, %p60
    %p62 = scmp.ne.s32.totalorder %s50, %s51
    %p63 = scmp.eq.s32.totalorder %s20, 1
    %p64 = por %p62, %p63
    %p66 = scmp.ne.s32.totalorder %s51, %s65
    %p67 = scmp.eq.s32.totalorder %s20, 0
    %p68 = por %p66, %p67
    %s70 = sadd.s32 %s69, 1
    %p73 = scmp.eq.s32.totalorder %s14, 1
    %p74 = scmp.ne.s32.totalorder %s69, %s71
    %p75 = scmp.eq.s32.totalorder %s14, 0
    %p76 = por %p74, %p75
    %p77 = scmp.ne.s32.totalorder %s69, %s71
    %p78 = scmp.eq.s32.totalorder %s19, 1
    %p79 = por %p77, %p78
    %p80 = scmp.ne.s32.totalorder %s71, %s72
    %p81 = scmp.eq.s32.totalorder %s19, 0
    %p82 = por %p80, %p81
    %p83 = scmp.ne.s32.totalorder %s71, %s72
    %p84 = scmp.eq.s32.totalorder %s20, 1
    %p85 = por %p83, %p84
    %p87 = scmp.ne.s32.totalorder %s72, %s86
    %p88 = scmp.eq.s32.totalorder %s20, 0
    %p89 = por %p87, %p88
    %s90 = ssub.s32 %s14, %s21
    %p91 = scmp.eq.s32.totalorder %s90, 0
    %s93 = sadd.s32 %s92, 1
    %s94 = scalar_select %p91, %s92, %s93
    %p97 = pneg %p91
    %p98 = scmp.eq.s32.totalorder %s14, 1
    %p99 = por %p97, %p98
    %p100 = scmp.ne.s32.totalorder %s92, %s95
    %p101 = scmp.eq.s32.totalorder %s14, 0
    %p102 = por %p100, %p101
    %p103 = scmp.ne.s32.totalorder %s92, %s95
    %p104 = scmp.eq.s32.totalorder %s19, 1
    %p105 = por %p103, %p104
    %p106 = scmp.ne.s32.totalorder %s95, %s96
    %p107 = scmp.eq.s32.totalorder %s19, 0
    %p108 = por %p106, %p107
    %p109 = scmp.ne.s32.totalorder %s95, %s96
    %p110 = scmp.eq.s32.totalorder %s20, 1
    %p111 = por %p109, %p110
    %p113 = scmp.ne.s32.totalorder %s96, %s112
    %p114 = scmp.eq.s32.totalorder %s20, 0
    %p115 = por %p113, %p114
    %s117 = sadd.s32 %s116, 1
    %p120 = scmp.eq.s32.totalorder %s14, 1
    %p121 = scmp.ne.s32.totalorder %s116, %s118
    %p122 = scmp.eq.s32.totalorder %s14, 0
    %p123 = por %p121, %p122
    %p124 = scmp.ne.s32.totalorder %s116, %s118
    %p125 = scmp.eq.s32.totalorder %s19, 1
    %p126 = por %p124, %p125
    %p127 = scmp.ne.s32.totalorder %s118, %s119
    %p128 = scmp.eq.s32.totalorder %s19, 0
    %p129 = por %p127, %p128
    %p130 = scmp.ne.s32.totalorder %s118, %s119
    %p131 = scmp.eq.s32.totalorder %s20, 1
    %p132 = por %p130, %p131
    %p134 = scmp.ne.s32.totalorder %s119, %s133
    %p135 = scmp.eq.s32.totalorder %s20, 0
    %p136 = por %p134, %p135
    %s138 = sadd.s32 %s137, 1
    %p141 = scmp.eq.s32.totalorder %s14, 1
    %p142 = scmp.ne.s32.totalorder %s137, %s139
    %p143 = scmp.eq.s32.totalorder %s14, 0
    %p144 = por %p142, %p143
    %p145 = scmp.ne.s32.totalorder %s137, %s139
    %p146 = scmp.eq.s32.totalorder %s19, 1
    %p147 = por %p145, %p146
    %p148 = scmp.ne.s32.totalorder %s139, %s140
    %p149 = scmp.eq.s32.totalorder %s19, 0
    %p150 = por %p148, %p149
    %p151 = scmp.ne.s32.totalorder %s139, %s140
    %p152 = scmp.eq.s32.totalorder %s20, 1
    %p153 = por %p151, %p152
    %p155 = scmp.ne.s32.totalorder %s140, %s154
    %p156 = scmp.eq.s32.totalorder %s20, 0
    %p157 = por %p155, %p156
    %s158 = ssub.s32 %s14, %s21
    %p159 = scmp.eq.s32.totalorder %s158, 0
    %s161 = sadd.s32 %s160, 1
    %s162 = scalar_select %p159, %s160, %s161
    %p165 = pneg %p159
    %p166 = scmp.eq.s32.totalorder %s14, 1
    %p167 = por %p165, %p166
    %p168 = scmp.ne.s32.totalorder %s160, %s163
    %p169 = scmp.eq.s32.totalorder %s14, 0
    %p170 = por %p168, %p169
    %p171 = scmp.ne.s32.totalorder %s160, %s163
    %p172 = scmp.eq.s32.totalorder %s19, 1
    %p173 = por %p171, %p172
    %p174 = scmp.ne.s32.totalorder %s163, %s164
    %p175 = scmp.eq.s32.totalorder %s19, 0
    %p176 = por %p174, %p175
    %p177 = scmp.ne.s32.totalorder %s163, %s164
    %p178 = scmp.eq.s32.totalorder %s20, 1
    %p179 = por %p177, %p178
    %p181 = scmp.ne.s32.totalorder %s164, %s180
    %p182 = scmp.eq.s32.totalorder %s20, 0
    %p183 = por %p181, %p182
    %s184 = ssub.s32 %s14, %s21
    %p185 = scmp.eq.s32.totalorder %s184, 0
    %s187 = sadd.s32 %s186, 1
    %s188 = scalar_select %p185, %s186, %s187
    %p191 = pneg %p185
    %p192 = scmp.eq.s32.totalorder %s14, 1
    %p193 = por %p191, %p192
    %p194 = scmp.ne.s32.totalorder %s186, %s189
    %p195 = scmp.eq.s32.totalorder %s14, 0
    %p196 = por %p194, %p195
    %p197 = scmp.ne.s32.totalorder %s186, %s189
    %p198 = scmp.eq.s32.totalorder %s19, 1
    %p199 = por %p197, %p198
    %p200 = scmp.ne.s32.totalorder %s189, %s190
    %p201 = scmp.eq.s32.totalorder %s19, 0
    %p202 = por %p200, %p201
    %p203 = scmp.ne.s32.totalorder %s189, %s190
    %p204 = scmp.eq.s32.totalorder %s20, 1
    %p205 = por %p203, %p204
    %p207 = scmp.ne.s32.totalorder %s190, %s206
    %p208 = scmp.eq.s32.totalorder %s20, 0
    %p209 = por %p207, %p208
    %p210 = scmp.le.s32.totalorder 1, %s14
    %p211 = scmp.lt.s32.totalorder %s14, 3
    %p212 = pnand %p210, %p211
    %p213 = pneg %p212
    // Predicated region
    $region9: #{_lambda_.7} parent=5 // pred_check
      _
    $region10: #{_lambda_.7} parent=5 // pred_check_branch
      %215 = sbr.rel (%p212) target = $region12
    $region11: #{_lambda_.7} parent=5 // pred_region
      %s216 = ssub.s32 %s14, 1
      // Predicated region
      $region13: #{_lambda_.7} parent=11 // pred_check
        %p217 = pneg %p61
      $region14: #{_lambda_.7} parent=11 // pred_check_branch
        %219 = sbr.rel (%p217) target = $region16
      $region15: #{_lambda_.7} parent=11 // pred_region
        _
      $region16: #{_lambda_.7} parent=11 // pred_fallthru
        _
      // Predicated region
      $region17: #{_lambda_.7} parent=11 // pred_check
        %p220 = pneg %p82
      $region18: #{_lambda_.7} parent=11 // pred_check_branch
        %222 = sbr.rel (%p220) target = $region20
      $region19: #{_lambda_.7} parent=11 // pred_region
        _
      $region20: #{_lambda_.7} parent=11 // pred_fallthru
        _
      // Predicated region
      $region21: #{_lambda_.7} parent=11 // pred_check
        %p223 = pneg %p129
      $region22: #{_lambda_.7} parent=11 // pred_check_branch
        %225 = sbr.rel (%p223) target = $region24
      $region23: #{_lambda_.7} parent=11 // pred_region
        _
      $region24: #{_lambda_.7} parent=11 // pred_fallthru
        _
      // Predicated region
      $region25: #{_lambda_.7} parent=11 // pred_check
        %p226 = pneg %p150
      $region26: #{_lambda_.7} parent=11 // pred_check_branch
        %228 = sbr.rel (%p226) target = $region28
      $region27: #{_lambda_.7} parent=11 // pred_region
        _
      $region28: #{_lambda_.7} parent=11 // pred_fallthru
        _
    $region12: #{_lambda_.7} parent=5 // pred_fallthru
      _
    %p229 = scmp.lt.s32.totalorder %s14, 2
    // Predicated region
    $region29: #{_lambda_.7} parent=5 // pred_check
      %p230 = pneg %p229
    $region30: #{_lambda_.7} parent=5 // pred_check_branch
      %232 = sbr.rel (%p230) target = $region32
    $region31: #{_lambda_.7} parent=5 // pred_region
      // Predicated region
      $region33: #{_lambda_.7} parent=31 // pred_check
        %p233 = pneg %p34
      $region34: #{_lambda_.7} parent=31 // pred_check_branch
        %235 = sbr.rel (%p233) target = $region36
      $region35: #{_lambda_.7} parent=31 // pred_region
        %p236 = scmp.lt.s32.totalorder %s14, 1
        %s237 = scalar_select %p236, %s14, 1
        %s238 = smul.addr %s237, 8
        %s239 = smul.addr %s238, 4
        %s240 = scalar_lea.vmem %s0, %s239
      $region36: #{_lambda_.7} parent=31 // pred_fallthru
        _
      // Predicated region
      $region37: #{_lambda_.7} parent=31 // pred_check
        %p241 = pneg %p102
      $region38: #{_lambda_.7} parent=31 // pred_check_branch
        %243 = sbr.rel (%p241) target = $region40
      $region39: #{_lambda_.7} parent=31 // pred_region
        %p244 = scmp.lt.s32.totalorder %s14, 1
        %s245 = scalar_select %p244, %s14, 1
        %s246 = smul.addr %s245, 2
        %s247 = smul.addr %s246, 4
        %s248 = scalar_lea.vmem %s3, %s247
      $region40: #{_lambda_.7} parent=31 // pred_fallthru
        _
    $region32: #{_lambda_.7} parent=5 // pred_fallthru
      _
    %p249 = scmp.le.s32.totalorder 1, %s14
    %p250 = scmp.lt.s32.totalorder %s14, 3
    %p251 = pnand %p249, %p250
    %p252 = pneg %p251
    // Predicated region
    $region41: #{_lambda_.7} parent=5 // pred_check
      _
    $region42: #{_lambda_.7} parent=5 // pred_check_branch
      %254 = sbr.rel (%p251) target = $region44
    $region43: #{_lambda_.7} parent=5 // pred_region
      %s255 = ssub.s32 %s14, 1
      %p256 = scmp.lt.s32.totalorder %s19, 1
      %s257 = scalar_select %p256, %s19, 1
      %s258 = smul.addr %s257, 8
      %s259 = smul.addr %s258, 4
      %s260 = scalar_lea.vmem %s0, %s259
      %p261 = pneg %p40
      %p262 = pneg %p37
      %p263 = pneg %p61
      %p264 = pneg %p58
      %p265 = pneg %p82
      %p266 = pneg %p79
      %p267 = scmp.lt.s32.totalorder %s19, 1
      %s268 = scalar_select %p267, %s19, 1
      %s269 = smul.addr %s268, 2
      %s270 = smul.addr %s269, 4
      %s271 = scalar_lea.vmem %s3, %s270
      %p272 = pneg %p108
      %p273 = pneg %p105
      %p274 = pneg %p129
      %p275 = pneg %p126
      %p276 = pneg %p150
      %p277 = pneg %p147
      %p278 = pneg %p176
      %p279 = pneg %p173
      %p280 = scmp.lt.s32.totalorder %s19, 1
      %s281 = scalar_select %p280, %s19, 1
      %s282 = smul.addr %s281, 8
      %s283 = scalar_lea.vmem %s6, %s282
      %p284 = pneg %p202
      %p285 = pneg %p199
      %p286 = scmp.lt.s32.totalorder %s19, 1
      %s287 = scalar_select %p286, %s19, 1
      %s288 = smul.addr %s287, 2
      %s289 = smul.addr %s288, 8
      %s290 = scalar_lea.vmem %s7, %s289
      %p291 = scmp.lt.s32.totalorder %s19, 1
      %s292 = scalar_select %p291, %s19, 1
      %s293 = smul.addr %s292, 8
      %s294 = smul.addr %s293, 4
      %s295 = scalar_lea.vmem %s0, %s294
      %p296 = scmp.lt.s32.totalorder %s19, 1
      %s297 = scalar_select %p296, %s19, 1
      %s298 = smul.addr %s297, 2
      %s299 = smul.addr %s298, 4
      %s300 = scalar_lea.vmem %s3, %s299
      %p301 = scmp.lt.s32.totalorder %s19, 1
      %s302 = scalar_select %p301, %s19, 1
      %s303 = smul.addr %s302, 8
      %s304 = scalar_lea.vmem %s6, %s303
      %p305 = scmp.lt.s32.totalorder %s19, 1
      %s306 = scalar_select %p305, %s19, 1
      %s307 = smul.addr %s306, 2
      %s308 = smul.addr %s307, 8
      %s309 = scalar_lea.vmem %s7, %s308
      %v311 = vld [vmem:[%s295] sm:$0xf]
      %v312 = vld [vmem:[%s295 + $0x4] sm:$0xf]
      %v313 = vld [vmem:[%s295 + $0x8] sm:$0xf]
      %v314 = vld [vmem:[%s295 + $0xc] sm:$0xf]
      %v315 = vld [vmem:[%s295 + $0x10] sm:$0xf]
      %v316 = vld [vmem:[%s295 + $0x14] sm:$0xf]
      %v317 = vld [vmem:[%s295 + $0x18] sm:$0xf]
      %v318 = vld [vmem:[%s295 + $0x1c] sm:$0xf]
      %v319 = vld [vmem:[%s1] sm:$0xf]
      %v320 = vld [vmem:[%s2] sm:$0xff]
      %322 = vset.pattern.permute.xlu0 0
      %323 = vperm.xlu0 %322, %v320
      %v324 = vpop.permute.xlu0 %323
      %v334 = vunpack.c.l.b16 %v311
      %v335 = vunpack.c.l.b16 %v312
      %v336 = vunpack.c.l.b16 %v313
      %v337 = vunpack.c.l.b16 %v314
      %v338 = vunpack.c.l.b16 %v315
      %v339 = vunpack.c.l.b16 %v316
      %v340 = vunpack.c.l.b16 %v317
      %v341 = vunpack.c.l.b16 %v318
      %v342 = vpack.c.b16 %v335, %v334
      %v343 = vpack.c.b16 %v337, %v336
      %v344 = vpack.c.b16 %v339, %v338
      %v345 = vpack.c.b16 %v341, %v340
      %vm350 = vcmask 523264
      %v352 = vsel %vm350, %v319, 0
      %354 = vmatprep.subr.bf16.mxu0 0
      %355 = vmatpush1.bf16.msra.mxu0 0
      %356 = vmatprep.subr.bf16.mxu0 0
      %357 = vmatpush1.bf16.msra.mxu0 0
      %358 = vmatprep.subr.bf16.mxu0 0
      %359 = vmatpush1.bf16.msra.mxu0 0
      %360 = vmatprep.subr.bf16.mxu0 0
      %361 = vmatpush1.bf16.msra.mxu0 0
      %362 = vmatprep.subr.bf16.mxu0 0
      %363 = vmatpush1.bf16.msra.mxu0 %v345
      %364 = vmatprep.subr.bf16.mxu0 0
      %365 = vmatpush1.bf16.msra.mxu0 %v344
      %366 = vmatprep.subr.bf16.mxu0 0
      %367 = vmatpush1.bf16.msra.mxu0 %v343
      %368 = vmatprep.subr.bf16.mxu0 0
      %369 = vmatpush1.bf16.msra.mxu0 %v342
      %370 = vmatprep.subr.bf16.mxu0 0
      %371 = vmatpush2.bf16.msra.mxu0 0
      %372 = vmatprep.subr.bf16.mxu0 0
      %373 = vmatpush2.bf16.msra.mxu0 0
      %374 = vmatprep.subr.bf16.mxu0 0
      %375 = vmatpush2.bf16.msra.mxu0 0
      %376 = vmatprep.subr.bf16.mxu0 0
      %377 = vmatpush2.bf16.msra.mxu0 0
      %378 = vmatprep.subr.bf16.mxu0 0
      %379 = vmatpush2.bf16.msra.mxu0 0
      %380 = vmatprep.subr.bf16.mxu0 0
      %381 = vmatpush2.bf16.msra.mxu0 0
      %382 = vmatprep.subr.bf16.mxu0 0
      %383 = vmatpush2.bf16.msra.mxu0 0
      %384 = vmatprep.subr.bf16.mxu0 0
      %385 = vmatpush2.bf16.msra.mxu0 0
      %386 = vmatprep.mubr.bf16.mxu0 0
      %387 = vmatmul.mubr.bf16.gmra.mxu0 %v352
      %v388 = vpop.f32.mrf.mxu0
      %v389 = vadd.f32 %v324, %v388
      %v390 = vpop.f32.mrf.mxu0
      %v391 = vpop.f32.mrf.mxu0
      %v392 = vpop.f32.mrf.mxu0
      %393 = vdwg.mxu0
      %v394 = vld [vmem:[%s300] sm:$0xff]
      %v396 = vcombine.high %v394, %v394
      %vm398 = vcmask 1043456
      %v399 = vsel %vm398, %v394, 0.0
      %v400 = vsel %vm398, %v396, 0.0
      %v401 = vadd.f32 %v399, %v400
      %402 = vadd.xlane.f32.xlu0 %v401
      %v403 = vpop.xlane.xlu0 %402
      %v404 = vrcp.pop 256.0
      %v405 = vmul.f32 %v403, %v404
      %406 = vst.msk [vmem:[%s304] sm:$0xff] %vm350, %v389
      %v407 = vld [vmem:[%s4] sm:$0xff]
      %v408 = vld [vmem:[%s4 + $0x8] sm:$0xff]
      %v409 = vld [vmem:[%s5] sm:$0xff]
      %v410 = vld [vmem:[%s5 + $0x8] sm:$0xff]
      %vm411 = vcmask 31744
      %v413 = vsel %vm411, %v407, 0
      %v416 = vsel %vm411, %v408, 0
      %v419 = vsel %vm398, %v405, 0
      %421 = vmatprep.subr.mxu0 0.0
      %422 = vmatpush1.msra.mxu0 0.0
      %423 = vmatprep.subr.mxu0 0.0
      %424 = vmatpush1.msra.mxu0 0.0
      %425 = vmatprep.subr.mxu0 0.0
      %426 = vmatpush1.msra.mxu0 0.0
      %427 = vmatprep.subr.mxu0 0.0
      %428 = vmatpush1.msra.mxu0 0.0
      %429 = vmatprep.subr.mxu0 0.0
      %430 = vmatpush1.msra.mxu0 0.0
      %431 = vmatprep.subr.mxu0 0.0
      %432 = vmatpush1.msra.mxu0 0.0
      %433 = vmatprep.subr.mxu0 0.0
      %434 = vmatpush1.msra.mxu0 0.0
      %435 = vmatprep.subr.mxu0 0.0
      %436 = vmatpush1.msra.mxu0 0.0
      %437 = vmatprep.subr.mxu0 0.0
      %438 = vmatpush1.msra.mxu0 0.0
      %439 = vmatprep.subr.mxu0 0.0
      %440 = vmatpush1.msra.mxu0 0.0
      %441 = vmatprep.subr.mxu0 0.0
      %442 = vmatpush1.msra.mxu0 0.0
      %443 = vmatprep.subr.mxu0 0.0
      %444 = vmatpush1.msra.mxu0 0.0
      %445 = vmatprep.subr.mxu0 0.0
      %446 = vmatpush1.msra.mxu0 0.0
      %447 = vmatprep.subr.mxu0 0.0
      %448 = vmatpush1.msra.mxu0 0.0
      %449 = vmatprep.subr.mxu0 0.0
      %450 = vmatpush1.msra.mxu0 0.0
      %451 = vmatprep.subr.mxu0 0.0
      %452 = vmatpush1.msra.mxu0 %v419
      %453 = vmatprep.subr.mxu0 0.0
      %454 = vmatpush2.msra.mxu0 0.0
      %455 = vmatprep.subr.mxu0 0.0
      %456 = vmatpush2.msra.mxu0 0.0
      %457 = vmatprep.subr.mxu0 0.0
      %458 = vmatpush2.msra.mxu0 0.0
      %459 = vmatprep.subr.mxu0 0.0
      %460 = vmatpush2.msra.mxu0 0.0
      %461 = vmatprep.subr.mxu0 0.0
      %462 = vmatpush2.msra.mxu0 0.0
      %463 = vmatprep.subr.mxu0 0.0
      %464 = vmatpush2.msra.mxu0 0.0
      %465 = vmatprep.subr.mxu0 0.0
      %466 = vmatpush2.msra.mxu0 0.0
      %467 = vmatprep.subr.mxu0 0.0
      %468 = vmatpush2.msra.mxu0 0.0
      %469 = vmatprep.subr.mxu0 0.0
      %470 = vmatpush2.msra.mxu0 0.0
      %471 = vmatprep.subr.mxu0 0.0
      %472 = vmatpush2.msra.mxu0 0.0
      %473 = vmatprep.subr.mxu0 0.0
      %474 = vmatpush2.msra.mxu0 0.0
      %475 = vmatprep.subr.mxu0 0.0
      %476 = vmatpush2.msra.mxu0 0.0
      %477 = vmatprep.subr.mxu0 0.0
      %478 = vmatpush2.msra.mxu0 0.0
      %479 = vmatprep.subr.mxu0 0.0
      %480 = vmatpush2.msra.mxu0 0.0
      %481 = vmatprep.subr.mxu0 0.0
      %482 = vmatpush2.msra.mxu0 0.0
      %483 = vmatprep.subr.mxu0 0.0
      %484 = vmatpush2.msra.mxu0 0.0
      %485 = vmatprep.mubr.f32.mxu0 0.0
      %486 = vmatmul.mubr.f32.gmra.mxu0 %v413
      %v487 = vpop.f32.mrf.mxu0
      %v488 = vadd.f32 %v409, %v487
      %v489 = vpop.f32.mrf.mxu0
      %490 = vmatprep.mubr.f32.mxu0 0.0
      %491 = vmatmul.mubr.f32.gmra.mxu0 %v416
      %v492 = vpop.f32.mrf.mxu0
      %v493 = vadd.f32 %v410, %v492
      %v494 = vpop.f32.mrf.mxu0
      %495 = vdwg.mxu0
      %vm496 = vcmp.gt.f32.partialorder %v488, 0.0
      %vm497 = vcmp.gt.f32.partialorder %v493, 0.0
      %v498 = vmul.f32 %v488, 1.442695
      %v499 = vpow.pop %v498
      %v500 = vmul.f32 %v493, 1.442695
      %v501 = vpow.pop %v500
      %v502 = vsub.f32 %v499, 1.0
      %v503 = vsub.f32 %v501, 1.0
      %v504 = vmul.f32 %v502, 1.6732632
      %v505 = vmul.f32 %v503, 1.6732632
      %v506 = vsel %vm496, %v488, %v504
      %v507 = vsel %vm497, %v493, %v505
      %v508 = vmul.f32 %v506, 1.050701
      %v509 = vmul.f32 %v507, 1.050701
      %vm510 = vcmask 7168
      %511 = vst.msk [vmem:[%s309] sm:$0xff] %vm510, %v508
      %512 = vst.msk [vmem:[%s309 + $0x8] sm:$0xff] %vm510, %v509
      %p513 = scmp.lt.s32.totalorder %s19, 1
      %s514 = scalar_select %p513, %s19, 1
      %s515 = smul.addr %s514, 8
      %s516 = scalar_lea.vmem %s6, %s515
      %p517 = scmp.lt.s32.totalorder %s19, 1
      %s518 = scalar_select %p517, %s19, 1
      %s519 = smul.addr %s518, 2
      %s520 = smul.addr %s519, 8
      %s521 = scalar_lea.vmem %s7, %s520
      // Predicated region
      $region45: #{_lambda_.7} parent=43 // pred_check
        %p522 = pneg %p173
      $region46: #{_lambda_.7} parent=43 // pred_check_branch
        %524 = sbr.rel (%p522) target = $region48
      $region47: #{_lambda_.7} parent=43 // pred_region
        _
      $region48: #{_lambda_.7} parent=43 // pred_fallthru
        _
      // Predicated region
      $region49: #{_lambda_.7} parent=43 // pred_check
        %p525 = pneg %p199
      $region50: #{_lambda_.7} parent=43 // pred_check_branch
        %527 = sbr.rel (%p525) target = $region52
      $region51: #{_lambda_.7} parent=43 // pred_region
        _
      $region52: #{_lambda_.7} parent=43 // pred_fallthru
        _
    $region44: #{_lambda_.7} parent=5 // pred_fallthru
      _
    %p528 = scmp.le.s32.totalorder 2, %s14
    // Predicated region
    $region53: #{_lambda_.7} parent=5 // pred_check
      %p529 = pneg %p528
    $region54: #{_lambda_.7} parent=5 // pred_check_branch
      %531 = sbr.rel (%p529) target = $region56
    $region55: #{_lambda_.7} parent=5 // pred_region
      %s532 = ssub.s32 %s14, 2
      // Predicated region
      $region57: #{_lambda_.7} parent=55 // pred_check
        %p533 = pneg %p179
      $region58: #{_lambda_.7} parent=55 // pred_check_branch
        %535 = sbr.rel (%p533) target = $region60
      $region59: #{_lambda_.7} parent=55 // pred_region
        %p536 = scmp.lt.s32.totalorder %s20, 1
        %s537 = scalar_select %p536, %s20, 1
        %s538 = smul.addr %s537, 8
        %s539 = scalar_lea.vmem %s6, %s538
      $region60: #{_lambda_.7} parent=55 // pred_fallthru
        _
      // Predicated region
      $region61: #{_lambda_.7} parent=55 // pred_check
        %p540 = pneg %p205
      $region62: #{_lambda_.7} parent=55 // pred_check_branch
        %542 = sbr.rel (%p540) target = $region64
      $region63: #{_lambda_.7} parent=55 // pred_region
        %p543 = scmp.lt.s32.totalorder %s20, 1
        %s544 = scalar_select %p543, %s20, 1
        %s545 = smul.addr %s544, 2
        %s546 = smul.addr %s545, 8
        %s547 = scalar_lea.vmem %s7, %s546
      $region64: #{_lambda_.7} parent=55 // pred_fallthru
        _
    $region56: #{_lambda_.7} parent=5 // pred_fallthru
      _
  $region6: #{_lambda_.7} parent=0 // loop_footer
    %s18 = sadd.s32 1, %s14
  $region7: #{_lambda_.7} parent=0 // loop_footer_branch
    %13 = sbr.rel target = $region3
  $region8: #{_lambda_.7} parent=0 // loop_exit
    _

// kernel: _lambda_.8
$region0: #{_lambda_.8}
  #allocation0 [shape = 'u32[]', space=smem, size = 0x4, offset = 0x4, fixed_abs, tag = 'smem constant byte address 0x4 - core index']
  #allocation1 [shape = 'u32[144,128]{1,0:T(1,128)}', space=vmem, size = 0x12000, scoped, tag = 'internal scratch']
  %s0 = inlined_call_operand.vmem [shape: bf16[2,128,16], index: 0, kind: input, shape index: {}]
  %s1 = inlined_call_operand.vmem [shape: bf16[16,128], index: 1, kind: input, shape index: {}]
  %s2 = inlined_call_operand.vmem [shape: f32[16,1], index: 2, kind: input, shape index: {}]
  %s3 = inlined_call_operand.vmem [shape: f32[2,16,1], index: 3, kind: input, shape index: {}]
  %s4 = inlined_call_operand.vmem [shape: f32[16,1], index: 4, kind: input, shape index: {}]
  %s5 = inlined_call_operand.vmem [shape: f32[16,1], index: 5, kind: input, shape index: {}]
  %s6 = inlined_call_operand.vmem [shape: f32[32,16], index: 6, kind: input, shape index: {}]
  %s7 = inlined_call_operand.vmem [shape: f32[2,32,1], index: 7, kind: input, shape index: {}]
  %s8 = inlined_call_operand.vmem [shape: f32[32,1], index: 8, kind: input, shape index: {}]
  %s9 = inlined_call_operand.vmem [shape: f32[2,16,16], index: 9, kind: output, shape index: {0}]
  %s10 = inlined_call_operand.vmem [shape: f32[2,32,1], index: 10, kind: output, shape index: {1}]
  %11 = xla_tuple %s9, %s10
  %s12 = sld [smem:[#allocation0]]
  $region77: #{_lambda_.8} parent=0
    _
  %s14 = ssub.s32 1, %s12
  %s15 = scalar_select 0, %s14, %s12
  loop: start=0, step=1, limit=4
  $region2: #{_lambda_.8} parent=0 // loop_pre_header
    _
  $region3: #{_lambda_.8} parent=0 // loop_header
    %s17 = sphi 0, %s21
    %p18 = scmp.ge.s32.totalorder %s17, 4
    %s27 = sphi 0, %s29
    %s30 = sphi 0, %s27
    %s31 = sphi 0, %s30
    %s47 = sphi 0, %s31
    %s51 = sphi 0, %s51
    %s53 = sphi 0, %s51
    %s54 = sphi 0, %s53
    %s68 = sphi 0, %s54
    %s72 = sphi 0, %s72
    %s74 = sphi 0, %s72
    %s75 = sphi 0, %s74
    %s89 = sphi 0, %s75
    %s95 = sphi 0, %s97
    %s98 = sphi 0, %s95
    %s99 = sphi 0, %s98
    %s115 = sphi 0, %s99
    %s119 = sphi 0, %s119
    %s121 = sphi 0, %s119
    %s122 = sphi 0, %s121
    %s136 = sphi 0, %s122
    %s140 = sphi 0, %s140
    %s142 = sphi 0, %s140
    %s143 = sphi 0, %s142
    %s157 = sphi 0, %s143
    %s161 = sphi 0, %s161
    %s163 = sphi 0, %s161
    %s164 = sphi 0, %s163
    %s178 = sphi 0, %s164
    %s184 = sphi 0, %s186
    %s187 = sphi 0, %s184
    %s188 = sphi 0, %s187
    %s204 = sphi 0, %s188
    %s208 = sphi 0, %s208
    %s210 = sphi 0, %s208
    %s211 = sphi 0, %s210
    %s225 = sphi 0, %s211
    %s231 = sphi 0, %s233
    %s234 = sphi 0, %s231
    %s235 = sphi 0, %s234
    %s251 = sphi 0, %s235
    %s257 = sphi 0, %s259
    %s260 = sphi 0, %s257
    %s261 = sphi 0, %s260
    %s277 = sphi 0, %s261
  $region4: #{_lambda_.8} parent=0 // loop_header_branch
    %20 = sbr.rel (%p18) target = $region8
  $region5: #{_lambda_.8} parent=0 // loop_body
    %s22 = ssub.s32 %s17, 1
    %s23 = ssub.s32 %s17, 2
    %s24 = sadd.s32 %s17, 1
    %s25 = ssub.s32 %s17, %s24
    %p26 = scmp.eq.s32.totalorder %s25, 0
    %s28 = sadd.s32 %s27, 1
    %s29 = scalar_select %p26, %s27, %s28
    %p32 = pneg %p26
    %p33 = scmp.eq.s32.totalorder %s17, 1
    %p34 = por %p32, %p33
    %p35 = scmp.ne.s32.totalorder %s27, %s30
    %p36 = scmp.eq.s32.totalorder %s17, 0
    %p37 = por %p35, %p36
    %p38 = scmp.ne.s32.totalorder %s27, %s30
    %p39 = scmp.eq.s32.totalorder %s22, 1
    %p40 = por %p38, %p39
    %p41 = scmp.ne.s32.totalorder %s30, %s31
    %p42 = scmp.eq.s32.totalorder %s22, 0
    %p43 = por %p41, %p42
    %p44 = scmp.ne.s32.totalorder %s30, %s31
    %p45 = scmp.eq.s32.totalorder %s23, 1
    %p46 = por %p44, %p45
    %p48 = scmp.ne.s32.totalorder %s31, %s47
    %p49 = scmp.eq.s32.totalorder %s23, 0
    %p50 = por %p48, %p49
    %s52 = sadd.s32 %s51, 1
    %p55 = scmp.eq.s32.totalorder %s17, 1
    %p56 = scmp.ne.s32.totalorder %s51, %s53
    %p57 = scmp.eq.s32.totalorder %s17, 0
    %p58 = por %p56, %p57
    %p59 = scmp.ne.s32.totalorder %s51, %s53
    %p60 = scmp.eq.s32.totalorder %s22, 1
    %p61 = por %p59, %p60
    %p62 = scmp.ne.s32.totalorder %s53, %s54
    %p63 = scmp.eq.s32.totalorder %s22, 0
    %p64 = por %p62, %p63
    %p65 = scmp.ne.s32.totalorder %s53, %s54
    %p66 = scmp.eq.s32.totalorder %s23, 1
    %p67 = por %p65, %p66
    %p69 = scmp.ne.s32.totalorder %s54, %s68
    %p70 = scmp.eq.s32.totalorder %s23, 0
    %p71 = por %p69, %p70
    %s73 = sadd.s32 %s72, 1
    %p76 = scmp.eq.s32.totalorder %s17, 1
    %p77 = scmp.ne.s32.totalorder %s72, %s74
    %p78 = scmp.eq.s32.totalorder %s17, 0
    %p79 = por %p77, %p78
    %p80 = scmp.ne.s32.totalorder %s72, %s74
    %p81 = scmp.eq.s32.totalorder %s22, 1
    %p82 = por %p80, %p81
    %p83 = scmp.ne.s32.totalorder %s74, %s75
    %p84 = scmp.eq.s32.totalorder %s22, 0
    %p85 = por %p83, %p84
    %p86 = scmp.ne.s32.totalorder %s74, %s75
    %p87 = scmp.eq.s32.totalorder %s23, 1
    %p88 = por %p86, %p87
    %p90 = scmp.ne.s32.totalorder %s75, %s89
    %p91 = scmp.eq.s32.totalorder %s23, 0
    %p92 = por %p90, %p91
    %s93 = ssub.s32 %s17, %s24
    %p94 = scmp.eq.s32.totalorder %s93, 0
    %s96 = sadd.s32 %s95, 1
    %s97 = scalar_select %p94, %s95, %s96
    %p100 = pneg %p94
    %p101 = scmp.eq.s32.totalorder %s17, 1
    %p102 = por %p100, %p101
    %p103 = scmp.ne.s32.totalorder %s95, %s98
    %p104 = scmp.eq.s32.totalorder %s17, 0
    %p105 = por %p103, %p104
    %p106 = scmp.ne.s32.totalorder %s95, %s98
    %p107 = scmp.eq.s32.totalorder %s22, 1
    %p108 = por %p106, %p107
    %p109 = scmp.ne.s32.totalorder %s98, %s99
    %p110 = scmp.eq.s32.totalorder %s22, 0
    %p111 = por %p109, %p110
    %p112 = scmp.ne.s32.totalorder %s98, %s99
    %p113 = scmp.eq.s32.totalorder %s23, 1
    %p114 = por %p112, %p113
    %p116 = scmp.ne.s32.totalorder %s99, %s115
    %p117 = scmp.eq.s32.totalorder %s23, 0
    %p118 = por %p116, %p117
    %s120 = sadd.s32 %s119, 1
    %p123 = scmp.eq.s32.totalorder %s17, 1
    %p124 = scmp.ne.s32.totalorder %s119, %s121
    %p125 = scmp.eq.s32.totalorder %s17, 0
    %p126 = por %p124, %p125
    %p127 = scmp.ne.s32.totalorder %s119, %s121
    %p128 = scmp.eq.s32.totalorder %s22, 1
    %p129 = por %p127, %p128
    %p130 = scmp.ne.s32.totalorder %s121, %s122
    %p131 = scmp.eq.s32.totalorder %s22, 0
    %p132 = por %p130, %p131
    %p133 = scmp.ne.s32.totalorder %s121, %s122
    %p134 = scmp.eq.s32.totalorder %s23, 1
    %p135 = por %p133, %p134
    %p137 = scmp.ne.s32.totalorder %s122, %s136
    %p138 = scmp.eq.s32.totalorder %s23, 0
    %p139 = por %p137, %p138
    %s141 = sadd.s32 %s140, 1
    %p144 = scmp.eq.s32.totalorder %s17, 1
    %p145 = scmp.ne.s32.totalorder %s140, %s142
    %p146 = scmp.eq.s32.totalorder %s17, 0
    %p147 = por %p145, %p146
    %p148 = scmp.ne.s32.totalorder %s140, %s142
    %p149 = scmp.eq.s32.totalorder %s22, 1
    %p150 = por %p148, %p149
    %p151 = scmp.ne.s32.totalorder %s142, %s143
    %p152 = scmp.eq.s32.totalorder %s22, 0
    %p153 = por %p151, %p152
    %p154 = scmp.ne.s32.totalorder %s142, %s143
    %p155 = scmp.eq.s32.totalorder %s23, 1
    %p156 = por %p154, %p155
    %p158 = scmp.ne.s32.totalorder %s143, %s157
    %p159 = scmp.eq.s32.totalorder %s23, 0
    %p160 = por %p158, %p159
    %s162 = sadd.s32 %s161, 1
    %p165 = scmp.eq.s32.totalorder %s17, 1
    %p166 = scmp.ne.s32.totalorder %s161, %s163
    %p167 = scmp.eq.s32.totalorder %s17, 0
    %p168 = por %p166, %p167
    %p169 = scmp.ne.s32.totalorder %s161, %s163
    %p170 = scmp.eq.s32.totalorder %s22, 1
    %p171 = por %p169, %p170
    %p172 = scmp.ne.s32.totalorder %s163, %s164
    %p173 = scmp.eq.s32.totalorder %s22, 0
    %p174 = por %p172, %p173
    %p175 = scmp.ne.s32.totalorder %s163, %s164
    %p176 = scmp.eq.s32.totalorder %s23, 1
    %p177 = por %p175, %p176
    %p179 = scmp.ne.s32.totalorder %s164, %s178
    %p180 = scmp.eq.s32.totalorder %s23, 0
    %p181 = por %p179, %p180
    %s182 = ssub.s32 %s17, %s24
    %p183 = scmp.eq.s32.totalorder %s182, 0
    %s185 = sadd.s32 %s184, 1
    %s186 = scalar_select %p183, %s184, %s185
    %p189 = pneg %p183
    %p190 = scmp.eq.s32.totalorder %s17, 1
    %p191 = por %p189, %p190
    %p192 = scmp.ne.s32.totalorder %s184, %s187
    %p193 = scmp.eq.s32.totalorder %s17, 0
    %p194 = por %p192, %p193
    %p195 = scmp.ne.s32.totalorder %s184, %s187
    %p196 = scmp.eq.s32.totalorder %s22, 1
    %p197 = por %p195, %p196
    %p198 = scmp.ne.s32.totalorder %s187, %s188
    %p199 = scmp.eq.s32.totalorder %s22, 0
    %p200 = por %p198, %p199
    %p201 = scmp.ne.s32.totalorder %s187, %s188
    %p202 = scmp.eq.s32.totalorder %s23, 1
    %p203 = por %p201, %p202
    %p205 = scmp.ne.s32.totalorder %s188, %s204
    %p206 = scmp.eq.s32.totalorder %s23, 0
    %p207 = por %p205, %p206
    %s209 = sadd.s32 %s208, 1
    %p212 = scmp.eq.s32.totalorder %s17, 1
    %p213 = scmp.ne.s32.totalorder %s208, %s210
    %p214 = scmp.eq.s32.totalorder %s17, 0
    %p215 = por %p213, %p214
    %p216 = scmp.ne.s32.totalorder %s208, %s210
    %p217 = scmp.eq.s32.totalorder %s22, 1
    %p218 = por %p216, %p217
    %p219 = scmp.ne.s32.totalorder %s210, %s211
    %p220 = scmp.eq.s32.totalorder %s22, 0
    %p221 = por %p219, %p220
    %p222 = scmp.ne.s32.totalorder %s210, %s211
    %p223 = scmp.eq.s32.totalorder %s23, 1
    %p224 = por %p222, %p223
    %p226 = scmp.ne.s32.totalorder %s211, %s225
    %p227 = scmp.eq.s32.totalorder %s23, 0
    %p228 = por %p226, %p227
    %s229 = ssub.s32 %s17, %s24
    %p230 = scmp.eq.s32.totalorder %s229, 0
    %s232 = sadd.s32 %s231, 1
    %s233 = scalar_select %p230, %s231, %s232
    %p236 = pneg %p230
    %p237 = scmp.eq.s32.totalorder %s17, 1
    %p238 = por %p236, %p237
    %p239 = scmp.ne.s32.totalorder %s231, %s234
    %p240 = scmp.eq.s32.totalorder %s17, 0
    %p241 = por %p239, %p240
    %p242 = scmp.ne.s32.totalorder %s231, %s234
    %p243 = scmp.eq.s32.totalorder %s22, 1
    %p244 = por %p242, %p243
    %p245 = scmp.ne.s32.totalorder %s234, %s235
    %p246 = scmp.eq.s32.totalorder %s22, 0
    %p247 = por %p245, %p246
    %p248 = scmp.ne.s32.totalorder %s234, %s235
    %p249 = scmp.eq.s32.totalorder %s23, 1
    %p250 = por %p248, %p249
    %p252 = scmp.ne.s32.totalorder %s235, %s251
    %p253 = scmp.eq.s32.totalorder %s23, 0
    %p254 = por %p252, %p253
    %s255 = ssub.s32 %s17, %s24
    %p256 = scmp.eq.s32.totalorder %s255, 0
    %s258 = sadd.s32 %s257, 1
    %s259 = scalar_select %p256, %s257, %s258
    %p262 = pneg %p256
    %p263 = scmp.eq.s32.totalorder %s17, 1
    %p264 = por %p262, %p263
    %p265 = scmp.ne.s32.totalorder %s257, %s260
    %p266 = scmp.eq.s32.totalorder %s17, 0
    %p267 = por %p265, %p266
    %p268 = scmp.ne.s32.totalorder %s257, %s260
    %p269 = scmp.eq.s32.totalorder %s22, 1
    %p270 = por %p268, %p269
    %p271 = scmp.ne.s32.totalorder %s260, %s261
    %p272 = scmp.eq.s32.totalorder %s22, 0
    %p273 = por %p271, %p272
    %p274 = scmp.ne.s32.totalorder %s260, %s261
    %p275 = scmp.eq.s32.totalorder %s23, 1
    %p276 = por %p274, %p275
    %p278 = scmp.ne.s32.totalorder %s261, %s277
    %p279 = scmp.eq.s32.totalorder %s23, 0
    %p280 = por %p278, %p279
    %p281 = scmp.le.s32.totalorder 1, %s17
    %p282 = scmp.lt.s32.totalorder %s17, 3
    %p283 = pnand %p281, %p282
    %p284 = pneg %p283
    // Predicated region
    $region9: #{_lambda_.8} parent=5 // pred_check
      _
    $region10: #{_lambda_.8} parent=5 // pred_check_branch
      %286 = sbr.rel (%p283) target = $region12
    $region11: #{_lambda_.8} parent=5 // pred_region
      %s287 = ssub.s32 %s17, 1
      // Predicated region
      $region13: #{_lambda_.8} parent=11 // pred_check
        %p288 = pneg %p64
      $region14: #{_lambda_.8} parent=11 // pred_check_branch
        %290 = sbr.rel (%p288) target = $region16
      $region15: #{_lambda_.8} parent=11 // pred_region
        _
      $region16: #{_lambda_.8} parent=11 // pred_fallthru
        _
      // Predicated region
      $region17: #{_lambda_.8} parent=11 // pred_check
        %p291 = pneg %p85
      $region18: #{_lambda_.8} parent=11 // pred_check_branch
        %293 = sbr.rel (%p291) target = $region20
      $region19: #{_lambda_.8} parent=11 // pred_region
        _
      $region20: #{_lambda_.8} parent=11 // pred_fallthru
        _
      // Predicated region
      $region21: #{_lambda_.8} parent=11 // pred_check
        %p294 = pneg %p132
      $region22: #{_lambda_.8} parent=11 // pred_check_branch
        %296 = sbr.rel (%p294) target = $region24
      $region23: #{_lambda_.8} parent=11 // pred_region
        _
      $region24: #{_lambda_.8} parent=11 // pred_fallthru
        _
      // Predicated region
      $region25: #{_lambda_.8} parent=11 // pred_check
        %p297 = pneg %p153
      $region26: #{_lambda_.8} parent=11 // pred_check_branch
        %299 = sbr.rel (%p297) target = $region28
      $region27: #{_lambda_.8} parent=11 // pred_region
        _
      $region28: #{_lambda_.8} parent=11 // pred_fallthru
        _
      // Predicated region
      $region29: #{_lambda_.8} parent=11 // pred_check
        %p300 = pneg %p174
      $region30: #{_lambda_.8} parent=11 // pred_check_branch
        %302 = sbr.rel (%p300) target = $region32
      $region31: #{_lambda_.8} parent=11 // pred_region
        _
      $region32: #{_lambda_.8} parent=11 // pred_fallthru
        _
      // Predicated region
      $region33: #{_lambda_.8} parent=11 // pred_check
        %p303 = pneg %p221
      $region34: #{_lambda_.8} parent=11 // pred_check_branch
        %305 = sbr.rel (%p303) target = $region36
      $region35: #{_lambda_.8} parent=11 // pred_region
        _
      $region36: #{_lambda_.8} parent=11 // pred_fallthru
        _
    $region12: #{_lambda_.8} parent=5 // pred_fallthru
      _
    %p306 = scmp.lt.s32.totalorder %s17, 2
    // Predicated region
    $region37: #{_lambda_.8} parent=5 // pred_check
      %p307 = pneg %p306
    $region38: #{_lambda_.8} parent=5 // pred_check_branch
      %309 = sbr.rel (%p307) target = $region40
    $region39: #{_lambda_.8} parent=5 // pred_region
      // Predicated region
      $region41: #{_lambda_.8} parent=39 // pred_check
        %p310 = pneg %p37
      $region42: #{_lambda_.8} parent=39 // pred_check_branch
        %312 = sbr.rel (%p310) target = $region44
      $region43: #{_lambda_.8} parent=39 // pred_region
        %p313 = scmp.lt.s32.totalorder %s17, 1
        %s314 = scalar_select %p313, %s17, 1
        %s315 = smul.addr %s314, 16
        %s316 = smul.addr %s315, 4
        %s317 = scalar_lea.vmem %s0, %s316
      $region44: #{_lambda_.8} parent=39 // pred_fallthru
        _
      // Predicated region
      $region45: #{_lambda_.8} parent=39 // pred_check
        %p318 = pneg %p105
      $region46: #{_lambda_.8} parent=39 // pred_check_branch
        %320 = sbr.rel (%p318) target = $region48
      $region47: #{_lambda_.8} parent=39 // pred_region
        %p321 = scmp.lt.s32.totalorder %s17, 1
        %s322 = scalar_select %p321, %s17, 1
        %s323 = smul.addr %s322, 2
        %s324 = smul.addr %s323, 8
        %s325 = scalar_lea.vmem %s3, %s324
      $region48: #{_lambda_.8} parent=39 // pred_fallthru
        _
      // Predicated region
      $region49: #{_lambda_.8} parent=39 // pred_check
        %p326 = pneg %p194
      $region50: #{_lambda_.8} parent=39 // pred_check_branch
        %328 = sbr.rel (%p326) target = $region52
      $region51: #{_lambda_.8} parent=39 // pred_region
        %p329 = scmp.lt.s32.totalorder %s17, 1
        %s330 = scalar_select %p329, %s17, 1
        %s331 = smul.addr %s330, 4
        %s332 = smul.addr %s331, 8
        %s333 = scalar_lea.vmem %s7, %s332
      $region52: #{_lambda_.8} parent=39 // pred_fallthru
        _
    $region40: #{_lambda_.8} parent=5 // pred_fallthru
      _
    %p334 = scmp.le.s32.totalorder 1, %s17
    %p335 = scmp.lt.s32.totalorder %s17, 3
    %p336 = pnand %p334, %p335
    %p337 = pneg %p336
    // Predicated region
    $region53: #{_lambda_.8} parent=5 // pred_check
      _
    $region54: #{_lambda_.8} parent=5 // pred_check_branch
      %339 = sbr.rel (%p336) target = $region56
    $region55: #{_lambda_.8} parent=5 // pred_region
      %s340 = ssub.s32 %s17, 1
      %p341 = scmp.lt.s32.totalorder %s22, 1
      %s342 = scalar_select %p341, %s22, 1
      %s343 = smul.addr %s342, 16
      %s344 = smul.addr %s343, 4
      %s345 = scalar_lea.vmem %s0, %s344
      %p346 = pneg %p43
      %p347 = pneg %p40
      %p348 = pneg %p64
      %p349 = pneg %p61
      %p350 = pneg %p85
      %p351 = pneg %p82
      %p352 = scmp.lt.s32.totalorder %s22, 1
      %s353 = scalar_select %p352, %s22, 1
      %s354 = smul.addr %s353, 2
      %s355 = smul.addr %s354, 8
      %s356 = scalar_lea.vmem %s3, %s355
      %p357 = pneg %p111
      %p358 = pneg %p108
      %p359 = pneg %p132
      %p360 = pneg %p129
      %p361 = pneg %p153
      %p362 = pneg %p150
      %p363 = pneg %p174
      %p364 = pneg %p171
      %p365 = scmp.lt.s32.totalorder %s22, 1
      %s366 = scalar_select %p365, %s22, 1
      %s367 = smul.addr %s366, 4
      %s368 = smul.addr %s367, 8
      %s369 = scalar_lea.vmem %s7, %s368
      %p370 = pneg %p200
      %p371 = pneg %p197
      %p372 = pneg %p221
      %p373 = pneg %p218
      %p374 = pneg %p247
      %p375 = pneg %p244
      %p376 = scmp.lt.s32.totalorder %s22, 1
      %s377 = scalar_select %p376, %s22, 1
      %s378 = smul.addr %s377, 2
      %s379 = smul.addr %s378, 8
      %s380 = scalar_lea.vmem %s9, %s379
      %p381 = pneg %p273
      %p382 = pneg %p270
      %p383 = scmp.lt.s32.totalorder %s22, 1
      %s384 = scalar_select %p383, %s22, 1
      %s385 = smul.addr %s384, 4
      %s386 = smul.addr %s385, 8
      %s387 = scalar_lea.vmem %s10, %s386
      %p388 = scmp.lt.s32.totalorder %s22, 1
      %s389 = scalar_select %p388, %s22, 1
      %s390 = smul.addr %s389, 16
      %s391 = smul.addr %s390, 4
      %s392 = scalar_lea.vmem %s0, %s391
      %p393 = scmp.lt.s32.totalorder %s22, 1
      %s394 = scalar_select %p393, %s22, 1
      %s395 = smul.addr %s394, 2
      %s396 = smul.addr %s395, 8
      %s397 = scalar_lea.vmem %s3, %s396
      %p398 = scmp.lt.s32.totalorder %s22, 1
      %s399 = scalar_select %p398, %s22, 1
      %s400 = smul.addr %s399, 4
      %s401 = smul.addr %s400, 8
      %s402 = scalar_lea.vmem %s7, %s401
      %p403 = scmp.lt.s32.totalorder %s22, 1
      %s404 = scalar_select %p403, %s22, 1
      %s405 = smul.addr %s404, 2
      %s406 = smul.addr %s405, 8
      %s407 = scalar_lea.vmem %s9, %s406
      %p408 = scmp.lt.s32.totalorder %s22, 1
      %s409 = scalar_select %p408, %s22, 1
      %s410 = smul.addr %s409, 4
      %s411 = smul.addr %s410, 8
      %s412 = scalar_lea.vmem %s10, %s411
      %v415 = vld [vmem:[%s392] sm:$0xf]
      %v416 = vld [vmem:[%s392 + $0x4] sm:$0xf]
      %v417 = vld [vmem:[%s392 + $0x8] sm:$0xf]
      %v418 = vld [vmem:[%s392 + $0xc] sm:$0xf]
      %v419 = vld [vmem:[%s392 + $0x10] sm:$0xf]
      %v420 = vld [vmem:[%s392 + $0x14] sm:$0xf]
      %v421 = vld [vmem:[%s392 + $0x18] sm:$0xf]
      %v422 = vld [vmem:[%s392 + $0x1c] sm:$0xf]
      %v423 = vld [vmem:[%s392 + $0x20] sm:$0xf]
      %v424 = vld [vmem:[%s392 + $0x24] sm:$0xf]
      %v425 = vld [vmem:[%s392 + $0x28] sm:$0xf]
      %v426 = vld [vmem:[%s392 + $0x2c] sm:$0xf]
      %v427 = vld [vmem:[%s392 + $0x30] sm:$0xf]
      %v428 = vld [vmem:[%s392 + $0x34] sm:$0xf]
      %v429 = vld [vmem:[%s392 + $0x38] sm:$0xf]
      %v430 = vld [vmem:[%s392 + $0x3c] sm:$0xf]
      %vm431 = vcmp.ge.bf16.partialorder %v415, 0
      %vm432 = vcmp.ge.bf16.partialorder %v416, 0
      %vm433 = vcmp.ge.bf16.partialorder %v417, 0
      %vm434 = vcmp.ge.bf16.partialorder %v418, 0
      %vm435 = vcmp.ge.bf16.partialorder %v419, 0
      %vm436 = vcmp.ge.bf16.partialorder %v420, 0
      %vm437 = vcmp.ge.bf16.partialorder %v421, 0
      %vm438 = vcmp.ge.bf16.partialorder %v422, 0
      %vm439 = vcmp.ge.bf16.partialorder %v423, 0
      %vm440 = vcmp.ge.bf16.partialorder %v424, 0
      %vm441 = vcmp.ge.bf16.partialorder %v425, 0
      %vm442 = vcmp.ge.bf16.partialorder %v426, 0
      %vm443 = vcmp.ge.bf16.partialorder %v427, 0
      %vm444 = vcmp.ge.bf16.partialorder %v428, 0
      %vm445 = vcmp.ge.bf16.partialorder %v429, 0
      %vm446 = vcmp.ge.bf16.partialorder %v430, 0
      %v447 = vmul.bf16 %v415, 1045249613
      %v448 = vmul.bf16 %v416, 1045249613
      %v449 = vmul.bf16 %v417, 1045249613
      %v450 = vmul.bf16 %v418, 1045249613
      %v451 = vmul.bf16 %v419, 1045249613
      %v452 = vmul.bf16 %v420, 1045249613
      %v453 = vmul.bf16 %v421, 1045249613
      %v454 = vmul.bf16 %v422, 1045249613
      %v455 = vmul.bf16 %v423, 1045249613
      %v456 = vmul.bf16 %v424, 1045249613
      %v457 = vmul.bf16 %v425, 1045249613
      %v458 = vmul.bf16 %v426, 1045249613
      %v459 = vmul.bf16 %v427, 1045249613
      %v460 = vmul.bf16 %v428, 1045249613
      %v461 = vmul.bf16 %v429, 1045249613
      %v462 = vmul.bf16 %v430, 1045249613
      %v463 = vsel %vm431, %v415, %v447
      %v464 = vsel %vm432, %v416, %v448
      %v465 = vsel %vm433, %v417, %v449
      %v466 = vsel %vm434, %v418, %v450
      %v467 = vsel %vm435, %v419, %v451
      %v468 = vsel %vm436, %v420, %v452
      %v469 = vsel %vm437, %v421, %v453
      %v470 = vsel %vm438, %v422, %v454
      %v471 = vsel %vm439, %v423, %v455
      %v472 = vsel %vm440, %v424, %v456
      %v473 = vsel %vm441, %v425, %v457
      %v474 = vsel %vm442, %v426, %v458
      %v475 = vsel %vm443, %v427, %v459
      %v476 = vsel %vm444, %v428, %v460
      %v477 = vsel %vm445, %v429, %v461
      %v478 = vsel %vm446, %v430, %v462
      %v479 = vld [vmem:[%s1] sm:$0xf]
      %v480 = vld [vmem:[%s1 + $0x4] sm:$0xf]
      %v481 = vld [vmem:[%s2] sm:$0xff]
      %v482 = vld [vmem:[%s2 + $0x8] sm:$0xff]
      %484 = vset.pattern.permute.xlu0 0
      %485 = vperm.xlu0 %484, %v481
      %v486 = vpop.permute.xlu0 %485
      %489 = vset.pattern.permute.xlu0 0
      %490 = vperm.xlu0 %489, %v482
      %v491 = vpop.permute.xlu0 %490
      %v495 = vunpack.c.l.b16 %v479
      %v496 = vunpack.c.l.b16 %v480
      %v497 = vpack.c.b16 %v496, %v495
      %v515 = vunpack.c.l.b16 %v463
      %v516 = vunpack.c.l.b16 %v464
      %v517 = vunpack.c.l.b16 %v465
      %v518 = vunpack.c.l.b16 %v466
      %v519 = vunpack.c.l.b16 %v467
      %v520 = vunpack.c.l.b16 %v468
      %v521 = vunpack.c.l.b16 %v469
      %v522 = vunpack.c.l.b16 %v470
      %v523 = vunpack.c.l.b16 %v471
      %v524 = vunpack.c.l.b16 %v472
      %v525 = vunpack.c.l.b16 %v473
      %v526 = vunpack.c.l.b16 %v474
      %v527 = vunpack.c.l.b16 %v475
      %v528 = vunpack.c.l.b16 %v476
      %v529 = vunpack.c.l.b16 %v477
      %v530 = vunpack.c.l.b16 %v478
      %v531 = vpack.c.b16 %v516, %v515
      %v532 = vpack.c.b16 %v518, %v517
      %v533 = vpack.c.b16 %v520, %v519
      %v534 = vpack.c.b16 %v522, %v521
      %v535 = vpack.c.b16 %v524, %v523
      %v536 = vpack.c.b16 %v526, %v525
      %v537 = vpack.c.b16 %v528, %v527
      %v538 = vpack.c.b16 %v530, %v529
      %547 = vmatprep.subr.bf16.mxu0 0
      %548 = vmatpush1.bf16.msra.mxu0 %v538
      %549 = vmatprep.subr.bf16.mxu0 0
      %550 = vmatpush1.bf16.msra.mxu0 %v537
      %551 = vmatprep.subr.bf16.mxu0 0
      %552 = vmatpush1.bf16.msra.mxu0 %v536
      %553 = vmatprep.subr.bf16.mxu0 0
      %554 = vmatpush1.bf16.msra.mxu0 %v535
      %555 = vmatprep.subr.bf16.mxu0 0
      %556 = vmatpush1.bf16.msra.mxu0 %v534
      %557 = vmatprep.subr.bf16.mxu0 0
      %558 = vmatpush1.bf16.msra.mxu0 %v533
      %559 = vmatprep.subr.bf16.mxu0 0
      %560 = vmatpush1.bf16.msra.mxu0 %v532
      %561 = vmatprep.subr.bf16.mxu0 0
      %562 = vmatpush1.bf16.msra.mxu0 %v531
      %563 = vmatprep.subr.bf16.mxu0 0
      %564 = vmatpush2.bf16.msra.mxu0 0
      %565 = vmatprep.subr.bf16.mxu0 0
      %566 = vmatpush2.bf16.msra.mxu0 0
      %567 = vmatprep.subr.bf16.mxu0 0
      %568 = vmatpush2.bf16.msra.mxu0 0
      %569 = vmatprep.subr.bf16.mxu0 0
      %570 = vmatpush2.bf16.msra.mxu0 0
      %571 = vmatprep.subr.bf16.mxu0 0
      %572 = vmatpush2.bf16.msra.mxu0 0
      %573 = vmatprep.subr.bf16.mxu0 0
      %574 = vmatpush2.bf16.msra.mxu0 0
      %575 = vmatprep.subr.bf16.mxu0 0
      %576 = vmatpush2.bf16.msra.mxu0 0
      %577 = vmatprep.subr.bf16.mxu0 0
      %578 = vmatpush2.bf16.msra.mxu0 0
      %579 = vmatprep.mubr.bf16.mxu0 0
      %580 = vmatmul.mubr.bf16.gmra.mxu0 %v497
      %v581 = vpop.f32.mrf.mxu0
      %v582 = vadd.f32 %v486, %v581
      %v583 = vpop.f32.mrf.mxu0
      %v584 = vpop.f32.mrf.mxu0
      %v585 = vadd.f32 %v491, %v584
      %v586 = vpop.f32.mrf.mxu0
      %587 = vdwg.mxu0
      %vm588 = vcmask 130048
      %v589 = vsel %vm588, %v582, 0.0
      %590 = vadd.xlane.f32.xlu0 %v589
      %v591 = vpop.xlane.xlu0 %590
      %v592 = vsel %vm588, %v585, 0.0
      %593 = vadd.xlane.f32.xlu0 %v592
      %v594 = vpop.xlane.xlu0 %593
      %v595 = vrcp.pop 16.0
      %v596 = vmul.f32 %v591, %v595
      %v597 = vmul.f32 %v594, %v595
      %v598 = vmul.f32 %v582, %v582
      %v599 = vmul.f32 %v585, %v585
      %v600 = vsel %vm588, %v598, 0.0
      %601 = vadd.xlane.f32.xlu0 %v600
      %v602 = vpop.xlane.xlu0 %601
      %v603 = vsel %vm588, %v599, 0.0
      %604 = vadd.xlane.f32.xlu0 %v603
      %v605 = vpop.xlane.xlu0 %604
      %v606 = vmul.f32 %v602, %v595
      %v607 = vmul.f32 %v605, %v595
      %v608 = vmul.f32 %v596, %v596
      %v609 = vmul.f32 %v597, %v597
      %v610 = vsub.f32 %v606, %v608
      %v611 = vsub.f32 %v607, %v609
      %v612 = vmax.f32 %v610, 0.0
      %v613 = vmax.f32 %v611, 0.0
      %v614 = vsub.f32 %v582, %v596
      %v615 = vsub.f32 %v585, %v597
      %v616 = vadd.f32 %v612, 1e-05
      %v617 = vadd.f32 %v613, 1e-05
      %v618 = vrsqrt.pop %v616
      %v619 = vrsqrt.pop %v617
      %v620 = vmul.f32 %v614, %v618
      %v621 = vmul.f32 %v615, %v619
      %v622 = vld [vmem:[%s4] sm:$0xff]
      %v623 = vld [vmem:[%s4 + $0x8] sm:$0xff]
      %625 = vset.pattern.permute.xlu0 0
      %626 = vperm.xlu0 %625, %v622
      %v627 = vpop.permute.xlu0 %626
      %630 = vset.pattern.permute.xlu0 0
      %631 = vperm.xlu0 %630, %v623
      %v632 = vpop.permute.xlu0 %631
      %v634 = vmul.f32 %v620, %v627
      %v635 = vmul.f32 %v621, %v632
      %v636 = vld [vmem:[%s5] sm:$0xff]
      %v637 = vld [vmem:[%s5 + $0x8] sm:$0xff]
      %639 = vset.pattern.permute.xlu0 0
      %640 = vperm.xlu0 %639, %v636
      %v641 = vpop.permute.xlu0 %640
      %644 = vset.pattern.permute.xlu0 0
      %645 = vperm.xlu0 %644, %v637
      %v646 = vpop.permute.xlu0 %645
      %v648 = vadd.f32 %v634, %v641
      %v649 = vadd.f32 %v635, %v646
      %v650 = vld [vmem:[%s397] sm:$0xff]
      %v651 = vld [vmem:[%s397 + $0x8] sm:$0xff]
      %653 = vset.pattern.permute.xlu0 0
      %654 = vperm.xlu0 %653, %v650
      %v655 = vpop.permute.xlu0 %654
      %658 = vset.pattern.permute.xlu0 0
      %659 = vperm.xlu0 %658, %v651
      %v660 = vpop.permute.xlu0 %659
      %v662 = vadd.f32 %v648, %v655
      %v663 = vadd.f32 %v649, %v660
      %664 = vst.msk [vmem:[%s407] sm:$0xff] %vm588, %v662
      %665 = vst.msk [vmem:[%s407 + $0x8] sm:$0xff] %vm588, %v663
      %v666 = vld [vmem:[%s6] sm:$0xff]
      %v667 = vld [vmem:[%s6 + $0x8] sm:$0xff]
      %v668 = vld [vmem:[%s6 + $0x10] sm:$0xff]
      %v669 = vld [vmem:[%s6 + $0x18] sm:$0xff]
      %v670 = vld [vmem:[%s402] sm:$0xff]
      %v671 = vld [vmem:[%s402 + $0x8] sm:$0xff]
      %v672 = vld [vmem:[%s402 + $0x10] sm:$0xff]
      %v673 = vld [vmem:[%s402 + $0x18] sm:$0xff]
      %v675 = vsel %vm588, %v666, 0
      %v678 = vsel %vm588, %v667, 0
      %v681 = vsel %vm588, %v668, 0
      %v684 = vsel %vm588, %v669, 0
      %686 = vmatprep.subr.mxu0 0.0
      %687 = vmatpush1.msra.mxu0 0.0
      %688 = vmatprep.subr.mxu0 0.0
      %689 = vmatpush1.msra.mxu0 0.0
      %690 = vmatprep.subr.mxu0 0.0
      %691 = vmatpush1.msra.mxu0 0.0
      %692 = vmatprep.subr.mxu0 0.0
      %693 = vmatpush1.msra.mxu0 0.0
      %694 = vmatprep.subr.mxu0 0.0
      %695 = vmatpush1.msra.mxu0 0.0
      %696 = vmatprep.subr.mxu0 0.0
      %697 = vmatpush1.msra.mxu0 0.0
      %698 = vmatprep.subr.mxu0 0.0
      %699 = vmatpush1.msra.mxu0 0.0
      %700 = vmatprep.subr.mxu0 0.0
      %701 = vmatpush1.msra.mxu0 0.0
      %702 = vmatprep.subr.mxu0 0.0
      %703 = vmatpush1.msra.mxu0 0.0
      %704 = vmatprep.subr.mxu0 0.0
      %705 = vmatpush1.msra.mxu0 0.0
      %706 = vmatprep.subr.mxu0 0.0
      %707 = vmatpush1.msra.mxu0 0.0
      %708 = vmatprep.subr.mxu0 0.0
      %709 = vmatpush1.msra.mxu0 0.0
      %710 = vmatprep.subr.mxu0 0.0
      %711 = vmatpush1.msra.mxu0 0.0
      %712 = vmatprep.subr.mxu0 0.0
      %713 = vmatpush1.msra.mxu0 0.0
      %714 = vmatprep.subr.mxu0 0.0
      %715 = vmatpush1.msra.mxu0 %v597
      %716 = vmatprep.subr.mxu0 0.0
      %717 = vmatpush1.msra.mxu0 %v596
      %718 = vmatprep.subr.mxu0 0.0
      %719 = vmatpush2.msra.mxu0 0.0
      %720 = vmatprep.subr.mxu0 0.0
      %721 = vmatpush2.msra.mxu0 0.0
      %722 = vmatprep.subr.mxu0 0.0
      %723 = vmatpush2.msra.mxu0 0.0
      %724 = vmatprep.subr.mxu0 0.0
      %725 = vmatpush2.msra.mxu0 0.0
      %726 = vmatprep.subr.mxu0 0.0
      %727 = vmatpush2.msra.mxu0 0.0
      %728 = vmatprep.subr.mxu0 0.0
      %729 = vmatpush2.msra.mxu0 0.0
      %730 = vmatprep.subr.mxu0 0.0
      %731 = vmatpush2.msra.mxu0 0.0
      %732 = vmatprep.subr.mxu0 0.0
      %733 = vmatpush2.msra.mxu0 0.0
      %734 = vmatprep.subr.mxu0 0.0
      %735 = vmatpush2.msra.mxu0 0.0
      %736 = vmatprep.subr.mxu0 0.0
      %737 = vmatpush2.msra.mxu0 0.0
      %738 = vmatprep.subr.mxu0 0.0
      %739 = vmatpush2.msra.mxu0 0.0
      %740 = vmatprep.subr.mxu0 0.0
      %741 = vmatpush2.msra.mxu0 0.0
      %742 = vmatprep.subr.mxu0 0.0
      %743 = vmatpush2.msra.mxu0 0.0
      %744 = vmatprep.subr.mxu0 0.0
      %745 = vmatpush2.msra.mxu0 0.0
      %746 = vmatprep.subr.mxu0 0.0
      %747 = vmatpush2.msra.mxu0 0.0
      %748 = vmatprep.subr.mxu0 0.0
      %749 = vmatpush2.msra.mxu0 0.0
      %750 = vmatprep.mubr.f32.mxu0 0.0
      %751 = vmatmul.mubr.f32.gmra.mxu0 %v675
      %v752 = vpop.f32.mrf.mxu0
      %v753 = vadd.f32 %v670, %v752
      %v754 = vpop.f32.mrf.mxu0
      %755 = vmatprep.mubr.f32.mxu0 0.0
      %756 = vmatmul.mubr.f32.gmra.mxu0 %v678
      %v757 = vpop.f32.mrf.mxu0
      %v758 = vadd.f32 %v671, %v757
      %v759 = vpop.f32.mrf.mxu0
      %760 = vmatprep.mubr.f32.mxu0 0.0
      %761 = vmatmul.mubr.f32.gmra.mxu0 %v681
      %v762 = vpop.f32.mrf.mxu0
      %v763 = vadd.f32 %v672, %v762
      %v764 = vpop.f32.mrf.mxu0
      %765 = vmatprep.mubr.f32.mxu0 0.0
      %766 = vmatmul.mubr.f32.gmra.mxu0 %v684
      %v767 = vpop.f32.mrf.mxu0
      %v768 = vadd.f32 %v673, %v767
      %v769 = vpop.f32.mrf.mxu0
      %770 = vdwg.mxu0
      %v771 = vld [vmem:[%s8] sm:$0xff]
      %v772 = vld [vmem:[%s8 + $0x8] sm:$0xff]
      %v773 = vld [vmem:[%s8 + $0x10] sm:$0xff]
      %v774 = vld [vmem:[%s8 + $0x18] sm:$0xff]
      %v775 = vadd.f32 %v753, %v771
      %v776 = vadd.f32 %v758, %v772
      %v777 = vadd.f32 %v763, %v773
      %v778 = vadd.f32 %v768, %v774
      %vm779 = vcmp.gt.f32.partialorder %v775, 0.0
      %vm780 = vcmp.gt.f32.partialorder %v776, 0.0
      %vm781 = vcmp.gt.f32.partialorder %v777, 0.0
      %vm782 = vcmp.gt.f32.partialorder %v778, 0.0
      %v783 = vmul.f32 %v775, 1.442695
      %v784 = vpow.pop %v783
      %v785 = vmul.f32 %v776, 1.442695
      %v786 = vpow.pop %v785
      %v787 = vmul.f32 %v777, 1.442695
      %v788 = vpow.pop %v787
      %v789 = vmul.f32 %v778, 1.442695
      %v790 = vpow.pop %v789
      %v791 = vsub.f32 %v784, 1.0
      %v792 = vsub.f32 %v786, 1.0
      %v793 = vsub.f32 %v788, 1.0
      %v794 = vsub.f32 %v790, 1.0
      %v795 = vmul.f32 %v791, 1.6732632
      %v796 = vmul.f32 %v792, 1.6732632
      %v797 = vmul.f32 %v793, 1.6732632
      %v798 = vmul.f32 %v794, 1.6732632
      %v799 = vsel %vm779, %v775, %v795
      %v800 = vsel %vm780, %v776, %v796
      %v801 = vsel %vm781, %v777, %v797
      %v802 = vsel %vm782, %v778, %v798
      %v803 = vmul.f32 %v799, 1.050701
      %v804 = vmul.f32 %v800, 1.050701
      %v805 = vmul.f32 %v801, 1.050701
      %v806 = vmul.f32 %v802, 1.050701
      %vm807 = vcmask 7168
      %808 = vst.msk [vmem:[%s412] sm:$0xff] %vm807, %v803
      %809 = vst.msk [vmem:[%s412 + $0x8] sm:$0xff] %vm807, %v804
      %810 = vst.msk [vmem:[%s412 + $0x10] sm:$0xff] %vm807, %v805
      %811 = vst.msk [vmem:[%s412 + $0x18] sm:$0xff] %vm807, %v806
      %p812 = scmp.lt.s32.totalorder %s22, 1
      %s813 = scalar_select %p812, %s22, 1
      %s814 = smul.addr %s813, 2
      %s815 = smul.addr %s814, 8
      %s816 = scalar_lea.vmem %s9, %s815
      %p817 = scmp.lt.s32.totalorder %s22, 1
      %s818 = scalar_select %p817, %s22, 1
      %s819 = smul.addr %s818, 4
      %s820 = smul.addr %s819, 8
      %s821 = scalar_lea.vmem %s10, %s820
      // Predicated region
      $region57: #{_lambda_.8} parent=55 // pred_check
        %p822 = pneg %p244
      $region58: #{_lambda_.8} parent=55 // pred_check_branch
        %824 = sbr.rel (%p822) target = $region60
      $region59: #{_lambda_.8} parent=55 // pred_region
        _
      $region60: #{_lambda_.8} parent=55 // pred_fallthru
        _
      // Predicated region
      $region61: #{_lambda_.8} parent=55 // pred_check
        %p825 = pneg %p270
      $region62: #{_lambda_.8} parent=55 // pred_check_branch
        %827 = sbr.rel (%p825) target = $region64
      $region63: #{_lambda_.8} parent=55 // pred_region
        _
      $region64: #{_lambda_.8} parent=55 // pred_fallthru
        _
    $region56: #{_lambda_.8} parent=5 // pred_fallthru
      _
    %p828 = scmp.le.s32.totalorder 2, %s17
    // Predicated region
    $region65: #{_lambda_.8} parent=5 // pred_check
      %p829 = pneg %p828
    $region66: #{_lambda_.8} parent=5 // pred_check_branch
      %831 = sbr.rel (%p829) target = $region68
    $region67: #{_lambda_.8} parent=5 // pred_region
      %s832 = ssub.s32 %s17, 2
      // Predicated region
      $region69: #{_lambda_.8} parent=67 // pred_check
        %p833 = pneg %p250
      $region70: #{_lambda_.8} parent=67 // pred_check_branch
        %835 = sbr.rel (%p833) target = $region72
      $region71: #{_lambda_.8} parent=67 // pred_region
        %p836 = scmp.lt.s32.totalorder %s23, 1
        %s837 = scalar_select %p836, %s23, 1
        %s838 = smul.addr %s837, 2
        %s839 = smul.addr %s838, 8
        %s840 = scalar_lea.vmem %s9, %s839
      $region72: #{_lambda_.8} parent=67 // pred_fallthru
        _
      // Predicated region
      $region73: #{_lambda_.8} parent=67 // pred_check
        %p841 = pneg %p276
      $region74: #{_lambda_.8} parent=67 // pred_check_branch
        %843 = sbr.rel (%p841) target = $region76
      $region75: #{_lambda_.8} parent=67 // pred_region
        %p844 = scmp.lt.s32.totalorder %s23, 1
        %s845 = scalar_select %p844, %s23, 1
        %s846 = smul.addr %s845, 4
        %s847 = smul.addr %s846, 8
        %s848 = scalar_lea.vmem %s10, %s847
      $region76: #{_lambda_.8} parent=67 // pred_fallthru
        _
    $region68: #{_lambda_.8} parent=5 // pred_fallthru
      _
  $region6: #{_lambda_.8} parent=0 // loop_footer
    %s21 = sadd.s32 1, %s17
  $region7: #{_lambda_.8} parent=0 // loop_footer_branch
    %16 = sbr.rel target = $region3
  $region8: #{_lambda_.8} parent=0 // loop_exit
    _

// kernel: _lambda_.9
$region0: #{_lambda_.9}
  #allocation0 [shape = 'u32[]', space=smem, size = 0x4, offset = 0x4, fixed_abs, tag = 'smem constant byte address 0x4 - core index']
  #allocation1 [shape = 'u32[144,128]{1,0:T(1,128)}', space=vmem, size = 0x12000, scoped, tag = 'internal scratch']
  %s0 = inlined_call_operand.vmem [shape: bf16[2,256,4], index: 0, kind: input, shape index: {}]
  %s1 = inlined_call_operand.vmem [shape: bf16[32,256], index: 1, kind: input, shape index: {}]
  %s2 = inlined_call_operand.vmem [shape: f32[32,1], index: 2, kind: input, shape index: {}]
  %s3 = inlined_call_operand.vmem [shape: f32[2,32,1], index: 3, kind: input, shape index: {}]
  %s4 = inlined_call_operand.vmem [shape: f32[32,32], index: 4, kind: input, shape index: {}]
  %s5 = inlined_call_operand.vmem [shape: f32[2,32,1], index: 5, kind: input, shape index: {}]
  %s6 = inlined_call_operand.vmem [shape: f32[32,1], index: 6, kind: input, shape index: {}]
  %s7 = inlined_call_operand.vmem [shape: f32[2,32,4], index: 7, kind: output, shape index: {0}]
  %s8 = inlined_call_operand.vmem [shape: f32[2,32,1], index: 8, kind: output, shape index: {1}]
  %9 = xla_tuple %s7, %s8
  %s10 = sld [smem:[#allocation0]]
  $region69: #{_lambda_.9} parent=0
    _
  %s12 = ssub.s32 1, %s10
  %s13 = scalar_select 0, %s12, %s10
  loop: start=0, step=1, limit=4
  $region2: #{_lambda_.9} parent=0 // loop_pre_header
    _
  $region3: #{_lambda_.9} parent=0 // loop_header
    %s15 = sphi 0, %s19
    %p16 = scmp.ge.s32.totalorder %s15, 4
    %s25 = sphi 0, %s27
    %s28 = sphi 0, %s25
    %s29 = sphi 0, %s28
    %s45 = sphi 0, %s29
    %s49 = sphi 0, %s49
    %s51 = sphi 0, %s49
    %s52 = sphi 0, %s51
    %s66 = sphi 0, %s52
    %s70 = sphi 0, %s70
    %s72 = sphi 0, %s70
    %s73 = sphi 0, %s72
    %s87 = sphi 0, %s73
    %s93 = sphi 0, %s95
    %s96 = sphi 0, %s93
    %s97 = sphi 0, %s96
    %s113 = sphi 0, %s97
    %s117 = sphi 0, %s117
    %s119 = sphi 0, %s117
    %s120 = sphi 0, %s119
    %s134 = sphi 0, %s120
    %s140 = sphi 0, %s142
    %s143 = sphi 0, %s140
    %s144 = sphi 0, %s143
    %s160 = sphi 0, %s144
    %s164 = sphi 0, %s164
    %s166 = sphi 0, %s164
    %s167 = sphi 0, %s166
    %s181 = sphi 0, %s167
    %s187 = sphi 0, %s189
    %s190 = sphi 0, %s187
    %s191 = sphi 0, %s190
    %s207 = sphi 0, %s191
    %s213 = sphi 0, %s215
    %s216 = sphi 0, %s213
    %s217 = sphi 0, %s216
    %s233 = sphi 0, %s217
  $region4: #{_lambda_.9} parent=0 // loop_header_branch
    %18 = sbr.rel (%p16) target = $region8
  $region5: #{_lambda_.9} parent=0 // loop_body
    %s20 = ssub.s32 %s15, 1
    %s21 = ssub.s32 %s15, 2
    %s22 = sadd.s32 %s15, 1
    %s23 = ssub.s32 %s15, %s22
    %p24 = scmp.eq.s32.totalorder %s23, 0
    %s26 = sadd.s32 %s25, 1
    %s27 = scalar_select %p24, %s25, %s26
    %p30 = pneg %p24
    %p31 = scmp.eq.s32.totalorder %s15, 1
    %p32 = por %p30, %p31
    %p33 = scmp.ne.s32.totalorder %s25, %s28
    %p34 = scmp.eq.s32.totalorder %s15, 0
    %p35 = por %p33, %p34
    %p36 = scmp.ne.s32.totalorder %s25, %s28
    %p37 = scmp.eq.s32.totalorder %s20, 1
    %p38 = por %p36, %p37
    %p39 = scmp.ne.s32.totalorder %s28, %s29
    %p40 = scmp.eq.s32.totalorder %s20, 0
    %p41 = por %p39, %p40
    %p42 = scmp.ne.s32.totalorder %s28, %s29
    %p43 = scmp.eq.s32.totalorder %s21, 1
    %p44 = por %p42, %p43
    %p46 = scmp.ne.s32.totalorder %s29, %s45
    %p47 = scmp.eq.s32.totalorder %s21, 0
    %p48 = por %p46, %p47
    %s50 = sadd.s32 %s49, 1
    %p53 = scmp.eq.s32.totalorder %s15, 1
    %p54 = scmp.ne.s32.totalorder %s49, %s51
    %p55 = scmp.eq.s32.totalorder %s15, 0
    %p56 = por %p54, %p55
    %p57 = scmp.ne.s32.totalorder %s49, %s51
    %p58 = scmp.eq.s32.totalorder %s20, 1
    %p59 = por %p57, %p58
    %p60 = scmp.ne.s32.totalorder %s51, %s52
    %p61 = scmp.eq.s32.totalorder %s20, 0
    %p62 = por %p60, %p61
    %p63 = scmp.ne.s32.totalorder %s51, %s52
    %p64 = scmp.eq.s32.totalorder %s21, 1
    %p65 = por %p63, %p64
    %p67 = scmp.ne.s32.totalorder %s52, %s66
    %p68 = scmp.eq.s32.totalorder %s21, 0
    %p69 = por %p67, %p68
    %s71 = sadd.s32 %s70, 1
    %p74 = scmp.eq.s32.totalorder %s15, 1
    %p75 = scmp.ne.s32.totalorder %s70, %s72
    %p76 = scmp.eq.s32.totalorder %s15, 0
    %p77 = por %p75, %p76
    %p78 = scmp.ne.s32.totalorder %s70, %s72
    %p79 = scmp.eq.s32.totalorder %s20, 1
    %p80 = por %p78, %p79
    %p81 = scmp.ne.s32.totalorder %s72, %s73
    %p82 = scmp.eq.s32.totalorder %s20, 0
    %p83 = por %p81, %p82
    %p84 = scmp.ne.s32.totalorder %s72, %s73
    %p85 = scmp.eq.s32.totalorder %s21, 1
    %p86 = por %p84, %p85
    %p88 = scmp.ne.s32.totalorder %s73, %s87
    %p89 = scmp.eq.s32.totalorder %s21, 0
    %p90 = por %p88, %p89
    %s91 = ssub.s32 %s15, %s22
    %p92 = scmp.eq.s32.totalorder %s91, 0
    %s94 = sadd.s32 %s93, 1
    %s95 = scalar_select %p92, %s93, %s94
    %p98 = pneg %p92
    %p99 = scmp.eq.s32.totalorder %s15, 1
    %p100 = por %p98, %p99
    %p101 = scmp.ne.s32.totalorder %s93, %s96
    %p102 = scmp.eq.s32.totalorder %s15, 0
    %p103 = por %p101, %p102
    %p104 = scmp.ne.s32.totalorder %s93, %s96
    %p105 = scmp.eq.s32.totalorder %s20, 1
    %p106 = por %p104, %p105
    %p107 = scmp.ne.s32.totalorder %s96, %s97
    %p108 = scmp.eq.s32.totalorder %s20, 0
    %p109 = por %p107, %p108
    %p110 = scmp.ne.s32.totalorder %s96, %s97
    %p111 = scmp.eq.s32.totalorder %s21, 1
    %p112 = por %p110, %p111
    %p114 = scmp.ne.s32.totalorder %s97, %s113
    %p115 = scmp.eq.s32.totalorder %s21, 0
    %p116 = por %p114, %p115
    %s118 = sadd.s32 %s117, 1
    %p121 = scmp.eq.s32.totalorder %s15, 1
    %p122 = scmp.ne.s32.totalorder %s117, %s119
    %p123 = scmp.eq.s32.totalorder %s15, 0
    %p124 = por %p122, %p123
    %p125 = scmp.ne.s32.totalorder %s117, %s119
    %p126 = scmp.eq.s32.totalorder %s20, 1
    %p127 = por %p125, %p126
    %p128 = scmp.ne.s32.totalorder %s119, %s120
    %p129 = scmp.eq.s32.totalorder %s20, 0
    %p130 = por %p128, %p129
    %p131 = scmp.ne.s32.totalorder %s119, %s120
    %p132 = scmp.eq.s32.totalorder %s21, 1
    %p133 = por %p131, %p132
    %p135 = scmp.ne.s32.totalorder %s120, %s134
    %p136 = scmp.eq.s32.totalorder %s21, 0
    %p137 = por %p135, %p136
    %s138 = ssub.s32 %s15, %s22
    %p139 = scmp.eq.s32.totalorder %s138, 0
    %s141 = sadd.s32 %s140, 1
    %s142 = scalar_select %p139, %s140, %s141
    %p145 = pneg %p139
    %p146 = scmp.eq.s32.totalorder %s15, 1
    %p147 = por %p145, %p146
    %p148 = scmp.ne.s32.totalorder %s140, %s143
    %p149 = scmp.eq.s32.totalorder %s15, 0
    %p150 = por %p148, %p149
    %p151 = scmp.ne.s32.totalorder %s140, %s143
    %p152 = scmp.eq.s32.totalorder %s20, 1
    %p153 = por %p151, %p152
    %p154 = scmp.ne.s32.totalorder %s143, %s144
    %p155 = scmp.eq.s32.totalorder %s20, 0
    %p156 = por %p154, %p155
    %p157 = scmp.ne.s32.totalorder %s143, %s144
    %p158 = scmp.eq.s32.totalorder %s21, 1
    %p159 = por %p157, %p158
    %p161 = scmp.ne.s32.totalorder %s144, %s160
    %p162 = scmp.eq.s32.totalorder %s21, 0
    %p163 = por %p161, %p162
    %s165 = sadd.s32 %s164, 1
    %p168 = scmp.eq.s32.totalorder %s15, 1
    %p169 = scmp.ne.s32.totalorder %s164, %s166
    %p170 = scmp.eq.s32.totalorder %s15, 0
    %p171 = por %p169, %p170
    %p172 = scmp.ne.s32.totalorder %s164, %s166
    %p173 = scmp.eq.s32.totalorder %s20, 1
    %p174 = por %p172, %p173
    %p175 = scmp.ne.s32.totalorder %s166, %s167
    %p176 = scmp.eq.s32.totalorder %s20, 0
    %p177 = por %p175, %p176
    %p178 = scmp.ne.s32.totalorder %s166, %s167
    %p179 = scmp.eq.s32.totalorder %s21, 1
    %p180 = por %p178, %p179
    %p182 = scmp.ne.s32.totalorder %s167, %s181
    %p183 = scmp.eq.s32.totalorder %s21, 0
    %p184 = por %p182, %p183
    %s185 = ssub.s32 %s15, %s22
    %p186 = scmp.eq.s32.totalorder %s185, 0
    %s188 = sadd.s32 %s187, 1
    %s189 = scalar_select %p186, %s187, %s188
    %p192 = pneg %p186
    %p193 = scmp.eq.s32.totalorder %s15, 1
    %p194 = por %p192, %p193
    %p195 = scmp.ne.s32.totalorder %s187, %s190
    %p196 = scmp.eq.s32.totalorder %s15, 0
    %p197 = por %p195, %p196
    %p198 = scmp.ne.s32.totalorder %s187, %s190
    %p199 = scmp.eq.s32.totalorder %s20, 1
    %p200 = por %p198, %p199
    %p201 = scmp.ne.s32.totalorder %s190, %s191
    %p202 = scmp.eq.s32.totalorder %s20, 0
    %p203 = por %p201, %p202
    %p204 = scmp.ne.s32.totalorder %s190, %s191
    %p205 = scmp.eq.s32.totalorder %s21, 1
    %p206 = por %p204, %p205
    %p208 = scmp.ne.s32.totalorder %s191, %s207
    %p209 = scmp.eq.s32.totalorder %s21, 0
    %p210 = por %p208, %p209
    %s211 = ssub.s32 %s15, %s22
    %p212 = scmp.eq.s32.totalorder %s211, 0
    %s214 = sadd.s32 %s213, 1
    %s215 = scalar_select %p212, %s213, %s214
    %p218 = pneg %p212
    %p219 = scmp.eq.s32.totalorder %s15, 1
    %p220 = por %p218, %p219
    %p221 = scmp.ne.s32.totalorder %s213, %s216
    %p222 = scmp.eq.s32.totalorder %s15, 0
    %p223 = por %p221, %p222
    %p224 = scmp.ne.s32.totalorder %s213, %s216
    %p225 = scmp.eq.s32.totalorder %s20, 1
    %p226 = por %p224, %p225
    %p227 = scmp.ne.s32.totalorder %s216, %s217
    %p228 = scmp.eq.s32.totalorder %s20, 0
    %p229 = por %p227, %p228
    %p230 = scmp.ne.s32.totalorder %s216, %s217
    %p231 = scmp.eq.s32.totalorder %s21, 1
    %p232 = por %p230, %p231
    %p234 = scmp.ne.s32.totalorder %s217, %s233
    %p235 = scmp.eq.s32.totalorder %s21, 0
    %p236 = por %p234, %p235
    %p237 = scmp.le.s32.totalorder 1, %s15
    %p238 = scmp.lt.s32.totalorder %s15, 3
    %p239 = pnand %p237, %p238
    %p240 = pneg %p239
    // Predicated region
    $region9: #{_lambda_.9} parent=5 // pred_check
      _
    $region10: #{_lambda_.9} parent=5 // pred_check_branch
      %242 = sbr.rel (%p239) target = $region12
    $region11: #{_lambda_.9} parent=5 // pred_region
      %s243 = ssub.s32 %s15, 1
      // Predicated region
      $region13: #{_lambda_.9} parent=11 // pred_check
        %p244 = pneg %p62
      $region14: #{_lambda_.9} parent=11 // pred_check_branch
        %246 = sbr.rel (%p244) target = $region16
      $region15: #{_lambda_.9} parent=11 // pred_region
        _
      $region16: #{_lambda_.9} parent=11 // pred_fallthru
        _
      // Predicated region
      $region17: #{_lambda_.9} parent=11 // pred_check
        %p247 = pneg %p83
      $region18: #{_lambda_.9} parent=11 // pred_check_branch
        %249 = sbr.rel (%p247) target = $region20
      $region19: #{_lambda_.9} parent=11 // pred_region
        _
      $region20: #{_lambda_.9} parent=11 // pred_fallthru
        _
      // Predicated region
      $region21: #{_lambda_.9} parent=11 // pred_check
        %p250 = pneg %p130
      $region22: #{_lambda_.9} parent=11 // pred_check_branch
        %252 = sbr.rel (%p250) target = $region24
      $region23: #{_lambda_.9} parent=11 // pred_region
        _
      $region24: #{_lambda_.9} parent=11 // pred_fallthru
        _
      // Predicated region
      $region25: #{_lambda_.9} parent=11 // pred_check
        %p253 = pneg %p177
      $region26: #{_lambda_.9} parent=11 // pred_check_branch
        %255 = sbr.rel (%p253) target = $region28
      $region27: #{_lambda_.9} parent=11 // pred_region
        _
      $region28: #{_lambda_.9} parent=11 // pred_fallthru
        _
    $region12: #{_lambda_.9} parent=5 // pred_fallthru
      _
    %p256 = scmp.lt.s32.totalorder %s15, 2
    // Predicated region
    $region29: #{_lambda_.9} parent=5 // pred_check
      %p257 = pneg %p256
    $region30: #{_lambda_.9} parent=5 // pred_check_branch
      %259 = sbr.rel (%p257) target = $region32
    $region31: #{_lambda_.9} parent=5 // pred_region
      // Predicated region
      $region33: #{_lambda_.9} parent=31 // pred_check
        %p260 = pneg %p35
      $region34: #{_lambda_.9} parent=31 // pred_check_branch
        %262 = sbr.rel (%p260) target = $region36
      $region35: #{_lambda_.9} parent=31 // pred_region
        %p263 = scmp.lt.s32.totalorder %s15, 1
        %s264 = scalar_select %p263, %s15, 1
        %s265 = smul.addr %s264, 32
        %s266 = smul.addr %s265, 4
        %s267 = scalar_lea.vmem %s0, %s266
      $region36: #{_lambda_.9} parent=31 // pred_fallthru
        _
      // Predicated region
      $region37: #{_lambda_.9} parent=31 // pred_check
        %p268 = pneg %p103
      $region38: #{_lambda_.9} parent=31 // pred_check_branch
        %270 = sbr.rel (%p268) target = $region40
      $region39: #{_lambda_.9} parent=31 // pred_region
        %p271 = scmp.lt.s32.totalorder %s15, 1
        %s272 = scalar_select %p271, %s15, 1
        %s273 = smul.addr %s272, 4
        %s274 = smul.addr %s273, 8
        %s275 = scalar_lea.vmem %s3, %s274
      $region40: #{_lambda_.9} parent=31 // pred_fallthru
        _
      // Predicated region
      $region41: #{_lambda_.9} parent=31 // pred_check
        %p276 = pneg %p150
      $region42: #{_lambda_.9} parent=31 // pred_check_branch
        %278 = sbr.rel (%p276) target = $region44
      $region43: #{_lambda_.9} parent=31 // pred_region
        %p279 = scmp.lt.s32.totalorder %s15, 1
        %s280 = scalar_select %p279, %s15, 1
        %s281 = smul.addr %s280, 4
        %s282 = smul.addr %s281, 8
        %s283 = scalar_lea.vmem %s5, %s282
      $region44: #{_lambda_.9} parent=31 // pred_fallthru
        _
    $region32: #{_lambda_.9} parent=5 // pred_fallthru
      _
    %p284 = scmp.le.s32.totalorder 1, %s15
    %p285 = scmp.lt.s32.totalorder %s15, 3
    %p286 = pnand %p284, %p285
    %p287 = pneg %p286
    // Predicated region
    $region45: #{_lambda_.9} parent=5 // pred_check
      _
    $region46: #{_lambda_.9} parent=5 // pred_check_branch
      %289 = sbr.rel (%p286) target = $region48
    $region47: #{_lambda_.9} parent=5 // pred_region
      %s290 = ssub.s32 %s15, 1
      %p291 = scmp.lt.s32.totalorder %s20, 1
      %s292 = scalar_select %p291, %s20, 1
      %s293 = smul.addr %s292, 32
      %s294 = smul.addr %s293, 4
      %s295 = scalar_lea.vmem %s0, %s294
      %p296 = pneg %p41
      %p297 = pneg %p38
      %p298 = pneg %p62
      %p299 = pneg %p59
      %p300 = pneg %p83
      %p301 = pneg %p80
      %p302 = scmp.lt.s32.totalorder %s20, 1
      %s303 = scalar_select %p302, %s20, 1
      %s304 = smul.addr %s303, 4
      %s305 = smul.addr %s304, 8
      %s306 = scalar_lea.vmem %s3, %s305
      %p307 = pneg %p109
      %p308 = pneg %p106
      %p309 = pneg %p130
      %p310 = pneg %p127
      %p311 = scmp.lt.s32.totalorder %s20, 1
      %s312 = scalar_select %p311, %s20, 1
      %s313 = smul.addr %s312, 4
      %s314 = smul.addr %s313, 8
      %s315 = scalar_lea.vmem %s5, %s314
      %p316 = pneg %p156
      %p317 = pneg %p153
      %p318 = pneg %p177
      %p319 = pneg %p174
      %p320 = pneg %p203
      %p321 = pneg %p200
      %p322 = scmp.lt.s32.totalorder %s20, 1
      %s323 = scalar_select %p322, %s20, 1
      %s324 = smul.addr %s323, 4
      %s325 = smul.addr %s324, 8
      %s326 = scalar_lea.vmem %s7, %s325
      %p327 = pneg %p229
      %p328 = pneg %p226
      %p329 = scmp.lt.s32.totalorder %s20, 1
      %s330 = scalar_select %p329, %s20, 1
      %s331 = smul.addr %s330, 4
      %s332 = smul.addr %s331, 8
      %s333 = scalar_lea.vmem %s8, %s332
      %p334 = scmp.lt.s32.totalorder %s20, 1
      %s335 = scalar_select %p334, %s20, 1
      %s336 = smul.addr %s335, 32
      %s337 = smul.addr %s336, 4
      %s338 = scalar_lea.vmem %s0, %s337
      %p339 = scmp.lt.s32.totalorder %s20, 1
      %s340 = scalar_select %p339, %s20, 1
      %s341 = smul.addr %s340, 4
      %s342 = smul.addr %s341, 8
      %s343 = scalar_lea.vmem %s3, %s342
      %p344 = scmp.lt.s32.totalorder %s20, 1
      %s345 = scalar_select %p344, %s20, 1
      %s346 = smul.addr %s345, 4
      %s347 = smul.addr %s346, 8
      %s348 = scalar_lea.vmem %s5, %s347
      %p349 = scmp.lt.s32.totalorder %s20, 1
      %s350 = scalar_select %p349, %s20, 1
      %s351 = smul.addr %s350, 4
      %s352 = smul.addr %s351, 8
      %s353 = scalar_lea.vmem %s7, %s352
      %p354 = scmp.lt.s32.totalorder %s20, 1
      %s355 = scalar_select %p354, %s20, 1
      %s356 = smul.addr %s355, 4
      %s357 = smul.addr %s356, 8
      %s358 = scalar_lea.vmem %s8, %s357
      %v361 = vld [vmem:[%s338] sm:$0xf]
      %v362 = vld [vmem:[%s338 + $0x4] sm:$0xf]
      %v363 = vld [vmem:[%s338 + $0x8] sm:$0xf]
      %v364 = vld [vmem:[%s338 + $0xc] sm:$0xf]
      %v365 = vld [vmem:[%s338 + $0x10] sm:$0xf]
      %v366 = vld [vmem:[%s338 + $0x14] sm:$0xf]
      %v367 = vld [vmem:[%s338 + $0x18] sm:$0xf]
      %v368 = vld [vmem:[%s338 + $0x1c] sm:$0xf]
      %v369 = vld [vmem:[%s338 + $0x20] sm:$0xf]
      %v370 = vld [vmem:[%s338 + $0x24] sm:$0xf]
      %v371 = vld [vmem:[%s338 + $0x28] sm:$0xf]
      %v372 = vld [vmem:[%s338 + $0x2c] sm:$0xf]
      %v373 = vld [vmem:[%s338 + $0x30] sm:$0xf]
      %v374 = vld [vmem:[%s338 + $0x34] sm:$0xf]
      %v375 = vld [vmem:[%s338 + $0x38] sm:$0xf]
      %v376 = vld [vmem:[%s338 + $0x3c] sm:$0xf]
      %v377 = vld [vmem:[%s338 + $0x40] sm:$0xf]
      %v378 = vld [vmem:[%s338 + $0x44] sm:$0xf]
      %v379 = vld [vmem:[%s338 + $0x48] sm:$0xf]
      %v380 = vld [vmem:[%s338 + $0x4c] sm:$0xf]
      %v381 = vld [vmem:[%s338 + $0x50] sm:$0xf]
      %v382 = vld [vmem:[%s338 + $0x54] sm:$0xf]
      %v383 = vld [vmem:[%s338 + $0x58] sm:$0xf]
      %v384 = vld [vmem:[%s338 + $0x5c] sm:$0xf]
      %v385 = vld [vmem:[%s338 + $0x60] sm:$0xf]
      %v386 = vld [vmem:[%s338 + $0x64] sm:$0xf]
      %v387 = vld [vmem:[%s338 + $0x68] sm:$0xf]
      %v388 = vld [vmem:[%s338 + $0x6c] sm:$0xf]
      %v389 = vld [vmem:[%s338 + $0x70] sm:$0xf]
      %v390 = vld [vmem:[%s338 + $0x74] sm:$0xf]
      %v391 = vld [vmem:[%s338 + $0x78] sm:$0xf]
      %v392 = vld [vmem:[%s338 + $0x7c] sm:$0xf]
      %vm393 = vcmp.ge.bf16.partialorder %v361, 0
      %vm394 = vcmp.ge.bf16.partialorder %v362, 0
      %vm395 = vcmp.ge.bf16.partialorder %v363, 0
      %vm396 = vcmp.ge.bf16.partialorder %v364, 0
      %vm397 = vcmp.ge.bf16.partialorder %v365, 0
      %vm398 = vcmp.ge.bf16.partialorder %v366, 0
      %vm399 = vcmp.ge.bf16.partialorder %v367, 0
      %vm400 = vcmp.ge.bf16.partialorder %v368, 0
      %vm401 = vcmp.ge.bf16.partialorder %v369, 0
      %vm402 = vcmp.ge.bf16.partialorder %v370, 0
      %vm403 = vcmp.ge.bf16.partialorder %v371, 0
      %vm404 = vcmp.ge.bf16.partialorder %v372, 0
      %vm405 = vcmp.ge.bf16.partialorder %v373, 0
      %vm406 = vcmp.ge.bf16.partialorder %v374, 0
      %vm407 = vcmp.ge.bf16.partialorder %v375, 0
      %vm408 = vcmp.ge.bf16.partialorder %v376, 0
      %vm409 = vcmp.ge.bf16.partialorder %v377, 0
      %vm410 = vcmp.ge.bf16.partialorder %v378, 0
      %vm411 = vcmp.ge.bf16.partialorder %v379, 0
      %vm412 = vcmp.ge.bf16.partialorder %v380, 0
      %vm413 = vcmp.ge.bf16.partialorder %v381, 0
      %vm414 = vcmp.ge.bf16.partialorder %v382, 0
      %vm415 = vcmp.ge.bf16.partialorder %v383, 0
      %vm416 = vcmp.ge.bf16.partialorder %v384, 0
      %vm417 = vcmp.ge.bf16.partialorder %v385, 0
      %vm418 = vcmp.ge.bf16.partialorder %v386, 0
      %vm419 = vcmp.ge.bf16.partialorder %v387, 0
      %vm420 = vcmp.ge.bf16.partialorder %v388, 0
      %vm421 = vcmp.ge.bf16.partialorder %v389, 0
      %vm422 = vcmp.ge.bf16.partialorder %v390, 0
      %vm423 = vcmp.ge.bf16.partialorder %v391, 0
      %vm424 = vcmp.ge.bf16.partialorder %v392, 0
      %v425 = vmul.bf16 %v361, 1045249613
      %v426 = vmul.bf16 %v362, 1045249613
      %v427 = vmul.bf16 %v363, 1045249613
      %v428 = vmul.bf16 %v364, 1045249613
      %v429 = vmul.bf16 %v365, 1045249613
      %v430 = vmul.bf16 %v366, 1045249613
      %v431 = vmul.bf16 %v367, 1045249613
      %v432 = vmul.bf16 %v368, 1045249613
      %v433 = vmul.bf16 %v369, 1045249613
      %v434 = vmul.bf16 %v370, 1045249613
      %v435 = vmul.bf16 %v371, 1045249613
      %v436 = vmul.bf16 %v372, 1045249613
      %v437 = vmul.bf16 %v373, 1045249613
      %v438 = vmul.bf16 %v374, 1045249613
      %v439 = vmul.bf16 %v375, 1045249613
      %v440 = vmul.bf16 %v376, 1045249613
      %v441 = vmul.bf16 %v377, 1045249613
      %v442 = vmul.bf16 %v378, 1045249613
      %v443 = vmul.bf16 %v379, 1045249613
      %v444 = vmul.bf16 %v380, 1045249613
      %v445 = vmul.bf16 %v381, 1045249613
      %v446 = vmul.bf16 %v382, 1045249613
      %v447 = vmul.bf16 %v383, 1045249613
      %v448 = vmul.bf16 %v384, 1045249613
      %v449 = vmul.bf16 %v385, 1045249613
      %v450 = vmul.bf16 %v386, 1045249613
      %v451 = vmul.bf16 %v387, 1045249613
      %v452 = vmul.bf16 %v388, 1045249613
      %v453 = vmul.bf16 %v389, 1045249613
      %v454 = vmul.bf16 %v390, 1045249613
      %v455 = vmul.bf16 %v391, 1045249613
      %v456 = vmul.bf16 %v392, 1045249613
      %v457 = vsel %vm393, %v361, %v425
      %v458 = vsel %vm394, %v362, %v426
      %v459 = vsel %vm395, %v363, %v427
      %v460 = vsel %vm396, %v364, %v428
      %v461 = vsel %vm397, %v365, %v429
      %v462 = vsel %vm398, %v366, %v430
      %v463 = vsel %vm399, %v367, %v431
      %v464 = vsel %vm400, %v368, %v432
      %v465 = vsel %vm401, %v369, %v433
      %v466 = vsel %vm402, %v370, %v434
      %v467 = vsel %vm403, %v371, %v435
      %v468 = vsel %vm404, %v372, %v436
      %v469 = vsel %vm405, %v373, %v437
      %v470 = vsel %vm406, %v374, %v438
      %v471 = vsel %vm407, %v375, %v439
      %v472 = vsel %vm408, %v376, %v440
      %v473 = vsel %vm409, %v377, %v441
      %v474 = vsel %vm410, %v378, %v442
      %v475 = vsel %vm411, %v379, %v443
      %v476 = vsel %vm412, %v380, %v444
      %v477 = vsel %vm413, %v381, %v445
      %v478 = vsel %vm414, %v382, %v446
      %v479 = vsel %vm415, %v383, %v447
      %v480 = vsel %vm416, %v384, %v448
      %v481 = vsel %vm417, %v385, %v449
      %v482 = vsel %vm418, %v386, %v450
      %v483 = vsel %vm419, %v387, %v451
      %v484 = vsel %vm420, %v388, %v452
      %v485 = vsel %vm421, %v389, %v453
      %v486 = vsel %vm422, %v390, %v454
      %v487 = vsel %vm423, %v391, %v455
      %v488 = vsel %vm424, %v392, %v456
      %v489 = vld [vmem:[%s1] sm:$0xff]
      %v490 = vld [vmem:[%s1 + $0x8] sm:$0xff]
      %v491 = vld [vmem:[%s1 + $0x10] sm:$0xff]
      %v492 = vld [vmem:[%s1 + $0x18] sm:$0xff]
      %v493 = vld [vmem:[%s2] sm:$0xff]
      %v494 = vld [vmem:[%s2 + $0x8] sm:$0xff]
      %v495 = vld [vmem:[%s2 + $0x10] sm:$0xff]
      %v496 = vld [vmem:[%s2 + $0x18] sm:$0xff]
      %498 = vset.pattern.permute.xlu0 0
      %499 = vperm.xlu0 %498, %v493
      %v500 = vpop.permute.xlu0 %499
      %503 = vset.pattern.permute.xlu0 0
      %504 = vperm.xlu0 %503, %v494
      %v505 = vpop.permute.xlu0 %504
      %508 = vset.pattern.permute.xlu0 0
      %509 = vperm.xlu0 %508, %v495
      %v510 = vpop.permute.xlu0 %509
      %513 = vset.pattern.permute.xlu0 0
      %514 = vperm.xlu0 %513, %v496
      %v515 = vpop.permute.xlu0 %514
      %v521 = vunpack.c.l.b16 %v489
      %v522 = vunpack.c.h.b16 %v489
      %v523 = vunpack.c.l.b16 %v490
      %v524 = vunpack.c.h.b16 %v490
      %v525 = vunpack.c.l.b16 %v491
      %v526 = vunpack.c.h.b16 %v491
      %v527 = vunpack.c.l.b16 %v492
      %v528 = vunpack.c.h.b16 %v492
      %v529 = vpack.c.b16 %v523, %v521
      %v530 = vpack.c.b16 %v524, %v522
      %v531 = vpack.c.b16 %v527, %v525
      %v532 = vpack.c.b16 %v528, %v526
      %v569 = vunpack.c.l.b16 %v457
      %v570 = vunpack.c.l.b16 %v458
      %v571 = vunpack.c.l.b16 %v459
      %v572 = vunpack.c.l.b16 %v460
      %v573 = vunpack.c.l.b16 %v461
      %v574 = vunpack.c.l.b16 %v462
      %v575 = vunpack.c.l.b16 %v463
      %v576 = vunpack.c.l.b16 %v464
      %v577 = vunpack.c.l.b16 %v465
      %v578 = vunpack.c.l.b16 %v466
      %v579 = vunpack.c.l.b16 %v467
      %v580 = vunpack.c.l.b16 %v468
      %v581 = vunpack.c.l.b16 %v469
      %v582 = vunpack.c.l.b16 %v470
      %v583 = vunpack.c.l.b16 %v471
      %v584 = vunpack.c.l.b16 %v472
      %v585 = vunpack.c.l.b16 %v473
      %v586 = vunpack.c.l.b16 %v474
      %v587 = vunpack.c.l.b16 %v475
      %v588 = vunpack.c.l.b16 %v476
      %v589 = vunpack.c.l.b16 %v477
      %v590 = vunpack.c.l.b16 %v478
      %v591 = vunpack.c.l.b16 %v479
      %v592 = vunpack.c.l.b16 %v480
      %v593 = vunpack.c.l.b16 %v481
      %v594 = vunpack.c.l.b16 %v482
      %v595 = vunpack.c.l.b16 %v483
      %v596 = vunpack.c.l.b16 %v484
      %v597 = vunpack.c.l.b16 %v485
      %v598 = vunpack.c.l.b16 %v486
      %v599 = vunpack.c.l.b16 %v487
      %v600 = vunpack.c.l.b16 %v488
      %v601 = vpack.c.b16 %v570, %v569
      %v602 = vpack.c.b16 %v572, %v571
      %v603 = vpack.c.b16 %v574, %v573
      %v604 = vpack.c.b16 %v576, %v575
      %v605 = vpack.c.b16 %v578, %v577
      %v606 = vpack.c.b16 %v580, %v579
      %v607 = vpack.c.b16 %v582, %v581
      %v608 = vpack.c.b16 %v584, %v583
      %v609 = vpack.c.b16 %v586, %v585
      %v610 = vpack.c.b16 %v588, %v587
      %v611 = vpack.c.b16 %v590, %v589
      %v612 = vpack.c.b16 %v592, %v591
      %v613 = vpack.c.b16 %v594, %v593
      %v614 = vpack.c.b16 %v596, %v595
      %v615 = vpack.c.b16 %v598, %v597
      %v616 = vpack.c.b16 %v600, %v599
      %633 = vmatprep.subr.bf16.mxu0 0
      %634 = vmatpush1.bf16.msra.mxu0 %v608
      %635 = vmatprep.subr.bf16.mxu0 0
      %636 = vmatpush1.bf16.msra.mxu0 %v607
      %637 = vmatprep.subr.bf16.mxu0 0
      %638 = vmatpush1.bf16.msra.mxu0 %v606
      %639 = vmatprep.subr.bf16.mxu0 0
      %640 = vmatpush1.bf16.msra.mxu0 %v605
      %641 = vmatprep.subr.bf16.mxu0 0
      %642 = vmatpush1.bf16.msra.mxu0 %v604
      %643 = vmatprep.subr.bf16.mxu0 0
      %644 = vmatpush1.bf16.msra.mxu0 %v603
      %645 = vmatprep.subr.bf16.mxu0 0
      %646 = vmatpush1.bf16.msra.mxu0 %v602
      %647 = vmatprep.subr.bf16.mxu0 0
      %648 = vmatpush1.bf16.msra.mxu0 %v601
      %649 = vmatprep.subr.bf16.mxu0 0
      %650 = vmatpush2.bf16.msra.mxu0 %v616
      %651 = vmatprep.subr.bf16.mxu0 0
      %652 = vmatpush2.bf16.msra.mxu0 %v615
      %653 = vmatprep.subr.bf16.mxu0 0
      %654 = vmatpush2.bf16.msra.mxu0 %v614
      %655 = vmatprep.subr.bf16.mxu0 0
      %656 = vmatpush2.bf16.msra.mxu0 %v613
      %657 = vmatprep.subr.bf16.mxu0 0
      %658 = vmatpush2.bf16.msra.mxu0 %v612
      %659 = vmatprep.subr.bf16.mxu0 0
      %660 = vmatpush2.bf16.msra.mxu0 %v611
      %661 = vmatprep.subr.bf16.mxu0 0
      %662 = vmatpush2.bf16.msra.mxu0 %v610
      %663 = vmatprep.subr.bf16.mxu0 0
      %664 = vmatpush2.bf16.msra.mxu0 %v609
      %665 = vmatprep.mubr.bf16.mxu0 %v530
      %666 = vmatmul.mubr.bf16.gmra.mxu0 %v529
      %v667 = vpop.f32.mrf.mxu0
      %v668 = vadd.f32 %v500, %v667
      %v669 = vpop.f32.mrf.mxu0
      %v670 = vpop.f32.mrf.mxu0
      %v671 = vadd.f32 %v505, %v670
      %v672 = vpop.f32.mrf.mxu0
      %673 = vmatprep.mubr.bf16.mxu0 %v532
      %674 = vmatmul.mubr.bf16.gmra.mxu0 %v531
      %v675 = vpop.f32.mrf.mxu0
      %v676 = vadd.f32 %v510, %v675
      %v677 = vpop.f32.mrf.mxu0
      %v678 = vpop.f32.mrf.mxu0
      %v679 = vadd.f32 %v515, %v678
      %v680 = vpop.f32.mrf.mxu0
      %681 = vdwg.mxu0
      %vm682 = vcmask 31744
      %v683 = vsel %vm682, %v668, 0.0
      %684 = vadd.xlane.f32.xlu0 %v683
      %v685 = vpop.xlane.xlu0 %684
      %v686 = vsel %vm682, %v671, 0.0
      %687 = vadd.xlane.f32.xlu0 %v686
      %v688 = vpop.xlane.xlu0 %687
      %v689 = vsel %vm682, %v676, 0.0
      %690 = vadd.xlane.f32.xlu0 %v689
      %v691 = vpop.xlane.xlu0 %690
      %v692 = vsel %vm682, %v679, 0.0
      %693 = vadd.xlane.f32.xlu0 %v692
      %v694 = vpop.xlane.xlu0 %693
      %v695 = vrcp.pop 4.0
      %v696 = vmul.f32 %v685, %v695
      %v697 = vmul.f32 %v688, %v695
      %v698 = vmul.f32 %v691, %v695
      %v699 = vmul.f32 %v694, %v695
      %v700 = vld [vmem:[%s343] sm:$0xff]
      %v701 = vld [vmem:[%s343 + $0x8] sm:$0xff]
      %v702 = vld [vmem:[%s343 + $0x10] sm:$0xff]
      %v703 = vld [vmem:[%s343 + $0x18] sm:$0xff]
      %705 = vset.pattern.permute.xlu0 0
      %706 = vperm.xlu0 %705, %v700
      %v707 = vpop.permute.xlu0 %706
      %710 = vset.pattern.permute.xlu0 0
      %711 = vperm.xlu0 %710, %v701
      %v712 = vpop.permute.xlu0 %711
      %715 = vset.pattern.permute.xlu0 0
      %716 = vperm.xlu0 %715, %v702
      %v717 = vpop.permute.xlu0 %716
      %720 = vset.pattern.permute.xlu0 0
      %721 = vperm.xlu0 %720, %v703
      %v722 = vpop.permute.xlu0 %721
      %v724 = vadd.f32 %v668, %v707
      %v725 = vadd.f32 %v671, %v712
      %v726 = vadd.f32 %v676, %v717
      %v727 = vadd.f32 %v679, %v722
      %728 = vst.msk [vmem:[%s353] sm:$0xff] %vm682, %v724
      %729 = vst.msk [vmem:[%s353 + $0x8] sm:$0xff] %vm682, %v725
      %730 = vst.msk [vmem:[%s353 + $0x10] sm:$0xff] %vm682, %v726
      %731 = vst.msk [vmem:[%s353 + $0x18] sm:$0xff] %vm682, %v727
      %v732 = vld [vmem:[%s4] sm:$0xff]
      %v733 = vld [vmem:[%s4 + $0x8] sm:$0xff]
      %v734 = vld [vmem:[%s4 + $0x10] sm:$0xff]
      %v735 = vld [vmem:[%s4 + $0x18] sm:$0xff]
      %v736 = vld [vmem:[%s348] sm:$0xff]
      %v737 = vld [vmem:[%s348 + $0x8] sm:$0xff]
      %v738 = vld [vmem:[%s348 + $0x10] sm:$0xff]
      %v739 = vld [vmem:[%s348 + $0x18] sm:$0xff]
      %vm740 = vcmask 261120
      %v742 = vsel %vm740, %v732, 0
      %v745 = vsel %vm740, %v733, 0
      %v748 = vsel %vm740, %v734, 0
      %v751 = vsel %vm740, %v735, 0
      %753 = vmatprep.subr.mxu0 0.0
      %754 = vmatpush1.msra.mxu0 0.0
      %755 = vmatprep.subr.mxu0 0.0
      %756 = vmatpush1.msra.mxu0 0.0
      %757 = vmatprep.subr.mxu0 0.0
      %758 = vmatpush1.msra.mxu0 0.0
      %759 = vmatprep.subr.mxu0 0.0
      %760 = vmatpush1.msra.mxu0 0.0
      %761 = vmatprep.subr.mxu0 0.0
      %762 = vmatpush1.msra.mxu0 0.0
      %763 = vmatprep.subr.mxu0 0.0
      %764 = vmatpush1.msra.mxu0 0.0
      %765 = vmatprep.subr.mxu0 0.0
      %766 = vmatpush1.msra.mxu0 0.0
      %767 = vmatprep.subr.mxu0 0.0
      %768 = vmatpush1.msra.mxu0 0.0
      %769 = vmatprep.subr.mxu0 0.0
      %770 = vmatpush1.msra.mxu0 0.0
      %771 = vmatprep.subr.mxu0 0.0
      %772 = vmatpush1.msra.mxu0 0.0
      %773 = vmatprep.subr.mxu0 0.0
      %774 = vmatpush1.msra.mxu0 0.0
      %775 = vmatprep.subr.mxu0 0.0
      %776 = vmatpush1.msra.mxu0 0.0
      %777 = vmatprep.subr.mxu0 0.0
      %778 = vmatpush1.msra.mxu0 %v699
      %779 = vmatprep.subr.mxu0 0.0
      %780 = vmatpush1.msra.mxu0 %v698
      %781 = vmatprep.subr.mxu0 0.0
      %782 = vmatpush1.msra.mxu0 %v697
      %783 = vmatprep.subr.mxu0 0.0
      %784 = vmatpush1.msra.mxu0 %v696
      %785 = vmatprep.subr.mxu0 0.0
      %786 = vmatpush2.msra.mxu0 0.0
      %787 = vmatprep.subr.mxu0 0.0
      %788 = vmatpush2.msra.mxu0 0.0
      %789 = vmatprep.subr.mxu0 0.0
      %790 = vmatpush2.msra.mxu0 0.0
      %791 = vmatprep.subr.mxu0 0.0
      %792 = vmatpush2.msra.mxu0 0.0
      %793 = vmatprep.subr.mxu0 0.0
      %794 = vmatpush2.msra.mxu0 0.0
      %795 = vmatprep.subr.mxu0 0.0
      %796 = vmatpush2.msra.mxu0 0.0
      %797 = vmatprep.subr.mxu0 0.0
      %798 = vmatpush2.msra.mxu0 0.0
      %799 = vmatprep.subr.mxu0 0.0
      %800 = vmatpush2.msra.mxu0 0.0
      %801 = vmatprep.subr.mxu0 0.0
      %802 = vmatpush2.msra.mxu0 0.0
      %803 = vmatprep.subr.mxu0 0.0
      %804 = vmatpush2.msra.mxu0 0.0
      %805 = vmatprep.subr.mxu0 0.0
      %806 = vmatpush2.msra.mxu0 0.0
      %807 = vmatprep.subr.mxu0 0.0
      %808 = vmatpush2.msra.mxu0 0.0
      %809 = vmatprep.subr.mxu0 0.0
      %810 = vmatpush2.msra.mxu0 0.0
      %811 = vmatprep.subr.mxu0 0.0
      %812 = vmatpush2.msra.mxu0 0.0
      %813 = vmatprep.subr.mxu0 0.0
      %814 = vmatpush2.msra.mxu0 0.0
      %815 = vmatprep.subr.mxu0 0.0
      %816 = vmatpush2.msra.mxu0 0.0
      %817 = vmatprep.mubr.f32.mxu0 0.0
      %818 = vmatmul.mubr.f32.gmra.mxu0 %v742
      %v819 = vpop.f32.mrf.mxu0
      %v820 = vadd.f32 %v736, %v819
      %v821 = vpop.f32.mrf.mxu0
      %822 = vmatprep.mubr.f32.mxu0 0.0
      %823 = vmatmul.mubr.f32.gmra.mxu0 %v745
      %v824 = vpop.f32.mrf.mxu0
      %v825 = vadd.f32 %v737, %v824
      %v826 = vpop.f32.mrf.mxu0
      %827 = vmatprep.mubr.f32.mxu0 0.0
      %828 = vmatmul.mubr.f32.gmra.mxu0 %v748
      %v829 = vpop.f32.mrf.mxu0
      %v830 = vadd.f32 %v738, %v829
      %v831 = vpop.f32.mrf.mxu0
      %832 = vmatprep.mubr.f32.mxu0 0.0
      %833 = vmatmul.mubr.f32.gmra.mxu0 %v751
      %v834 = vpop.f32.mrf.mxu0
      %v835 = vadd.f32 %v739, %v834
      %v836 = vpop.f32.mrf.mxu0
      %837 = vdwg.mxu0
      %v838 = vld [vmem:[%s6] sm:$0xff]
      %v839 = vld [vmem:[%s6 + $0x8] sm:$0xff]
      %v840 = vld [vmem:[%s6 + $0x10] sm:$0xff]
      %v841 = vld [vmem:[%s6 + $0x18] sm:$0xff]
      %v842 = vadd.f32 %v820, %v838
      %v843 = vadd.f32 %v825, %v839
      %v844 = vadd.f32 %v830, %v840
      %v845 = vadd.f32 %v835, %v841
      %vm846 = vcmp.gt.f32.partialorder %v842, 0.0
      %vm847 = vcmp.gt.f32.partialorder %v843, 0.0
      %vm848 = vcmp.gt.f32.partialorder %v844, 0.0
      %vm849 = vcmp.gt.f32.partialorder %v845, 0.0
      %v850 = vmul.f32 %v842, 1.442695
      %v851 = vpow.pop %v850
      %v852 = vmul.f32 %v843, 1.442695
      %v853 = vpow.pop %v852
      %v854 = vmul.f32 %v844, 1.442695
      %v855 = vpow.pop %v854
      %v856 = vmul.f32 %v845, 1.442695
      %v857 = vpow.pop %v856
      %v858 = vsub.f32 %v851, 1.0
      %v859 = vsub.f32 %v853, 1.0
      %v860 = vsub.f32 %v855, 1.0
      %v861 = vsub.f32 %v857, 1.0
      %v862 = vmul.f32 %v858, 1.6732632
      %v863 = vmul.f32 %v859, 1.6732632
      %v864 = vmul.f32 %v860, 1.6732632
      %v865 = vmul.f32 %v861, 1.6732632
      %v866 = vsel %vm846, %v842, %v862
      %v867 = vsel %vm847, %v843, %v863
      %v868 = vsel %vm848, %v844, %v864
      %v869 = vsel %vm849, %v845, %v865
      %v870 = vmul.f32 %v866, 1.050701
      %v871 = vmul.f32 %v867, 1.050701
      %v872 = vmul.f32 %v868, 1.050701
      %v873 = vmul.f32 %v869, 1.050701
      %vm874 = vcmask 7168
      %875 = vst.msk [vmem:[%s358] sm:$0xff] %vm874, %v870
      %876 = vst.msk [vmem:[%s358 + $0x8] sm:$0xff] %vm874, %v871
      %877 = vst.msk [vmem:[%s358 + $0x10] sm:$0xff] %vm874, %v872
      %878 = vst.msk [vmem:[%s358 + $0x18] sm:$0xff] %vm874, %v873
      %p879 = scmp.lt.s32.totalorder %s20, 1
      %s880 = scalar_select %p879, %s20, 1
      %s881 = smul.addr %s880, 4
      %s882 = smul.addr %s881, 8
      %s883 = scalar_lea.vmem %s7, %s882
      %p884 = scmp.lt.s32.totalorder %s20, 1
      %s885 = scalar_select %p884, %s20, 1
      %s886 = smul.addr %s885, 4
      %s887 = smul.addr %s886, 8
      %s888 = scalar_lea.vmem %s8, %s887
      // Predicated region
      $region49: #{_lambda_.9} parent=47 // pred_check
        %p889 = pneg %p200
      $region50: #{_lambda_.9} parent=47 // pred_check_branch
        %891 = sbr.rel (%p889) target = $region52
      $region51: #{_lambda_.9} parent=47 // pred_region
        _
      $region52: #{_lambda_.9} parent=47 // pred_fallthru
        _
      // Predicated region
      $region53: #{_lambda_.9} parent=47 // pred_check
        %p892 = pneg %p226
      $region54: #{_lambda_.9} parent=47 // pred_check_branch
        %894 = sbr.rel (%p892) target = $region56
      $region55: #{_lambda_.9} parent=47 // pred_region
        _
      $region56: #{_lambda_.9} parent=47 // pred_fallthru
        _
    $region48: #{_lambda_.9} parent=5 // pred_fallthru
      _
    %p895 = scmp.le.s32.totalorder 2, %s15
    // Predicated region
    $region57: #{_lambda_.9} parent=5 // pred_check
      %p896 = pneg %p895
    $region58: #{_lambda_.9} parent=5 // pred_check_branch
      %898 = sbr.rel (%p896) target = $region60
    $region59: #{_lambda_.9} parent=5 // pred_region
      %s899 = ssub.s32 %s15, 2
      // Predicated region
      $region61: #{_lambda_.9} parent=59 // pred_check
        %p900 = pneg %p206
      $region62: #{_lambda_.9} parent=59 // pred_check_branch
        %902 = sbr.rel (%p900) target = $region64
      $region63: #{_lambda_.9} parent=59 // pred_region
        %p903 = scmp.lt.s32.totalorder %s21, 1
        %s904 = scalar_select %p903, %s21, 1
        %s905 = smul.addr %s904, 4
        %s906 = smul.addr %s905, 8
        %s907 = scalar_lea.vmem %s7, %s906
      $region64: #{_lambda_.9} parent=59 // pred_fallthru
        _
      // Predicated region
      $region65: #{_lambda_.9} parent=59 // pred_check
        %p908 = pneg %p232
      $region66: #{_lambda_.9} parent=59 // pred_check_branch
        %910 = sbr.rel (%p908) target = $region68
      $region67: #{_lambda_.9} parent=59 // pred_region
        %p911 = scmp.lt.s32.totalorder %s21, 1
        %s912 = scalar_select %p911, %s21, 1
        %s913 = smul.addr %s912, 4
        %s914 = smul.addr %s913, 8
        %s915 = scalar_lea.vmem %s8, %s914
      $region68: #{_lambda_.9} parent=59 // pred_fallthru
        _
    $region60: #{_lambda_.9} parent=5 // pred_fallthru
      _
  $region6: #{_lambda_.9} parent=0 // loop_footer
    %s19 = sadd.s32 1, %s15
  $region7: #{_lambda_.9} parent=0 // loop_footer_branch
    %14 = sbr.rel target = $region3
  $region8: #{_lambda_.9} parent=0 // loop_exit
    _

// kernel: _lambda_.10
$region0: #{_lambda_.10}
  #allocation0 [shape = 'u32[]', space=smem, size = 0x4, offset = 0x4, fixed_abs, tag = 'smem constant byte address 0x4 - core index']
  #allocation1 [shape = 'u32[144,128]{1,0:T(1,128)}', space=vmem, size = 0x12000, scoped, tag = 'internal scratch']
  %s0 = inlined_call_operand.vmem [shape: bf16[2,32,16], index: 0, kind: input, shape index: {}]
  %s1 = inlined_call_operand.vmem [shape: bf16[16,288], index: 1, kind: input, shape index: {}]
  %s2 = inlined_call_operand.vmem [shape: f32[16,1], index: 2, kind: input, shape index: {}]
  %s3 = inlined_call_operand.vmem [shape: bf16[16,144], index: 3, kind: input, shape index: {}]
  %s4 = inlined_call_operand.vmem [shape: f32[16,1], index: 4, kind: input, shape index: {}]
  %s5 = inlined_call_operand.vmem [shape: f32[2,16,1], index: 5, kind: input, shape index: {}]
  %s6 = inlined_call_operand.vmem [shape: f32[16,1], index: 6, kind: input, shape index: {}]
  %s7 = inlined_call_operand.vmem [shape: f32[16,1], index: 7, kind: input, shape index: {}]
  %s8 = inlined_call_operand.vmem [shape: f32[16,16], index: 8, kind: input, shape index: {}]
  %s9 = inlined_call_operand.vmem [shape: f32[2,16,1], index: 9, kind: input, shape index: {}]
  %s10 = inlined_call_operand.vmem [shape: f32[16,1], index: 10, kind: input, shape index: {}]
  %s11 = inlined_call_operand.vmem [shape: f32[2,16,16], index: 11, kind: output, shape index: {0}]
  %s12 = inlined_call_operand.vmem [shape: f32[2,16,1], index: 12, kind: output, shape index: {1}]
  %13 = xla_tuple %s11, %s12
  %s14 = sld [smem:[#allocation0]]
  $region85: #{_lambda_.10} parent=0
    _
  %s16 = ssub.s32 1, %s14
  %s17 = scalar_select 0, %s16, %s14
  loop: start=0, step=1, limit=4
  $region2: #{_lambda_.10} parent=0 // loop_pre_header
    _
  $region3: #{_lambda_.10} parent=0 // loop_header
    %s19 = sphi 0, %s23
    %p20 = scmp.ge.s32.totalorder %s19, 4
    %s29 = sphi 0, %s31
    %s32 = sphi 0, %s29
    %s33 = sphi 0, %s32
    %s49 = sphi 0, %s33
    %s53 = sphi 0, %s53
    %s55 = sphi 0, %s53
    %s56 = sphi 0, %s55
    %s70 = sphi 0, %s56
    %s74 = sphi 0, %s74
    %s76 = sphi 0, %s74
    %s77 = sphi 0, %s76
    %s91 = sphi 0, %s77
    %s95 = sphi 0, %s95
    %s97 = sphi 0, %s95
    %s98 = sphi 0, %s97
    %s112 = sphi 0, %s98
    %s116 = sphi 0, %s116
    %s118 = sphi 0, %s116
    %s119 = sphi 0, %s118
    %s133 = sphi 0, %s119
    %s139 = sphi 0, %s141
    %s142 = sphi 0, %s139
    %s143 = sphi 0, %s142
    %s159 = sphi 0, %s143
    %s163 = sphi 0, %s163
    %s165 = sphi 0, %s163
    %s166 = sphi 0, %s165
    %s180 = sphi 0, %s166
    %s184 = sphi 0, %s184
    %s186 = sphi 0, %s184
    %s187 = sphi 0, %s186
    %s201 = sphi 0, %s187
    %s205 = sphi 0, %s205
    %s207 = sphi 0, %s205
    %s208 = sphi 0, %s207
    %s222 = sphi 0, %s208
    %s228 = sphi 0, %s230
    %s231 = sphi 0, %s228
    %s232 = sphi 0, %s231
    %s248 = sphi 0, %s232
    %s252 = sphi 0, %s252
    %s254 = sphi 0, %s252
    %s255 = sphi 0, %s254
    %s269 = sphi 0, %s255
    %s275 = sphi 0, %s277
    %s278 = sphi 0, %s275
    %s279 = sphi 0, %s278
    %s295 = sphi 0, %s279
    %s301 = sphi 0, %s303
    %s304 = sphi 0, %s301
    %s305 = sphi 0, %s304
    %s321 = sphi 0, %s305
  $region4: #{_lambda_.10} parent=0 // loop_header_branch
    %22 = sbr.rel (%p20) target = $region8
  $region5: #{_lambda_.10} parent=0 // loop_body
    %s24 = ssub.s32 %s19, 1
    %s25 = ssub.s32 %s19, 2
    %s26 = sadd.s32 %s19, 1
    %s27 = ssub.s32 %s19, %s26
    %p28 = scmp.eq.s32.totalorder %s27, 0
    %s30 = sadd.s32 %s29, 1
    %s31 = scalar_select %p28, %s29, %s30
    %p34 = pneg %p28
    %p35 = scmp.eq.s32.totalorder %s19, 1
    %p36 = por %p34, %p35
    %p37 = scmp.ne.s32.totalorder %s29, %s32
    %p38 = scmp.eq.s32.totalorder %s19, 0
    %p39 = por %p37, %p38
    %p40 = scmp.ne.s32.totalorder %s29, %s32
    %p41 = scmp.eq.s32.totalorder %s24, 1
    %p42 = por %p40, %p41
    %p43 = scmp.ne.s32.totalorder %s32, %s33
    %p44 = scmp.eq.s32.totalorder %s24, 0
    %p45 = por %p43, %p44
    %p46 = scmp.ne.s32.totalorder %s32, %s33
    %p47 = scmp.eq.s32.totalorder %s25, 1
    %p48 = por %p46, %p47
    %p50 = scmp.ne.s32.totalorder %s33, %s49
    %p51 = scmp.eq.s32.totalorder %s25, 0
    %p52 = por %p50, %p51
    %s54 = sadd.s32 %s53, 1
    %p57 = scmp.eq.s32.totalorder %s19, 1
    %p58 = scmp.ne.s32.totalorder %s53, %s55
    %p59 = scmp.eq.s32.totalorder %s19, 0
    %p60 = por %p58, %p59
    %p61 = scmp.ne.s32.totalorder %s53, %s55
    %p62 = scmp.eq.s32.totalorder %s24, 1
    %p63 = por %p61, %p62
    %p64 = scmp.ne.s32.totalorder %s55, %s56
    %p65 = scmp.eq.s32.totalorder %s24, 0
    %p66 = por %p64, %p65
    %p67 = scmp.ne.s32.totalorder %s55, %s56
    %p68 = scmp.eq.s32.totalorder %s25, 1
    %p69 = por %p67, %p68
    %p71 = scmp.ne.s32.totalorder %s56, %s70
    %p72 = scmp.eq.s32.totalorder %s25, 0
    %p73 = por %p71, %p72
    %s75 = sadd.s32 %s74, 1
    %p78 = scmp.eq.s32.totalorder %s19, 1
    %p79 = scmp.ne.s32.totalorder %s74, %s76
    %p80 = scmp.eq.s32.totalorder %s19, 0
    %p81 = por %p79, %p80
    %p82 = scmp.ne.s32.totalorder %s74, %s76
    %p83 = scmp.eq.s32.totalorder %s24, 1
    %p84 = por %p82, %p83
    %p85 = scmp.ne.s32.totalorder %s76, %s77
    %p86 = scmp.eq.s32.totalorder %s24, 0
    %p87 = por %p85, %p86
    %p88 = scmp.ne.s32.totalorder %s76, %s77
    %p89 = scmp.eq.s32.totalorder %s25, 1
    %p90 = por %p88, %p89
    %p92 = scmp.ne.s32.totalorder %s77, %s91
    %p93 = scmp.eq.s32.totalorder %s25, 0
    %p94 = por %p92, %p93
    %s96 = sadd.s32 %s95, 1
    %p99 = scmp.eq.s32.totalorder %s19, 1
    %p100 = scmp.ne.s32.totalorder %s95, %s97
    %p101 = scmp.eq.s32.totalorder %s19, 0
    %p102 = por %p100, %p101
    %p103 = scmp.ne.s32.totalorder %s95, %s97
    %p104 = scmp.eq.s32.totalorder %s24, 1
    %p105 = por %p103, %p104
    %p106 = scmp.ne.s32.totalorder %s97, %s98
    %p107 = scmp.eq.s32.totalorder %s24, 0
    %p108 = por %p106, %p107
    %p109 = scmp.ne.s32.totalorder %s97, %s98
    %p110 = scmp.eq.s32.totalorder %s25, 1
    %p111 = por %p109, %p110
    %p113 = scmp.ne.s32.totalorder %s98, %s112
    %p114 = scmp.eq.s32.totalorder %s25, 0
    %p115 = por %p113, %p114
    %s117 = sadd.s32 %s116, 1
    %p120 = scmp.eq.s32.totalorder %s19, 1
    %p121 = scmp.ne.s32.totalorder %s116, %s118
    %p122 = scmp.eq.s32.totalorder %s19, 0
    %p123 = por %p121, %p122
    %p124 = scmp.ne.s32.totalorder %s116, %s118
    %p125 = scmp.eq.s32.totalorder %s24, 1
    %p126 = por %p124, %p125
    %p127 = scmp.ne.s32.totalorder %s118, %s119
    %p128 = scmp.eq.s32.totalorder %s24, 0
    %p129 = por %p127, %p128
    %p130 = scmp.ne.s32.totalorder %s118, %s119
    %p131 = scmp.eq.s32.totalorder %s25, 1
    %p132 = por %p130, %p131
    %p134 = scmp.ne.s32.totalorder %s119, %s133
    %p135 = scmp.eq.s32.totalorder %s25, 0
    %p136 = por %p134, %p135
    %s137 = ssub.s32 %s19, %s26
    %p138 = scmp.eq.s32.totalorder %s137, 0
    %s140 = sadd.s32 %s139, 1
    %s141 = scalar_select %p138, %s139, %s140
    %p144 = pneg %p138
    %p145 = scmp.eq.s32.totalorder %s19, 1
    %p146 = por %p144, %p145
    %p147 = scmp.ne.s32.totalorder %s139, %s142
    %p148 = scmp.eq.s32.totalorder %s19, 0
    %p149 = por %p147, %p148
    %p150 = scmp.ne.s32.totalorder %s139, %s142
    %p151 = scmp.eq.s32.totalorder %s24, 1
    %p152 = por %p150, %p151
    %p153 = scmp.ne.s32.totalorder %s142, %s143
    %p154 = scmp.eq.s32.totalorder %s24, 0
    %p155 = por %p153, %p154
    %p156 = scmp.ne.s32.totalorder %s142, %s143
    %p157 = scmp.eq.s32.totalorder %s25, 1
    %p158 = por %p156, %p157
    %p160 = scmp.ne.s32.totalorder %s143, %s159
    %p161 = scmp.eq.s32.totalorder %s25, 0
    %p162 = por %p160, %p161
    %s164 = sadd.s32 %s163, 1
    %p167 = scmp.eq.s32.totalorder %s19, 1
    %p168 = scmp.ne.s32.totalorder %s163, %s165
    %p169 = scmp.eq.s32.totalorder %s19, 0
    %p170 = por %p168, %p169
    %p171 = scmp.ne.s32.totalorder %s163, %s165
    %p172 = scmp.eq.s32.totalorder %s24, 1
    %p173 = por %p171, %p172
    %p174 = scmp.ne.s32.totalorder %s165, %s166
    %p175 = scmp.eq.s32.totalorder %s24, 0
    %p176 = por %p174, %p175
    %p177 = scmp.ne.s32.totalorder %s165, %s166
    %p178 = scmp.eq.s32.totalorder %s25, 1
    %p179 = por %p177, %p178
    %p181 = scmp.ne.s32.totalorder %s166, %s180
    %p182 = scmp.eq.s32.totalorder %s25, 0
    %p183 = por %p181, %p182
    %s185 = sadd.s32 %s184, 1
    %p188 = scmp.eq.s32.totalorder %s19, 1
    %p189 = scmp.ne.s32.totalorder %s184, %s186
    %p190 = scmp.eq.s32.totalorder %s19, 0
    %p191 = por %p189, %p190
    %p192 = scmp.ne.s32.totalorder %s184, %s186
    %p193 = scmp.eq.s32.totalorder %s24, 1
    %p194 = por %p192, %p193
    %p195 = scmp.ne.s32.totalorder %s186, %s187
    %p196 = scmp.eq.s32.totalorder %s24, 0
    %p197 = por %p195, %p196
    %p198 = scmp.ne.s32.totalorder %s186, %s187
    %p199 = scmp.eq.s32.totalorder %s25, 1
    %p200 = por %p198, %p199
    %p202 = scmp.ne.s32.totalorder %s187, %s201
    %p203 = scmp.eq.s32.totalorder %s25, 0
    %p204 = por %p202, %p203
    %s206 = sadd.s32 %s205, 1
    %p209 = scmp.eq.s32.totalorder %s19, 1
    %p210 = scmp.ne.s32.totalorder %s205, %s207
    %p211 = scmp.eq.s32.totalorder %s19, 0
    %p212 = por %p210, %p211
    %p213 = scmp.ne.s32.totalorder %s205, %s207
    %p214 = scmp.eq.s32.totalorder %s24, 1
    %p215 = por %p213, %p214
    %p216 = scmp.ne.s32.totalorder %s207, %s208
    %p217 = scmp.eq.s32.totalorder %s24, 0
    %p218 = por %p216, %p217
    %p219 = scmp.ne.s32.totalorder %s207, %s208
    %p220 = scmp.eq.s32.totalorder %s25, 1
    %p221 = por %p219, %p220
    %p223 = scmp.ne.s32.totalorder %s208, %s222
    %p224 = scmp.eq.s32.totalorder %s25, 0
    %p225 = por %p223, %p224
    %s226 = ssub.s32 %s19, %s26
    %p227 = scmp.eq.s32.totalorder %s226, 0
    %s229 = sadd.s32 %s228, 1
    %s230 = scalar_select %p227, %s228, %s229
    %p233 = pneg %p227
    %p234 = scmp.eq.s32.totalorder %s19, 1
    %p235 = por %p233, %p234
    %p236 = scmp.ne.s32.totalorder %s228, %s231
    %p237 = scmp.eq.s32.totalorder %s19, 0
    %p238 = por %p236, %p237
    %p239 = scmp.ne.s32.totalorder %s228, %s231
    %p240 = scmp.eq.s32.totalorder %s24, 1
    %p241 = por %p239, %p240
    %p242 = scmp.ne.s32.totalorder %s231, %s232
    %p243 = scmp.eq.s32.totalorder %s24, 0
    %p244 = por %p242, %p243
    %p245 = scmp.ne.s32.totalorder %s231, %s232
    %p246 = scmp.eq.s32.totalorder %s25, 1
    %p247 = por %p245, %p246
    %p249 = scmp.ne.s32.totalorder %s232, %s248
    %p250 = scmp.eq.s32.totalorder %s25, 0
    %p251 = por %p249, %p250
    %s253 = sadd.s32 %s252, 1
    %p256 = scmp.eq.s32.totalorder %s19, 1
    %p257 = scmp.ne.s32.totalorder %s252, %s254
    %p258 = scmp.eq.s32.totalorder %s19, 0
    %p259 = por %p257, %p258
    %p260 = scmp.ne.s32.totalorder %s252, %s254
    %p261 = scmp.eq.s32.totalorder %s24, 1
    %p262 = por %p260, %p261
    %p263 = scmp.ne.s32.totalorder %s254, %s255
    %p264 = scmp.eq.s32.totalorder %s24, 0
    %p265 = por %p263, %p264
    %p266 = scmp.ne.s32.totalorder %s254, %s255
    %p267 = scmp.eq.s32.totalorder %s25, 1
    %p268 = por %p266, %p267
    %p270 = scmp.ne.s32.totalorder %s255, %s269
    %p271 = scmp.eq.s32.totalorder %s25, 0
    %p272 = por %p270, %p271
    %s273 = ssub.s32 %s19, %s26
    %p274 = scmp.eq.s32.totalorder %s273, 0
    %s276 = sadd.s32 %s275, 1
    %s277 = scalar_select %p274, %s275, %s276
    %p280 = pneg %p274
    %p281 = scmp.eq.s32.totalorder %s19, 1
    %p282 = por %p280, %p281
    %p283 = scmp.ne.s32.totalorder %s275, %s278
    %p284 = scmp.eq.s32.totalorder %s19, 0
    %p285 = por %p283, %p284
    %p286 = scmp.ne.s32.totalorder %s275, %s278
    %p287 = scmp.eq.s32.totalorder %s24, 1
    %p288 = por %p286, %p287
    %p289 = scmp.ne.s32.totalorder %s278, %s279
    %p290 = scmp.eq.s32.totalorder %s24, 0
    %p291 = por %p289, %p290
    %p292 = scmp.ne.s32.totalorder %s278, %s279
    %p293 = scmp.eq.s32.totalorder %s25, 1
    %p294 = por %p292, %p293
    %p296 = scmp.ne.s32.totalorder %s279, %s295
    %p297 = scmp.eq.s32.totalorder %s25, 0
    %p298 = por %p296, %p297
    %s299 = ssub.s32 %s19, %s26
    %p300 = scmp.eq.s32.totalorder %s299, 0
    %s302 = sadd.s32 %s301, 1
    %s303 = scalar_select %p300, %s301, %s302
    %p306 = pneg %p300
    %p307 = scmp.eq.s32.totalorder %s19, 1
    %p308 = por %p306, %p307
    %p309 = scmp.ne.s32.totalorder %s301, %s304
    %p310 = scmp.eq.s32.totalorder %s19, 0
    %p311 = por %p309, %p310
    %p312 = scmp.ne.s32.totalorder %s301, %s304
    %p313 = scmp.eq.s32.totalorder %s24, 1
    %p314 = por %p312, %p313
    %p315 = scmp.ne.s32.totalorder %s304, %s305
    %p316 = scmp.eq.s32.totalorder %s24, 0
    %p317 = por %p315, %p316
    %p318 = scmp.ne.s32.totalorder %s304, %s305
    %p319 = scmp.eq.s32.totalorder %s25, 1
    %p320 = por %p318, %p319
    %p322 = scmp.ne.s32.totalorder %s305, %s321
    %p323 = scmp.eq.s32.totalorder %s25, 0
    %p324 = por %p322, %p323
    %p325 = scmp.le.s32.totalorder 1, %s19
    %p326 = scmp.lt.s32.totalorder %s19, 3
    %p327 = pnand %p325, %p326
    %p328 = pneg %p327
    // Predicated region
    $region9: #{_lambda_.10} parent=5 // pred_check
      _
    $region10: #{_lambda_.10} parent=5 // pred_check_branch
      %330 = sbr.rel (%p327) target = $region12
    $region11: #{_lambda_.10} parent=5 // pred_region
      %s331 = ssub.s32 %s19, 1
      // Predicated region
      $region13: #{_lambda_.10} parent=11 // pred_check
        %p332 = pneg %p66
      $region14: #{_lambda_.10} parent=11 // pred_check_branch
        %334 = sbr.rel (%p332) target = $region16
      $region15: #{_lambda_.10} parent=11 // pred_region
        _
      $region16: #{_lambda_.10} parent=11 // pred_fallthru
        _
      // Predicated region
      $region17: #{_lambda_.10} parent=11 // pred_check
        %p335 = pneg %p87
      $region18: #{_lambda_.10} parent=11 // pred_check_branch
        %337 = sbr.rel (%p335) target = $region20
      $region19: #{_lambda_.10} parent=11 // pred_region
        _
      $region20: #{_lambda_.10} parent=11 // pred_fallthru
        _
      // Predicated region
      $region21: #{_lambda_.10} parent=11 // pred_check
        %p338 = pneg %p108
      $region22: #{_lambda_.10} parent=11 // pred_check_branch
        %340 = sbr.rel (%p338) target = $region24
      $region23: #{_lambda_.10} parent=11 // pred_region
        _
      $region24: #{_lambda_.10} parent=11 // pred_fallthru
        _
      // Predicated region
      $region25: #{_lambda_.10} parent=11 // pred_check
        %p341 = pneg %p129
      $region26: #{_lambda_.10} parent=11 // pred_check_branch
        %343 = sbr.rel (%p341) target = $region28
      $region27: #{_lambda_.10} parent=11 // pred_region
        _
      $region28: #{_lambda_.10} parent=11 // pred_fallthru
        _
      // Predicated region
      $region29: #{_lambda_.10} parent=11 // pred_check
        %p344 = pneg %p176
      $region30: #{_lambda_.10} parent=11 // pred_check_branch
        %346 = sbr.rel (%p344) target = $region32
      $region31: #{_lambda_.10} parent=11 // pred_region
        _
      $region32: #{_lambda_.10} parent=11 // pred_fallthru
        _
      // Predicated region
      $region33: #{_lambda_.10} parent=11 // pred_check
        %p347 = pneg %p197
      $region34: #{_lambda_.10} parent=11 // pred_check_branch
        %349 = sbr.rel (%p347) target = $region36
      $region35: #{_lambda_.10} parent=11 // pred_region
        _
      $region36: #{_lambda_.10} parent=11 // pred_fallthru
        _
      // Predicated region
      $region37: #{_lambda_.10} parent=11 // pred_check
        %p350 = pneg %p218
      $region38: #{_lambda_.10} parent=11 // pred_check_branch
        %352 = sbr.rel (%p350) target = $region40
      $region39: #{_lambda_.10} parent=11 // pred_region
        _
      $region40: #{_lambda_.10} parent=11 // pred_fallthru
        _
      // Predicated region
      $region41: #{_lambda_.10} parent=11 // pred_check
        %p353 = pneg %p265
      $region42: #{_lambda_.10} parent=11 // pred_check_branch
        %355 = sbr.rel (%p353) target = $region44
      $region43: #{_lambda_.10} parent=11 // pred_region
        _
      $region44: #{_lambda_.10} parent=11 // pred_fallthru
        _
    $region12: #{_lambda_.10} parent=5 // pred_fallthru
      _
    %p356 = scmp.lt.s32.totalorder %s19, 2
    // Predicated region
    $region45: #{_lambda_.10} parent=5 // pred_check
      %p357 = pneg %p356
    $region46: #{_lambda_.10} parent=5 // pred_check_branch
      %359 = sbr.rel (%p357) target = $region48
    $region47: #{_lambda_.10} parent=5 // pred_region
      // Predicated region
      $region49: #{_lambda_.10} parent=47 // pred_check
        %p360 = pneg %p39
      $region50: #{_lambda_.10} parent=47 // pred_check_branch
        %362 = sbr.rel (%p360) target = $region52
      $region51: #{_lambda_.10} parent=47 // pred_region
        %p363 = scmp.lt.s32.totalorder %s19, 1
        %s364 = scalar_select %p363, %s19, 1
        %s365 = smul.addr %s364, 4
        %s366 = smul.addr %s365, 4
        %s367 = scalar_lea.vmem %s0, %s366
      $region52: #{_lambda_.10} parent=47 // pred_fallthru
        _
      // Predicated region
      $region53: #{_lambda_.10} parent=47 // pred_check
        %p368 = pneg %p149
      $region54: #{_lambda_.10} parent=47 // pred_check_branch
        %370 = sbr.rel (%p368) target = $region56
      $region55: #{_lambda_.10} parent=47 // pred_region
        %p371 = scmp.lt.s32.totalorder %s19, 1
        %s372 = scalar_select %p371, %s19, 1
        %s373 = smul.addr %s372, 2
        %s374 = smul.addr %s373, 8
        %s375 = scalar_lea.vmem %s5, %s374
      $region56: #{_lambda_.10} parent=47 // pred_fallthru
        _
      // Predicated region
      $region57: #{_lambda_.10} parent=47 // pred_check
        %p376 = pneg %p238
      $region58: #{_lambda_.10} parent=47 // pred_check_branch
        %378 = sbr.rel (%p376) target = $region60
      $region59: #{_lambda_.10} parent=47 // pred_region
        %p379 = scmp.lt.s32.totalorder %s19, 1
        %s380 = scalar_select %p379, %s19, 1
        %s381 = smul.addr %s380, 2
        %s382 = smul.addr %s381, 8
        %s383 = scalar_lea.vmem %s9, %s382
      $region60: #{_lambda_.10} parent=47 // pred_fallthru
        _
    $region48: #{_lambda_.10} parent=5 // pred_fallthru
      _
    %p384 = scmp.le.s32.totalorder 1, %s19
    %p385 = scmp.lt.s32.totalorder %s19, 3
    %p386 = pnand %p384, %p385
    %p387 = pneg %p386
    // Predicated region
    $region61: #{_lambda_.10} parent=5 // pred_check
      _
    $region62: #{_lambda_.10} parent=5 // pred_check_branch
      %389 = sbr.rel (%p386) target = $region64
    $region63: #{_lambda_.10} parent=5 // pred_region
      %s390 = ssub.s32 %s19, 1
      %p391 = scmp.lt.s32.totalorder %s24, 1
      %s392 = scalar_select %p391, %s24, 1
      %s393 = smul.addr %s392, 4
      %s394 = smul.addr %s393, 4
      %s395 = scalar_lea.vmem %s0, %s394
      %p396 = pneg %p45
      %p397 = pneg %p42
      %p398 = pneg %p66
      %p399 = pneg %p63
      %p400 = pneg %p87
      %p401 = pneg %p84
      %p402 = pneg %p108
      %p403 = pneg %p105
      %p404 = pneg %p129
      %p405 = pneg %p126
      %p406 = scmp.lt.s32.totalorder %s24, 1
      %s407 = scalar_select %p406, %s24, 1
      %s408 = smul.addr %s407, 2
      %s409 = smul.addr %s408, 8
      %s410 = scalar_lea.vmem %s5, %s409
      %p411 = pneg %p155
      %p412 = pneg %p152
      %p413 = pneg %p176
      %p414 = pneg %p173
      %p415 = pneg %p197
      %p416 = pneg %p194
      %p417 = pneg %p218
      %p418 = pneg %p215
      %p419 = scmp.lt.s32.totalorder %s24, 1
      %s420 = scalar_select %p419, %s24, 1
      %s421 = smul.addr %s420, 2
      %s422 = smul.addr %s421, 8
      %s423 = scalar_lea.vmem %s9, %s422
      %p424 = pneg %p244
      %p425 = pneg %p241
      %p426 = pneg %p265
      %p427 = pneg %p262
      %p428 = pneg %p291
      %p429 = pneg %p288
      %p430 = scmp.lt.s32.totalorder %s24, 1
      %s431 = scalar_select %p430, %s24, 1
      %s432 = smul.addr %s431, 2
      %s433 = smul.addr %s432, 8
      %s434 = scalar_lea.vmem %s11, %s433
      %p435 = pneg %p317
      %p436 = pneg %p314
      %p437 = scmp.lt.s32.totalorder %s24, 1
      %s438 = scalar_select %p437, %s24, 1
      %s439 = smul.addr %s438, 2
      %s440 = smul.addr %s439, 8
      %s441 = scalar_lea.vmem %s12, %s440
      %p442 = scmp.lt.s32.totalorder %s24, 1
      %s443 = scalar_select %p442, %s24, 1
      %s444 = smul.addr %s443, 4
      %s445 = smul.addr %s444, 4
      %s446 = scalar_lea.vmem %s0, %s445
      %p447 = scmp.lt.s32.totalorder %s24, 1
      %s448 = scalar_select %p447, %s24, 1
      %s449 = smul.addr %s448, 2
      %s450 = smul.addr %s449, 8
      %s451 = scalar_lea.vmem %s5, %s450
      %p452 = scmp.lt.s32.totalorder %s24, 1
      %s453 = scalar_select %p452, %s24, 1
      %s454 = smul.addr %s453, 2
      %s455 = smul.addr %s454, 8
      %s456 = scalar_lea.vmem %s9, %s455
      %p457 = scmp.lt.s32.totalorder %s24, 1
      %s458 = scalar_select %p457, %s24, 1
      %s459 = smul.addr %s458, 2
      %s460 = smul.addr %s459, 8
      %s461 = scalar_lea.vmem %s11, %s460
      %p462 = scmp.lt.s32.totalorder %s24, 1
      %s463 = scalar_select %p462, %s24, 1
      %s464 = smul.addr %s463, 2
      %s465 = smul.addr %s464, 8
      %s466 = scalar_lea.vmem %s12, %s465
      %v471 = vld [vmem:[%s446] sm:$0xf]
      %v472 = vld [vmem:[%s446 + $0x4] sm:$0xf]
      %v473 = vld [vmem:[%s446 + $0x8] sm:$0xf]
      %v474 = vld [vmem:[%s446 + $0xc] sm:$0xf]
      %vm475 = vcmp.ge.bf16.partialorder %v471, 0
      %vm476 = vcmp.ge.bf16.partialorder %v472, 0
      %vm477 = vcmp.ge.bf16.partialorder %v473, 0
      %vm478 = vcmp.ge.bf16.partialorder %v474, 0
      %v479 = vmul.bf16 %v471, 1045249613
      %v480 = vmul.bf16 %v472, 1045249613
      %v481 = vmul.bf16 %v473, 1045249613
      %v482 = vmul.bf16 %v474, 1045249613
      %v483 = vsel %vm475, %v471, %v479
      %v484 = vsel %vm476, %v472, %v480
      %v485 = vsel %vm477, %v473, %v481
      %v486 = vsel %vm478, %v474, %v482
      %v491 = vunpack.c.l.b16 %v483
      %v492 = vunpack.c.l.b16 %v484
      %v493 = vunpack.c.l.b16 %v485
      %v494 = vunpack.c.l.b16 %v486
      %v495 = vpack.c.b16 %v492, %v491
      %v496 = vpack.c.b16 %v494, %v493
      %497 = vrot.lane.b32.xlu0 %v495, 5
      %v498 = vpop.permute.xlu0 %497
      %499 = vrot.lane.b32.xlu0 %v496, 5
      %v500 = vpop.permute.xlu0 %499
      %vm501 = vcmask 39936
      %v504 = vsel %vm501, 0, %v498
      %v506 = vsel %vm501, 0, %v500
      %vm507 = vcmask 171008
      %v508 = vsel %vm507, %v504, 0
      %v510 = vsel %vm507, %v506, 0
      %v512 = vlaneseq
      %v513 = vand.u32 %v512, 127
      %vm514 = vcmp.lt.s32.totalorder %v513, 0
      %v515 = vsub.s32 0, %v513
      %v516 = vsel %vm514, %v515, %v513
      %v517 = vshrl.u32 %v516, 2
      %v518 = vand.u32 %v516, 3
      %v519 = vsub.s32 0, %v518
      %v520 = vsel %vm514, %v519, %v518
      %vm521 = vcmp.ne.s32.totalorder %v520, 0
      %vm522 = vcmp.lt.s32.totalorder %v520, 0
      %vm523 = vmand %vm522, %vm521
      %v524 = vadd.s32 %v520, 4
      %v525 = vsel %vm523, %v524, %v520
      %vm526 = vcmp.ge.s32.totalorder %v525, 1
      %vm527 = vcmp.le.s32.totalorder %v525, 2
      %v528 = vsel %vm526, 1, 0
      %vm529 = vcmp.eq.s32.totalorder %v528, 1
      %vm530 = vmpackc.low %vm529, %vm529
      %v531 = vsel %vm530, 65537, 0
      %v532 = vlaneseq
      %v533 = vshrl.u32 %v532, 7
      %v534 = vsub.s32 0, %v533
      %v535 = vrot.slane %v531, %v534
      %vm536 = vcmp.ne.s16.totalorder %v535, 0
      %v537 = vsel %vm536, %v508, 0
      %v538 = vsel %vm536, %v510, 0
      %v539 = vsel %vm527, 1, 0
      %vm540 = vcmp.eq.s32.totalorder %v539, 1
      %vm541 = vmpackc.low %vm540, %vm540
      %v542 = vsel %vm541, 65537, 0
      %v543 = vlaneseq
      %v544 = vshrl.u32 %v543, 7
      %v545 = vsub.s32 0, %v544
      %v546 = vrot.slane %v542, %v545
      %547 = vrot.lane.b32.xlu0 %v546, 2
      %v548 = vpop.permute.xlu0 %547
      %vm549 = vcmp.ne.s16.totalorder %v548, 0
      %v550 = vsel %vm549, %v508, 0
      %v551 = vsel %vm549, %v510, 0
      %552 = vrot.lane.b32.xlu0 %v535, 4
      %v553 = vpop.permute.xlu0 %552
      %vm554 = vcmp.ne.s16.totalorder %v553, 0
      %v555 = vsel %vm554, %v508, 0
      %v556 = vsel %vm554, %v510, 0
      %557 = vrot.lane.b32.xlu0 %v546, 6
      %v558 = vpop.permute.xlu0 %557
      %vm559 = vcmp.ne.s16.totalorder %v558, 0
      %v560 = vsel %vm559, %v508, 0
      %v561 = vsel %vm559, %v510, 0
      %562 = vrot.lane.b32.xlu0 %v535, 8
      %v563 = vpop.permute.xlu0 %562
      %vm564 = vcmp.ne.s16.totalorder %v563, 0
      %v565 = vsel %vm564, %v508, 0
      %v566 = vsel %vm564, %v510, 0
      %567 = vrot.lane.b32.xlu0 %v546, 10
      %v568 = vpop.permute.xlu0 %567
      %vm569 = vcmp.ne.s16.totalorder %v568, 0
      %v570 = vsel %vm569, %v508, 0
      %v571 = vsel %vm569, %v510, 0
      %574 = vrot.lane.b32.xlu0 %v508, 127
      %v575 = vpop.permute.xlu0 %574
      %576 = vrot.lane.b32.xlu0 %v510, 127
      %v577 = vpop.permute.xlu0 %576
      %582 = vrot.lane.b32.xlu0 %v550, 126
      %v583 = vpop.permute.xlu0 %582
      %584 = vrot.lane.b32.xlu0 %v551, 126
      %v585 = vpop.permute.xlu0 %584
      %590 = vrot.lane.b32.xlu0 %v555, 124
      %v591 = vpop.permute.xlu0 %590
      %592 = vrot.lane.b32.xlu0 %v556, 124
      %v593 = vpop.permute.xlu0 %592
      %596 = vrot.lane.b32.xlu0 %v508, 123
      %v597 = vpop.permute.xlu0 %596
      %598 = vrot.lane.b32.xlu0 %v510, 123
      %v599 = vpop.permute.xlu0 %598
      %604 = vrot.lane.b32.xlu0 %v560, 122
      %v605 = vpop.permute.xlu0 %604
      %606 = vrot.lane.b32.xlu0 %v561, 122
      %v607 = vpop.permute.xlu0 %606
      %612 = vrot.lane.b32.xlu0 %v565, 120
      %v613 = vpop.permute.xlu0 %612
      %614 = vrot.lane.b32.xlu0 %v566, 120
      %v615 = vpop.permute.xlu0 %614
      %618 = vrot.lane.b32.xlu0 %v508, 119
      %v619 = vpop.permute.xlu0 %618
      %620 = vrot.lane.b32.xlu0 %v510, 119
      %v621 = vpop.permute.xlu0 %620
      %626 = vrot.lane.b32.xlu0 %v570, 118
      %v627 = vpop.permute.xlu0 %626
      %628 = vrot.lane.b32.xlu0 %v571, 118
      %v629 = vpop.permute.xlu0 %628
      %v632 = vld [vmem:[%s1] sm:$0xff]
      %v633 = vld [vmem:[%s1 + $0x8] sm:$0xf]
      %v634 = vld [vmem:[%s1 + $0xc] sm:$0xff]
      %v635 = vld [vmem:[%s1 + $0x14] sm:$0xf]
      %v636 = vld [vmem:[%s2] sm:$0xff]
      %v637 = vld [vmem:[%s2 + $0x8] sm:$0xff]
      %639 = vset.pattern.permute.xlu0 0
      %640 = vperm.xlu0 %639, %v636
      %v641 = vpop.permute.xlu0 %640
      %644 = vset.pattern.permute.xlu0 0
      %645 = vperm.xlu0 %644, %v637
      %v646 = vpop.permute.xlu0 %645
      %v652 = vunpack.c.l.b16 %v632
      %v653 = vunpack.c.h.b16 %v632
      %v654 = vunpack.c.l.b16 %v633
      %v655 = vunpack.c.l.b16 %v634
      %v656 = vunpack.c.h.b16 %v634
      %v657 = vunpack.c.l.b16 %v635
      %v658 = vpack.c.b16 %v655, %v652
      %v659 = vpack.c.b16 %v656, %v653
      %v660 = vpack.c.b16 %v657, %v654
      %vm663 = vcmask 261120
      %v665 = vsel %vm663, %v660, 0
      %667 = vmatprep.subr.bf16.mxu0 0
      %668 = vmatpush1.bf16.msra.mxu0 %v593
      %669 = vmatprep.subr.bf16.mxu0 0
      %670 = vmatpush1.bf16.msra.mxu0 %v591
      %671 = vmatprep.subr.bf16.mxu0 0
      %672 = vmatpush1.bf16.msra.mxu0 %v585
      %673 = vmatprep.subr.bf16.mxu0 0
      %674 = vmatpush1.bf16.msra.mxu0 %v583
      %675 = vmatprep.subr.bf16.mxu0 0
      %676 = vmatpush1.bf16.msra.mxu0 %v577
      %677 = vmatprep.subr.bf16.mxu0 0
      %678 = vmatpush1.bf16.msra.mxu0 %v575
      %679 = vmatprep.subr.bf16.mxu0 0
      %680 = vmatpush1.bf16.msra.mxu0 %v538
      %681 = vmatprep.subr.bf16.mxu0 0
      %682 = vmatpush1.bf16.msra.mxu0 %v537
      %683 = vmatprep.subr.bf16.mxu0 0
      %684 = vmatpush2.bf16.msra.mxu0 %v621
      %685 = vmatprep.subr.bf16.mxu0 0
      %686 = vmatpush2.bf16.msra.mxu0 %v619
      %687 = vmatprep.subr.bf16.mxu0 0
      %688 = vmatpush2.bf16.msra.mxu0 %v615
      %689 = vmatprep.subr.bf16.mxu0 0
      %690 = vmatpush2.bf16.msra.mxu0 %v613
      %691 = vmatprep.subr.bf16.mxu0 0
      %692 = vmatpush2.bf16.msra.mxu0 %v607
      %693 = vmatprep.subr.bf16.mxu0 0
      %694 = vmatpush2.bf16.msra.mxu0 %v605
      %695 = vmatprep.subr.bf16.mxu0 0
      %696 = vmatpush2.bf16.msra.mxu0 %v599
      %697 = vmatprep.subr.bf16.mxu0 0
      %698 = vmatpush2.bf16.msra.mxu0 %v597
      %699 = vmatprep.mubr.bf16.mxu0 %v659
      %700 = vmatmul.mubr.bf16.gmra.mxu0 %v658
      %v701 = vpop.f32.mrf.mxu0
      %v702 = vadd.f32 %v641, %v701
      %v703 = vpop.f32.mrf.mxu0
      %v704 = vpop.f32.mrf.mxu0
      %v705 = vadd.f32 %v646, %v704
      %v706 = vpop.f32.mrf.mxu0
      %707 = vdwg.mxu0
      %708 = vmatprep.subr.bf16.mxu0 0
      %709 = vmatpush1.bf16.msra.mxu0 0
      %710 = vmatprep.subr.bf16.mxu0 0
      %711 = vmatpush1.bf16.msra.mxu0 0
      %712 = vmatprep.subr.bf16.mxu0 0
      %713 = vmatpush1.bf16.msra.mxu0 0
      %714 = vmatprep.subr.bf16.mxu0 0
      %715 = vmatpush1.bf16.msra.mxu0 0
      %716 = vmatprep.subr.bf16.mxu0 0
      %717 = vmatpush1.bf16.msra.mxu0 0
      %718 = vmatprep.subr.bf16.mxu0 0
      %719 = vmatpush1.bf16.msra.mxu0 0
      %720 = vmatprep.subr.bf16.mxu0 0
      %721 = vmatpush1.bf16.msra.mxu0 %v629
      %722 = vmatprep.subr.bf16.mxu0 0
      %723 = vmatpush1.bf16.msra.mxu0 %v627
      %724 = vmatprep.subr.bf16.mxu0 0
      %725 = vmatpush2.bf16.msra.mxu0 0
      %726 = vmatprep.subr.bf16.mxu0 0
      %727 = vmatpush2.bf16.msra.mxu0 0
      %728 = vmatprep.subr.bf16.mxu0 0
      %729 = vmatpush2.bf16.msra.mxu0 0
      %730 = vmatprep.subr.bf16.mxu0 0
      %731 = vmatpush2.bf16.msra.mxu0 0
      %732 = vmatprep.subr.bf16.mxu0 0
      %733 = vmatpush2.bf16.msra.mxu0 0
      %734 = vmatprep.subr.bf16.mxu0 0
      %735 = vmatpush2.bf16.msra.mxu0 0
      %736 = vmatprep.subr.bf16.mxu0 0
      %737 = vmatpush2.bf16.msra.mxu0 0
      %738 = vmatprep.subr.bf16.mxu0 0
      %739 = vmatpush2.bf16.msra.mxu0 0
      %740 = vmatprep.mubr.bf16.mxu0 0
      %741 = vmatmul.mubr.bf16.gmra.mxu0 %v665
      %v742 = vpop.f32.mrf.mxu0
      %v743 = vadd.f32 %v702, %v742
      %v744 = vpop.f32.mrf.mxu0
      %v745 = vpop.f32.mrf.mxu0
      %v746 = vadd.f32 %v705, %v745
      %v747 = vpop.f32.mrf.mxu0
      %748 = vdwg.mxu0
      %v749 = vpack.c.bf16 %v746, %v743
      %751 = vrot.lane.b32.xlu0 %v749, 5
      %v752 = vpop.permute.xlu0 %751
      %v754 = vsel %vm501, 0, %v752
      %v755 = vsel %vm507, %v754, 0
      %v757 = vsel %vm536, %v755, 0
      %v758 = vsel %vm549, %v755, 0
      %v759 = vsel %vm554, %v755, 0
      %v760 = vsel %vm559, %v755, 0
      %v761 = vsel %vm564, %v755, 0
      %v762 = vsel %vm569, %v755, 0
      %764 = vrot.lane.b32.xlu0 %v755, 127
      %v765 = vpop.permute.xlu0 %764
      %768 = vrot.lane.b32.xlu0 %v758, 126
      %v769 = vpop.permute.xlu0 %768
      %772 = vrot.lane.b32.xlu0 %v759, 124
      %v773 = vpop.permute.xlu0 %772
      %775 = vrot.lane.b32.xlu0 %v755, 123
      %v776 = vpop.permute.xlu0 %775
      %779 = vrot.lane.b32.xlu0 %v760, 122
      %v780 = vpop.permute.xlu0 %779
      %783 = vrot.lane.b32.xlu0 %v761, 120
      %v784 = vpop.permute.xlu0 %783
      %786 = vrot.lane.b32.xlu0 %v755, 119
      %v787 = vpop.permute.xlu0 %786
      %790 = vrot.lane.b32.xlu0 %v762, 118
      %v791 = vpop.permute.xlu0 %790
      %v793 = vld [vmem:[%s3] sm:$0xff]
      %v794 = vld [vmem:[%s3 + $0x8] sm:$0xff]
      %v795 = vld [vmem:[%s4] sm:$0xff]
      %v796 = vld [vmem:[%s4 + $0x8] sm:$0xff]
      %798 = vset.pattern.permute.xlu0 0
      %799 = vperm.xlu0 %798, %v795
      %v800 = vpop.permute.xlu0 %799
      %803 = vset.pattern.permute.xlu0 0
      %804 = vperm.xlu0 %803, %v796
      %v805 = vpop.permute.xlu0 %804
      %v809 = vunpack.c.l.b16 %v793
      %v810 = vunpack.c.h.b16 %v793
      %v811 = vunpack.c.l.b16 %v794
      %v812 = vunpack.c.h.b16 %v794
      %v813 = vpack.c.b16 %v811, %v809
      %v814 = vpack.c.b16 %v812, %v810
      %vm816 = vcmask 130048
      %v818 = vsel %vm816, %v814, 0
      %820 = vmatprep.subr.bf16.mxu0 0
      %821 = vmatpush1.bf16.msra.mxu0 %v787
      %822 = vmatprep.subr.bf16.mxu0 0
      %823 = vmatpush1.bf16.msra.mxu0 %v784
      %824 = vmatprep.subr.bf16.mxu0 0
      %825 = vmatpush1.bf16.msra.mxu0 %v780
      %826 = vmatprep.subr.bf16.mxu0 0
      %827 = vmatpush1.bf16.msra.mxu0 %v776
      %828 = vmatprep.subr.bf16.mxu0 0
      %829 = vmatpush1.bf16.msra.mxu0 %v773
      %830 = vmatprep.subr.bf16.mxu0 0
      %831 = vmatpush1.bf16.msra.mxu0 %v769
      %832 = vmatprep.subr.bf16.mxu0 0
      %833 = vmatpush1.bf16.msra.mxu0 %v765
      %834 = vmatprep.subr.bf16.mxu0 0
      %835 = vmatpush1.bf16.msra.mxu0 %v757
      %836 = vmatprep.subr.bf16.mxu0 0
      %837 = vmatpush2.bf16.msra.mxu0 0
      %838 = vmatprep.subr.bf16.mxu0 0
      %839 = vmatpush2.bf16.msra.mxu0 0
      %840 = vmatprep.subr.bf16.mxu0 0
      %841 = vmatpush2.bf16.msra.mxu0 0
      %842 = vmatprep.subr.bf16.mxu0 0
      %843 = vmatpush2.bf16.msra.mxu0 0
      %844 = vmatprep.subr.bf16.mxu0 0
      %845 = vmatpush2.bf16.msra.mxu0 0
      %846 = vmatprep.subr.bf16.mxu0 0
      %847 = vmatpush2.bf16.msra.mxu0 0
      %848 = vmatprep.subr.bf16.mxu0 0
      %849 = vmatpush2.bf16.msra.mxu0 0
      %850 = vmatprep.subr.bf16.mxu0 0
      %851 = vmatpush2.bf16.msra.mxu0 %v791
      %852 = vmatprep.mubr.bf16.mxu0 %v818
      %853 = vmatmul.mubr.bf16.gmra.mxu0 %v813
      %v854 = vpop.f32.mrf.mxu0
      %v855 = vadd.f32 %v800, %v854
      %v856 = vpop.f32.mrf.mxu0
      %v857 = vpop.f32.mrf.mxu0
      %v858 = vadd.f32 %v805, %v857
      %v859 = vpop.f32.mrf.mxu0
      %860 = vdwg.mxu0
      %v861 = vsel %vm816, %v855, 0.0
      %862 = vadd.xlane.f32.xlu0 %v861
      %v863 = vpop.xlane.xlu0 %862
      %v864 = vsel %vm816, %v858, 0.0
      %865 = vadd.xlane.f32.xlu0 %v864
      %v866 = vpop.xlane.xlu0 %865
      %v867 = vrcp.pop 16.0
      %v868 = vmul.f32 %v863, %v867
      %v869 = vmul.f32 %v866, %v867
      %v870 = vmul.f32 %v855, %v855
      %v871 = vmul.f32 %v858, %v858
      %v872 = vsel %vm816, %v870, 0.0
      %873 = vadd.xlane.f32.xlu0 %v872
      %v874 = vpop.xlane.xlu0 %873
      %v875 = vsel %vm816, %v871, 0.0
      %876 = vadd.xlane.f32.xlu0 %v875
      %v877 = vpop.xlane.xlu0 %876
      %v878 = vmul.f32 %v874, %v867
      %v879 = vmul.f32 %v877, %v867
      %v880 = vmul.f32 %v868, %v868
      %v881 = vmul.f32 %v869, %v869
      %v882 = vsub.f32 %v878, %v880
      %v883 = vsub.f32 %v879, %v881
      %v884 = vmax.f32 %v882, 0.0
      %v885 = vmax.f32 %v883, 0.0
      %v886 = vsub.f32 %v855, %v868
      %v887 = vsub.f32 %v858, %v869
      %v888 = vadd.f32 %v884, 1e-05
      %v889 = vadd.f32 %v885, 1e-05
      %v890 = vrsqrt.pop %v888
      %v891 = vrsqrt.pop %v889
      %v892 = vmul.f32 %v886, %v890
      %v893 = vmul.f32 %v887, %v891
      %v894 = vld [vmem:[%s6] sm:$0xff]
      %v895 = vld [vmem:[%s6 + $0x8] sm:$0xff]
      %897 = vset.pattern.permute.xlu0 0
      %898 = vperm.xlu0 %897, %v894
      %v899 = vpop.permute.xlu0 %898
      %902 = vset.pattern.permute.xlu0 0
      %903 = vperm.xlu0 %902, %v895
      %v904 = vpop.permute.xlu0 %903
      %v906 = vmul.f32 %v892, %v899
      %v907 = vmul.f32 %v893, %v904
      %v908 = vld [vmem:[%s7] sm:$0xff]
      %v909 = vld [vmem:[%s7 + $0x8] sm:$0xff]
      %911 = vset.pattern.permute.xlu0 0
      %912 = vperm.xlu0 %911, %v908
      %v913 = vpop.permute.xlu0 %912
      %916 = vset.pattern.permute.xlu0 0
      %917 = vperm.xlu0 %916, %v909
      %v918 = vpop.permute.xlu0 %917
      %v920 = vadd.f32 %v906, %v913
      %v921 = vadd.f32 %v907, %v918
      %v922 = vld [vmem:[%s451] sm:$0xff]
      %v923 = vld [vmem:[%s451 + $0x8] sm:$0xff]
      %925 = vset.pattern.permute.xlu0 0
      %926 = vperm.xlu0 %925, %v922
      %v927 = vpop.permute.xlu0 %926
      %930 = vset.pattern.permute.xlu0 0
      %931 = vperm.xlu0 %930, %v923
      %v932 = vpop.permute.xlu0 %931
      %v934 = vadd.f32 %v920, %v927
      %v935 = vadd.f32 %v921, %v932
      %936 = vst.msk [vmem:[%s461] sm:$0xff] %vm816, %v934
      %937 = vst.msk [vmem:[%s461 + $0x8] sm:$0xff] %vm816, %v935
      %v938 = vld [vmem:[%s8] sm:$0xff]
      %v939 = vld [vmem:[%s8 + $0x8] sm:$0xff]
      %v940 = vld [vmem:[%s456] sm:$0xff]
      %v941 = vld [vmem:[%s456 + $0x8] sm:$0xff]
      %v943 = vsel %vm816, %v938, 0
      %v946 = vsel %vm816, %v939, 0
      %948 = vmatprep.subr.mxu0 0.0
      %949 = vmatpush1.msra.mxu0 0.0
      %950 = vmatprep.subr.mxu0 0.0
      %951 = vmatpush1.msra.mxu0 0.0
      %952 = vmatprep.subr.mxu0 0.0
      %953 = vmatpush1.msra.mxu0 0.0
      %954 = vmatprep.subr.mxu0 0.0
      %955 = vmatpush1.msra.mxu0 0.0
      %956 = vmatprep.subr.mxu0 0.0
      %957 = vmatpush1.msra.mxu0 0.0
      %958 = vmatprep.subr.mxu0 0.0
      %959 = vmatpush1.msra.mxu0 0.0
      %960 = vmatprep.subr.mxu0 0.0
      %961 = vmatpush1.msra.mxu0 0.0
      %962 = vmatprep.subr.mxu0 0.0
      %963 = vmatpush1.msra.mxu0 0.0
      %964 = vmatprep.subr.mxu0 0.0
      %965 = vmatpush1.msra.mxu0 0.0
      %966 = vmatprep.subr.mxu0 0.0
      %967 = vmatpush1.msra.mxu0 0.0
      %968 = vmatprep.subr.mxu0 0.0
      %969 = vmatpush1.msra.mxu0 0.0
      %970 = vmatprep.subr.mxu0 0.0
      %971 = vmatpush1.msra.mxu0 0.0
      %972 = vmatprep.subr.mxu0 0.0
      %973 = vmatpush1.msra.mxu0 0.0
      %974 = vmatprep.subr.mxu0 0.0
      %975 = vmatpush1.msra.mxu0 0.0
      %976 = vmatprep.subr.mxu0 0.0
      %977 = vmatpush1.msra.mxu0 %v869
      %978 = vmatprep.subr.mxu0 0.0
      %979 = vmatpush1.msra.mxu0 %v868
      %980 = vmatprep.subr.mxu0 0.0
      %981 = vmatpush2.msra.mxu0 0.0
      %982 = vmatprep.subr.mxu0 0.0
      %983 = vmatpush2.msra.mxu0 0.0
      %984 = vmatprep.subr.mxu0 0.0
      %985 = vmatpush2.msra.mxu0 0.0
      %986 = vmatprep.subr.mxu0 0.0
      %987 = vmatpush2.msra.mxu0 0.0
      %988 = vmatprep.subr.mxu0 0.0
      %989 = vmatpush2.msra.mxu0 0.0
      %990 = vmatprep.subr.mxu0 0.0
      %991 = vmatpush2.msra.mxu0 0.0
      %992 = vmatprep.subr.mxu0 0.0
      %993 = vmatpush2.msra.mxu0 0.0
      %994 = vmatprep.subr.mxu0 0.0
      %995 = vmatpush2.msra.mxu0 0.0
      %996 = vmatprep.subr.mxu0 0.0
      %997 = vmatpush2.msra.mxu0 0.0
      %998 = vmatprep.subr.mxu0 0.0
      %999 = vmatpush2.msra.mxu0 0.0
      %1000 = vmatprep.subr.mxu0 0.0
      %1001 = vmatpush2.msra.mxu0 0.0
      %1002 = vmatprep.subr.mxu0 0.0
      %1003 = vmatpush2.msra.mxu0 0.0
      %1004 = vmatprep.subr.mxu0 0.0
      %1005 = vmatpush2.msra.mxu0 0.0
      %1006 = vmatprep.subr.mxu0 0.0
      %1007 = vmatpush2.msra.mxu0 0.0
      %1008 = vmatprep.subr.mxu0 0.0
      %1009 = vmatpush2.msra.mxu0 0.0
      %1010 = vmatprep.subr.mxu0 0.0
      %1011 = vmatpush2.msra.mxu0 0.0
      %1012 = vmatprep.mubr.f32.mxu0 0.0
      %1013 = vmatmul.mubr.f32.gmra.mxu0 %v943
      %v1014 = vpop.f32.mrf.mxu0
      %v1015 = vadd.f32 %v940, %v1014
      %v1016 = vpop.f32.mrf.mxu0
      %1017 = vmatprep.mubr.f32.mxu0 0.0
      %1018 = vmatmul.mubr.f32.gmra.mxu0 %v946
      %v1019 = vpop.f32.mrf.mxu0
      %v1020 = vadd.f32 %v941, %v1019
      %v1021 = vpop.f32.mrf.mxu0
      %1022 = vdwg.mxu0
      %v1023 = vld [vmem:[%s10] sm:$0xff]
      %v1024 = vld [vmem:[%s10 + $0x8] sm:$0xff]
      %v1025 = vadd.f32 %v1015, %v1023
      %v1026 = vadd.f32 %v1020, %v1024
      %vm1027 = vcmp.gt.f32.partialorder %v1025, 0.0
      %vm1028 = vcmp.gt.f32.partialorder %v1026, 0.0
      %v1029 = vmul.f32 %v1025, 1.442695
      %v1030 = vpow.pop %v1029
      %v1031 = vmul.f32 %v1026, 1.442695
      %v1032 = vpow.pop %v1031
      %v1033 = vsub.f32 %v1030, 1.0
      %v1034 = vsub.f32 %v1032, 1.0
      %v1035 = vmul.f32 %v1033, 1.6732632
      %v1036 = vmul.f32 %v1034, 1.6732632
      %v1037 = vsel %vm1027, %v1025, %v1035
      %v1038 = vsel %vm1028, %v1026, %v1036
      %v1039 = vmul.f32 %v1037, 1.050701
      %v1040 = vmul.f32 %v1038, 1.050701
      %vm1041 = vcmask 7168
      %1042 = vst.msk [vmem:[%s466] sm:$0xff] %vm1041, %v1039
      %1043 = vst.msk [vmem:[%s466 + $0x8] sm:$0xff] %vm1041, %v1040
      %p1044 = scmp.lt.s32.totalorder %s24, 1
      %s1045 = scalar_select %p1044, %s24, 1
      %s1046 = smul.addr %s1045, 2
      %s1047 = smul.addr %s1046, 8
      %s1048 = scalar_lea.vmem %s11, %s1047
      %p1049 = scmp.lt.s32.totalorder %s24, 1
      %s1050 = scalar_select %p1049, %s24, 1
      %s1051 = smul.addr %s1050, 2
      %s1052 = smul.addr %s1051, 8
      %s1053 = scalar_lea.vmem %s12, %s1052
      // Predicated region
      $region65: #{_lambda_.10} parent=63 // pred_check
        %p1054 = pneg %p288
      $region66: #{_lambda_.10} parent=63 // pred_check_branch
        %1056 = sbr.rel (%p1054) target = $region68
      $region67: #{_lambda_.10} parent=63 // pred_region
        _
      $region68: #{_lambda_.10} parent=63 // pred_fallthru
        _
      // Predicated region
      $region69: #{_lambda_.10} parent=63 // pred_check
        %p1057 = pneg %p314
      $region70: #{_lambda_.10} parent=63 // pred_check_branch
        %1059 = sbr.rel (%p1057) target = $region72
      $region71: #{_lambda_.10} parent=63 // pred_region
        _
      $region72: #{_lambda_.10} parent=63 // pred_fallthru
        _
    $region64: #{_lambda_.10} parent=5 // pred_fallthru
      _
    %p1060 = scmp.le.s32.totalorder 2, %s19
    // Predicated region
    $region73: #{_lambda_.10} parent=5 // pred_check
      %p1061 = pneg %p1060
    $region74: #{_lambda_.10} parent=5 // pred_check_branch
      %1063 = sbr.rel (%p1061) target = $region76
    $region75: #{_lambda_.10} parent=5 // pred_region
      %s1064 = ssub.s32 %s19, 2
      // Predicated region
      $region77: #{_lambda_.10} parent=75 // pred_check
        %p1065 = pneg %p294
      $region78: #{_lambda_.10} parent=75 // pred_check_branch
        %1067 = sbr.rel (%p1065) target = $region80
      $region79: #{_lambda_.10} parent=75 // pred_region
        %p1068 = scmp.lt.s32.totalorder %s25, 1
        %s1069 = scalar_select %p1068, %s25, 1
        %s1070 = smul.addr %s1069, 2
        %s1071 = smul.addr %s1070, 8
        %s1072 = scalar_lea.vmem %s11, %s1071
      $region80: #{_lambda_.10} parent=75 // pred_fallthru
        _
      // Predicated region
      $region81: #{_lambda_.10} parent=75 // pred_check
        %p1073 = pneg %p320
      $region82: #{_lambda_.10} parent=75 // pred_check_branch
        %1075 = sbr.rel (%p1073) target = $region84
      $region83: #{_lambda_.10} parent=75 // pred_region
        %p1076 = scmp.lt.s32.totalorder %s25, 1
        %s1077 = scalar_select %p1076, %s25, 1
        %s1078 = smul.addr %s1077, 2
        %s1079 = smul.addr %s1078, 8
        %s1080 = scalar_lea.vmem %s12, %s1079
      $region84: #{_lambda_.10} parent=75 // pred_fallthru
        _
    $region76: #{_lambda_.10} parent=5 // pred_fallthru
      _
  $region6: #{_lambda_.10} parent=0 // loop_footer
    %s23 = sadd.s32 1, %s19
  $region7: #{_lambda_.10} parent=0 // loop_footer_branch
    %18 = sbr.rel target = $region3
  $region8: #{_lambda_.10} parent=0 // loop_exit
    _

// kernel: _lambda_.11
$region0: #{_lambda_.11}
  #allocation0 [shape = 'u32[]', space=smem, size = 0x4, offset = 0x4, fixed_abs, tag = 'smem constant byte address 0x4 - core index']
  #allocation1 [shape = 'u32[144,128]{1,0:T(1,128)}', space=vmem, size = 0x12000, scoped, tag = 'internal scratch']
  %s0 = inlined_call_operand.vmem [shape: bf16[2,32,64], index: 0, kind: input, shape index: {}]
  %s1 = inlined_call_operand.vmem [shape: bf16[8,288], index: 1, kind: input, shape index: {}]
  %s2 = inlined_call_operand.vmem [shape: f32[8,1], index: 2, kind: input, shape index: {}]
  %s3 = inlined_call_operand.vmem [shape: bf16[8,72], index: 3, kind: input, shape index: {}]
  %s4 = inlined_call_operand.vmem [shape: f32[8,1], index: 4, kind: input, shape index: {}]
  %s5 = inlined_call_operand.vmem [shape: f32[2,8,1], index: 5, kind: input, shape index: {}]
  %s6 = inlined_call_operand.vmem [shape: f32[8,1], index: 6, kind: input, shape index: {}]
  %s7 = inlined_call_operand.vmem [shape: f32[8,1], index: 7, kind: input, shape index: {}]
  %s8 = inlined_call_operand.vmem [shape: f32[8,8], index: 8, kind: input, shape index: {}]
  %s9 = inlined_call_operand.vmem [shape: f32[2,8,1], index: 9, kind: input, shape index: {}]
  %s10 = inlined_call_operand.vmem [shape: f32[8,1], index: 10, kind: input, shape index: {}]
  %s11 = inlined_call_operand.vmem [shape: f32[2,8,64], index: 11, kind: output, shape index: {0}]
  %s12 = inlined_call_operand.vmem [shape: f32[2,8,1], index: 12, kind: output, shape index: {1}]
  %13 = xla_tuple %s11, %s12
  %s14 = sld [smem:[#allocation0]]
  $region85: #{_lambda_.11} parent=0
    _
  %s16 = ssub.s32 1, %s14
  %s17 = scalar_select 0, %s16, %s14
  loop: start=0, step=1, limit=4
  $region2: #{_lambda_.11} parent=0 // loop_pre_header
    _
  $region3: #{_lambda_.11} parent=0 // loop_header
    %s19 = sphi 0, %s23
    %p20 = scmp.ge.s32.totalorder %s19, 4
    %s29 = sphi 0, %s31
    %s32 = sphi 0, %s29
    %s33 = sphi 0, %s32
    %s49 = sphi 0, %s33
    %s53 = sphi 0, %s53
    %s55 = sphi 0, %s53
    %s56 = sphi 0, %s55
    %s70 = sphi 0, %s56
    %s74 = sphi 0, %s74
    %s76 = sphi 0, %s74
    %s77 = sphi 0, %s76
    %s91 = sphi 0, %s77
    %s95 = sphi 0, %s95
    %s97 = sphi 0, %s95
    %s98 = sphi 0, %s97
    %s112 = sphi 0, %s98
    %s116 = sphi 0, %s116
    %s118 = sphi 0, %s116
    %s119 = sphi 0, %s118
    %s133 = sphi 0, %s119
    %s139 = sphi 0, %s141
    %s142 = sphi 0, %s139
    %s143 = sphi 0, %s142
    %s159 = sphi 0, %s143
    %s163 = sphi 0, %s163
    %s165 = sphi 0, %s163
    %s166 = sphi 0, %s165
    %s180 = sphi 0, %s166
    %s184 = sphi 0, %s184
    %s186 = sphi 0, %s184
    %s187 = sphi 0, %s186
    %s201 = sphi 0, %s187
    %s205 = sphi 0, %s205
    %s207 = sphi 0, %s205
    %s208 = sphi 0, %s207
    %s222 = sphi 0, %s208
    %s228 = sphi 0, %s230
    %s231 = sphi 0, %s228
    %s232 = sphi 0, %s231
    %s248 = sphi 0, %s232
    %s252 = sphi 0, %s252
    %s254 = sphi 0, %s252
    %s255 = sphi 0, %s254
    %s269 = sphi 0, %s255
    %s275 = sphi 0, %s277
    %s278 = sphi 0, %s275
    %s279 = sphi 0, %s278
    %s295 = sphi 0, %s279
    %s301 = sphi 0, %s303
    %s304 = sphi 0, %s301
    %s305 = sphi 0, %s304
    %s321 = sphi 0, %s305
  $region4: #{_lambda_.11} parent=0 // loop_header_branch
    %22 = sbr.rel (%p20) target = $region8
  $region5: #{_lambda_.11} parent=0 // loop_body
    %s24 = ssub.s32 %s19, 1
    %s25 = ssub.s32 %s19, 2
    %s26 = sadd.s32 %s19, 1
    %s27 = ssub.s32 %s19, %s26
    %p28 = scmp.eq.s32.totalorder %s27, 0
    %s30 = sadd.s32 %s29, 1
    %s31 = scalar_select %p28, %s29, %s30
    %p34 = pneg %p28
    %p35 = scmp.eq.s32.totalorder %s19, 1
    %p36 = por %p34, %p35
    %p37 = scmp.ne.s32.totalorder %s29, %s32
    %p38 = scmp.eq.s32.totalorder %s19, 0
    %p39 = por %p37, %p38
    %p40 = scmp.ne.s32.totalorder %s29, %s32
    %p41 = scmp.eq.s32.totalorder %s24, 1
    %p42 = por %p40, %p41
    %p43 = scmp.ne.s32.totalorder %s32, %s33
    %p44 = scmp.eq.s32.totalorder %s24, 0
    %p45 = por %p43, %p44
    %p46 = scmp.ne.s32.totalorder %s32, %s33
    %p47 = scmp.eq.s32.totalorder %s25, 1
    %p48 = por %p46, %p47
    %p50 = scmp.ne.s32.totalorder %s33, %s49
    %p51 = scmp.eq.s32.totalorder %s25, 0
    %p52 = por %p50, %p51
    %s54 = sadd.s32 %s53, 1
    %p57 = scmp.eq.s32.totalorder %s19, 1
    %p58 = scmp.ne.s32.totalorder %s53, %s55
    %p59 = scmp.eq.s32.totalorder %s19, 0
    %p60 = por %p58, %p59
    %p61 = scmp.ne.s32.totalorder %s53, %s55
    %p62 = scmp.eq.s32.totalorder %s24, 1
    %p63 = por %p61, %p62
    %p64 = scmp.ne.s32.totalorder %s55, %s56
    %p65 = scmp.eq.s32.totalorder %s24, 0
    %p66 = por %p64, %p65
    %p67 = scmp.ne.s32.totalorder %s55, %s56
    %p68 = scmp.eq.s32.totalorder %s25, 1
    %p69 = por %p67, %p68
    %p71 = scmp.ne.s32.totalorder %s56, %s70
    %p72 = scmp.eq.s32.totalorder %s25, 0
    %p73 = por %p71, %p72
    %s75 = sadd.s32 %s74, 1
    %p78 = scmp.eq.s32.totalorder %s19, 1
    %p79 = scmp.ne.s32.totalorder %s74, %s76
    %p80 = scmp.eq.s32.totalorder %s19, 0
    %p81 = por %p79, %p80
    %p82 = scmp.ne.s32.totalorder %s74, %s76
    %p83 = scmp.eq.s32.totalorder %s24, 1
    %p84 = por %p82, %p83
    %p85 = scmp.ne.s32.totalorder %s76, %s77
    %p86 = scmp.eq.s32.totalorder %s24, 0
    %p87 = por %p85, %p86
    %p88 = scmp.ne.s32.totalorder %s76, %s77
    %p89 = scmp.eq.s32.totalorder %s25, 1
    %p90 = por %p88, %p89
    %p92 = scmp.ne.s32.totalorder %s77, %s91
    %p93 = scmp.eq.s32.totalorder %s25, 0
    %p94 = por %p92, %p93
    %s96 = sadd.s32 %s95, 1
    %p99 = scmp.eq.s32.totalorder %s19, 1
    %p100 = scmp.ne.s32.totalorder %s95, %s97
    %p101 = scmp.eq.s32.totalorder %s19, 0
    %p102 = por %p100, %p101
    %p103 = scmp.ne.s32.totalorder %s95, %s97
    %p104 = scmp.eq.s32.totalorder %s24, 1
    %p105 = por %p103, %p104
    %p106 = scmp.ne.s32.totalorder %s97, %s98
    %p107 = scmp.eq.s32.totalorder %s24, 0
    %p108 = por %p106, %p107
    %p109 = scmp.ne.s32.totalorder %s97, %s98
    %p110 = scmp.eq.s32.totalorder %s25, 1
    %p111 = por %p109, %p110
    %p113 = scmp.ne.s32.totalorder %s98, %s112
    %p114 = scmp.eq.s32.totalorder %s25, 0
    %p115 = por %p113, %p114
    %s117 = sadd.s32 %s116, 1
    %p120 = scmp.eq.s32.totalorder %s19, 1
    %p121 = scmp.ne.s32.totalorder %s116, %s118
    %p122 = scmp.eq.s32.totalorder %s19, 0
    %p123 = por %p121, %p122
    %p124 = scmp.ne.s32.totalorder %s116, %s118
    %p125 = scmp.eq.s32.totalorder %s24, 1
    %p126 = por %p124, %p125
    %p127 = scmp.ne.s32.totalorder %s118, %s119
    %p128 = scmp.eq.s32.totalorder %s24, 0
    %p129 = por %p127, %p128
    %p130 = scmp.ne.s32.totalorder %s118, %s119
    %p131 = scmp.eq.s32.totalorder %s25, 1
    %p132 = por %p130, %p131
    %p134 = scmp.ne.s32.totalorder %s119, %s133
    %p135 = scmp.eq.s32.totalorder %s25, 0
    %p136 = por %p134, %p135
    %s137 = ssub.s32 %s19, %s26
    %p138 = scmp.eq.s32.totalorder %s137, 0
    %s140 = sadd.s32 %s139, 1
    %s141 = scalar_select %p138, %s139, %s140
    %p144 = pneg %p138
    %p145 = scmp.eq.s32.totalorder %s19, 1
    %p146 = por %p144, %p145
    %p147 = scmp.ne.s32.totalorder %s139, %s142
    %p148 = scmp.eq.s32.totalorder %s19, 0
    %p149 = por %p147, %p148
    %p150 = scmp.ne.s32.totalorder %s139, %s142
    %p151 = scmp.eq.s32.totalorder %s24, 1
    %p152 = por %p150, %p151
    %p153 = scmp.ne.s32.totalorder %s142, %s143
    %p154 = scmp.eq.s32.totalorder %s24, 0
    %p155 = por %p153, %p154
    %p156 = scmp.ne.s32.totalorder %s142, %s143
    %p157 = scmp.eq.s32.totalorder %s25, 1
    %p158 = por %p156, %p157
    %p160 = scmp.ne.s32.totalorder %s143, %s159
    %p161 = scmp.eq.s32.totalorder %s25, 0
    %p162 = por %p160, %p161
    %s164 = sadd.s32 %s163, 1
    %p167 = scmp.eq.s32.totalorder %s19, 1
    %p168 = scmp.ne.s32.totalorder %s163, %s165
    %p169 = scmp.eq.s32.totalorder %s19, 0
    %p170 = por %p168, %p169
    %p171 = scmp.ne.s32.totalorder %s163, %s165
    %p172 = scmp.eq.s32.totalorder %s24, 1
    %p173 = por %p171, %p172
    %p174 = scmp.ne.s32.totalorder %s165, %s166
    %p175 = scmp.eq.s32.totalorder %s24, 0
    %p176 = por %p174, %p175
    %p177 = scmp.ne.s32.totalorder %s165, %s166
    %p178 = scmp.eq.s32.totalorder %s25, 1
    %p179 = por %p177, %p178
    %p181 = scmp.ne.s32.totalorder %s166, %s180
    %p182 = scmp.eq.s32.totalorder %s25, 0
    %p183 = por %p181, %p182
    %s185 = sadd.s32 %s184, 1
    %p188 = scmp.eq.s32.totalorder %s19, 1
    %p189 = scmp.ne.s32.totalorder %s184, %s186
    %p190 = scmp.eq.s32.totalorder %s19, 0
    %p191 = por %p189, %p190
    %p192 = scmp.ne.s32.totalorder %s184, %s186
    %p193 = scmp.eq.s32.totalorder %s24, 1
    %p194 = por %p192, %p193
    %p195 = scmp.ne.s32.totalorder %s186, %s187
    %p196 = scmp.eq.s32.totalorder %s24, 0
    %p197 = por %p195, %p196
    %p198 = scmp.ne.s32.totalorder %s186, %s187
    %p199 = scmp.eq.s32.totalorder %s25, 1
    %p200 = por %p198, %p199
    %p202 = scmp.ne.s32.totalorder %s187, %s201
    %p203 = scmp.eq.s32.totalorder %s25, 0
    %p204 = por %p202, %p203
    %s206 = sadd.s32 %s205, 1
    %p209 = scmp.eq.s32.totalorder %s19, 1
    %p210 = scmp.ne.s32.totalorder %s205, %s207
    %p211 = scmp.eq.s32.totalorder %s19, 0
    %p212 = por %p210, %p211
    %p213 = scmp.ne.s32.totalorder %s205, %s207
    %p214 = scmp.eq.s32.totalorder %s24, 1
    %p215 = por %p213, %p214
    %p216 = scmp.ne.s32.totalorder %s207, %s208
    %p217 = scmp.eq.s32.totalorder %s24, 0
    %p218 = por %p216, %p217
    %p219 = scmp.ne.s32.totalorder %s207, %s208
    %p220 = scmp.eq.s32.totalorder %s25, 1
    %p221 = por %p219, %p220
    %p223 = scmp.ne.s32.totalorder %s208, %s222
    %p224 = scmp.eq.s32.totalorder %s25, 0
    %p225 = por %p223, %p224
    %s226 = ssub.s32 %s19, %s26
    %p227 = scmp.eq.s32.totalorder %s226, 0
    %s229 = sadd.s32 %s228, 1
    %s230 = scalar_select %p227, %s228, %s229
    %p233 = pneg %p227
    %p234 = scmp.eq.s32.totalorder %s19, 1
    %p235 = por %p233, %p234
    %p236 = scmp.ne.s32.totalorder %s228, %s231
    %p237 = scmp.eq.s32.totalorder %s19, 0
    %p238 = por %p236, %p237
    %p239 = scmp.ne.s32.totalorder %s228, %s231
    %p240 = scmp.eq.s32.totalorder %s24, 1
    %p241 = por %p239, %p240
    %p242 = scmp.ne.s32.totalorder %s231, %s232
    %p243 = scmp.eq.s32.totalorder %s24, 0
    %p244 = por %p242, %p243
    %p245 = scmp.ne.s32.totalorder %s231, %s232
    %p246 = scmp.eq.s32.totalorder %s25, 1
    %p247 = por %p245, %p246
    %p249 = scmp.ne.s32.totalorder %s232, %s248
    %p250 = scmp.eq.s32.totalorder %s25, 0
    %p251 = por %p249, %p250
    %s253 = sadd.s32 %s252, 1
    %p256 = scmp.eq.s32.totalorder %s19, 1
    %p257 = scmp.ne.s32.totalorder %s252, %s254
    %p258 = scmp.eq.s32.totalorder %s19, 0
    %p259 = por %p257, %p258
    %p260 = scmp.ne.s32.totalorder %s252, %s254
    %p261 = scmp.eq.s32.totalorder %s24, 1
    %p262 = por %p260, %p261
    %p263 = scmp.ne.s32.totalorder %s254, %s255
    %p264 = scmp.eq.s32.totalorder %s24, 0
    %p265 = por %p263, %p264
    %p266 = scmp.ne.s32.totalorder %s254, %s255
    %p267 = scmp.eq.s32.totalorder %s25, 1
    %p268 = por %p266, %p267
    %p270 = scmp.ne.s32.totalorder %s255, %s269
    %p271 = scmp.eq.s32.totalorder %s25, 0
    %p272 = por %p270, %p271
    %s273 = ssub.s32 %s19, %s26
    %p274 = scmp.eq.s32.totalorder %s273, 0
    %s276 = sadd.s32 %s275, 1
    %s277 = scalar_select %p274, %s275, %s276
    %p280 = pneg %p274
    %p281 = scmp.eq.s32.totalorder %s19, 1
    %p282 = por %p280, %p281
    %p283 = scmp.ne.s32.totalorder %s275, %s278
    %p284 = scmp.eq.s32.totalorder %s19, 0
    %p285 = por %p283, %p284
    %p286 = scmp.ne.s32.totalorder %s275, %s278
    %p287 = scmp.eq.s32.totalorder %s24, 1
    %p288 = por %p286, %p287
    %p289 = scmp.ne.s32.totalorder %s278, %s279
    %p290 = scmp.eq.s32.totalorder %s24, 0
    %p291 = por %p289, %p290
    %p292 = scmp.ne.s32.totalorder %s278, %s279
    %p293 = scmp.eq.s32.totalorder %s25, 1
    %p294 = por %p292, %p293
    %p296 = scmp.ne.s32.totalorder %s279, %s295
    %p297 = scmp.eq.s32.totalorder %s25, 0
    %p298 = por %p296, %p297
    %s299 = ssub.s32 %s19, %s26
    %p300 = scmp.eq.s32.totalorder %s299, 0
    %s302 = sadd.s32 %s301, 1
    %s303 = scalar_select %p300, %s301, %s302
    %p306 = pneg %p300
    %p307 = scmp.eq.s32.totalorder %s19, 1
    %p308 = por %p306, %p307
    %p309 = scmp.ne.s32.totalorder %s301, %s304
    %p310 = scmp.eq.s32.totalorder %s19, 0
    %p311 = por %p309, %p310
    %p312 = scmp.ne.s32.totalorder %s301, %s304
    %p313 = scmp.eq.s32.totalorder %s24, 1
    %p314 = por %p312, %p313
    %p315 = scmp.ne.s32.totalorder %s304, %s305
    %p316 = scmp.eq.s32.totalorder %s24, 0
    %p317 = por %p315, %p316
    %p318 = scmp.ne.s32.totalorder %s304, %s305
    %p319 = scmp.eq.s32.totalorder %s25, 1
    %p320 = por %p318, %p319
    %p322 = scmp.ne.s32.totalorder %s305, %s321
    %p323 = scmp.eq.s32.totalorder %s25, 0
    %p324 = por %p322, %p323
    %p325 = scmp.le.s32.totalorder 1, %s19
    %p326 = scmp.lt.s32.totalorder %s19, 3
    %p327 = pnand %p325, %p326
    %p328 = pneg %p327
    // Predicated region
    $region9: #{_lambda_.11} parent=5 // pred_check
      _
    $region10: #{_lambda_.11} parent=5 // pred_check_branch
      %330 = sbr.rel (%p327) target = $region12
    $region11: #{_lambda_.11} parent=5 // pred_region
      %s331 = ssub.s32 %s19, 1
      // Predicated region
      $region13: #{_lambda_.11} parent=11 // pred_check
        %p332 = pneg %p66
      $region14: #{_lambda_.11} parent=11 // pred_check_branch
        %334 = sbr.rel (%p332) target = $region16
      $region15: #{_lambda_.11} parent=11 // pred_region
        _
      $region16: #{_lambda_.11} parent=11 // pred_fallthru
        _
      // Predicated region
      $region17: #{_lambda_.11} parent=11 // pred_check
        %p335 = pneg %p87
      $region18: #{_lambda_.11} parent=11 // pred_check_branch
        %337 = sbr.rel (%p335) target = $region20
      $region19: #{_lambda_.11} parent=11 // pred_region
        _
      $region20: #{_lambda_.11} parent=11 // pred_fallthru
        _
      // Predicated region
      $region21: #{_lambda_.11} parent=11 // pred_check
        %p338 = pneg %p108
      $region22: #{_lambda_.11} parent=11 // pred_check_branch
        %340 = sbr.rel (%p338) target = $region24
      $region23: #{_lambda_.11} parent=11 // pred_region
        _
      $region24: #{_lambda_.11} parent=11 // pred_fallthru
        _
      // Predicated region
      $region25: #{_lambda_.11} parent=11 // pred_check
        %p341 = pneg %p129
      $region26: #{_lambda_.11} parent=11 // pred_check_branch
        %343 = sbr.rel (%p341) target = $region28
      $region27: #{_lambda_.11} parent=11 // pred_region
        _
      $region28: #{_lambda_.11} parent=11 // pred_fallthru
        _
      // Predicated region
      $region29: #{_lambda_.11} parent=11 // pred_check
        %p344 = pneg %p176
      $region30: #{_lambda_.11} parent=11 // pred_check_branch
        %346 = sbr.rel (%p344) target = $region32
      $region31: #{_lambda_.11} parent=11 // pred_region
        _
      $region32: #{_lambda_.11} parent=11 // pred_fallthru
        _
      // Predicated region
      $region33: #{_lambda_.11} parent=11 // pred_check
        %p347 = pneg %p197
      $region34: #{_lambda_.11} parent=11 // pred_check_branch
        %349 = sbr.rel (%p347) target = $region36
      $region35: #{_lambda_.11} parent=11 // pred_region
        _
      $region36: #{_lambda_.11} parent=11 // pred_fallthru
        _
      // Predicated region
      $region37: #{_lambda_.11} parent=11 // pred_check
        %p350 = pneg %p218
      $region38: #{_lambda_.11} parent=11 // pred_check_branch
        %352 = sbr.rel (%p350) target = $region40
      $region39: #{_lambda_.11} parent=11 // pred_region
        _
      $region40: #{_lambda_.11} parent=11 // pred_fallthru
        _
      // Predicated region
      $region41: #{_lambda_.11} parent=11 // pred_check
        %p353 = pneg %p265
      $region42: #{_lambda_.11} parent=11 // pred_check_branch
        %355 = sbr.rel (%p353) target = $region44
      $region43: #{_lambda_.11} parent=11 // pred_region
        _
      $region44: #{_lambda_.11} parent=11 // pred_fallthru
        _
    $region12: #{_lambda_.11} parent=5 // pred_fallthru
      _
    %p356 = scmp.lt.s32.totalorder %s19, 2
    // Predicated region
    $region45: #{_lambda_.11} parent=5 // pred_check
      %p357 = pneg %p356
    $region46: #{_lambda_.11} parent=5 // pred_check_branch
      %359 = sbr.rel (%p357) target = $region48
    $region47: #{_lambda_.11} parent=5 // pred_region
      // Predicated region
      $region49: #{_lambda_.11} parent=47 // pred_check
        %p360 = pneg %p39
      $region50: #{_lambda_.11} parent=47 // pred_check_branch
        %362 = sbr.rel (%p360) target = $region52
      $region51: #{_lambda_.11} parent=47 // pred_region
        %p363 = scmp.lt.s32.totalorder %s19, 1
        %s364 = scalar_select %p363, %s19, 1
        %s365 = smul.addr %s364, 4
        %s366 = smul.addr %s365, 4
        %s367 = scalar_lea.vmem %s0, %s366
      $region52: #{_lambda_.11} parent=47 // pred_fallthru
        _
      // Predicated region
      $region53: #{_lambda_.11} parent=47 // pred_check
        %p368 = pneg %p149
      $region54: #{_lambda_.11} parent=47 // pred_check_branch
        %370 = sbr.rel (%p368) target = $region56
      $region55: #{_lambda_.11} parent=47 // pred_region
        %p371 = scmp.lt.s32.totalorder %s19, 1
        %s372 = scalar_select %p371, %s19, 1
        %s373 = smul.addr %s372, 8
        %s374 = scalar_lea.vmem %s5, %s373
      $region56: #{_lambda_.11} parent=47 // pred_fallthru
        _
      // Predicated region
      $region57: #{_lambda_.11} parent=47 // pred_check
        %p375 = pneg %p238
      $region58: #{_lambda_.11} parent=47 // pred_check_branch
        %377 = sbr.rel (%p375) target = $region60
      $region59: #{_lambda_.11} parent=47 // pred_region
        %p378 = scmp.lt.s32.totalorder %s19, 1
        %s379 = scalar_select %p378, %s19, 1
        %s380 = smul.addr %s379, 8
        %s381 = scalar_lea.vmem %s9, %s380
      $region60: #{_lambda_.11} parent=47 // pred_fallthru
        _
    $region48: #{_lambda_.11} parent=5 // pred_fallthru
      _
    %p382 = scmp.le.s32.totalorder 1, %s19
    %p383 = scmp.lt.s32.totalorder %s19, 3
    %p384 = pnand %p382, %p383
    %p385 = pneg %p384
    // Predicated region
    $region61: #{_lambda_.11} parent=5 // pred_check
      _
    $region62: #{_lambda_.11} parent=5 // pred_check_branch
      %387 = sbr.rel (%p384) target = $region64
    $region63: #{_lambda_.11} parent=5 // pred_region
      %s388 = ssub.s32 %s19, 1
      %p389 = scmp.lt.s32.totalorder %s24, 1
      %s390 = scalar_select %p389, %s24, 1
      %s391 = smul.addr %s390, 4
      %s392 = smul.addr %s391, 4
      %s393 = scalar_lea.vmem %s0, %s392
      %p394 = pneg %p45
      %p395 = pneg %p42
      %p396 = pneg %p66
      %p397 = pneg %p63
      %p398 = pneg %p87
      %p399 = pneg %p84
      %p400 = pneg %p108
      %p401 = pneg %p105
      %p402 = pneg %p129
      %p403 = pneg %p126
      %p404 = scmp.lt.s32.totalorder %s24, 1
      %s405 = scalar_select %p404, %s24, 1
      %s406 = smul.addr %s405, 8
      %s407 = scalar_lea.vmem %s5, %s406
      %p408 = pneg %p155
      %p409 = pneg %p152
      %p410 = pneg %p176
      %p411 = pneg %p173
      %p412 = pneg %p197
      %p413 = pneg %p194
      %p414 = pneg %p218
      %p415 = pneg %p215
      %p416 = scmp.lt.s32.totalorder %s24, 1
      %s417 = scalar_select %p416, %s24, 1
      %s418 = smul.addr %s417, 8
      %s419 = scalar_lea.vmem %s9, %s418
      %p420 = pneg %p244
      %p421 = pneg %p241
      %p422 = pneg %p265
      %p423 = pneg %p262
      %p424 = pneg %p291
      %p425 = pneg %p288
      %p426 = scmp.lt.s32.totalorder %s24, 1
      %s427 = scalar_select %p426, %s24, 1
      %s428 = smul.addr %s427, 8
      %s429 = scalar_lea.vmem %s11, %s428
      %p430 = pneg %p317
      %p431 = pneg %p314
      %p432 = scmp.lt.s32.totalorder %s24, 1
      %s433 = scalar_select %p432, %s24, 1
      %s434 = smul.addr %s433, 8
      %s435 = scalar_lea.vmem %s12, %s434
      %p436 = scmp.lt.s32.totalorder %s24, 1
      %s437 = scalar_select %p436, %s24, 1
      %s438 = smul.addr %s437, 4
      %s439 = smul.addr %s438, 4
      %s440 = scalar_lea.vmem %s0, %s439
      %p441 = scmp.lt.s32.totalorder %s24, 1
      %s442 = scalar_select %p441, %s24, 1
      %s443 = smul.addr %s442, 8
      %s444 = scalar_lea.vmem %s5, %s443
      %p445 = scmp.lt.s32.totalorder %s24, 1
      %s446 = scalar_select %p445, %s24, 1
      %s447 = smul.addr %s446, 8
      %s448 = scalar_lea.vmem %s9, %s447
      %p449 = scmp.lt.s32.totalorder %s24, 1
      %s450 = scalar_select %p449, %s24, 1
      %s451 = smul.addr %s450, 8
      %s452 = scalar_lea.vmem %s11, %s451
      %p453 = scmp.lt.s32.totalorder %s24, 1
      %s454 = scalar_select %p453, %s24, 1
      %s455 = smul.addr %s454, 8
      %s456 = scalar_lea.vmem %s12, %s455
      %v461 = vld [vmem:[%s440] sm:$0xf]
      %v462 = vld [vmem:[%s440 + $0x4] sm:$0xf]
      %v463 = vld [vmem:[%s440 + $0x8] sm:$0xf]
      %v464 = vld [vmem:[%s440 + $0xc] sm:$0xf]
      %vm465 = vcmp.ge.bf16.partialorder %v461, 0
      %vm466 = vcmp.ge.bf16.partialorder %v462, 0
      %vm467 = vcmp.ge.bf16.partialorder %v463, 0
      %vm468 = vcmp.ge.bf16.partialorder %v464, 0
      %v469 = vmul.bf16 %v461, 1045249613
      %v470 = vmul.bf16 %v462, 1045249613
      %v471 = vmul.bf16 %v463, 1045249613
      %v472 = vmul.bf16 %v464, 1045249613
      %v473 = vsel %vm465, %v461, %v469
      %v474 = vsel %vm466, %v462, %v470
      %v475 = vsel %vm467, %v463, %v471
      %v476 = vsel %vm468, %v464, %v472
      %v481 = vunpack.c.l.b16 %v473
      %v482 = vunpack.c.l.b16 %v474
      %v483 = vunpack.c.l.b16 %v475
      %v484 = vunpack.c.l.b16 %v476
      %v485 = vpack.c.b16 %v482, %v481
      %v486 = vpack.c.b16 %v484, %v483
      %487 = vrot.lane.b32.xlu0 %v485, 9
      %v488 = vpop.permute.xlu0 %487
      %489 = vrot.lane.b32.xlu0 %v486, 9
      %v490 = vpop.permute.xlu0 %489
      %vm491 = vcmask 72704
      %v494 = vsel %vm491, 0, %v488
      %v496 = vsel %vm491, 0, %v490
      %vm497 = vcmask 596992
      %v498 = vsel %vm497, %v494, 0
      %v500 = vsel %vm497, %v496, 0
      %v502 = vlaneseq
      %v503 = vand.u32 %v502, 127
      %vm504 = vcmp.lt.s32.totalorder %v503, 0
      %v505 = vsub.s32 0, %v503
      %v506 = vsel %vm504, %v505, %v503
      %v507 = vshrl.u32 %v506, 3
      %v508 = vand.u32 %v506, 7
      %v509 = vsub.s32 0, %v508
      %v510 = vsel %vm504, %v509, %v508
      %vm511 = vcmp.ne.s32.totalorder %v510, 0
      %vm512 = vcmp.lt.s32.totalorder %v510, 0
      %vm513 = vmand %vm512, %vm511
      %v514 = vadd.s32 %v510, 8
      %v515 = vsel %vm513, %v514, %v510
      %vm516 = vcmp.ge.s32.totalorder %v515, 1
      %vm517 = vcmp.le.s32.totalorder %v515, 6
      %v518 = vsel %vm516, 1, 0
      %vm519 = vcmp.eq.s32.totalorder %v518, 1
      %vm520 = vmpackc.low %vm519, %vm519
      %v521 = vsel %vm520, 65537, 0
      %v522 = vlaneseq
      %v523 = vshrl.u32 %v522, 7
      %v524 = vsub.s32 0, %v523
      %v525 = vrot.slane %v521, %v524
      %vm526 = vcmp.ne.s16.totalorder %v525, 0
      %v527 = vsel %vm526, %v498, 0
      %v528 = vsel %vm526, %v500, 0
      %v529 = vsel %vm517, 1, 0
      %vm530 = vcmp.eq.s32.totalorder %v529, 1
      %vm531 = vmpackc.low %vm530, %vm530
      %v532 = vsel %vm531, 65537, 0
      %v533 = vlaneseq
      %v534 = vshrl.u32 %v533, 7
      %v535 = vsub.s32 0, %v534
      %v536 = vrot.slane %v532, %v535
      %537 = vrot.lane.b32.xlu0 %v536, 2
      %v538 = vpop.permute.xlu0 %537
      %vm539 = vcmp.ne.s16.totalorder %v538, 0
      %v540 = vsel %vm539, %v498, 0
      %v541 = vsel %vm539, %v500, 0
      %542 = vrot.lane.b32.xlu0 %v525, 8
      %v543 = vpop.permute.xlu0 %542
      %vm544 = vcmp.ne.s16.totalorder %v543, 0
      %v545 = vsel %vm544, %v498, 0
      %v546 = vsel %vm544, %v500, 0
      %547 = vrot.lane.b32.xlu0 %v536, 10
      %v548 = vpop.permute.xlu0 %547
      %vm549 = vcmp.ne.s16.totalorder %v548, 0
      %v550 = vsel %vm549, %v498, 0
      %v551 = vsel %vm549, %v500, 0
      %552 = vrot.lane.b32.xlu0 %v525, 16
      %v553 = vpop.permute.xlu0 %552
      %vm554 = vcmp.ne.s16.totalorder %v553, 0
      %v555 = vsel %vm554, %v498, 0
      %v556 = vsel %vm554, %v500, 0
      %557 = vrot.lane.b32.xlu0 %v536, 18
      %v558 = vpop.permute.xlu0 %557
      %vm559 = vcmp.ne.s16.totalorder %v558, 0
      %v560 = vsel %vm559, %v498, 0
      %v561 = vsel %vm559, %v500, 0
      %564 = vrot.lane.b32.xlu0 %v498, 127
      %v565 = vpop.permute.xlu0 %564
      %566 = vrot.lane.b32.xlu0 %v500, 127
      %v567 = vpop.permute.xlu0 %566
      %572 = vrot.lane.b32.xlu0 %v540, 126
      %v573 = vpop.permute.xlu0 %572
      %574 = vrot.lane.b32.xlu0 %v541, 126
      %v575 = vpop.permute.xlu0 %574
      %580 = vrot.lane.b32.xlu0 %v545, 120
      %v581 = vpop.permute.xlu0 %580
      %582 = vrot.lane.b32.xlu0 %v546, 120
      %v583 = vpop.permute.xlu0 %582
      %586 = vrot.lane.b32.xlu0 %v498, 119
      %v587 = vpop.permute.xlu0 %586
      %588 = vrot.lane.b32.xlu0 %v500, 119
      %v589 = vpop.permute.xlu0 %588
      %594 = vrot.lane.b32.xlu0 %v550, 118
      %v595 = vpop.permute.xlu0 %594
      %596 = vrot.lane.b32.xlu0 %v551, 118
      %v597 = vpop.permute.xlu0 %596
      %602 = vrot.lane.b32.xlu0 %v555, 112
      %v603 = vpop.permute.xlu0 %602
      %604 = vrot.lane.b32.xlu0 %v556, 112
      %v605 = vpop.permute.xlu0 %604
      %608 = vrot.lane.b32.xlu0 %v498, 111
      %v609 = vpop.permute.xlu0 %608
      %610 = vrot.lane.b32.xlu0 %v500, 111
      %v611 = vpop.permute.xlu0 %610
      %616 = vrot.lane.b32.xlu0 %v560, 110
      %v617 = vpop.permute.xlu0 %616
      %618 = vrot.lane.b32.xlu0 %v561, 110
      %v619 = vpop.permute.xlu0 %618
      %v622 = vld [vmem:[%s1] sm:$0xff]
      %v623 = vld [vmem:[%s1 + $0x8] sm:$0xf]
      %v624 = vld [vmem:[%s2] sm:$0xff]
      %626 = vset.pattern.permute.xlu0 0
      %627 = vperm.xlu0 %626, %v624
      %v628 = vpop.permute.xlu0 %627
      %v632 = vunpack.c.l.b16 %v622
      %v633 = vunpack.c.h.b16 %v622
      %v634 = vunpack.c.l.b16 %v623
      %v635 = vpack.c.b16 %v632, %v632
      %v636 = vpack.c.b16 %v633, %v633
      %v637 = vpack.c.b16 %v634, %v634
      %vm640 = vcmask 261120
      %v642 = vsel %vm640, %v637, 0
      %644 = vmatprep.subr.bf16.mxu0 0
      %645 = vmatpush1.bf16.msra.mxu0 %v583
      %646 = vmatprep.subr.bf16.mxu0 0
      %647 = vmatpush1.bf16.msra.mxu0 %v581
      %648 = vmatprep.subr.bf16.mxu0 0
      %649 = vmatpush1.bf16.msra.mxu0 %v575
      %650 = vmatprep.subr.bf16.mxu0 0
      %651 = vmatpush1.bf16.msra.mxu0 %v573
      %652 = vmatprep.subr.bf16.mxu0 0
      %653 = vmatpush1.bf16.msra.mxu0 %v567
      %654 = vmatprep.subr.bf16.mxu0 0
      %655 = vmatpush1.bf16.msra.mxu0 %v565
      %656 = vmatprep.subr.bf16.mxu0 0
      %657 = vmatpush1.bf16.msra.mxu0 %v528
      %658 = vmatprep.subr.bf16.mxu0 0
      %659 = vmatpush1.bf16.msra.mxu0 %v527
      %660 = vmatprep.subr.bf16.mxu0 0
      %661 = vmatpush2.bf16.msra.mxu0 %v611
      %662 = vmatprep.subr.bf16.mxu0 0
      %663 = vmatpush2.bf16.msra.mxu0 %v609
      %664 = vmatprep.subr.bf16.mxu0 0
      %665 = vmatpush2.bf16.msra.mxu0 %v605
      %666 = vmatprep.subr.bf16.mxu0 0
      %667 = vmatpush2.bf16.msra.mxu0 %v603
      %668 = vmatprep.subr.bf16.mxu0 0
      %669 = vmatpush2.bf16.msra.mxu0 %v597
      %670 = vmatprep.subr.bf16.mxu0 0
      %671 = vmatpush2.bf16.msra.mxu0 %v595
      %672 = vmatprep.subr.bf16.mxu0 0
      %673 = vmatpush2.bf16.msra.mxu0 %v589
      %674 = vmatprep.subr.bf16.mxu0 0
      %675 = vmatpush2.bf16.msra.mxu0 %v587
      %676 = vmatprep.mubr.bf16.mxu0 %v636
      %677 = vmatmul.mubr.bf16.gmra.mxu0 %v635
      %v678 = vpop.f32.mrf.mxu0
      %v679 = vadd.f32 %v628, %v678
      %v680 = vpop.f32.mrf.mxu0
      %v681 = vpop.f32.mrf.mxu0
      %v682 = vpop.f32.mrf.mxu0
      %683 = vdwg.mxu0
      %684 = vmatprep.subr.bf16.mxu0 0
      %685 = vmatpush1.bf16.msra.mxu0 0
      %686 = vmatprep.subr.bf16.mxu0 0
      %687 = vmatpush1.bf16.msra.mxu0 0
      %688 = vmatprep.subr.bf16.mxu0 0
      %689 = vmatpush1.bf16.msra.mxu0 0
      %690 = vmatprep.subr.bf16.mxu0 0
      %691 = vmatpush1.bf16.msra.mxu0 0
      %692 = vmatprep.subr.bf16.mxu0 0
      %693 = vmatpush1.bf16.msra.mxu0 0
      %694 = vmatprep.subr.bf16.mxu0 0
      %695 = vmatpush1.bf16.msra.mxu0 0
      %696 = vmatprep.subr.bf16.mxu0 0
      %697 = vmatpush1.bf16.msra.mxu0 %v619
      %698 = vmatprep.subr.bf16.mxu0 0
      %699 = vmatpush1.bf16.msra.mxu0 %v617
      %700 = vmatprep.subr.bf16.mxu0 0
      %701 = vmatpush2.bf16.msra.mxu0 0
      %702 = vmatprep.subr.bf16.mxu0 0
      %703 = vmatpush2.bf16.msra.mxu0 0
      %704 = vmatprep.subr.bf16.mxu0 0
      %705 = vmatpush2.bf16.msra.mxu0 0
      %706 = vmatprep.subr.bf16.mxu0 0
      %707 = vmatpush2.bf16.msra.mxu0 0
      %708 = vmatprep.subr.bf16.mxu0 0
      %709 = vmatpush2.bf16.msra.mxu0 0
      %710 = vmatprep.subr.bf16.mxu0 0
      %711 = vmatpush2.bf16.msra.mxu0 0
      %712 = vmatprep.subr.bf16.mxu0 0
      %713 = vmatpush2.bf16.msra.mxu0 0
      %714 = vmatprep.subr.bf16.mxu0 0
      %715 = vmatpush2.bf16.msra.mxu0 0
      %716 = vmatprep.mubr.bf16.mxu0 0
      %717 = vmatmul.mubr.bf16.gmra.mxu0 %v642
      %v718 = vpop.f32.mrf.mxu0
      %v719 = vadd.f32 %v679, %v718
      %v720 = vpop.f32.mrf.mxu0
      %v721 = vpop.f32.mrf.mxu0
      %v722 = vpop.f32.mrf.mxu0
      %723 = vdwg.mxu0
      %v724 = vpack.c.bf16 %v719, %v719
      %726 = vrot.lane.b32.xlu0 %v724, 9
      %v727 = vpop.permute.xlu0 %726
      %v729 = vsel %vm491, 0, %v727
      %v730 = vsel %vm497, %v729, 0
      %v732 = vsel %vm520, %v730, 0
      %v733 = vsel %vm539, %v730, 0
      %v734 = vsel %vm544, %v730, 0
      %v735 = vsel %vm549, %v730, 0
      %v736 = vsel %vm554, %v730, 0
      %v737 = vsel %vm559, %v730, 0
      %v739 = vrot.slane %v730, 4
      %740 = vrot.lane.b32.xlu0 %v739, 127
      %v741 = vpop.permute.xlu0 %740
      %743 = vrot.lane.b32.xlu0 %v733, 126
      %v744 = vpop.permute.xlu0 %743
      %v746 = vrot.slane %v734, 4
      %747 = vrot.lane.b32.xlu0 %v746, 120
      %v748 = vpop.permute.xlu0 %747
      %749 = vrot.lane.b32.xlu0 %v730, 119
      %v750 = vpop.permute.xlu0 %749
      %v752 = vrot.slane %v735, 4
      %753 = vrot.lane.b32.xlu0 %v752, 118
      %v754 = vpop.permute.xlu0 %753
      %756 = vrot.lane.b32.xlu0 %v736, 112
      %v757 = vpop.permute.xlu0 %756
      %758 = vrot.lane.b32.xlu0 %v739, 111
      %v759 = vpop.permute.xlu0 %758
      %761 = vrot.lane.b32.xlu0 %v737, 110
      %v762 = vpop.permute.xlu0 %761
      %vm763 = vcmask 1043456
      %v766 = vsel %vm763, %v732, %v741
      %v770 = vsel %vm763, %v744, %v748
      %v774 = vsel %vm763, %v750, %v754
      %v778 = vsel %vm763, %v757, %v759
      %v780 = vld [vmem:[%s3] sm:$0xf]
      %v781 = vld [vmem:[%s4] sm:$0xff]
      %783 = vset.pattern.permute.xlu0 0
      %784 = vperm.xlu0 %783, %v781
      %v785 = vpop.permute.xlu0 %784
      %vm787 = vcmask 588800
      %v789 = vsel %vm787, %v780, 0
      %v792 = vsel %vm763, %v762, 0
      %794 = vmatprep.subr.bf16.mxu0 0
      %795 = vmatpush1.bf16.msra.mxu0 0
      %796 = vmatprep.subr.bf16.mxu0 0
      %797 = vmatpush1.bf16.msra.mxu0 0
      %798 = vmatprep.subr.bf16.mxu0 0
      %799 = vmatpush1.bf16.msra.mxu0 0
      %800 = vmatprep.subr.bf16.mxu0 0
      %801 = vmatpush1.bf16.msra.mxu0 %v792
      %802 = vmatprep.subr.bf16.mxu0 0
      %803 = vmatpush1.bf16.msra.mxu0 %v778
      %804 = vmatprep.subr.bf16.mxu0 0
      %805 = vmatpush1.bf16.msra.mxu0 %v774
      %806 = vmatprep.subr.bf16.mxu0 0
      %807 = vmatpush1.bf16.msra.mxu0 %v770
      %808 = vmatprep.subr.bf16.mxu0 0
      %809 = vmatpush1.bf16.msra.mxu0 %v766
      %810 = vmatprep.subr.bf16.mxu0 0
      %811 = vmatpush2.bf16.msra.mxu0 0
      %812 = vmatprep.subr.bf16.mxu0 0
      %813 = vmatpush2.bf16.msra.mxu0 0
      %814 = vmatprep.subr.bf16.mxu0 0
      %815 = vmatpush2.bf16.msra.mxu0 0
      %816 = vmatprep.subr.bf16.mxu0 0
      %817 = vmatpush2.bf16.msra.mxu0 0
      %818 = vmatprep.subr.bf16.mxu0 0
      %819 = vmatpush2.bf16.msra.mxu0 0
      %820 = vmatprep.subr.bf16.mxu0 0
      %821 = vmatpush2.bf16.msra.mxu0 0
      %822 = vmatprep.subr.bf16.mxu0 0
      %823 = vmatpush2.bf16.msra.mxu0 0
      %824 = vmatprep.subr.bf16.mxu0 0
      %825 = vmatpush2.bf16.msra.mxu0 0
      %826 = vmatprep.mubr.bf16.mxu0 0
      %827 = vmatmul.mubr.bf16.gmra.mxu0 %v789
      %v828 = vpop.f32.mrf.mxu0
      %v829 = vadd.f32 %v785, %v828
      %v830 = vpop.f32.mrf.mxu0
      %v831 = vpop.f32.mrf.mxu0
      %v832 = vpop.f32.mrf.mxu0
      %833 = vdwg.mxu0
      %vm834 = vcmask 523264
      %v835 = vsel %vm834, %v829, 0.0
      %836 = vadd.xlane.f32.xlu0 %v835
      %v837 = vpop.xlane.xlu0 %836
      %v838 = vrcp.pop 64.0
      %v839 = vmul.f32 %v837, %v838
      %v840 = vmul.f32 %v829, %v829
      %v841 = vsel %vm834, %v840, 0.0
      %842 = vadd.xlane.f32.xlu0 %v841
      %v843 = vpop.xlane.xlu0 %842
      %v844 = vmul.f32 %v843, %v838
      %v845 = vmul.f32 %v839, %v839
      %v846 = vsub.f32 %v844, %v845
      %v847 = vmax.f32 %v846, 0.0
      %v848 = vsub.f32 %v829, %v839
      %v849 = vadd.f32 %v847, 1e-05
      %v850 = vrsqrt.pop %v849
      %v851 = vmul.f32 %v848, %v850
      %v852 = vld [vmem:[%s6] sm:$0xff]
      %854 = vset.pattern.permute.xlu0 0
      %855 = vperm.xlu0 %854, %v852
      %v856 = vpop.permute.xlu0 %855
      %v858 = vmul.f32 %v851, %v856
      %v859 = vld [vmem:[%s7] sm:$0xff]
      %861 = vset.pattern.permute.xlu0 0
      %862 = vperm.xlu0 %861, %v859
      %v863 = vpop.permute.xlu0 %862
      %v865 = vadd.f32 %v858, %v863
      %v866 = vld [vmem:[%s444] sm:$0xff]
      %868 = vset.pattern.permute.xlu0 0
      %869 = vperm.xlu0 %868, %v866
      %v870 = vpop.permute.xlu0 %869
      %v872 = vadd.f32 %v865, %v870
      %873 = vst.msk [vmem:[%s452] sm:$0xff] %vm834, %v872
      %v874 = vld [vmem:[%s8] sm:$0xff]
      %v875 = vld [vmem:[%s448] sm:$0xff]
      %vm876 = vcmask 64512
      %v878 = vsel %vm876, %v874, 0
      %880 = vmatprep.subr.mxu0 0.0
      %881 = vmatpush1.msra.mxu0 0.0
      %882 = vmatprep.subr.mxu0 0.0
      %883 = vmatpush1.msra.mxu0 0.0
      %884 = vmatprep.subr.mxu0 0.0
      %885 = vmatpush1.msra.mxu0 0.0
      %886 = vmatprep.subr.mxu0 0.0
      %887 = vmatpush1.msra.mxu0 0.0
      %888 = vmatprep.subr.mxu0 0.0
      %889 = vmatpush1.msra.mxu0 0.0
      %890 = vmatprep.subr.mxu0 0.0
      %891 = vmatpush1.msra.mxu0 0.0
      %892 = vmatprep.subr.mxu0 0.0
      %893 = vmatpush1.msra.mxu0 0.0
      %894 = vmatprep.subr.mxu0 0.0
      %895 = vmatpush1.msra.mxu0 0.0
      %896 = vmatprep.subr.mxu0 0.0
      %897 = vmatpush1.msra.mxu0 0.0
      %898 = vmatprep.subr.mxu0 0.0
      %899 = vmatpush1.msra.mxu0 0.0
      %900 = vmatprep.subr.mxu0 0.0
      %901 = vmatpush1.msra.mxu0 0.0
      %902 = vmatprep.subr.mxu0 0.0
      %903 = vmatpush1.msra.mxu0 0.0
      %904 = vmatprep.subr.mxu0 0.0
      %905 = vmatpush1.msra.mxu0 0.0
      %906 = vmatprep.subr.mxu0 0.0
      %907 = vmatpush1.msra.mxu0 0.0
      %908 = vmatprep.subr.mxu0 0.0
      %909 = vmatpush1.msra.mxu0 0.0
      %910 = vmatprep.subr.mxu0 0.0
      %911 = vmatpush1.msra.mxu0 %v839
      %912 = vmatprep.subr.mxu0 0.0
      %913 = vmatpush2.msra.mxu0 0.0
      %914 = vmatprep.subr.mxu0 0.0
      %915 = vmatpush2.msra.mxu0 0.0
      %916 = vmatprep.subr.mxu0 0.0
      %917 = vmatpush2.msra.mxu0 0.0
      %918 = vmatprep.subr.mxu0 0.0
      %919 = vmatpush2.msra.mxu0 0.0
      %920 = vmatprep.subr.mxu0 0.0
      %921 = vmatpush2.msra.mxu0 0.0
      %922 = vmatprep.subr.mxu0 0.0
      %923 = vmatpush2.msra.mxu0 0.0
      %924 = vmatprep.subr.mxu0 0.0
      %925 = vmatpush2.msra.mxu0 0.0
      %926 = vmatprep.subr.mxu0 0.0
      %927 = vmatpush2.msra.mxu0 0.0
      %928 = vmatprep.subr.mxu0 0.0
      %929 = vmatpush2.msra.mxu0 0.0
      %930 = vmatprep.subr.mxu0 0.0
      %931 = vmatpush2.msra.mxu0 0.0
      %932 = vmatprep.subr.mxu0 0.0
      %933 = vmatpush2.msra.mxu0 0.0
      %934 = vmatprep.subr.mxu0 0.0
      %935 = vmatpush2.msra.mxu0 0.0
      %936 = vmatprep.subr.mxu0 0.0
      %937 = vmatpush2.msra.mxu0 0.0
      %938 = vmatprep.subr.mxu0 0.0
      %939 = vmatpush2.msra.mxu0 0.0
      %940 = vmatprep.subr.mxu0 0.0
      %941 = vmatpush2.msra.mxu0 0.0
      %942 = vmatprep.subr.mxu0 0.0
      %943 = vmatpush2.msra.mxu0 0.0
      %944 = vmatprep.mubr.f32.mxu0 0.0
      %945 = vmatmul.mubr.f32.gmra.mxu0 %v878
      %v946 = vpop.f32.mrf.mxu0
      %v947 = vadd.f32 %v875, %v946
      %v948 = vpop.f32.mrf.mxu0
      %949 = vdwg.mxu0
      %v950 = vld [vmem:[%s10] sm:$0xff]
      %v951 = vadd.f32 %v947, %v950
      %vm952 = vcmp.gt.f32.partialorder %v951, 0.0
      %v953 = vmul.f32 %v951, 1.442695
      %v954 = vpow.pop %v953
      %v955 = vsub.f32 %v954, 1.0
      %v956 = vmul.f32 %v955, 1.6732632
      %v957 = vsel %vm952, %v951, %v956
      %v958 = vmul.f32 %v957, 1.050701
      %vm959 = vcmask 7168
      %960 = vst.msk [vmem:[%s456] sm:$0xff] %vm959, %v958
      %p961 = scmp.lt.s32.totalorder %s24, 1
      %s962 = scalar_select %p961, %s24, 1
      %s963 = smul.addr %s962, 8
      %s964 = scalar_lea.vmem %s11, %s963
      %p965 = scmp.lt.s32.totalorder %s24, 1
      %s966 = scalar_select %p965, %s24, 1
      %s967 = smul.addr %s966, 8
      %s968 = scalar_lea.vmem %s12, %s967
      // Predicated region
      $region65: #{_lambda_.11} parent=63 // pred_check
        %p969 = pneg %p288
      $region66: #{_lambda_.11} parent=63 // pred_check_branch
        %971 = sbr.rel (%p969) target = $region68
      $region67: #{_lambda_.11} parent=63 // pred_region
        _
      $region68: #{_lambda_.11} parent=63 // pred_fallthru
        _
      // Predicated region
      $region69: #{_lambda_.11} parent=63 // pred_check
        %p972 = pneg %p314
      $region70: #{_lambda_.11} parent=63 // pred_check_branch
        %974 = sbr.rel (%p972) target = $region72
      $region71: #{_lambda_.11} parent=63 // pred_region
        _
      $region72: #{_lambda_.11} parent=63 // pred_fallthru
        _
    $region64: #{_lambda_.11} parent=5 // pred_fallthru
      _
    %p975 = scmp.le.s32.totalorder 2, %s19
    // Predicated region
    $region73: #{_lambda_.11} parent=5 // pred_check
      %p976 = pneg %p975
    $region74: #{_lambda_.11} parent=5 // pred_check_branch
      %978 = sbr.rel (%p976) target = $region76
    $region75: #{_lambda_.11} parent=5 // pred_region
      %s979 = ssub.s32 %s19, 2
      // Predicated region
      $region77: #{_lambda_.11} parent=75 // pred_check
        %p980 = pneg %p294
      $region78: #{_lambda_.11} parent=75 // pred_check_branch
        %982 = sbr.rel (%p980) target = $region80
      $region79: #{_lambda_.11} parent=75 // pred_region
        %p983 = scmp.lt.s32.totalorder %s25, 1
        %s984 = scalar_select %p983, %s25, 1
        %s985 = smul.addr %s984, 8
        %s986 = scalar_lea.vmem %s11, %s985
      $region80: #{_lambda_.11} parent=75 // pred_fallthru
        _
      // Predicated region
      $region81: #{_lambda_.11} parent=75 // pred_check
        %p987 = pneg %p320
      $region82: #{_lambda_.11} parent=75 // pred_check_branch
        %989 = sbr.rel (%p987) target = $region84
      $region83: #{_lambda_.11} parent=75 // pred_region
        %p990 = scmp.lt.s32.totalorder %s25, 1
        %s991 = scalar_select %p990, %s25, 1
        %s992 = smul.addr %s991, 8
        %s993 = scalar_lea.vmem %s12, %s992
      $region84: #{_lambda_.11} parent=75 // pred_fallthru
        _
    $region76: #{_lambda_.11} parent=5 // pred_fallthru
      _
  $region6: #{_lambda_.11} parent=0 // loop_footer
    %s23 = sadd.s32 1, %s19
  $region7: #{_lambda_.11} parent=0 // loop_footer_branch
    %18 = sbr.rel target = $region3
  $region8: #{_lambda_.11} parent=0 // loop_exit
    _

// kernel: _lambda_.12
$region0: #{_lambda_.12}
  #allocation0 [shape = 'u32[]', space=smem, size = 0x4, offset = 0x4, fixed_abs, tag = 'smem constant byte address 0x4 - core index']
  #allocation1 [shape = 'u32[144,128]{1,0:T(1,128)}', space=vmem, size = 0x12000, scoped, tag = 'internal scratch']
  %s0 = inlined_call_operand.vmem [shape: bf16[2,16,256], index: 0, kind: input, shape index: {}]
  %s1 = inlined_call_operand.vmem [shape: bf16[8,144], index: 1, kind: input, shape index: {}]
  %s2 = inlined_call_operand.vmem [shape: f32[8,1], index: 2, kind: input, shape index: {}]
  %s3 = inlined_call_operand.vmem [shape: bf16[8,72], index: 3, kind: input, shape index: {}]
  %s4 = inlined_call_operand.vmem [shape: f32[8,1], index: 4, kind: input, shape index: {}]
  %s5 = inlined_call_operand.vmem [shape: f32[2,8,1], index: 5, kind: input, shape index: {}]
  %s6 = inlined_call_operand.vmem [shape: f32[2,8,256], index: 6, kind: output, shape index: {}]
  %s7 = sld [smem:[#allocation0]]
  $region57: #{_lambda_.12} parent=0
    _
  %s9 = ssub.s32 1, %s7
  %s10 = scalar_select 0, %s9, %s7
  loop: start=0, step=1, limit=4
  $region2: #{_lambda_.12} parent=0 // loop_pre_header
    _
  $region3: #{_lambda_.12} parent=0 // loop_header
    %s12 = sphi 0, %s16
    %p13 = scmp.ge.s32.totalorder %s12, 4
    %s22 = sphi 0, %s24
    %s25 = sphi 0, %s22
    %s26 = sphi 0, %s25
    %s42 = sphi 0, %s26
    %s46 = sphi 0, %s46
    %s48 = sphi 0, %s46
    %s49 = sphi 0, %s48
    %s63 = sphi 0, %s49
    %s67 = sphi 0, %s67
    %s69 = sphi 0, %s67
    %s70 = sphi 0, %s69
    %s84 = sphi 0, %s70
    %s88 = sphi 0, %s88
    %s90 = sphi 0, %s88
    %s91 = sphi 0, %s90
    %s105 = sphi 0, %s91
    %s109 = sphi 0, %s109
    %s111 = sphi 0, %s109
    %s112 = sphi 0, %s111
    %s126 = sphi 0, %s112
    %s132 = sphi 0, %s134
    %s135 = sphi 0, %s132
    %s136 = sphi 0, %s135
    %s152 = sphi 0, %s136
    %s158 = sphi 0, %s160
    %s161 = sphi 0, %s158
    %s162 = sphi 0, %s161
    %s178 = sphi 0, %s162
  $region4: #{_lambda_.12} parent=0 // loop_header_branch
    %15 = sbr.rel (%p13) target = $region8
  $region5: #{_lambda_.12} parent=0 // loop_body
    %s17 = ssub.s32 %s12, 1
    %s18 = ssub.s32 %s12, 2
    %s19 = sadd.s32 %s12, 1
    %s20 = ssub.s32 %s12, %s19
    %p21 = scmp.eq.s32.totalorder %s20, 0
    %s23 = sadd.s32 %s22, 1
    %s24 = scalar_select %p21, %s22, %s23
    %p27 = pneg %p21
    %p28 = scmp.eq.s32.totalorder %s12, 1
    %p29 = por %p27, %p28
    %p30 = scmp.ne.s32.totalorder %s22, %s25
    %p31 = scmp.eq.s32.totalorder %s12, 0
    %p32 = por %p30, %p31
    %p33 = scmp.ne.s32.totalorder %s22, %s25
    %p34 = scmp.eq.s32.totalorder %s17, 1
    %p35 = por %p33, %p34
    %p36 = scmp.ne.s32.totalorder %s25, %s26
    %p37 = scmp.eq.s32.totalorder %s17, 0
    %p38 = por %p36, %p37
    %p39 = scmp.ne.s32.totalorder %s25, %s26
    %p40 = scmp.eq.s32.totalorder %s18, 1
    %p41 = por %p39, %p40
    %p43 = scmp.ne.s32.totalorder %s26, %s42
    %p44 = scmp.eq.s32.totalorder %s18, 0
    %p45 = por %p43, %p44
    %s47 = sadd.s32 %s46, 1
    %p50 = scmp.eq.s32.totalorder %s12, 1
    %p51 = scmp.ne.s32.totalorder %s46, %s48
    %p52 = scmp.eq.s32.totalorder %s12, 0
    %p53 = por %p51, %p52
    %p54 = scmp.ne.s32.totalorder %s46, %s48
    %p55 = scmp.eq.s32.totalorder %s17, 1
    %p56 = por %p54, %p55
    %p57 = scmp.ne.s32.totalorder %s48, %s49
    %p58 = scmp.eq.s32.totalorder %s17, 0
    %p59 = por %p57, %p58
    %p60 = scmp.ne.s32.totalorder %s48, %s49
    %p61 = scmp.eq.s32.totalorder %s18, 1
    %p62 = por %p60, %p61
    %p64 = scmp.ne.s32.totalorder %s49, %s63
    %p65 = scmp.eq.s32.totalorder %s18, 0
    %p66 = por %p64, %p65
    %s68 = sadd.s32 %s67, 1
    %p71 = scmp.eq.s32.totalorder %s12, 1
    %p72 = scmp.ne.s32.totalorder %s67, %s69
    %p73 = scmp.eq.s32.totalorder %s12, 0
    %p74 = por %p72, %p73
    %p75 = scmp.ne.s32.totalorder %s67, %s69
    %p76 = scmp.eq.s32.totalorder %s17, 1
    %p77 = por %p75, %p76
    %p78 = scmp.ne.s32.totalorder %s69, %s70
    %p79 = scmp.eq.s32.totalorder %s17, 0
    %p80 = por %p78, %p79
    %p81 = scmp.ne.s32.totalorder %s69, %s70
    %p82 = scmp.eq.s32.totalorder %s18, 1
    %p83 = por %p81, %p82
    %p85 = scmp.ne.s32.totalorder %s70, %s84
    %p86 = scmp.eq.s32.totalorder %s18, 0
    %p87 = por %p85, %p86
    %s89 = sadd.s32 %s88, 1
    %p92 = scmp.eq.s32.totalorder %s12, 1
    %p93 = scmp.ne.s32.totalorder %s88, %s90
    %p94 = scmp.eq.s32.totalorder %s12, 0
    %p95 = por %p93, %p94
    %p96 = scmp.ne.s32.totalorder %s88, %s90
    %p97 = scmp.eq.s32.totalorder %s17, 1
    %p98 = por %p96, %p97
    %p99 = scmp.ne.s32.totalorder %s90, %s91
    %p100 = scmp.eq.s32.totalorder %s17, 0
    %p101 = por %p99, %p100
    %p102 = scmp.ne.s32.totalorder %s90, %s91
    %p103 = scmp.eq.s32.totalorder %s18, 1
    %p104 = por %p102, %p103
    %p106 = scmp.ne.s32.totalorder %s91, %s105
    %p107 = scmp.eq.s32.totalorder %s18, 0
    %p108 = por %p106, %p107
    %s110 = sadd.s32 %s109, 1
    %p113 = scmp.eq.s32.totalorder %s12, 1
    %p114 = scmp.ne.s32.totalorder %s109, %s111
    %p115 = scmp.eq.s32.totalorder %s12, 0
    %p116 = por %p114, %p115
    %p117 = scmp.ne.s32.totalorder %s109, %s111
    %p118 = scmp.eq.s32.totalorder %s17, 1
    %p119 = por %p117, %p118
    %p120 = scmp.ne.s32.totalorder %s111, %s112
    %p121 = scmp.eq.s32.totalorder %s17, 0
    %p122 = por %p120, %p121
    %p123 = scmp.ne.s32.totalorder %s111, %s112
    %p124 = scmp.eq.s32.totalorder %s18, 1
    %p125 = por %p123, %p124
    %p127 = scmp.ne.s32.totalorder %s112, %s126
    %p128 = scmp.eq.s32.totalorder %s18, 0
    %p129 = por %p127, %p128
    %s130 = ssub.s32 %s12, %s19
    %p131 = scmp.eq.s32.totalorder %s130, 0
    %s133 = sadd.s32 %s132, 1
    %s134 = scalar_select %p131, %s132, %s133
    %p137 = pneg %p131
    %p138 = scmp.eq.s32.totalorder %s12, 1
    %p139 = por %p137, %p138
    %p140 = scmp.ne.s32.totalorder %s132, %s135
    %p141 = scmp.eq.s32.totalorder %s12, 0
    %p142 = por %p140, %p141
    %p143 = scmp.ne.s32.totalorder %s132, %s135
    %p144 = scmp.eq.s32.totalorder %s17, 1
    %p145 = por %p143, %p144
    %p146 = scmp.ne.s32.totalorder %s135, %s136
    %p147 = scmp.eq.s32.totalorder %s17, 0
    %p148 = por %p146, %p147
    %p149 = scmp.ne.s32.totalorder %s135, %s136
    %p150 = scmp.eq.s32.totalorder %s18, 1
    %p151 = por %p149, %p150
    %p153 = scmp.ne.s32.totalorder %s136, %s152
    %p154 = scmp.eq.s32.totalorder %s18, 0
    %p155 = por %p153, %p154
    %s156 = ssub.s32 %s12, %s19
    %p157 = scmp.eq.s32.totalorder %s156, 0
    %s159 = sadd.s32 %s158, 1
    %s160 = scalar_select %p157, %s158, %s159
    %p163 = pneg %p157
    %p164 = scmp.eq.s32.totalorder %s12, 1
    %p165 = por %p163, %p164
    %p166 = scmp.ne.s32.totalorder %s158, %s161
    %p167 = scmp.eq.s32.totalorder %s12, 0
    %p168 = por %p166, %p167
    %p169 = scmp.ne.s32.totalorder %s158, %s161
    %p170 = scmp.eq.s32.totalorder %s17, 1
    %p171 = por %p169, %p170
    %p172 = scmp.ne.s32.totalorder %s161, %s162
    %p173 = scmp.eq.s32.totalorder %s17, 0
    %p174 = por %p172, %p173
    %p175 = scmp.ne.s32.totalorder %s161, %s162
    %p176 = scmp.eq.s32.totalorder %s18, 1
    %p177 = por %p175, %p176
    %p179 = scmp.ne.s32.totalorder %s162, %s178
    %p180 = scmp.eq.s32.totalorder %s18, 0
    %p181 = por %p179, %p180
    %p182 = scmp.le.s32.totalorder 1, %s12
    %p183 = scmp.lt.s32.totalorder %s12, 3
    %p184 = pnand %p182, %p183
    %p185 = pneg %p184
    // Predicated region
    $region9: #{_lambda_.12} parent=5 // pred_check
      _
    $region10: #{_lambda_.12} parent=5 // pred_check_branch
      %187 = sbr.rel (%p184) target = $region12
    $region11: #{_lambda_.12} parent=5 // pred_region
      %s188 = ssub.s32 %s12, 1
      // Predicated region
      $region13: #{_lambda_.12} parent=11 // pred_check
        %p189 = pneg %p59
      $region14: #{_lambda_.12} parent=11 // pred_check_branch
        %191 = sbr.rel (%p189) target = $region16
      $region15: #{_lambda_.12} parent=11 // pred_region
        _
      $region16: #{_lambda_.12} parent=11 // pred_fallthru
        _
      // Predicated region
      $region17: #{_lambda_.12} parent=11 // pred_check
        %p192 = pneg %p80
      $region18: #{_lambda_.12} parent=11 // pred_check_branch
        %194 = sbr.rel (%p192) target = $region20
      $region19: #{_lambda_.12} parent=11 // pred_region
        _
      $region20: #{_lambda_.12} parent=11 // pred_fallthru
        _
      // Predicated region
      $region21: #{_lambda_.12} parent=11 // pred_check
        %p195 = pneg %p101
      $region22: #{_lambda_.12} parent=11 // pred_check_branch
        %197 = sbr.rel (%p195) target = $region24
      $region23: #{_lambda_.12} parent=11 // pred_region
        _
      $region24: #{_lambda_.12} parent=11 // pred_fallthru
        _
      // Predicated region
      $region25: #{_lambda_.12} parent=11 // pred_check
        %p198 = pneg %p122
      $region26: #{_lambda_.12} parent=11 // pred_check_branch
        %200 = sbr.rel (%p198) target = $region28
      $region27: #{_lambda_.12} parent=11 // pred_region
        _
      $region28: #{_lambda_.12} parent=11 // pred_fallthru
        _
    $region12: #{_lambda_.12} parent=5 // pred_fallthru
      _
    %p201 = scmp.lt.s32.totalorder %s12, 2
    // Predicated region
    $region29: #{_lambda_.12} parent=5 // pred_check
      %p202 = pneg %p201
    $region30: #{_lambda_.12} parent=5 // pred_check_branch
      %204 = sbr.rel (%p202) target = $region32
    $region31: #{_lambda_.12} parent=5 // pred_region
      // Predicated region
      $region33: #{_lambda_.12} parent=31 // pred_check
        %p205 = pneg %p32
      $region34: #{_lambda_.12} parent=31 // pred_check_branch
        %207 = sbr.rel (%p205) target = $region36
      $region35: #{_lambda_.12} parent=31 // pred_region
        %p208 = scmp.lt.s32.totalorder %s12, 1
        %s209 = scalar_select %p208, %s12, 1
        %s210 = smul.addr %s209, 4
        %s211 = smul.addr %s210, 4
        %s212 = scalar_lea.vmem %s0, %s211
      $region36: #{_lambda_.12} parent=31 // pred_fallthru
        _
      // Predicated region
      $region37: #{_lambda_.12} parent=31 // pred_check
        %p213 = pneg %p142
      $region38: #{_lambda_.12} parent=31 // pred_check_branch
        %215 = sbr.rel (%p213) target = $region40
      $region39: #{_lambda_.12} parent=31 // pred_region
        %p216 = scmp.lt.s32.totalorder %s12, 1
        %s217 = scalar_select %p216, %s12, 1
        %s218 = smul.addr %s217, 8
        %s219 = scalar_lea.vmem %s5, %s218
      $region40: #{_lambda_.12} parent=31 // pred_fallthru
        _
    $region32: #{_lambda_.12} parent=5 // pred_fallthru
      _
    %p220 = scmp.le.s32.totalorder 1, %s12
    %p221 = scmp.lt.s32.totalorder %s12, 3
    %p222 = pnand %p220, %p221
    %p223 = pneg %p222
    // Predicated region
    $region41: #{_lambda_.12} parent=5 // pred_check
      _
    $region42: #{_lambda_.12} parent=5 // pred_check_branch
      %225 = sbr.rel (%p222) target = $region44
    $region43: #{_lambda_.12} parent=5 // pred_region
      %s226 = ssub.s32 %s12, 1
      %p227 = scmp.lt.s32.totalorder %s17, 1
      %s228 = scalar_select %p227, %s17, 1
      %s229 = smul.addr %s228, 4
      %s230 = smul.addr %s229, 4
      %s231 = scalar_lea.vmem %s0, %s230
      %p232 = pneg %p38
      %p233 = pneg %p35
      %p234 = pneg %p59
      %p235 = pneg %p56
      %p236 = pneg %p80
      %p237 = pneg %p77
      %p238 = pneg %p101
      %p239 = pneg %p98
      %p240 = pneg %p122
      %p241 = pneg %p119
      %p242 = scmp.lt.s32.totalorder %s17, 1
      %s243 = scalar_select %p242, %s17, 1
      %s244 = smul.addr %s243, 8
      %s245 = scalar_lea.vmem %s5, %s244
      %p246 = pneg %p148
      %p247 = pneg %p145
      %p248 = pneg %p174
      %p249 = pneg %p171
      %p250 = scmp.lt.s32.totalorder %s17, 1
      %s251 = scalar_select %p250, %s17, 1
      %s252 = smul.addr %s251, 2
      %s253 = smul.addr %s252, 8
      %s254 = scalar_lea.vmem %s6, %s253
      %p255 = scmp.lt.s32.totalorder %s17, 1
      %s256 = scalar_select %p255, %s17, 1
      %s257 = smul.addr %s256, 4
      %s258 = smul.addr %s257, 4
      %s259 = scalar_lea.vmem %s0, %s258
      %p260 = scmp.lt.s32.totalorder %s17, 1
      %s261 = scalar_select %p260, %s17, 1
      %s262 = smul.addr %s261, 8
      %s263 = scalar_lea.vmem %s5, %s262
      %p264 = scmp.lt.s32.totalorder %s17, 1
      %s265 = scalar_select %p264, %s17, 1
      %s266 = smul.addr %s265, 2
      %s267 = smul.addr %s266, 8
      %s268 = scalar_lea.vmem %s6, %s267
      %v273 = vld [vmem:[%s259] sm:$0xff]
      %v274 = vld [vmem:[%s259 + $0x8] sm:$0xff]
      %vm275 = vcmp.ge.bf16.partialorder %v273, 0
      %vm276 = vcmp.ge.bf16.partialorder %v274, 0
      %v277 = vmul.bf16 %v273, 1045249613
      %v278 = vmul.bf16 %v274, 1045249613
      %v279 = vsel %vm275, %v273, %v277
      %v280 = vsel %vm276, %v274, %v278
      %v283 = vunpack.c.l.b16 %v279
      %v284 = vunpack.c.h.b16 %v279
      %v285 = vunpack.c.l.b16 %v280
      %v286 = vunpack.c.h.b16 %v280
      %v287 = vpack.c.b16 %v285, %v283
      %v288 = vpack.c.b16 %v286, %v284
      %289 = vrot.lane.b32.xlu0 %v287, 17
      %v290 = vpop.permute.xlu0 %289
      %291 = vrot.lane.b32.xlu0 %v288, 17
      %v292 = vpop.permute.xlu0 %291
      %vm293 = vcmask 138240
      %v294 = vsel %vm293, %v290, %v292
      %vm296 = vcmask 138240
      %v299 = vsel %vm296, 0, %v290
      %v302 = vsel %vm296, %v292, 0
      %v304 = vlaneseq
      %v305 = vand.u32 %v304, 127
      %v306 = vadd.s32 %v305, 128
      %vm307 = vcmp.lt.s32.totalorder %v305, 0
      %v308 = vsub.s32 0, %v305
      %v309 = vsel %vm307, %v308, %v305
      %v310 = vshrl.u32 %v309, 4
      %v311 = vand.u32 %v309, 15
      %v312 = vsub.s32 0, %v311
      %v313 = vsel %vm307, %v312, %v311
      %vm314 = vcmp.lt.s32.totalorder %v306, 0
      %v315 = vsub.s32 0, %v306
      %v316 = vsel %vm314, %v315, %v306
      %v317 = vshrl.u32 %v316, 4
      %v318 = vand.u32 %v316, 15
      %v319 = vsub.s32 0, %v318
      %v320 = vsel %vm314, %v319, %v318
      %vm321 = vcmp.ne.s32.totalorder %v313, 0
      %vm322 = vcmp.ne.s32.totalorder %v320, 0
      %vm323 = vcmp.lt.s32.totalorder %v313, 0
      %vm324 = vcmp.lt.s32.totalorder %v320, 0
      %vm325 = vmand %vm323, %vm321
      %vm326 = vmand %vm324, %vm322
      %v327 = vadd.s32 %v313, 16
      %v328 = vadd.s32 %v320, 16
      %v329 = vsel %vm325, %v327, %v313
      %v330 = vsel %vm326, %v328, %v320
      %vm331 = vcmp.ge.s32.totalorder %v329, 1
      %vm332 = vcmp.ge.s32.totalorder %v330, 1
      %vm333 = vcmp.le.s32.totalorder %v329, 14
      %vm334 = vcmp.le.s32.totalorder %v330, 14
      %v335 = vsel %vm331, 1, 0
      %v336 = vsel %vm332, 1, 0
      %vm337 = vcmp.eq.s32.totalorder %v335, 1
      %vm338 = vcmp.eq.s32.totalorder %v336, 1
      %vm339 = vmpackc.low %vm338, %vm337
      %v340 = vsel %vm339, 65537, 0
      %v341 = vlaneseq
      %v342 = vshrl.u32 %v341, 7
      %v343 = vsub.s32 0, %v342
      %v344 = vrot.slane %v340, %v343
      %v345 = vlaneseq
      %v346 = vshrl.u32 %v345, 7
      %v347 = vsub.s32 4, %v346
      %v348 = vrot.slane %v340, %v347
      %vm349 = vcmp.ne.s16.totalorder %v344, 0
      %vm350 = vcmp.ne.s16.totalorder %v348, 0
      %v351 = vsel %vm349, %v299, 0
      %v352 = vsel %vm350, %v294, 0
      %v353 = vsel %vm333, 1, 0
      %v354 = vsel %vm334, 1, 0
      %vm355 = vcmp.eq.s32.totalorder %v353, 1
      %vm356 = vcmp.eq.s32.totalorder %v354, 1
      %vm357 = vmpackc.low %vm356, %vm355
      %v358 = vsel %vm357, 65537, 0
      %v359 = vlaneseq
      %v360 = vshrl.u32 %v359, 7
      %v361 = vsub.s32 0, %v360
      %v362 = vrot.slane %v358, %v361
      %v363 = vlaneseq
      %v364 = vshrl.u32 %v363, 7
      %v365 = vsub.s32 4, %v364
      %v366 = vrot.slane %v358, %v365
      %367 = vrot.lane.b32.xlu0 %v362, 2
      %v368 = vpop.permute.xlu0 %367
      %369 = vrot.lane.b32.xlu0 %v366, 2
      %v370 = vpop.permute.xlu0 %369
      %vm371 = vcmask 15360
      %v372 = vsel %vm371, %v368, %v370
      %vm373 = vcmp.ne.s16.totalorder %v368, 0
      %vm374 = vcmp.ne.s16.totalorder %v372, 0
      %vm375 = vcmp.ne.s16.totalorder %v370, 0
      %v376 = vsel %vm373, %v299, 0
      %v377 = vsel %vm374, %v294, 0
      %v378 = vsel %vm375, %v302, 0
      %379 = vrot.lane.b32.xlu0 %v344, 16
      %v380 = vpop.permute.xlu0 %379
      %381 = vrot.lane.b32.xlu0 %v348, 16
      %v382 = vpop.permute.xlu0 %381
      %vm383 = vcmask 130048
      %v384 = vsel %vm383, %v380, %v382
      %vm385 = vcmp.ne.s16.totalorder %v380, 0
      %vm386 = vcmp.ne.s16.totalorder %v384, 0
      %vm387 = vcmp.ne.s16.totalorder %v382, 0
      %v388 = vsel %vm385, %v299, 0
      %v389 = vsel %vm386, %v294, 0
      %v390 = vsel %vm387, %v302, 0
      %391 = vrot.lane.b32.xlu0 %v362, 18
      %v392 = vpop.permute.xlu0 %391
      %393 = vrot.lane.b32.xlu0 %v366, 18
      %v394 = vpop.permute.xlu0 %393
      %vm395 = vcmask 146432
      %v396 = vsel %vm395, %v392, %v394
      %vm397 = vcmp.ne.s16.totalorder %v392, 0
      %vm398 = vcmp.ne.s16.totalorder %v396, 0
      %vm399 = vcmp.ne.s16.totalorder %v394, 0
      %v400 = vsel %vm397, %v299, 0
      %v401 = vsel %vm398, %v294, 0
      %v402 = vsel %vm399, %v302, 0
      %403 = vrot.lane.b32.xlu0 %v344, 32
      %v404 = vpop.permute.xlu0 %403
      %405 = vrot.lane.b32.xlu0 %v348, 32
      %v406 = vpop.permute.xlu0 %405
      %vm407 = vcmask 261120
      %v408 = vsel %vm407, %v404, %v406
      %vm409 = vcmp.ne.s16.totalorder %v404, 0
      %vm410 = vcmp.ne.s16.totalorder %v408, 0
      %vm411 = vcmp.ne.s16.totalorder %v406, 0
      %v412 = vsel %vm409, %v299, 0
      %v413 = vsel %vm410, %v294, 0
      %v414 = vsel %vm411, %v302, 0
      %415 = vrot.lane.b32.xlu0 %v362, 34
      %v416 = vpop.permute.xlu0 %415
      %417 = vrot.lane.b32.xlu0 %v366, 34
      %v418 = vpop.permute.xlu0 %417
      %vm419 = vcmask 277504
      %v420 = vsel %vm419, %v416, %v418
      %vm421 = vcmp.ne.s16.totalorder %v416, 0
      %vm422 = vcmp.ne.s16.totalorder %v420, 0
      %vm423 = vcmp.ne.s16.totalorder %v418, 0
      %v424 = vsel %vm421, %v299, 0
      %v425 = vsel %vm422, %v294, 0
      %v426 = vsel %vm423, %v302, 0
      %429 = vrot.lane.b32.xlu0 %v299, 127
      %v430 = vpop.permute.xlu0 %429
      %431 = vrot.lane.b32.xlu0 %v294, 127
      %v432 = vpop.permute.xlu0 %431
      %433 = vrot.lane.b32.xlu0 %v302, 127
      %v434 = vpop.permute.xlu0 %433
      %vm435 = vcmask 1039360
      %v436 = vsel %vm435, %v430, %v432
      %v437 = vsel %vm435, %v432, %v434
      %443 = vrot.lane.b32.xlu0 %v376, 126
      %v444 = vpop.permute.xlu0 %443
      %445 = vrot.lane.b32.xlu0 %v377, 126
      %v446 = vpop.permute.xlu0 %445
      %447 = vrot.lane.b32.xlu0 %v378, 126
      %v448 = vpop.permute.xlu0 %447
      %vm449 = vcmask 1031168
      %v450 = vsel %vm449, %v444, %v446
      %v451 = vsel %vm449, %v446, %v448
      %457 = vrot.lane.b32.xlu0 %v388, 112
      %v458 = vpop.permute.xlu0 %457
      %459 = vrot.lane.b32.xlu0 %v389, 112
      %v460 = vpop.permute.xlu0 %459
      %461 = vrot.lane.b32.xlu0 %v390, 112
      %v462 = vpop.permute.xlu0 %461
      %vm463 = vcmask 916480
      %v464 = vsel %vm463, %v458, %v460
      %v465 = vsel %vm463, %v460, %v462
      %468 = vrot.lane.b32.xlu0 %v299, 111
      %v469 = vpop.permute.xlu0 %468
      %470 = vrot.lane.b32.xlu0 %v294, 111
      %v471 = vpop.permute.xlu0 %470
      %472 = vrot.lane.b32.xlu0 %v302, 111
      %v473 = vpop.permute.xlu0 %472
      %vm474 = vcmask 908288
      %v475 = vsel %vm474, %v469, %v471
      %v476 = vsel %vm474, %v471, %v473
      %482 = vrot.lane.b32.xlu0 %v400, 110
      %v483 = vpop.permute.xlu0 %482
      %484 = vrot.lane.b32.xlu0 %v401, 110
      %v485 = vpop.permute.xlu0 %484
      %486 = vrot.lane.b32.xlu0 %v402, 110
      %v487 = vpop.permute.xlu0 %486
      %vm488 = vcmask 900096
      %v489 = vsel %vm488, %v483, %v485
      %v490 = vsel %vm488, %v485, %v487
      %496 = vrot.lane.b32.xlu0 %v412, 96
      %v497 = vpop.permute.xlu0 %496
      %498 = vrot.lane.b32.xlu0 %v413, 96
      %v499 = vpop.permute.xlu0 %498
      %500 = vrot.lane.b32.xlu0 %v414, 96
      %v501 = vpop.permute.xlu0 %500
      %vm502 = vcmask 785408
      %v503 = vsel %vm502, %v497, %v499
      %v504 = vsel %vm502, %v499, %v501
      %507 = vrot.lane.b32.xlu0 %v299, 95
      %v508 = vpop.permute.xlu0 %507
      %509 = vrot.lane.b32.xlu0 %v294, 95
      %v510 = vpop.permute.xlu0 %509
      %511 = vrot.lane.b32.xlu0 %v302, 95
      %v512 = vpop.permute.xlu0 %511
      %vm513 = vcmask 777216
      %v514 = vsel %vm513, %v508, %v510
      %v515 = vsel %vm513, %v510, %v512
      %521 = vrot.lane.b32.xlu0 %v424, 94
      %v522 = vpop.permute.xlu0 %521
      %523 = vrot.lane.b32.xlu0 %v425, 94
      %v524 = vpop.permute.xlu0 %523
      %525 = vrot.lane.b32.xlu0 %v426, 94
      %v526 = vpop.permute.xlu0 %525
      %vm527 = vcmask 769024
      %v528 = vsel %vm527, %v522, %v524
      %v529 = vsel %vm527, %v524, %v526
      %v532 = vld [vmem:[%s1] sm:$0xff]
      %v533 = vld [vmem:[%s2] sm:$0xff]
      %535 = vset.pattern.permute.xlu0 0
      %536 = vperm.xlu0 %535, %v533
      %v537 = vpop.permute.xlu0 %536
      %v540 = vunpack.c.l.b16 %v532
      %v541 = vunpack.c.h.b16 %v532
      %v542 = vpack.c.b16 %v540, %v540
      %v543 = vpack.c.b16 %v541, %v541
      %vm545 = vcmask 130048
      %v547 = vsel %vm545, %v543, 0
      %549 = vmatprep.subr.bf16.mxu0 %v515
      %550 = vmatpush1.bf16.msra.mxu0 %v514
      %551 = vmatprep.subr.bf16.mxu0 %v504
      %552 = vmatpush1.bf16.msra.mxu0 %v503
      %553 = vmatprep.subr.bf16.mxu0 %v490
      %554 = vmatpush1.bf16.msra.mxu0 %v489
      %555 = vmatprep.subr.bf16.mxu0 %v476
      %556 = vmatpush1.bf16.msra.mxu0 %v475
      %557 = vmatprep.subr.bf16.mxu0 %v465
      %558 = vmatpush1.bf16.msra.mxu0 %v464
      %559 = vmatprep.subr.bf16.mxu0 %v451
      %560 = vmatpush1.bf16.msra.mxu0 %v450
      %561 = vmatprep.subr.bf16.mxu0 %v437
      %562 = vmatpush1.bf16.msra.mxu0 %v436
      %563 = vmatprep.subr.bf16.mxu0 %v352
      %564 = vmatpush1.bf16.msra.mxu0 %v351
      %565 = vmatprep.subr.bf16.mxu0 0
      %566 = vmatpush2.bf16.msra.mxu0 0
      %567 = vmatprep.subr.bf16.mxu0 0
      %568 = vmatpush2.bf16.msra.mxu0 0
      %569 = vmatprep.subr.bf16.mxu0 0
      %570 = vmatpush2.bf16.msra.mxu0 0
      %571 = vmatprep.subr.bf16.mxu0 0
      %572 = vmatpush2.bf16.msra.mxu0 0
      %573 = vmatprep.subr.bf16.mxu0 0
      %574 = vmatpush2.bf16.msra.mxu0 0
      %575 = vmatprep.subr.bf16.mxu0 0
      %576 = vmatpush2.bf16.msra.mxu0 0
      %577 = vmatprep.subr.bf16.mxu0 0
      %578 = vmatpush2.bf16.msra.mxu0 0
      %579 = vmatprep.subr.bf16.mxu0 %v529
      %580 = vmatpush2.bf16.msra.mxu0 %v528
      %581 = vmatprep.mubr.bf16.mxu0 %v547
      %582 = vmatmul.mubr.bf16.gmra.mxu0 %v542
      %v583 = vpop.f32.mrf.mxu0
      %v584 = vadd.f32 %v537, %v583
      %v585 = vpop.f32.mrf.mxu0
      %v586 = vadd.f32 %v537, %v585
      %v587 = vpop.f32.mrf.mxu0
      %v588 = vpop.f32.mrf.mxu0
      %589 = vdwg.mxu0
      %v590 = vpack.c.bf16 %v584, %v584
      %v591 = vpack.c.bf16 %v586, %v586
      %594 = vrot.lane.b32.xlu0 %v590, 17
      %v595 = vpop.permute.xlu0 %594
      %596 = vrot.lane.b32.xlu0 %v591, 17
      %v597 = vpop.permute.xlu0 %596
      %v598 = vsel %vm293, %v595, %v597
      %v601 = vsel %vm296, 0, %v595
      %v604 = vsel %vm296, %v597, 0
      %v606 = vsel %vm349, %v601, 0
      %v607 = vsel %vm350, %v598, 0
      %v608 = vsel %vm373, %v601, 0
      %v609 = vsel %vm374, %v598, 0
      %v610 = vsel %vm375, %v604, 0
      %v611 = vsel %vm385, %v601, 0
      %v612 = vsel %vm386, %v598, 0
      %v613 = vsel %vm387, %v604, 0
      %v614 = vsel %vm397, %v601, 0
      %v615 = vsel %vm398, %v598, 0
      %v616 = vsel %vm399, %v604, 0
      %v617 = vsel %vm409, %v601, 0
      %v618 = vsel %vm410, %v598, 0
      %v619 = vsel %vm411, %v604, 0
      %v620 = vsel %vm421, %v601, 0
      %v621 = vsel %vm422, %v598, 0
      %v622 = vsel %vm423, %v604, 0
      %v625 = vrot.slane %v601, 4
      %v626 = vrot.slane %v598, 4
      %v627 = vrot.slane %v604, 4
      %628 = vrot.lane.b32.xlu0 %v625, 127
      %v629 = vpop.permute.xlu0 %628
      %630 = vrot.lane.b32.xlu0 %v626, 127
      %v631 = vpop.permute.xlu0 %630
      %632 = vrot.lane.b32.xlu0 %v627, 127
      %v633 = vpop.permute.xlu0 %632
      %v634 = vsel %vm435, %v629, %v631
      %v635 = vsel %vm435, %v631, %v633
      %639 = vrot.lane.b32.xlu0 %v608, 126
      %v640 = vpop.permute.xlu0 %639
      %641 = vrot.lane.b32.xlu0 %v609, 126
      %v642 = vpop.permute.xlu0 %641
      %643 = vrot.lane.b32.xlu0 %v610, 126
      %v644 = vpop.permute.xlu0 %643
      %v645 = vsel %vm449, %v640, %v642
      %v646 = vsel %vm449, %v642, %v644
      %v650 = vrot.slane %v611, 4
      %v651 = vrot.slane %v612, 4
      %v652 = vrot.slane %v613, 4
      %653 = vrot.lane.b32.xlu0 %v650, 112
      %v654 = vpop.permute.xlu0 %653
      %655 = vrot.lane.b32.xlu0 %v651, 112
      %v656 = vpop.permute.xlu0 %655
      %657 = vrot.lane.b32.xlu0 %v652, 112
      %v658 = vpop.permute.xlu0 %657
      %v659 = vsel %vm463, %v654, %v656
      %v660 = vsel %vm463, %v656, %v658
      %661 = vrot.lane.b32.xlu0 %v601, 111
      %v662 = vpop.permute.xlu0 %661
      %663 = vrot.lane.b32.xlu0 %v598, 111
      %v664 = vpop.permute.xlu0 %663
      %665 = vrot.lane.b32.xlu0 %v604, 111
      %v666 = vpop.permute.xlu0 %665
      %v667 = vsel %vm474, %v662, %v664
      %v668 = vsel %vm474, %v664, %v666
      %v672 = vrot.slane %v614, 4
      %v673 = vrot.slane %v615, 4
      %v674 = vrot.slane %v616, 4
      %675 = vrot.lane.b32.xlu0 %v672, 110
      %v676 = vpop.permute.xlu0 %675
      %677 = vrot.lane.b32.xlu0 %v673, 110
      %v678 = vpop.permute.xlu0 %677
      %679 = vrot.lane.b32.xlu0 %v674, 110
      %v680 = vpop.permute.xlu0 %679
      %v681 = vsel %vm488, %v676, %v678
      %v682 = vsel %vm488, %v678, %v680
      %686 = vrot.lane.b32.xlu0 %v617, 96
      %v687 = vpop.permute.xlu0 %686
      %688 = vrot.lane.b32.xlu0 %v618, 96
      %v689 = vpop.permute.xlu0 %688
      %690 = vrot.lane.b32.xlu0 %v619, 96
      %v691 = vpop.permute.xlu0 %690
      %v692 = vsel %vm502, %v687, %v689
      %v693 = vsel %vm502, %v689, %v691
      %694 = vrot.lane.b32.xlu0 %v625, 95
      %v695 = vpop.permute.xlu0 %694
      %696 = vrot.lane.b32.xlu0 %v626, 95
      %v697 = vpop.permute.xlu0 %696
      %698 = vrot.lane.b32.xlu0 %v627, 95
      %v699 = vpop.permute.xlu0 %698
      %v700 = vsel %vm513, %v695, %v697
      %v701 = vsel %vm513, %v697, %v699
      %705 = vrot.lane.b32.xlu0 %v620, 94
      %v706 = vpop.permute.xlu0 %705
      %707 = vrot.lane.b32.xlu0 %v621, 94
      %v708 = vpop.permute.xlu0 %707
      %709 = vrot.lane.b32.xlu0 %v622, 94
      %v710 = vpop.permute.xlu0 %709
      %v711 = vsel %vm527, %v706, %v708
      %v712 = vsel %vm527, %v708, %v710
      %vm713 = vcmask 1043456
      %v716 = vsel %vm713, %v606, %v634
      %v720 = vsel %vm713, %v607, %v635
      %v724 = vsel %vm713, %v645, %v659
      %v728 = vsel %vm713, %v646, %v660
      %v732 = vsel %vm713, %v667, %v681
      %v736 = vsel %vm713, %v668, %v682
      %v740 = vsel %vm713, %v692, %v700
      %v744 = vsel %vm713, %v693, %v701
      %v746 = vld [vmem:[%s3] sm:$0xf]
      %v747 = vld [vmem:[%s4] sm:$0xff]
      %749 = vset.pattern.permute.xlu0 0
      %750 = vperm.xlu0 %749, %v747
      %v751 = vpop.permute.xlu0 %750
      %vm753 = vcmask 588800
      %v755 = vsel %vm753, %v746, 0
      %v758 = vsel %vm713, %v711, 0
      %v761 = vsel %vm713, %v712, 0
      %763 = vmatprep.subr.bf16.mxu0 0
      %764 = vmatpush1.bf16.msra.mxu0 0
      %765 = vmatprep.subr.bf16.mxu0 0
      %766 = vmatpush1.bf16.msra.mxu0 0
      %767 = vmatprep.subr.bf16.mxu0 0
      %768 = vmatpush1.bf16.msra.mxu0 0
      %769 = vmatprep.subr.bf16.mxu0 %v761
      %770 = vmatpush1.bf16.msra.mxu0 %v758
      %771 = vmatprep.subr.bf16.mxu0 %v744
      %772 = vmatpush1.bf16.msra.mxu0 %v740
      %773 = vmatprep.subr.bf16.mxu0 %v736
      %774 = vmatpush1.bf16.msra.mxu0 %v732
      %775 = vmatprep.subr.bf16.mxu0 %v728
      %776 = vmatpush1.bf16.msra.mxu0 %v724
      %777 = vmatprep.subr.bf16.mxu0 %v720
      %778 = vmatpush1.bf16.msra.mxu0 %v716
      %779 = vmatprep.subr.bf16.mxu0 0
      %780 = vmatpush2.bf16.msra.mxu0 0
      %781 = vmatprep.subr.bf16.mxu0 0
      %782 = vmatpush2.bf16.msra.mxu0 0
      %783 = vmatprep.subr.bf16.mxu0 0
      %784 = vmatpush2.bf16.msra.mxu0 0
      %785 = vmatprep.subr.bf16.mxu0 0
      %786 = vmatpush2.bf16.msra.mxu0 0
      %787 = vmatprep.subr.bf16.mxu0 0
      %788 = vmatpush2.bf16.msra.mxu0 0
      %789 = vmatprep.subr.bf16.mxu0 0
      %790 = vmatpush2.bf16.msra.mxu0 0
      %791 = vmatprep.subr.bf16.mxu0 0
      %792 = vmatpush2.bf16.msra.mxu0 0
      %793 = vmatprep.subr.bf16.mxu0 0
      %794 = vmatpush2.bf16.msra.mxu0 0
      %795 = vmatprep.mubr.bf16.mxu0 0
      %796 = vmatmul.mubr.bf16.gmra.mxu0 %v755
      %v797 = vpop.f32.mrf.mxu0
      %v798 = vadd.f32 %v751, %v797
      %v799 = vpop.f32.mrf.mxu0
      %v800 = vadd.f32 %v751, %v799
      %v801 = vpop.f32.mrf.mxu0
      %v802 = vpop.f32.mrf.mxu0
      %803 = vdwg.mxu0
      %v804 = vld [vmem:[%s263] sm:$0xff]
      %806 = vset.pattern.permute.xlu0 0
      %807 = vperm.xlu0 %806, %v804
      %v808 = vpop.permute.xlu0 %807
      %v810 = vadd.f32 %v798, %v808
      %v811 = vadd.f32 %v800, %v808
      %v812 = vtanh.pop %v810
      %v813 = vtanh.pop %v811
      %814 = vst [vmem:[%s268] sm:$0xff] %v812
      %815 = vst [vmem:[%s268 + $0x8] sm:$0xff] %v813
      %p816 = scmp.lt.s32.totalorder %s17, 1
      %s817 = scalar_select %p816, %s17, 1
      %s818 = smul.addr %s817, 2
      %s819 = smul.addr %s818, 8
      %s820 = scalar_lea.vmem %s6, %s819
      // Predicated region
      $region45: #{_lambda_.12} parent=43 // pred_check
        %p821 = pneg %p171
      $region46: #{_lambda_.12} parent=43 // pred_check_branch
        %823 = sbr.rel (%p821) target = $region48
      $region47: #{_lambda_.12} parent=43 // pred_region
        _
      $region48: #{_lambda_.12} parent=43 // pred_fallthru
        _
    $region44: #{_lambda_.12} parent=5 // pred_fallthru
      _
    %p824 = scmp.le.s32.totalorder 2, %s12
    // Predicated region
    $region49: #{_lambda_.12} parent=5 // pred_check
      %p825 = pneg %p824
    $region50: #{_lambda_.12} parent=5 // pred_check_branch
      %827 = sbr.rel (%p825) target = $region52
    $region51: #{_lambda_.12} parent=5 // pred_region
      %s828 = ssub.s32 %s12, 2
      // Predicated region
      $region53: #{_lambda_.12} parent=51 // pred_check
        %p829 = pneg %p177
      $region54: #{_lambda_.12} parent=51 // pred_check_branch
        %831 = sbr.rel (%p829) target = $region56
      $region55: #{_lambda_.12} parent=51 // pred_region
        %p832 = scmp.lt.s32.totalorder %s18, 1
        %s833 = scalar_select %p832, %s18, 1
        %s834 = smul.addr %s833, 2
        %s835 = smul.addr %s834, 8
        %s836 = scalar_lea.vmem %s6, %s835
      $region56: #{_lambda_.12} parent=51 // pred_fallthru
        _
    $region52: #{_lambda_.12} parent=5 // pred_fallthru
      _
  $region6: #{_lambda_.12} parent=0 // loop_footer
    %s16 = sadd.s32 1, %s12
  $region7: #{_lambda_.12} parent=0 // loop_footer_branch
    %11 = sbr.rel target = $region3
  $region8: #{_lambda_.12} parent=0 // loop_exit
    _

// kernel: _lambda_.13
$region0: #{_lambda_.13}
  #allocation0 [shape = 'u32[]', space=smem, size = 0x4, offset = 0x4, fixed_abs, tag = 'smem constant byte address 0x4 - core index']
  #allocation1 [shape = 'u32[144,128]{1,0:T(1,128)}', space=vmem, size = 0x12000, scoped, tag = 'internal scratch']
  %s0 = inlined_call_operand.vmem [shape: f32[2,128], index: 0, kind: input, shape index: {}]
  %s1 = inlined_call_operand.vmem [shape: bf16[128,64], index: 1, kind: input, shape index: {}]
  %s2 = inlined_call_operand.vmem [shape: f32[1,64], index: 2, kind: input, shape index: {}]
  %s3 = inlined_call_operand.vmem [shape: bf16[64,80], index: 3, kind: input, shape index: {}]
  %s4 = inlined_call_operand.vmem [shape: f32[1,80], index: 4, kind: input, shape index: {}]
  %s5 = inlined_call_operand.vmem [shape: f32[2,80], index: 5, kind: output, shape index: {}]
  %s6 = sld [smem:[#allocation0]]
  $region30: #{_lambda_.13} parent=0
    _
  %s8 = ssub.s32 1, %s6
  %s9 = scalar_select 0, %s8, %s6
  // Predicated region
  $region2: #{_lambda_.13} parent=0 // pred_check
    _
  $region3: #{_lambda_.13} parent=0 // pred_check_branch
    %11 = sbr.rel (0) target = $region5
  $region4: #{_lambda_.13} parent=0 // pred_region
    _
  $region5: #{_lambda_.13} parent=0 // pred_fallthru
    _
  // Predicated region
  $region6: #{_lambda_.13} parent=0 // pred_check
    _
  $region7: #{_lambda_.13} parent=0 // pred_check_branch
    %13 = sbr.rel (0) target = $region9
  $region8: #{_lambda_.13} parent=0 // pred_region
    _
  $region9: #{_lambda_.13} parent=0 // pred_fallthru
    _
  // Predicated region
  $region10: #{_lambda_.13} parent=0 // pred_check
    _
  $region11: #{_lambda_.13} parent=0 // pred_check_branch
    %15 = sbr.rel (0) target = $region13
  $region12: #{_lambda_.13} parent=0 // pred_region
    _
  $region13: #{_lambda_.13} parent=0 // pred_fallthru
    _
  // Predicated region
  $region14: #{_lambda_.13} parent=0 // pred_check
    _
  $region15: #{_lambda_.13} parent=0 // pred_check_branch
    %17 = sbr.rel (0) target = $region17
  $region16: #{_lambda_.13} parent=0 // pred_region
    _
  $region17: #{_lambda_.13} parent=0 // pred_fallthru
    _
  // Predicated region
  $region18: #{_lambda_.13} parent=0 // pred_check
    _
  $region19: #{_lambda_.13} parent=0 // pred_check_branch
    %19 = sbr.rel (0) target = $region21
  $region20: #{_lambda_.13} parent=0 // pred_region
    _
  $region21: #{_lambda_.13} parent=0 // pred_fallthru
    _
  %v21 = vld [vmem:[%s0] sm:$0x3]
  %v22 = vld [vmem:[%s1] sm:$0xf]
  %v23 = vld [vmem:[%s1 + $0x4] sm:$0xf]
  %v24 = vld [vmem:[%s1 + $0x8] sm:$0xf]
  %v25 = vld [vmem:[%s1 + $0xc] sm:$0xf]
  %v26 = vld [vmem:[%s1 + $0x10] sm:$0xf]
  %v27 = vld [vmem:[%s1 + $0x14] sm:$0xf]
  %v28 = vld [vmem:[%s1 + $0x18] sm:$0xf]
  %v29 = vld [vmem:[%s1 + $0x1c] sm:$0xf]
  %v30 = vld [vmem:[%s1 + $0x20] sm:$0xf]
  %v31 = vld [vmem:[%s1 + $0x24] sm:$0xf]
  %v32 = vld [vmem:[%s1 + $0x28] sm:$0xf]
  %v33 = vld [vmem:[%s1 + $0x2c] sm:$0xf]
  %v34 = vld [vmem:[%s1 + $0x30] sm:$0xf]
  %v35 = vld [vmem:[%s1 + $0x34] sm:$0xf]
  %v36 = vld [vmem:[%s1 + $0x38] sm:$0xf]
  %v37 = vld [vmem:[%s1 + $0x3c] sm:$0xf]
  %v38 = vld [vmem:[%s2] sm:$0x1]
  %v39 = vpack.c.bf16 %v21, %v21
  %v41 = vlaneseq
  %v42 = vshrl.u32 %v41, 7
  %v43 = vsub.s32 0, %v42
  %v44 = vrot.slane %v38, %v43
  %v62 = vunpack.c.l.b16 %v22
  %v63 = vunpack.c.l.b16 %v23
  %v64 = vunpack.c.l.b16 %v24
  %v65 = vunpack.c.l.b16 %v25
  %v66 = vunpack.c.l.b16 %v26
  %v67 = vunpack.c.l.b16 %v27
  %v68 = vunpack.c.l.b16 %v28
  %v69 = vunpack.c.l.b16 %v29
  %v70 = vunpack.c.l.b16 %v30
  %v71 = vunpack.c.l.b16 %v31
  %v72 = vunpack.c.l.b16 %v32
  %v73 = vunpack.c.l.b16 %v33
  %v74 = vunpack.c.l.b16 %v34
  %v75 = vunpack.c.l.b16 %v35
  %v76 = vunpack.c.l.b16 %v36
  %v77 = vunpack.c.l.b16 %v37
  %v78 = vpack.c.b16 %v63, %v62
  %v79 = vpack.c.b16 %v65, %v64
  %v80 = vpack.c.b16 %v67, %v66
  %v81 = vpack.c.b16 %v69, %v68
  %v82 = vpack.c.b16 %v71, %v70
  %v83 = vpack.c.b16 %v73, %v72
  %v84 = vpack.c.b16 %v75, %v74
  %v85 = vpack.c.b16 %v77, %v76
  %94 = vmatprep.subr.bf16.mxu0 0
  %95 = vmatpush1.bf16.msra.mxu0 %v85
  %96 = vmatprep.subr.bf16.mxu0 0
  %97 = vmatpush1.bf16.msra.mxu0 %v84
  %98 = vmatprep.subr.bf16.mxu0 0
  %99 = vmatpush1.bf16.msra.mxu0 %v83
  %100 = vmatprep.subr.bf16.mxu0 0
  %101 = vmatpush1.bf16.msra.mxu0 %v82
  %102 = vmatprep.subr.bf16.mxu0 0
  %103 = vmatpush1.bf16.msra.mxu0 %v81
  %104 = vmatprep.subr.bf16.mxu0 0
  %105 = vmatpush1.bf16.msra.mxu0 %v80
  %106 = vmatprep.subr.bf16.mxu0 0
  %107 = vmatpush1.bf16.msra.mxu0 %v79
  %108 = vmatprep.subr.bf16.mxu0 0
  %109 = vmatpush1.bf16.msra.mxu0 %v78
  %110 = vmatprep.subr.bf16.mxu0 0
  %111 = vmatpush2.bf16.msra.mxu0 0
  %112 = vmatprep.subr.bf16.mxu0 0
  %113 = vmatpush2.bf16.msra.mxu0 0
  %114 = vmatprep.subr.bf16.mxu0 0
  %115 = vmatpush2.bf16.msra.mxu0 0
  %116 = vmatprep.subr.bf16.mxu0 0
  %117 = vmatpush2.bf16.msra.mxu0 0
  %118 = vmatprep.subr.bf16.mxu0 0
  %119 = vmatpush2.bf16.msra.mxu0 0
  %120 = vmatprep.subr.bf16.mxu0 0
  %121 = vmatpush2.bf16.msra.mxu0 0
  %122 = vmatprep.subr.bf16.mxu0 0
  %123 = vmatpush2.bf16.msra.mxu0 0
  %124 = vmatprep.subr.bf16.mxu0 0
  %125 = vmatpush2.bf16.msra.mxu0 0
  %126 = vmatprep.mubr.bf16.mxu0 0
  %127 = vmatmul.mubr.bf16.gmra.mxu0 %v39
  %v128 = vpop.f32.mrf.mxu0
  %v129 = vadd.f32 %v44, %v128
  %v130 = vpop.f32.mrf.mxu0
  %v131 = vpop.f32.mrf.mxu0
  %v132 = vpop.f32.mrf.mxu0
  %133 = vdwg.mxu0
  %vm134 = vcmp.ge.f32.partialorder %v129, 0.0
  %v135 = vmul.f32 %v129, 0.2
  %v136 = vsel %vm134, %v129, %v135
  %v137 = vld [vmem:[%s3] sm:$0xf]
  %v138 = vld [vmem:[%s3 + $0x4] sm:$0xf]
  %v139 = vld [vmem:[%s3 + $0x8] sm:$0xf]
  %v140 = vld [vmem:[%s3 + $0xc] sm:$0xf]
  %v141 = vld [vmem:[%s3 + $0x10] sm:$0xf]
  %v142 = vld [vmem:[%s3 + $0x14] sm:$0xf]
  %v143 = vld [vmem:[%s3 + $0x18] sm:$0xf]
  %v144 = vld [vmem:[%s3 + $0x1c] sm:$0xf]
  %v145 = vld [vmem:[%s4] sm:$0x1]
  %v146 = vpack.c.bf16 %v136, %v136
  %v148 = vlaneseq
  %v149 = vshrl.u32 %v148, 7
  %v150 = vsub.s32 0, %v149
  %v151 = vrot.slane %v145, %v150
  %v161 = vunpack.c.l.b16 %v137
  %v162 = vunpack.c.l.b16 %v138
  %v163 = vunpack.c.l.b16 %v139
  %v164 = vunpack.c.l.b16 %v140
  %v165 = vunpack.c.l.b16 %v141
  %v166 = vunpack.c.l.b16 %v142
  %v167 = vunpack.c.l.b16 %v143
  %v168 = vunpack.c.l.b16 %v144
  %v169 = vpack.c.b16 %v162, %v161
  %v170 = vpack.c.b16 %v164, %v163
  %v171 = vpack.c.b16 %v166, %v165
  %v172 = vpack.c.b16 %v168, %v167
  %vm177 = vcmask 523264
  %v179 = vsel %vm177, %v146, 0
  %181 = vmatprep.subr.bf16.mxu0 0
  %182 = vmatpush1.bf16.msra.mxu0 0
  %183 = vmatprep.subr.bf16.mxu0 0
  %184 = vmatpush1.bf16.msra.mxu0 0
  %185 = vmatprep.subr.bf16.mxu0 0
  %186 = vmatpush1.bf16.msra.mxu0 0
  %187 = vmatprep.subr.bf16.mxu0 0
  %188 = vmatpush1.bf16.msra.mxu0 0
  %189 = vmatprep.subr.bf16.mxu0 0
  %190 = vmatpush1.bf16.msra.mxu0 %v172
  %191 = vmatprep.subr.bf16.mxu0 0
  %192 = vmatpush1.bf16.msra.mxu0 %v171
  %193 = vmatprep.subr.bf16.mxu0 0
  %194 = vmatpush1.bf16.msra.mxu0 %v170
  %195 = vmatprep.subr.bf16.mxu0 0
  %196 = vmatpush1.bf16.msra.mxu0 %v169
  %197 = vmatprep.subr.bf16.mxu0 0
  %198 = vmatpush2.bf16.msra.mxu0 0
  %199 = vmatprep.subr.bf16.mxu0 0
  %200 = vmatpush2.bf16.msra.mxu0 0
  %201 = vmatprep.subr.bf16.mxu0 0
  %202 = vmatpush2.bf16.msra.mxu0 0
  %203 = vmatprep.subr.bf16.mxu0 0
  %204 = vmatpush2.bf16.msra.mxu0 0
  %205 = vmatprep.subr.bf16.mxu0 0
  %206 = vmatpush2.bf16.msra.mxu0 0
  %207 = vmatprep.subr.bf16.mxu0 0
  %208 = vmatpush2.bf16.msra.mxu0 0
  %209 = vmatprep.subr.bf16.mxu0 0
  %210 = vmatpush2.bf16.msra.mxu0 0
  %211 = vmatprep.subr.bf16.mxu0 0
  %212 = vmatpush2.bf16.msra.mxu0 0
  %213 = vmatprep.mubr.bf16.mxu0 0
  %214 = vmatmul.mubr.bf16.gmra.mxu0 %v179
  %v215 = vpop.f32.mrf.mxu0
  %v216 = vadd.f32 %v151, %v215
  %v217 = vpop.f32.mrf.mxu0
  %v218 = vpop.f32.mrf.mxu0
  %v219 = vpop.f32.mrf.mxu0
  %220 = vdwg.mxu0
  %v221 = vtanh.pop %v216
  %vm222 = vcmask 648192
  %223 = vst.msk [vmem:[%s5] sm:$0x3] %vm222, %v221
  // Predicated region
  $region22: #{_lambda_.13} parent=0 // pred_check
    _
  $region23: #{_lambda_.13} parent=0 // pred_check_branch
    %225 = sbr.rel (0) target = $region25
  $region24: #{_lambda_.13} parent=0 // pred_region
    _
  $region25: #{_lambda_.13} parent=0 // pred_fallthru
    _
  // Predicated region
  $region26: #{_lambda_.13} parent=0 // pred_check
    _
  $region27: #{_lambda_.13} parent=0 // pred_check_branch
    %227 = sbr.rel (0) target = $region29
  $region28: #{_lambda_.13} parent=0 // pred_region
    _
  $region29: #{_lambda_.13} parent=0 // pred_fallthru
    _

</llo_original>
